<compile_context>
chip_gen: v5e
topology: v5e:2x2
jax: 0.10.0
libtpu: 0.0.40
codegen_flags: <defaults>
</compile_context>

<pallas_src>
import functools

import numpy as np
import jax
import jax.numpy as jnp
from jax import lax
from jax.experimental import pallas as pl
from jax.experimental.pallas import tpu as pltpu


# ----------------------------------------------------------------------------
# Fused decoder kernel: one grid step == TB samples
# ----------------------------------------------------------------------------
def _decoder_kernel(tb,
                    z_ref, wfc_ref, bfc_ref,
                    w1_ref, s1_ref, b1_ref,
                    w2_ref, s2_ref, b2_ref,
                    w3_ref, b3_ref, s3_hbm_ref,
                    out_ref,
                    t1_ref, t2_ref, t3_ref, s3_ref, s3_sem):
    bf16, f32 = jnp.bfloat16, jnp.float32
    first_step = pl.program_id(0) == 0

    # Kick the big (~3.2 MiB) layer-3 col2im matrix HBM->VMEM DMA now; it is
    # consumed only by the very last GEMMs, so the transfer overlaps with the
    # FC + conv1 + conv2 compute.  Grid steps run sequentially ("arbitrary"),
    # so filling the persistent scratch on step 0 only is sufficient.
    @pl.when(first_step)
    def _():
        pltpu.make_async_copy(s3_hbm_ref, s3_ref, s3_sem).start()

    # ---------------- Linear(L -> 2048) + ReLU : all TB samples in one GEMM --
    z = z_ref[...].astype(bf16)                                    # (tb, L)
    h = jnp.dot(z, wfc_ref[...], preferred_element_type=f32)
    h = jnp.maximum(h + bfc_ref[...], 0.0)                         # (tb, 2048) f32

    # ---------------- helpers -------------------------------------------------
    def channel_gemms(x_rows, ci, w_ref, t_ref):
        # x_rows: (tb*ci, HW) f32, channel-major per sample (samples stacked on
        # sublanes).  One fused 9-tap GEMM per sample: (9*Cop, ci) @ (ci, HW).
        for s in range(tb):
            xs = x_rows[s * ci:(s + 1) * ci, :].astype(bf16)
            t_ref[s] = jnp.dot(w_ref[...], xs, preferred_element_type=f32)

    def batched_scatter(t_ref, cop, hw, n_out, s_read, b_ref):
        # Stride-2 col2im on the MXU, batched across samples:
        # per tap one (tb*cop, hw) @ (hw, n_out) GEMM with a lane-dense RHS.
        acc = jnp.zeros((tb * cop, n_out), f32)
        for t in range(9):                                         # unrolled taps
            p = t_ref[:, pl.ds(t * cop, cop), :]                   # (tb, cop, hw)
            p = p.reshape(tb * cop, hw).astype(bf16)
            acc = acc + jnp.dot(p, s_read(t), preferred_element_type=f32)
        bias = jnp.concatenate([b_ref[...]] * tb, axis=0)          # (tb*cop, 1)
        return acc + bias

    # ---------------- Unflatten + ConvTranspose2d(128 -> 64) -----------------
    # fc columns were host-permuted so lanes [128p, 128(p+1)) hold the 128
    # channels of spatial position p: 16 aligned lane slices + one small 2-D
    # transpose produce the (128, 16) channel-major block per sample.
    for s in range(tb):
        hs = h[s:s + 1, :]                                         # (1, 2048)
        x0 = jnp.concatenate([hs[:, 128 * p:128 * (p + 1)] for p in range(16)],
                             axis=0)                               # (16, 128)
        xs = x0.T.astype(bf16)                                     # (128, 16)
        t1_ref[s] = jnp.dot(w1_ref[...], xs, preferred_element_type=f32)  # (576, 16)

    y1 = jnp.maximum(
        batched_scatter(t1_ref, 64, 16, 49, lambda t: s1_ref[t], b1_ref), 0.0)
    # y1: (tb*64, 49) f32

    # ---------------- ConvTranspose2d(64 -> 32) ------------------------------
    channel_gemms(y1, 64, w2_ref, t2_ref)                          # (288, 49) / sample
    y2 = jnp.maximum(
        batched_scatter(t2_ref, 32, 49, 196, lambda t: s2_ref[t], b2_ref), 0.0)
    # y2: (tb*32, 196) f32

    # ---------------- ConvTranspose2d(32 -> 3), out-ch padded 3 -> 8 ---------
    channel_gemms(y2, 32, w3_ref, t3_ref)                          # (72, 196) / sample

    # The layer-3 col2im matrix must be resident from here on.
    @pl.when(first_step)
    def _():
        pltpu.make_async_copy(s3_hbm_ref, s3_ref, s3_sem).wait()

    y3 = batched_scatter(t3_ref, 8, 196, 784, lambda t: s3_ref[t], b3_ref)
    # y3: (tb*8, 784) f32; padded channels 3..7 are exactly zero (zero weights/bias).

    # Drop the padded channels and pack rows densely: (tb*3, 784), no ReLU.
    out_ref[...] = jnp.concatenate([y3[s * 8:s * 8 + 3, :] for s in range(tb)],
                                   axis=0)


def _const_index(b, *, ndim):
    return (0,) * ndim


# ----------------------------------------------------------------------------
# Public forward pass (single pallas_call)
# ----------------------------------------------------------------------------
def decoder_img_forward(packed, style_latent, class_latent, *,
                        factorized_representation=True, samples_per_step=8):
    if factorized_representation:
        z = jnp.concatenate([style_latent, class_latent], axis=1)
    else:
        z = class_latent
    B, L = z.shape

    # TB samples per grid step.  When more than one step is needed, the batch-
    # blocked dims must be 8-sublane aligned, hence TB is a multiple of 8.
    if B <= samples_per_step:
        tb = B
    else:
        tb = max(8, (samples_per_step // 8) * 8)
    b_pad = pl.cdiv(B, tb) * tb
    if b_pad != B:
        z = jnp.concatenate([z, jnp.zeros((b_pad - B, L), z.dtype)], axis=0)
    grid_b = b_pad // tb

    args = (z,
            packed["fc_w"], packed["fc_b"],
            packed["w1"], packed["s1"], packed["b1"],
            packed["w2"], packed["s2"], packed["b2"],
            packed["w3"], packed["b3"],
            packed["s3"])

    in_specs = [pl.BlockSpec((tb, L), lambda b: (b, 0))]
    for a in args[1:-1]:     # grid-invariant weights: DMA'd once, revisited
        in_specs.append(
            pl.BlockSpec(a.shape, functools.partial(_const_index, ndim=a.ndim)))
    # Layer-3 col2im matrix bypasses the auto-pipeline; it is copied into VMEM
    # with a manual async DMA inside the kernel (overlapped with compute).
    in_specs.append(pl.BlockSpec(memory_space=pl.ANY))

    out = pl.pallas_call(
        functools.partial(_decoder_kernel, tb),
        out_shape=jax.ShapeDtypeStruct((b_pad * 3, 28 * 28), jnp.float32),
        grid=(grid_b,),
        in_specs=in_specs,
        out_specs=pl.BlockSpec((tb * 3, 28 * 28), lambda b: (b, 0)),
        scratch_shapes=[
            pltpu.VMEM((tb, 9 * 64, 16), jnp.float32),    # layer-1 tap results
            pltpu.VMEM((tb, 9 * 32, 49), jnp.float32),    # layer-2 tap results
            pltpu.VMEM((tb, 9 * 8, 196), jnp.float32),    # layer-3 tap results
            pltpu.VMEM((9, 196, 784), jnp.bfloat16),      # layer-3 col2im (manual DMA)
            pltpu.SemaphoreType.DMA(()),
        ],
        # "arbitrary": steps run sequentially (required for the step-0-only
        # manual DMA that fills the persistent s3 scratch) and avoids
        # duplicating the weight/S set per TensorCore on v7x for small batches.
        compiler_params=pltpu.CompilerParams(
            dimension_semantics=("arbitrary",)),
    )(*args)

    x_hat = out.reshape(b_pad, 3, 28, 28)[:B]     # free reshape: rows are (sample, ch)
    return x_hat, jnp.float32(0.75)


# ----------------------------------------------------------------------------
# Parameter construction (PyTorch layouts) and packing for the kernel
# ----------------------------------------------------------------------------
def init_params(key, latent_dim):
    """Deterministic synthetic parameters in the original PyTorch layouts."""
    keys = jax.random.split(key, 8)
    s = 0.05
    return {
        "fc_w": s * jax.random.normal(keys[0], (2048, latent_dim), jnp.float32),  # (out, in)
        "fc_b": s * jax.random.normal(keys[1], (2048,), jnp.float32),
        "ct1_w": s * jax.random.normal(keys[2], (128, 64, 3, 3), jnp.float32),    # (Cin, Cout, kH, kW)
        "ct1_b": s * jax.random.normal(keys[3], (64,), jnp.float32),
        "ct2_w": s * jax.random.normal(keys[4], (64, 32, 3, 3), jnp.float32),
        "ct2_b": s * jax.random.normal(keys[5], (32,), jnp.float32),
        "ct3_w": s * jax.random.normal(keys[6], (32, 3, 3, 3), jnp.float32),
        "ct3_b": s * jax.random.normal(keys[7], (3,), jnp.float32),
    }


def _col2im_scatter(h, w, stride, pad, out_pad):
    """(9, h*w, ho*wo) 0/1 matrices: S[kh*3+kw, iy*w+ix, oy*wo+ox] = 1 iff the
    ConvTranspose2d tap (kh, kw) sends input pixel (iy, ix) to output (oy, ox),
    i.e. oy = stride*iy - pad + kh and ox = stride*ix - pad + kw (in range)."""
    ho = (h - 1) * stride - 2 * pad + 3 + out_pad
    wo = (w - 1) * stride - 2 * pad + 3 + out_pad
    s = np.zeros((3, 3, h * w, ho * wo), np.float32)
    for kh in range(3):
        for kw in range(3):
            for iy in range(h):
                oy = stride * iy - pad + kh
                if not 0 <= oy < ho:
                    continue
                for ix in range(w):
                    ox = stride * ix - pad + kw
                    if 0 <= ox < wo:
                        s[kh, kw, iy * w + ix, oy * wo + ox] = 1.0
    return s.reshape(9, h * w, ho * wo)


def pack_params(params):
    """Convert PyTorch-layout params into kernel layouts: bf16 MXU operands,
    per-layer fused 9-tap weights (9*Cop, Ci) (layer-3 Co padded 3 -> 8),
    col2im scatter matrices, permuted FC weight (channel-major unflatten)."""
    bf16, f32 = jnp.bfloat16, jnp.float32

    # fc: kernel computes z @ Wk; permute columns so lanes [128p, 128(p+1))
    # hold the 128 channels of spatial position p (PyTorch Unflatten is
    # channel-major: original column index = c*16 + p).
    perm = (np.arange(128)[None, :] * 16 + np.arange(16)[:, None]).reshape(-1)
    fc_w = jnp.asarray(params["fc_w"]).T[:, perm]                  # (L, 2048)
    fc_b = params["fc_b"][perm].reshape(1, 2048)

    def conv(w, cop):  # (Ci, Co, 3, 3) -> (9*cop, Ci), row index = t*cop + co
        ci, co = w.shape[0], w.shape[1]
        wt = jnp.transpose(w, (2, 3, 1, 0)).reshape(9, co, ci)
        if cop != co:
            wt = jnp.pad(wt, ((0, 0), (0, cop - co), (0, 0)))
        return wt.reshape(9 * cop, ci).astype(bf16)

    def bias(b, cop):
        co = b.shape[0]
        if cop != co:
            b = jnp.pad(b, (0, cop - co))
        return b.reshape(cop, 1).astype(f32)

    return {
        "fc_w": fc_w.astype(bf16),
        "fc_b": fc_b.astype(f32),
        "w1": conv(params["ct1_w"], 64), "b1": bias(params["ct1_b"], 64),
        "s1": jnp.asarray(_col2im_scatter(4, 4, 2, 1, 0), bf16),     # (9, 16, 49)
        "w2": conv(params["ct2_w"], 32), "b2": bias(params["ct2_b"], 32),
        "s2": jnp.asarray(_col2im_scatter(7, 7, 2, 1, 1), bf16),     # (9, 49, 196)
        "w3": conv(params["ct3_w"], 8),  "b3": bias(params["ct3_b"], 8),
        "s3": jnp.asarray(_col2im_scatter(14, 14, 2, 1, 1), bf16),   # (9, 196, 784)
    }


# ----------------------------------------------------------------------------
# Pure-XLA float32 reference (independent formulation) for validation
# ----------------------------------------------------------------------------
def _reference_conv_transpose(x, w, b, out_pad):
    # ConvTranspose2d == regular conv over the zero-dilated input with the
    # kernel flipped and in/out channels swapped.
    wc = jnp.transpose(jnp.flip(w, (2, 3)), (1, 0, 2, 3))          # (Co, Ci, 3, 3)
    y = lax.conv_general_dilated(
        x, wc, window_strides=(1, 1),
        padding=((1, 1 + out_pad), (1, 1 + out_pad)),
        lhs_dilation=(2, 2),
        dimension_numbers=("NCHW", "OIHW", "NCHW"))
    return y + b[None, :, None, None]


def decoder_img_reference(params, style_latent, class_latent, *,
                          factorized_representation=True):
    if factorized_representation:
        z = jnp.concatenate([style_latent, class_latent], axis=1)
    else:
        z = class_latent
    h = jnp.maximum(z @ params["fc_w"].T + params["fc_b"], 0.0)
    x = h.reshape(-1, 128, 4, 4)
    x = jnp.maximum(_reference_conv_transpose(x, params["ct1_w"], params["ct1_b"], 0), 0.0)
    x = jnp.maximum(_reference_conv_transpose(x, params["ct2_w"], params["ct2_b"], 1), 0.0)
    x = _reference_conv_transpose(x, params["ct3_w"], params["ct3_b"], 1)
    return x


if __name__ == "__main__":
    key = jax.random.PRNGKey(0)
    batch, style_dim, class_dim = 2, 2, 8
    k_params, k_style, k_class = jax.random.split(key, 3)

    params = init_params(k_params, style_dim + class_dim)
    packed = pack_params(params)
    style = jax.random.normal(k_style, (batch, style_dim), jnp.float32)
    cls = jax.random.normal(k_class, (batch, class_dim), jnp.float32)

    fwd = jax.jit(functools.partial(decoder_img_forward,
                                    factorized_representation=True))
    x_hat, const = fwd(packed, style, cls)
    jax.block_until_ready((x_hat, const))

    assert x_hat.shape == (batch, 3, 28, 28), x_hat.shape
    assert x_hat.dtype == jnp.float32
    assert float(const) == 0.75

    # Numerical cross-check against the independent f32 reference (bf16 MXU
    # inputs + f32 accumulation => small rounding differences only).
    x_ref = decoder_img_reference(params, style, cls)
    max_err = float(jnp.max(jnp.abs(x_hat - x_ref)))
    assert max_err < 3e-2, max_err

    print("KERNEL_OK")
</pallas_src>

<mosaic_0001>
module attributes {stable_mosaic.version = 11 : i64} {
  func.func @_decoder_kernel(%arg0: i32, %arg1: memref<2x10xf32, #tpu.memory_space<vmem>>, %arg2: memref<10x2048xbf16, #tpu.memory_space<vmem>>, %arg3: memref<1x2048xf32, #tpu.memory_space<vmem>>, %arg4: memref<576x128xbf16, #tpu.memory_space<vmem>>, %arg5: memref<9x16x49xbf16, #tpu.memory_space<vmem>>, %arg6: memref<64x1xf32, #tpu.memory_space<vmem>>, %arg7: memref<288x64xbf16, #tpu.memory_space<vmem>>, %arg8: memref<9x49x196xbf16, #tpu.memory_space<vmem>>, %arg9: memref<32x1xf32, #tpu.memory_space<vmem>>, %arg10: memref<72x32xbf16, #tpu.memory_space<vmem>>, %arg11: memref<8x1xf32, #tpu.memory_space<vmem>>, %arg12: memref<9x196x784xbf16, #tpu.memory_space<any>>, %arg13: memref<6x784xf32, #tpu.memory_space<vmem>>, %arg14: memref<2x576x16xf32, #tpu.memory_space<vmem>>, %arg15: memref<2x288x49xf32, #tpu.memory_space<vmem>>, %arg16: memref<2x72x196xf32, #tpu.memory_space<vmem>>, %arg17: memref<9x196x784xbf16, #tpu.memory_space<vmem>>, %arg18: memref<!tpu.dma_semaphore, #tpu.memory_space<semaphore_mem>>) attributes {dimension_semantics = [#tpu.dimension_semantics<arbitrary>], iteration_bounds = array<i64: 1>, scalar_prefetch = 0 : i64, scratch_operands = 5 : i64, tpu.core_type = #tpu.core_type<tc>, window_params = [{transform_indices = @transform_0, window_bounds = array<i64: 2, 10>}, {pipeline_mode = #tpu.pipeline_mode<synchronous>, transform_indices = @transform_1, window_bounds = array<i64: 10, 2048>}, {pipeline_mode = #tpu.pipeline_mode<synchronous>, transform_indices = @transform_2, window_bounds = array<i64: 1, 2048>}, {pipeline_mode = #tpu.pipeline_mode<synchronous>, transform_indices = @transform_3, window_bounds = array<i64: 576, 128>}, {pipeline_mode = #tpu.pipeline_mode<synchronous>, transform_indices = @transform_4, window_bounds = array<i64: 9, 16, 49>}, {pipeline_mode = #tpu.pipeline_mode<synchronous>, transform_indices = @transform_5, window_bounds = array<i64: 64, 1>}, {pipeline_mode = #tpu.pipeline_mode<synchronous>, transform_indices = @transform_6, window_bounds = array<i64: 288, 64>}, {pipeline_mode = #tpu.pipeline_mode<synchronous>, transform_indices = @transform_7, window_bounds = array<i64: 9, 49, 196>}, {pipeline_mode = #tpu.pipeline_mode<synchronous>, transform_indices = @transform_8, window_bounds = array<i64: 32, 1>}, {pipeline_mode = #tpu.pipeline_mode<synchronous>, transform_indices = @transform_9, window_bounds = array<i64: 72, 32>}, {pipeline_mode = #tpu.pipeline_mode<synchronous>, transform_indices = @transform_10, window_bounds = array<i64: 8, 1>}, {}, {transform_indices = @transform_12, window_bounds = array<i64: 6, 784>}]} {
    %c0_i32 = arith.constant 0 : i32
    %0 = arith.cmpi eq, %arg0, %c0_i32 : i32
    %1 = arith.extui %0 : i1 to i32
    %c0_i32_0 = arith.constant 0 : i32
    %2 = arith.cmpi ne, %1, %c0_i32_0 : i32
    scf.if %2 {
      tpu.enqueue_dma source(%arg12 : memref<9x196x784xbf16, #tpu.memory_space<any>>) target(%arg17 : memref<9x196x784xbf16, #tpu.memory_space<vmem>>) target_semaphore(%arg18 : memref<!tpu.dma_semaphore, #tpu.memory_space<semaphore_mem>>)
    } else {
    }
    %c0 = arith.constant 0 : index
    %c0_1 = arith.constant 0 : index
    %3 = vector.load %arg1[%c0, %c0_1] : memref<2x10xf32, #tpu.memory_space<vmem>>, vector<2x10xf32>
    %4 = arith.truncf %3 : vector<2x10xf32> to vector<2x10xbf16>
    %c0_2 = arith.constant 0 : index
    %c0_3 = arith.constant 0 : index
    %5 = vector.load %arg2[%c0_2, %c0_3] : memref<10x2048xbf16, #tpu.memory_space<vmem>>, vector<10x2048xbf16>
    %cst = arith.constant dense<0.000000e+00> : vector<2x2048xf32>
    %6 = tpu.matmul %4, %5, %cst {dimension_numbers = #tpu.dot_dimension_numbers<[1], [0], [0], [1], [0, 0, 1, 1], [], []>} : vector<2x10xbf16>, vector<10x2048xbf16>, vector<2x2048xf32> -> vector<2x2048xf32>
    %c0_4 = arith.constant 0 : index
    %c0_5 = arith.constant 0 : index
    %7 = vector.load %arg3[%c0_4, %c0_5] : memref<1x2048xf32, #tpu.memory_space<vmem>>, vector<1x2048xf32>
    %8 = vector.broadcast %7 : vector<1x2048xf32> to vector<2x2048xf32>
    %9 = arith.addf %6, %8 : vector<2x2048xf32>
    %cst_6 = arith.constant 0.000000e+00 : f32
    %10 = vector.broadcast %cst_6 : f32 to vector<2x2048xf32>
    %11 = arith.maximumf %9, %10 : vector<2x2048xf32>
    %12 = vector.extract_strided_slice %11 {offsets = [0, 0], sizes = [1, 2048], strides = [1, 1]} : vector<2x2048xf32> to vector<1x2048xf32>
    %13 = vector.extract_strided_slice %12 {offsets = [0, 0], sizes = [1, 128], strides = [1, 1]} : vector<1x2048xf32> to vector<1x128xf32>
    %14 = vector.extract_strided_slice %12 {offsets = [0, 128], sizes = [1, 128], strides = [1, 1]} : vector<1x2048xf32> to vector<1x128xf32>
    %15 = vector.extract_strided_slice %12 {offsets = [0, 256], sizes = [1, 128], strides = [1, 1]} : vector<1x2048xf32> to vector<1x128xf32>
    %16 = vector.extract_strided_slice %12 {offsets = [0, 384], sizes = [1, 128], strides = [1, 1]} : vector<1x2048xf32> to vector<1x128xf32>
    %17 = vector.extract_strided_slice %12 {offsets = [0, 512], sizes = [1, 128], strides = [1, 1]} : vector<1x2048xf32> to vector<1x128xf32>
    %18 = vector.extract_strided_slice %12 {offsets = [0, 640], sizes = [1, 128], strides = [1, 1]} : vector<1x2048xf32> to vector<1x128xf32>
    %19 = vector.extract_strided_slice %12 {offsets = [0, 768], sizes = [1, 128], strides = [1, 1]} : vector<1x2048xf32> to vector<1x128xf32>
    %20 = vector.extract_strided_slice %12 {offsets = [0, 896], sizes = [1, 128], strides = [1, 1]} : vector<1x2048xf32> to vector<1x128xf32>
    %21 = vector.extract_strided_slice %12 {offsets = [0, 1024], sizes = [1, 128], strides = [1, 1]} : vector<1x2048xf32> to vector<1x128xf32>
    %22 = vector.extract_strided_slice %12 {offsets = [0, 1152], sizes = [1, 128], strides = [1, 1]} : vector<1x2048xf32> to vector<1x128xf32>
    %23 = vector.extract_strided_slice %12 {offsets = [0, 1280], sizes = [1, 128], strides = [1, 1]} : vector<1x2048xf32> to vector<1x128xf32>
    %24 = vector.extract_strided_slice %12 {offsets = [0, 1408], sizes = [1, 128], strides = [1, 1]} : vector<1x2048xf32> to vector<1x128xf32>
    %25 = vector.extract_strided_slice %12 {offsets = [0, 1536], sizes = [1, 128], strides = [1, 1]} : vector<1x2048xf32> to vector<1x128xf32>
    %26 = vector.extract_strided_slice %12 {offsets = [0, 1664], sizes = [1, 128], strides = [1, 1]} : vector<1x2048xf32> to vector<1x128xf32>
    %27 = vector.extract_strided_slice %12 {offsets = [0, 1792], sizes = [1, 128], strides = [1, 1]} : vector<1x2048xf32> to vector<1x128xf32>
    %28 = vector.extract_strided_slice %12 {offsets = [0, 1920], sizes = [1, 128], strides = [1, 1]} : vector<1x2048xf32> to vector<1x128xf32>
    %29 = tpu.concatenate %13, %14, %15, %16, %17, %18, %19, %20, %21, %22, %23, %24, %25, %26, %27, %28 in 0 : vector<1x128xf32>, vector<1x128xf32>, vector<1x128xf32>, vector<1x128xf32>, vector<1x128xf32>, vector<1x128xf32>, vector<1x128xf32>, vector<1x128xf32>, vector<1x128xf32>, vector<1x128xf32>, vector<1x128xf32>, vector<1x128xf32>, vector<1x128xf32>, vector<1x128xf32>, vector<1x128xf32>, vector<1x128xf32> -> vector<16x128xf32>
    %30 = tpu.transpose %29, [1, 0] : vector<16x128xf32> -> vector<128x16xf32>
    %31 = arith.truncf %30 : vector<128x16xf32> to vector<128x16xbf16>
    %c0_7 = arith.constant 0 : index
    %c0_8 = arith.constant 0 : index
    %32 = vector.load %arg4[%c0_7, %c0_8] : memref<576x128xbf16, #tpu.memory_space<vmem>>, vector<576x128xbf16>
    %cst_9 = arith.constant dense<0.000000e+00> : vector<576x16xf32>
    %33 = tpu.matmul %32, %31, %cst_9 {dimension_numbers = #tpu.dot_dimension_numbers<[1], [0], [0], [1], [0, 0, 1, 1], [], []>} : vector<576x128xbf16>, vector<128x16xbf16>, vector<576x16xf32> -> vector<576x16xf32>
    %c0_10 = arith.constant 0 : index
    %c0_11 = arith.constant 0 : index
    %c0_12 = arith.constant 0 : index
    %34 = vector.load %arg14[%c0_10, %c0_11, %c0_12] : memref<2x576x16xf32, #tpu.memory_space<vmem>>, vector<1x576x16xf32>
    %35 = vector.shape_cast %34 : vector<1x576x16xf32> to vector<576x16xf32>
    %36 = vector.shape_cast %33 : vector<576x16xf32> to vector<1x576x16xf32>
    tpu.vector_store %arg14[%c0_10, %c0_11, %c0_12], %36 {strides = array<i32>} : memref<2x576x16xf32, #tpu.memory_space<vmem>>, vector<1x576x16xf32>,
    %37 = vector.extract_strided_slice %11 {offsets = [1, 0], sizes = [1, 2048], strides = [1, 1]} : vector<2x2048xf32> to vector<1x2048xf32>
    %38 = vector.extract_strided_slice %37 {offsets = [0, 0], sizes = [1, 128], strides = [1, 1]} : vector<1x2048xf32> to vector<1x128xf32>
    %39 = vector.extract_strided_slice %37 {offsets = [0, 128], sizes = [1, 128], strides = [1, 1]} : vector<1x2048xf32> to vector<1x128xf32>
    %40 = vector.extract_strided_slice %37 {offsets = [0, 256], sizes = [1, 128], strides = [1, 1]} : vector<1x2048xf32> to vector<1x128xf32>
    %41 = vector.extract_strided_slice %37 {offsets = [0, 384], sizes = [1, 128], strides = [1, 1]} : vector<1x2048xf32> to vector<1x128xf32>
    %42 = vector.extract_strided_slice %37 {offsets = [0, 512], sizes = [1, 128], strides = [1, 1]} : vector<1x2048xf32> to vector<1x128xf32>
    %43 = vector.extract_strided_slice %37 {offsets = [0, 640], sizes = [1, 128], strides = [1, 1]} : vector<1x2048xf32> to vector<1x128xf32>
    %44 = vector.extract_strided_slice %37 {offsets = [0, 768], sizes = [1, 128], strides = [1, 1]} : vector<1x2048xf32> to vector<1x128xf32>
    %45 = vector.extract_strided_slice %37 {offsets = [0, 896], sizes = [1, 128], strides = [1, 1]} : vector<1x2048xf32> to vector<1x128xf32>
    %46 = vector.extract_strided_slice %37 {offsets = [0, 1024], sizes = [1, 128], strides = [1, 1]} : vector<1x2048xf32> to vector<1x128xf32>
    %47 = vector.extract_strided_slice %37 {offsets = [0, 1152], sizes = [1, 128], strides = [1, 1]} : vector<1x2048xf32> to vector<1x128xf32>
    %48 = vector.extract_strided_slice %37 {offsets = [0, 1280], sizes = [1, 128], strides = [1, 1]} : vector<1x2048xf32> to vector<1x128xf32>
    %49 = vector.extract_strided_slice %37 {offsets = [0, 1408], sizes = [1, 128], strides = [1, 1]} : vector<1x2048xf32> to vector<1x128xf32>
    %50 = vector.extract_strided_slice %37 {offsets = [0, 1536], sizes = [1, 128], strides = [1, 1]} : vector<1x2048xf32> to vector<1x128xf32>
    %51 = vector.extract_strided_slice %37 {offsets = [0, 1664], sizes = [1, 128], strides = [1, 1]} : vector<1x2048xf32> to vector<1x128xf32>
    %52 = vector.extract_strided_slice %37 {offsets = [0, 1792], sizes = [1, 128], strides = [1, 1]} : vector<1x2048xf32> to vector<1x128xf32>
    %53 = vector.extract_strided_slice %37 {offsets = [0, 1920], sizes = [1, 128], strides = [1, 1]} : vector<1x2048xf32> to vector<1x128xf32>
    %54 = tpu.concatenate %38, %39, %40, %41, %42, %43, %44, %45, %46, %47, %48, %49, %50, %51, %52, %53 in 0 : vector<1x128xf32>, vector<1x128xf32>, vector<1x128xf32>, vector<1x128xf32>, vector<1x128xf32>, vector<1x128xf32>, vector<1x128xf32>, vector<1x128xf32>, vector<1x128xf32>, vector<1x128xf32>, vector<1x128xf32>, vector<1x128xf32>, vector<1x128xf32>, vector<1x128xf32>, vector<1x128xf32>, vector<1x128xf32> -> vector<16x128xf32>
    %55 = tpu.transpose %54, [1, 0] : vector<16x128xf32> -> vector<128x16xf32>
    %56 = arith.truncf %55 : vector<128x16xf32> to vector<128x16xbf16>
    %c0_13 = arith.constant 0 : index
    %c0_14 = arith.constant 0 : index
    %57 = vector.load %arg4[%c0_13, %c0_14] : memref<576x128xbf16, #tpu.memory_space<vmem>>, vector<576x128xbf16>
    %cst_15 = arith.constant dense<0.000000e+00> : vector<576x16xf32>
    %58 = tpu.matmul %57, %56, %cst_15 {dimension_numbers = #tpu.dot_dimension_numbers<[1], [0], [0], [1], [0, 0, 1, 1], [], []>} : vector<576x128xbf16>, vector<128x16xbf16>, vector<576x16xf32> -> vector<576x16xf32>
    %c1 = arith.constant 1 : index
    %c0_16 = arith.constant 0 : index
    %c0_17 = arith.constant 0 : index
    %59 = vector.load %arg14[%c1, %c0_16, %c0_17] : memref<2x576x16xf32, #tpu.memory_space<vmem>>, vector<1x576x16xf32>
    %60 = vector.shape_cast %59 : vector<1x576x16xf32> to vector<576x16xf32>
    %61 = vector.shape_cast %58 : vector<576x16xf32> to vector<1x576x16xf32>
    tpu.vector_store %arg14[%c1, %c0_16, %c0_17], %61 {strides = array<i32>} : memref<2x576x16xf32, #tpu.memory_space<vmem>>, vector<1x576x16xf32>,
    %cst_18 = arith.constant 0.000000e+00 : f32
    %62 = vector.broadcast %cst_18 : f32 to vector<128x49xf32>
    %c0_19 = arith.constant 0 : index
    %c0_20 = arith.constant 0 : index
    %c0_21 = arith.constant 0 : index
    %63 = vector.load %arg14[%c0_19, %c0_20, %c0_21] : memref<2x576x16xf32, #tpu.memory_space<vmem>>, vector<2x64x16xf32>
    %64 = vector.shape_cast %63 : vector<2x64x16xf32> to vector<128x16xf32>
    %65 = arith.truncf %64 : vector<128x16xf32> to vector<128x16xbf16>
    %c0_22 = arith.constant 0 : index
    %c0_23 = arith.constant 0 : index
    %c0_24 = arith.constant 0 : index
    %66 = vector.load %arg5[%c0_22, %c0_23, %c0_24] : memref<9x16x49xbf16, #tpu.memory_space<vmem>>, vector<1x16x49xbf16>
    %67 = vector.shape_cast %66 : vector<1x16x49xbf16> to vector<16x49xbf16>
    %cst_25 = arith.constant dense<0.000000e+00> : vector<128x49xf32>
    %68 = tpu.matmul %65, %67, %cst_25 {dimension_numbers = #tpu.dot_dimension_numbers<[1], [0], [0], [1], [0, 0, 1, 1], [], []>} : vector<128x16xbf16>, vector<16x49xbf16>, vector<128x49xf32> -> vector<128x49xf32>
    %69 = arith.addf %62, %68 : vector<128x49xf32>
    %c0_26 = arith.constant 0 : index
    %c64 = arith.constant 64 : index
    %c0_27 = arith.constant 0 : index
    %70 = vector.load %arg14[%c0_26, %c64, %c0_27] : memref<2x576x16xf32, #tpu.memory_space<vmem>>, vector<2x64x16xf32>
    %71 = vector.shape_cast %70 : vector<2x64x16xf32> to vector<128x16xf32>
    %72 = arith.truncf %71 : vector<128x16xf32> to vector<128x16xbf16>
    %c1_28 = arith.constant 1 : index
    %c0_29 = arith.constant 0 : index
    %c0_30 = arith.constant 0 : index
    %73 = vector.load %arg5[%c1_28, %c0_29, %c0_30] : memref<9x16x49xbf16, #tpu.memory_space<vmem>>, vector<1x16x49xbf16>
    %74 = vector.shape_cast %73 : vector<1x16x49xbf16> to vector<16x49xbf16>
    %cst_31 = arith.constant dense<0.000000e+00> : vector<128x49xf32>
    %75 = tpu.matmul %72, %74, %cst_31 {dimension_numbers = #tpu.dot_dimension_numbers<[1], [0], [0], [1], [0, 0, 1, 1], [], []>} : vector<128x16xbf16>, vector<16x49xbf16>, vector<128x49xf32> -> vector<128x49xf32>
    %76 = arith.addf %69, %75 : vector<128x49xf32>
    %c0_32 = arith.constant 0 : index
    %c128 = arith.constant 128 : index
    %c0_33 = arith.constant 0 : index
    %77 = vector.load %arg14[%c0_32, %c128, %c0_33] : memref<2x576x16xf32, #tpu.memory_space<vmem>>, vector<2x64x16xf32>
    %78 = vector.shape_cast %77 : vector<2x64x16xf32> to vector<128x16xf32>
    %79 = arith.truncf %78 : vector<128x16xf32> to vector<128x16xbf16>
    %c2 = arith.constant 2 : index
    %c0_34 = arith.constant 0 : index
    %c0_35 = arith.constant 0 : index
    %80 = vector.load %arg5[%c2, %c0_34, %c0_35] : memref<9x16x49xbf16, #tpu.memory_space<vmem>>, vector<1x16x49xbf16>
    %81 = vector.shape_cast %80 : vector<1x16x49xbf16> to vector<16x49xbf16>
    %cst_36 = arith.constant dense<0.000000e+00> : vector<128x49xf32>
    %82 = tpu.matmul %79, %81, %cst_36 {dimension_numbers = #tpu.dot_dimension_numbers<[1], [0], [0], [1], [0, 0, 1, 1], [], []>} : vector<128x16xbf16>, vector<16x49xbf16>, vector<128x49xf32> -> vector<128x49xf32>
    %83 = arith.addf %76, %82 : vector<128x49xf32>
    %c0_37 = arith.constant 0 : index
    %c192 = arith.constant 192 : index
    %c0_38 = arith.constant 0 : index
    %84 = vector.load %arg14[%c0_37, %c192, %c0_38] : memref<2x576x16xf32, #tpu.memory_space<vmem>>, vector<2x64x16xf32>
    %85 = vector.shape_cast %84 : vector<2x64x16xf32> to vector<128x16xf32>
    %86 = arith.truncf %85 : vector<128x16xf32> to vector<128x16xbf16>
    %c3 = arith.constant 3 : index
    %c0_39 = arith.constant 0 : index
    %c0_40 = arith.constant 0 : index
    %87 = vector.load %arg5[%c3, %c0_39, %c0_40] : memref<9x16x49xbf16, #tpu.memory_space<vmem>>, vector<1x16x49xbf16>
    %88 = vector.shape_cast %87 : vector<1x16x49xbf16> to vector<16x49xbf16>
    %cst_41 = arith.constant dense<0.000000e+00> : vector<128x49xf32>
    %89 = tpu.matmul %86, %88, %cst_41 {dimension_numbers = #tpu.dot_dimension_numbers<[1], [0], [0], [1], [0, 0, 1, 1], [], []>} : vector<128x16xbf16>, vector<16x49xbf16>, vector<128x49xf32> -> vector<128x49xf32>
    %90 = arith.addf %83, %89 : vector<128x49xf32>
    %c0_42 = arith.constant 0 : index
    %c256 = arith.constant 256 : index
    %c0_43 = arith.constant 0 : index
    %91 = vector.load %arg14[%c0_42, %c256, %c0_43] : memref<2x576x16xf32, #tpu.memory_space<vmem>>, vector<2x64x16xf32>
    %92 = vector.shape_cast %91 : vector<2x64x16xf32> to vector<128x16xf32>
    %93 = arith.truncf %92 : vector<128x16xf32> to vector<128x16xbf16>
    %c4 = arith.constant 4 : index
    %c0_44 = arith.constant 0 : index
    %c0_45 = arith.constant 0 : index
    %94 = vector.load %arg5[%c4, %c0_44, %c0_45] : memref<9x16x49xbf16, #tpu.memory_space<vmem>>, vector<1x16x49xbf16>
    %95 = vector.shape_cast %94 : vector<1x16x49xbf16> to vector<16x49xbf16>
    %cst_46 = arith.constant dense<0.000000e+00> : vector<128x49xf32>
    %96 = tpu.matmul %93, %95, %cst_46 {dimension_numbers = #tpu.dot_dimension_numbers<[1], [0], [0], [1], [0, 0, 1, 1], [], []>} : vector<128x16xbf16>, vector<16x49xbf16>, vector<128x49xf32> -> vector<128x49xf32>
    %97 = arith.addf %90, %96 : vector<128x49xf32>
    %c0_47 = arith.constant 0 : index
    %c320 = arith.constant 320 : index
    %c0_48 = arith.constant 0 : index
    %98 = vector.load %arg14[%c0_47, %c320, %c0_48] : memref<2x576x16xf32, #tpu.memory_space<vmem>>, vector<2x64x16xf32>
    %99 = vector.shape_cast %98 : vector<2x64x16xf32> to vector<128x16xf32>
    %100 = arith.truncf %99 : vector<128x16xf32> to vector<128x16xbf16>
    %c5 = arith.constant 5 : index
    %c0_49 = arith.constant 0 : index
    %c0_50 = arith.constant 0 : index
    %101 = vector.load %arg5[%c5, %c0_49, %c0_50] : memref<9x16x49xbf16, #tpu.memory_space<vmem>>, vector<1x16x49xbf16>
    %102 = vector.shape_cast %101 : vector<1x16x49xbf16> to vector<16x49xbf16>
    %cst_51 = arith.constant dense<0.000000e+00> : vector<128x49xf32>
    %103 = tpu.matmul %100, %102, %cst_51 {dimension_numbers = #tpu.dot_dimension_numbers<[1], [0], [0], [1], [0, 0, 1, 1], [], []>} : vector<128x16xbf16>, vector<16x49xbf16>, vector<128x49xf32> -> vector<128x49xf32>
    %104 = arith.addf %97, %103 : vector<128x49xf32>
    %c0_52 = arith.constant 0 : index
    %c384 = arith.constant 384 : index
    %c0_53 = arith.constant 0 : index
    %105 = vector.load %arg14[%c0_52, %c384, %c0_53] : memref<2x576x16xf32, #tpu.memory_space<vmem>>, vector<2x64x16xf32>
    %106 = vector.shape_cast %105 : vector<2x64x16xf32> to vector<128x16xf32>
    %107 = arith.truncf %106 : vector<128x16xf32> to vector<128x16xbf16>
    %c6 = arith.constant 6 : index
    %c0_54 = arith.constant 0 : index
    %c0_55 = arith.constant 0 : index
    %108 = vector.load %arg5[%c6, %c0_54, %c0_55] : memref<9x16x49xbf16, #tpu.memory_space<vmem>>, vector<1x16x49xbf16>
    %109 = vector.shape_cast %108 : vector<1x16x49xbf16> to vector<16x49xbf16>
    %cst_56 = arith.constant dense<0.000000e+00> : vector<128x49xf32>
    %110 = tpu.matmul %107, %109, %cst_56 {dimension_numbers = #tpu.dot_dimension_numbers<[1], [0], [0], [1], [0, 0, 1, 1], [], []>} : vector<128x16xbf16>, vector<16x49xbf16>, vector<128x49xf32> -> vector<128x49xf32>
    %111 = arith.addf %104, %110 : vector<128x49xf32>
    %c0_57 = arith.constant 0 : index
    %c448 = arith.constant 448 : index
    %c0_58 = arith.constant 0 : index
    %112 = vector.load %arg14[%c0_57, %c448, %c0_58] : memref<2x576x16xf32, #tpu.memory_space<vmem>>, vector<2x64x16xf32>
    %113 = vector.shape_cast %112 : vector<2x64x16xf32> to vector<128x16xf32>
    %114 = arith.truncf %113 : vector<128x16xf32> to vector<128x16xbf16>
    %c7 = arith.constant 7 : index
    %c0_59 = arith.constant 0 : index
    %c0_60 = arith.constant 0 : index
    %115 = vector.load %arg5[%c7, %c0_59, %c0_60] : memref<9x16x49xbf16, #tpu.memory_space<vmem>>, vector<1x16x49xbf16>
    %116 = vector.shape_cast %115 : vector<1x16x49xbf16> to vector<16x49xbf16>
    %cst_61 = arith.constant dense<0.000000e+00> : vector<128x49xf32>
    %117 = tpu.matmul %114, %116, %cst_61 {dimension_numbers = #tpu.dot_dimension_numbers<[1], [0], [0], [1], [0, 0, 1, 1], [], []>} : vector<128x16xbf16>, vector<16x49xbf16>, vector<128x49xf32> -> vector<128x49xf32>
    %118 = arith.addf %111, %117 : vector<128x49xf32>
    %c0_62 = arith.constant 0 : index
    %c512 = arith.constant 512 : index
    %c0_63 = arith.constant 0 : index
    %119 = vector.load %arg14[%c0_62, %c512, %c0_63] : memref<2x576x16xf32, #tpu.memory_space<vmem>>, vector<2x64x16xf32>
    %120 = vector.shape_cast %119 : vector<2x64x16xf32> to vector<128x16xf32>
    %121 = arith.truncf %120 : vector<128x16xf32> to vector<128x16xbf16>
    %c8 = arith.constant 8 : index
    %c0_64 = arith.constant 0 : index
    %c0_65 = arith.constant 0 : index
    %122 = vector.load %arg5[%c8, %c0_64, %c0_65] : memref<9x16x49xbf16, #tpu.memory_space<vmem>>, vector<1x16x49xbf16>
    %123 = vector.shape_cast %122 : vector<1x16x49xbf16> to vector<16x49xbf16>
    %cst_66 = arith.constant dense<0.000000e+00> : vector<128x49xf32>
    %124 = tpu.matmul %121, %123, %cst_66 {dimension_numbers = #tpu.dot_dimension_numbers<[1], [0], [0], [1], [0, 0, 1, 1], [], []>} : vector<128x16xbf16>, vector<16x49xbf16>, vector<128x49xf32> -> vector<128x49xf32>
    %125 = arith.addf %118, %124 : vector<128x49xf32>
    %c0_67 = arith.constant 0 : index
    %c0_68 = arith.constant 0 : index
    %126 = vector.load %arg6[%c0_67, %c0_68] : memref<64x1xf32, #tpu.memory_space<vmem>>, vector<64x1xf32>
    %127 = tpu.concatenate %126, %126 in 0 : vector<64x1xf32>, vector<64x1xf32> -> vector<128x1xf32>
    %128 = vector.broadcast %127 : vector<128x1xf32> to vector<128x49xf32>
    %129 = arith.addf %125, %128 : vector<128x49xf32>
    %cst_69 = arith.constant 0.000000e+00 : f32
    %130 = vector.broadcast %cst_69 : f32 to vector<128x49xf32>
    %131 = arith.maximumf %129, %130 : vector<128x49xf32>
    %132 = vector.extract_strided_slice %131 {offsets = [0, 0], sizes = [64, 49], strides = [1, 1]} : vector<128x49xf32> to vector<64x49xf32>
    %133 = arith.truncf %132 : vector<64x49xf32> to vector<64x49xbf16>
    %c0_70 = arith.constant 0 : index
    %c0_71 = arith.constant 0 : index
    %134 = vector.load %arg7[%c0_70, %c0_71] : memref<288x64xbf16, #tpu.memory_space<vmem>>, vector<288x64xbf16>
    %cst_72 = arith.constant dense<0.000000e+00> : vector<288x49xf32>
    %135 = tpu.matmul %134, %133, %cst_72 {dimension_numbers = #tpu.dot_dimension_numbers<[1], [0], [0], [1], [0, 0, 1, 1], [], []>} : vector<288x64xbf16>, vector<64x49xbf16>, vector<288x49xf32> -> vector<288x49xf32>
    %c0_73 = arith.constant 0 : index
    %c0_74 = arith.constant 0 : index
    %c0_75 = arith.constant 0 : index
    %136 = vector.load %arg15[%c0_73, %c0_74, %c0_75] : memref<2x288x49xf32, #tpu.memory_space<vmem>>, vector<1x288x49xf32>
    %137 = vector.shape_cast %136 : vector<1x288x49xf32> to vector<288x49xf32>
    %138 = vector.shape_cast %135 : vector<288x49xf32> to vector<1x288x49xf32>
    tpu.vector_store %arg15[%c0_73, %c0_74, %c0_75], %138 {strides = array<i32>} : memref<2x288x49xf32, #tpu.memory_space<vmem>>, vector<1x288x49xf32>,
    %139 = vector.extract_strided_slice %131 {offsets = [64, 0], sizes = [64, 49], strides = [1, 1]} : vector<128x49xf32> to vector<64x49xf32>
    %140 = arith.truncf %139 : vector<64x49xf32> to vector<64x49xbf16>
    %c0_76 = arith.constant 0 : index
    %c0_77 = arith.constant 0 : index
    %141 = vector.load %arg7[%c0_76, %c0_77] : memref<288x64xbf16, #tpu.memory_space<vmem>>, vector<288x64xbf16>
    %cst_78 = arith.constant dense<0.000000e+00> : vector<288x49xf32>
    %142 = tpu.matmul %141, %140, %cst_78 {dimension_numbers = #tpu.dot_dimension_numbers<[1], [0], [0], [1], [0, 0, 1, 1], [], []>} : vector<288x64xbf16>, vector<64x49xbf16>, vector<288x49xf32> -> vector<288x49xf32>
    %c1_79 = arith.constant 1 : index
    %c0_80 = arith.constant 0 : index
    %c0_81 = arith.constant 0 : index
    %143 = vector.load %arg15[%c1_79, %c0_80, %c0_81] : memref<2x288x49xf32, #tpu.memory_space<vmem>>, vector<1x288x49xf32>
    %144 = vector.shape_cast %143 : vector<1x288x49xf32> to vector<288x49xf32>
    %145 = vector.shape_cast %142 : vector<288x49xf32> to vector<1x288x49xf32>
    tpu.vector_store %arg15[%c1_79, %c0_80, %c0_81], %145 {strides = array<i32>} : memref<2x288x49xf32, #tpu.memory_space<vmem>>, vector<1x288x49xf32>,
    %cst_82 = arith.constant 0.000000e+00 : f32
    %146 = vector.broadcast %cst_82 : f32 to vector<64x196xf32>
    %c0_83 = arith.constant 0 : index
    %c0_84 = arith.constant 0 : index
    %c0_85 = arith.constant 0 : index
    %147 = vector.load %arg15[%c0_83, %c0_84, %c0_85] : memref<2x288x49xf32, #tpu.memory_space<vmem>>, vector<2x32x49xf32>
    %148 = vector.shape_cast %147 : vector<2x32x49xf32> to vector<64x49xf32>
    %149 = arith.truncf %148 : vector<64x49xf32> to vector<64x49xbf16>
    %c0_86 = arith.constant 0 : index
    %c0_87 = arith.constant 0 : index
    %c0_88 = arith.constant 0 : index
    %150 = vector.load %arg8[%c0_86, %c0_87, %c0_88] : memref<9x49x196xbf16, #tpu.memory_space<vmem>>, vector<1x49x196xbf16>
    %151 = vector.shape_cast %150 : vector<1x49x196xbf16> to vector<49x196xbf16>
    %cst_89 = arith.constant dense<0.000000e+00> : vector<64x196xf32>
    %152 = tpu.matmul %149, %151, %cst_89 {dimension_numbers = #tpu.dot_dimension_numbers<[1], [0], [0], [1], [0, 0, 1, 1], [], []>} : vector<64x49xbf16>, vector<49x196xbf16>, vector<64x196xf32> -> vector<64x196xf32>
    %153 = arith.addf %146, %152 : vector<64x196xf32>
    %c0_90 = arith.constant 0 : index
    %c32 = arith.constant 32 : index
    %c0_91 = arith.constant 0 : index
    %154 = vector.load %arg15[%c0_90, %c32, %c0_91] : memref<2x288x49xf32, #tpu.memory_space<vmem>>, vector<2x32x49xf32>
    %155 = vector.shape_cast %154 : vector<2x32x49xf32> to vector<64x49xf32>
    %156 = arith.truncf %155 : vector<64x49xf32> to vector<64x49xbf16>
    %c1_92 = arith.constant 1 : index
    %c0_93 = arith.constant 0 : index
    %c0_94 = arith.constant 0 : index
    %157 = vector.load %arg8[%c1_92, %c0_93, %c0_94] : memref<9x49x196xbf16, #tpu.memory_space<vmem>>, vector<1x49x196xbf16>
    %158 = vector.shape_cast %157 : vector<1x49x196xbf16> to vector<49x196xbf16>
    %cst_95 = arith.constant dense<0.000000e+00> : vector<64x196xf32>
    %159 = tpu.matmul %156, %158, %cst_95 {dimension_numbers = #tpu.dot_dimension_numbers<[1], [0], [0], [1], [0, 0, 1, 1], [], []>} : vector<64x49xbf16>, vector<49x196xbf16>, vector<64x196xf32> -> vector<64x196xf32>
    %160 = arith.addf %153, %159 : vector<64x196xf32>
    %c0_96 = arith.constant 0 : index
    %c64_97 = arith.constant 64 : index
    %c0_98 = arith.constant 0 : index
    %161 = vector.load %arg15[%c0_96, %c64_97, %c0_98] : memref<2x288x49xf32, #tpu.memory_space<vmem>>, vector<2x32x49xf32>
    %162 = vector.shape_cast %161 : vector<2x32x49xf32> to vector<64x49xf32>
    %163 = arith.truncf %162 : vector<64x49xf32> to vector<64x49xbf16>
    %c2_99 = arith.constant 2 : index
    %c0_100 = arith.constant 0 : index
    %c0_101 = arith.constant 0 : index
    %164 = vector.load %arg8[%c2_99, %c0_100, %c0_101] : memref<9x49x196xbf16, #tpu.memory_space<vmem>>, vector<1x49x196xbf16>
    %165 = vector.shape_cast %164 : vector<1x49x196xbf16> to vector<49x196xbf16>
    %cst_102 = arith.constant dense<0.000000e+00> : vector<64x196xf32>
    %166 = tpu.matmul %163, %165, %cst_102 {dimension_numbers = #tpu.dot_dimension_numbers<[1], [0], [0], [1], [0, 0, 1, 1], [], []>} : vector<64x49xbf16>, vector<49x196xbf16>, vector<64x196xf32> -> vector<64x196xf32>
    %167 = arith.addf %160, %166 : vector<64x196xf32>
    %c0_103 = arith.constant 0 : index
    %c96 = arith.constant 96 : index
    %c0_104 = arith.constant 0 : index
    %168 = vector.load %arg15[%c0_103, %c96, %c0_104] : memref<2x288x49xf32, #tpu.memory_space<vmem>>, vector<2x32x49xf32>
    %169 = vector.shape_cast %168 : vector<2x32x49xf32> to vector<64x49xf32>
    %170 = arith.truncf %169 : vector<64x49xf32> to vector<64x49xbf16>
    %c3_105 = arith.constant 3 : index
    %c0_106 = arith.constant 0 : index
    %c0_107 = arith.constant 0 : index
    %171 = vector.load %arg8[%c3_105, %c0_106, %c0_107] : memref<9x49x196xbf16, #tpu.memory_space<vmem>>, vector<1x49x196xbf16>
    %172 = vector.shape_cast %171 : vector<1x49x196xbf16> to vector<49x196xbf16>
    %cst_108 = arith.constant dense<0.000000e+00> : vector<64x196xf32>
    %173 = tpu.matmul %170, %172, %cst_108 {dimension_numbers = #tpu.dot_dimension_numbers<[1], [0], [0], [1], [0, 0, 1, 1], [], []>} : vector<64x49xbf16>, vector<49x196xbf16>, vector<64x196xf32> -> vector<64x196xf32>
    %174 = arith.addf %167, %173 : vector<64x196xf32>
    %c0_109 = arith.constant 0 : index
    %c128_110 = arith.constant 128 : index
    %c0_111 = arith.constant 0 : index
    %175 = vector.load %arg15[%c0_109, %c128_110, %c0_111] : memref<2x288x49xf32, #tpu.memory_space<vmem>>, vector<2x32x49xf32>
    %176 = vector.shape_cast %175 : vector<2x32x49xf32> to vector<64x49xf32>
    %177 = arith.truncf %176 : vector<64x49xf32> to vector<64x49xbf16>
    %c4_112 = arith.constant 4 : index
    %c0_113 = arith.constant 0 : index
    %c0_114 = arith.constant 0 : index
    %178 = vector.load %arg8[%c4_112, %c0_113, %c0_114] : memref<9x49x196xbf16, #tpu.memory_space<vmem>>, vector<1x49x196xbf16>
    %179 = vector.shape_cast %178 : vector<1x49x196xbf16> to vector<49x196xbf16>
    %cst_115 = arith.constant dense<0.000000e+00> : vector<64x196xf32>
    %180 = tpu.matmul %177, %179, %cst_115 {dimension_numbers = #tpu.dot_dimension_numbers<[1], [0], [0], [1], [0, 0, 1, 1], [], []>} : vector<64x49xbf16>, vector<49x196xbf16>, vector<64x196xf32> -> vector<64x196xf32>
    %181 = arith.addf %174, %180 : vector<64x196xf32>
    %c0_116 = arith.constant 0 : index
    %c160 = arith.constant 160 : index
    %c0_117 = arith.constant 0 : index
    %182 = vector.load %arg15[%c0_116, %c160, %c0_117] : memref<2x288x49xf32, #tpu.memory_space<vmem>>, vector<2x32x49xf32>
    %183 = vector.shape_cast %182 : vector<2x32x49xf32> to vector<64x49xf32>
    %184 = arith.truncf %183 : vector<64x49xf32> to vector<64x49xbf16>
    %c5_118 = arith.constant 5 : index
    %c0_119 = arith.constant 0 : index
    %c0_120 = arith.constant 0 : index
    %185 = vector.load %arg8[%c5_118, %c0_119, %c0_120] : memref<9x49x196xbf16, #tpu.memory_space<vmem>>, vector<1x49x196xbf16>
    %186 = vector.shape_cast %185 : vector<1x49x196xbf16> to vector<49x196xbf16>
    %cst_121 = arith.constant dense<0.000000e+00> : vector<64x196xf32>
    %187 = tpu.matmul %184, %186, %cst_121 {dimension_numbers = #tpu.dot_dimension_numbers<[1], [0], [0], [1], [0, 0, 1, 1], [], []>} : vector<64x49xbf16>, vector<49x196xbf16>, vector<64x196xf32> -> vector<64x196xf32>
    %188 = arith.addf %181, %187 : vector<64x196xf32>
    %c0_122 = arith.constant 0 : index
    %c192_123 = arith.constant 192 : index
    %c0_124 = arith.constant 0 : index
    %189 = vector.load %arg15[%c0_122, %c192_123, %c0_124] : memref<2x288x49xf32, #tpu.memory_space<vmem>>, vector<2x32x49xf32>
    %190 = vector.shape_cast %189 : vector<2x32x49xf32> to vector<64x49xf32>
    %191 = arith.truncf %190 : vector<64x49xf32> to vector<64x49xbf16>
    %c6_125 = arith.constant 6 : index
    %c0_126 = arith.constant 0 : index
    %c0_127 = arith.constant 0 : index
    %192 = vector.load %arg8[%c6_125, %c0_126, %c0_127] : memref<9x49x196xbf16, #tpu.memory_space<vmem>>, vector<1x49x196xbf16>
    %193 = vector.shape_cast %192 : vector<1x49x196xbf16> to vector<49x196xbf16>
    %cst_128 = arith.constant dense<0.000000e+00> : vector<64x196xf32>
    %194 = tpu.matmul %191, %193, %cst_128 {dimension_numbers = #tpu.dot_dimension_numbers<[1], [0], [0], [1], [0, 0, 1, 1], [], []>} : vector<64x49xbf16>, vector<49x196xbf16>, vector<64x196xf32> -> vector<64x196xf32>
    %195 = arith.addf %188, %194 : vector<64x196xf32>
    %c0_129 = arith.constant 0 : index
    %c224 = arith.constant 224 : index
    %c0_130 = arith.constant 0 : index
    %196 = vector.load %arg15[%c0_129, %c224, %c0_130] : memref<2x288x49xf32, #tpu.memory_space<vmem>>, vector<2x32x49xf32>
    %197 = vector.shape_cast %196 : vector<2x32x49xf32> to vector<64x49xf32>
    %198 = arith.truncf %197 : vector<64x49xf32> to vector<64x49xbf16>
    %c7_131 = arith.constant 7 : index
    %c0_132 = arith.constant 0 : index
    %c0_133 = arith.constant 0 : index
    %199 = vector.load %arg8[%c7_131, %c0_132, %c0_133] : memref<9x49x196xbf16, #tpu.memory_space<vmem>>, vector<1x49x196xbf16>
    %200 = vector.shape_cast %199 : vector<1x49x196xbf16> to vector<49x196xbf16>
    %cst_134 = arith.constant dense<0.000000e+00> : vector<64x196xf32>
    %201 = tpu.matmul %198, %200, %cst_134 {dimension_numbers = #tpu.dot_dimension_numbers<[1], [0], [0], [1], [0, 0, 1, 1], [], []>} : vector<64x49xbf16>, vector<49x196xbf16>, vector<64x196xf32> -> vector<64x196xf32>
    %202 = arith.addf %195, %201 : vector<64x196xf32>
    %c0_135 = arith.constant 0 : index
    %c256_136 = arith.constant 256 : index
    %c0_137 = arith.constant 0 : index
    %203 = vector.load %arg15[%c0_135, %c256_136, %c0_137] : memref<2x288x49xf32, #tpu.memory_space<vmem>>, vector<2x32x49xf32>
    %204 = vector.shape_cast %203 : vector<2x32x49xf32> to vector<64x49xf32>
    %205 = arith.truncf %204 : vector<64x49xf32> to vector<64x49xbf16>
    %c8_138 = arith.constant 8 : index
    %c0_139 = arith.constant 0 : index
    %c0_140 = arith.constant 0 : index
    %206 = vector.load %arg8[%c8_138, %c0_139, %c0_140] : memref<9x49x196xbf16, #tpu.memory_space<vmem>>, vector<1x49x196xbf16>
    %207 = vector.shape_cast %206 : vector<1x49x196xbf16> to vector<49x196xbf16>
    %cst_141 = arith.constant dense<0.000000e+00> : vector<64x196xf32>
    %208 = tpu.matmul %205, %207, %cst_141 {dimension_numbers = #tpu.dot_dimension_numbers<[1], [0], [0], [1], [0, 0, 1, 1], [], []>} : vector<64x49xbf16>, vector<49x196xbf16>, vector<64x196xf32> -> vector<64x196xf32>
    %209 = arith.addf %202, %208 : vector<64x196xf32>
    %c0_142 = arith.constant 0 : index
    %c0_143 = arith.constant 0 : index
    %210 = vector.load %arg9[%c0_142, %c0_143] : memref<32x1xf32, #tpu.memory_space<vmem>>, vector<32x1xf32>
    %211 = tpu.concatenate %210, %210 in 0 : vector<32x1xf32>, vector<32x1xf32> -> vector<64x1xf32>
    %212 = vector.broadcast %211 : vector<64x1xf32> to vector<64x196xf32>
    %213 = arith.addf %209, %212 : vector<64x196xf32>
    %cst_144 = arith.constant 0.000000e+00 : f32
    %214 = vector.broadcast %cst_144 : f32 to vector<64x196xf32>
    %215 = arith.maximumf %213, %214 : vector<64x196xf32>
    %216 = vector.extract_strided_slice %215 {offsets = [0, 0], sizes = [32, 196], strides = [1, 1]} : vector<64x196xf32> to vector<32x196xf32>
    %217 = arith.truncf %216 : vector<32x196xf32> to vector<32x196xbf16>
    %c0_145 = arith.constant 0 : index
    %c0_146 = arith.constant 0 : index
    %218 = vector.load %arg10[%c0_145, %c0_146] : memref<72x32xbf16, #tpu.memory_space<vmem>>, vector<72x32xbf16>
    %cst_147 = arith.constant dense<0.000000e+00> : vector<72x196xf32>
    %219 = tpu.matmul %218, %217, %cst_147 {dimension_numbers = #tpu.dot_dimension_numbers<[1], [0], [0], [1], [0, 0, 1, 1], [], []>} : vector<72x32xbf16>, vector<32x196xbf16>, vector<72x196xf32> -> vector<72x196xf32>
    %c0_148 = arith.constant 0 : index
    %c0_149 = arith.constant 0 : index
    %c0_150 = arith.constant 0 : index
    %220 = vector.load %arg16[%c0_148, %c0_149, %c0_150] : memref<2x72x196xf32, #tpu.memory_space<vmem>>, vector<1x72x196xf32>
    %221 = vector.shape_cast %220 : vector<1x72x196xf32> to vector<72x196xf32>
    %222 = vector.shape_cast %219 : vector<72x196xf32> to vector<1x72x196xf32>
    tpu.vector_store %arg16[%c0_148, %c0_149, %c0_150], %222 {strides = array<i32>} : memref<2x72x196xf32, #tpu.memory_space<vmem>>, vector<1x72x196xf32>,
    %223 = vector.extract_strided_slice %215 {offsets = [32, 0], sizes = [32, 196], strides = [1, 1]} : vector<64x196xf32> to vector<32x196xf32>
    %224 = arith.truncf %223 : vector<32x196xf32> to vector<32x196xbf16>
    %c0_151 = arith.constant 0 : index
    %c0_152 = arith.constant 0 : index
    %225 = vector.load %arg10[%c0_151, %c0_152] : memref<72x32xbf16, #tpu.memory_space<vmem>>, vector<72x32xbf16>
    %cst_153 = arith.constant dense<0.000000e+00> : vector<72x196xf32>
    %226 = tpu.matmul %225, %224, %cst_153 {dimension_numbers = #tpu.dot_dimension_numbers<[1], [0], [0], [1], [0, 0, 1, 1], [], []>} : vector<72x32xbf16>, vector<32x196xbf16>, vector<72x196xf32> -> vector<72x196xf32>
    %c1_154 = arith.constant 1 : index
    %c0_155 = arith.constant 0 : index
    %c0_156 = arith.constant 0 : index
    %227 = vector.load %arg16[%c1_154, %c0_155, %c0_156] : memref<2x72x196xf32, #tpu.memory_space<vmem>>, vector<1x72x196xf32>
    %228 = vector.shape_cast %227 : vector<1x72x196xf32> to vector<72x196xf32>
    %229 = vector.shape_cast %226 : vector<72x196xf32> to vector<1x72x196xf32>
    tpu.vector_store %arg16[%c1_154, %c0_155, %c0_156], %229 {strides = array<i32>} : memref<2x72x196xf32, #tpu.memory_space<vmem>>, vector<1x72x196xf32>,
    %230 = arith.extui %0 : i1 to i32
    %c0_i32_157 = arith.constant 0 : i32
    %231 = arith.cmpi ne, %230, %c0_i32_157 : i32
    scf.if %231 {
      tpu.wait_dma2 semaphore(%arg18 : memref<!tpu.dma_semaphore, #tpu.memory_space<semaphore_mem>>) src(%arg12 : memref<9x196x784xbf16, #tpu.memory_space<any>>) dst(%arg17 : memref<9x196x784xbf16, #tpu.memory_space<vmem>>)
    } else {
    }
    %cst_158 = arith.constant 0.000000e+00 : f32
    %232 = vector.broadcast %cst_158 : f32 to vector<16x784xf32>
    %c0_159 = arith.constant 0 : index
    %c0_160 = arith.constant 0 : index
    %c0_161 = arith.constant 0 : index
    %233 = vector.load %arg16[%c0_159, %c0_160, %c0_161] : memref<2x72x196xf32, #tpu.memory_space<vmem>>, vector<2x8x196xf32>
    %234 = vector.shape_cast %233 : vector<2x8x196xf32> to vector<16x196xf32>
    %235 = arith.truncf %234 : vector<16x196xf32> to vector<16x196xbf16>
    %c0_162 = arith.constant 0 : index
    %c0_163 = arith.constant 0 : index
    %c0_164 = arith.constant 0 : index
    %236 = vector.load %arg17[%c0_162, %c0_163, %c0_164] : memref<9x196x784xbf16, #tpu.memory_space<vmem>>, vector<1x196x784xbf16>
    %237 = vector.shape_cast %236 : vector<1x196x784xbf16> to vector<196x784xbf16>
    %cst_165 = arith.constant dense<0.000000e+00> : vector<16x784xf32>
    %238 = tpu.matmul %235, %237, %cst_165 {dimension_numbers = #tpu.dot_dimension_numbers<[1], [0], [0], [1], [0, 0, 1, 1], [], []>} : vector<16x196xbf16>, vector<196x784xbf16>, vector<16x784xf32> -> vector<16x784xf32>
    %239 = arith.addf %232, %238 : vector<16x784xf32>
    %c0_166 = arith.constant 0 : index
    %c8_167 = arith.constant 8 : index
    %c0_168 = arith.constant 0 : index
    %240 = vector.load %arg16[%c0_166, %c8_167, %c0_168] : memref<2x72x196xf32, #tpu.memory_space<vmem>>, vector<2x8x196xf32>
    %241 = vector.shape_cast %240 : vector<2x8x196xf32> to vector<16x196xf32>
    %242 = arith.truncf %241 : vector<16x196xf32> to vector<16x196xbf16>
    %c1_169 = arith.constant 1 : index
    %c0_170 = arith.constant 0 : index
    %c0_171 = arith.constant 0 : index
    %243 = vector.load %arg17[%c1_169, %c0_170, %c0_171] : memref<9x196x784xbf16, #tpu.memory_space<vmem>>, vector<1x196x784xbf16>
    %244 = vector.shape_cast %243 : vector<1x196x784xbf16> to vector<196x784xbf16>
    %cst_172 = arith.constant dense<0.000000e+00> : vector<16x784xf32>
    %245 = tpu.matmul %242, %244, %cst_172 {dimension_numbers = #tpu.dot_dimension_numbers<[1], [0], [0], [1], [0, 0, 1, 1], [], []>} : vector<16x196xbf16>, vector<196x784xbf16>, vector<16x784xf32> -> vector<16x784xf32>
    %246 = arith.addf %239, %245 : vector<16x784xf32>
    %c0_173 = arith.constant 0 : index
    %c16 = arith.constant 16 : index
    %c0_174 = arith.constant 0 : index
    %247 = vector.load %arg16[%c0_173, %c16, %c0_174] : memref<2x72x196xf32, #tpu.memory_space<vmem>>, vector<2x8x196xf32>
    %248 = vector.shape_cast %247 : vector<2x8x196xf32> to vector<16x196xf32>
    %249 = arith.truncf %248 : vector<16x196xf32> to vector<16x196xbf16>
    %c2_175 = arith.constant 2 : index
    %c0_176 = arith.constant 0 : index
    %c0_177 = arith.constant 0 : index
    %250 = vector.load %arg17[%c2_175, %c0_176, %c0_177] : memref<9x196x784xbf16, #tpu.memory_space<vmem>>, vector<1x196x784xbf16>
    %251 = vector.shape_cast %250 : vector<1x196x784xbf16> to vector<196x784xbf16>
    %cst_178 = arith.constant dense<0.000000e+00> : vector<16x784xf32>
    %252 = tpu.matmul %249, %251, %cst_178 {dimension_numbers = #tpu.dot_dimension_numbers<[1], [0], [0], [1], [0, 0, 1, 1], [], []>} : vector<16x196xbf16>, vector<196x784xbf16>, vector<16x784xf32> -> vector<16x784xf32>
    %253 = arith.addf %246, %252 : vector<16x784xf32>
    %c0_179 = arith.constant 0 : index
    %c24 = arith.constant 24 : index
    %c0_180 = arith.constant 0 : index
    %254 = vector.load %arg16[%c0_179, %c24, %c0_180] : memref<2x72x196xf32, #tpu.memory_space<vmem>>, vector<2x8x196xf32>
    %255 = vector.shape_cast %254 : vector<2x8x196xf32> to vector<16x196xf32>
    %256 = arith.truncf %255 : vector<16x196xf32> to vector<16x196xbf16>
    %c3_181 = arith.constant 3 : index
    %c0_182 = arith.constant 0 : index
    %c0_183 = arith.constant 0 : index
    %257 = vector.load %arg17[%c3_181, %c0_182, %c0_183] : memref<9x196x784xbf16, #tpu.memory_space<vmem>>, vector<1x196x784xbf16>
    %258 = vector.shape_cast %257 : vector<1x196x784xbf16> to vector<196x784xbf16>
    %cst_184 = arith.constant dense<0.000000e+00> : vector<16x784xf32>
    %259 = tpu.matmul %256, %258, %cst_184 {dimension_numbers = #tpu.dot_dimension_numbers<[1], [0], [0], [1], [0, 0, 1, 1], [], []>} : vector<16x196xbf16>, vector<196x784xbf16>, vector<16x784xf32> -> vector<16x784xf32>
    %260 = arith.addf %253, %259 : vector<16x784xf32>
    %c0_185 = arith.constant 0 : index
    %c32_186 = arith.constant 32 : index
    %c0_187 = arith.constant 0 : index
    %261 = vector.load %arg16[%c0_185, %c32_186, %c0_187] : memref<2x72x196xf32, #tpu.memory_space<vmem>>, vector<2x8x196xf32>
    %262 = vector.shape_cast %261 : vector<2x8x196xf32> to vector<16x196xf32>
    %263 = arith.truncf %262 : vector<16x196xf32> to vector<16x196xbf16>
    %c4_188 = arith.constant 4 : index
    %c0_189 = arith.constant 0 : index
    %c0_190 = arith.constant 0 : index
    %264 = vector.load %arg17[%c4_188, %c0_189, %c0_190] : memref<9x196x784xbf16, #tpu.memory_space<vmem>>, vector<1x196x784xbf16>
    %265 = vector.shape_cast %264 : vector<1x196x784xbf16> to vector<196x784xbf16>
    %cst_191 = arith.constant dense<0.000000e+00> : vector<16x784xf32>
    %266 = tpu.matmul %263, %265, %cst_191 {dimension_numbers = #tpu.dot_dimension_numbers<[1], [0], [0], [1], [0, 0, 1, 1], [], []>} : vector<16x196xbf16>, vector<196x784xbf16>, vector<16x784xf32> -> vector<16x784xf32>
    %267 = arith.addf %260, %266 : vector<16x784xf32>
    %c0_192 = arith.constant 0 : index
    %c40 = arith.constant 40 : index
    %c0_193 = arith.constant 0 : index
    %268 = vector.load %arg16[%c0_192, %c40, %c0_193] : memref<2x72x196xf32, #tpu.memory_space<vmem>>, vector<2x8x196xf32>
    %269 = vector.shape_cast %268 : vector<2x8x196xf32> to vector<16x196xf32>
    %270 = arith.truncf %269 : vector<16x196xf32> to vector<16x196xbf16>
    %c5_194 = arith.constant 5 : index
    %c0_195 = arith.constant 0 : index
    %c0_196 = arith.constant 0 : index
    %271 = vector.load %arg17[%c5_194, %c0_195, %c0_196] : memref<9x196x784xbf16, #tpu.memory_space<vmem>>, vector<1x196x784xbf16>
    %272 = vector.shape_cast %271 : vector<1x196x784xbf16> to vector<196x784xbf16>
    %cst_197 = arith.constant dense<0.000000e+00> : vector<16x784xf32>
    %273 = tpu.matmul %270, %272, %cst_197 {dimension_numbers = #tpu.dot_dimension_numbers<[1], [0], [0], [1], [0, 0, 1, 1], [], []>} : vector<16x196xbf16>, vector<196x784xbf16>, vector<16x784xf32> -> vector<16x784xf32>
    %274 = arith.addf %267, %273 : vector<16x784xf32>
    %c0_198 = arith.constant 0 : index
    %c48 = arith.constant 48 : index
    %c0_199 = arith.constant 0 : index
    %275 = vector.load %arg16[%c0_198, %c48, %c0_199] : memref<2x72x196xf32, #tpu.memory_space<vmem>>, vector<2x8x196xf32>
    %276 = vector.shape_cast %275 : vector<2x8x196xf32> to vector<16x196xf32>
    %277 = arith.truncf %276 : vector<16x196xf32> to vector<16x196xbf16>
    %c6_200 = arith.constant 6 : index
    %c0_201 = arith.constant 0 : index
    %c0_202 = arith.constant 0 : index
    %278 = vector.load %arg17[%c6_200, %c0_201, %c0_202] : memref<9x196x784xbf16, #tpu.memory_space<vmem>>, vector<1x196x784xbf16>
    %279 = vector.shape_cast %278 : vector<1x196x784xbf16> to vector<196x784xbf16>
    %cst_203 = arith.constant dense<0.000000e+00> : vector<16x784xf32>
    %280 = tpu.matmul %277, %279, %cst_203 {dimension_numbers = #tpu.dot_dimension_numbers<[1], [0], [0], [1], [0, 0, 1, 1], [], []>} : vector<16x196xbf16>, vector<196x784xbf16>, vector<16x784xf32> -> vector<16x784xf32>
    %281 = arith.addf %274, %280 : vector<16x784xf32>
    %c0_204 = arith.constant 0 : index
    %c56 = arith.constant 56 : index
    %c0_205 = arith.constant 0 : index
    %282 = vector.load %arg16[%c0_204, %c56, %c0_205] : memref<2x72x196xf32, #tpu.memory_space<vmem>>, vector<2x8x196xf32>
    %283 = vector.shape_cast %282 : vector<2x8x196xf32> to vector<16x196xf32>
    %284 = arith.truncf %283 : vector<16x196xf32> to vector<16x196xbf16>
    %c7_206 = arith.constant 7 : index
    %c0_207 = arith.constant 0 : index
    %c0_208 = arith.constant 0 : index
    %285 = vector.load %arg17[%c7_206, %c0_207, %c0_208] : memref<9x196x784xbf16, #tpu.memory_space<vmem>>, vector<1x196x784xbf16>
    %286 = vector.shape_cast %285 : vector<1x196x784xbf16> to vector<196x784xbf16>
    %cst_209 = arith.constant dense<0.000000e+00> : vector<16x784xf32>
    %287 = tpu.matmul %284, %286, %cst_209 {dimension_numbers = #tpu.dot_dimension_numbers<[1], [0], [0], [1], [0, 0, 1, 1], [], []>} : vector<16x196xbf16>, vector<196x784xbf16>, vector<16x784xf32> -> vector<16x784xf32>
    %288 = arith.addf %281, %287 : vector<16x784xf32>
    %c0_210 = arith.constant 0 : index
    %c64_211 = arith.constant 64 : index
    %c0_212 = arith.constant 0 : index
    %289 = vector.load %arg16[%c0_210, %c64_211, %c0_212] : memref<2x72x196xf32, #tpu.memory_space<vmem>>, vector<2x8x196xf32>
    %290 = vector.shape_cast %289 : vector<2x8x196xf32> to vector<16x196xf32>
    %291 = arith.truncf %290 : vector<16x196xf32> to vector<16x196xbf16>
    %c8_213 = arith.constant 8 : index
    %c0_214 = arith.constant 0 : index
    %c0_215 = arith.constant 0 : index
    %292 = vector.load %arg17[%c8_213, %c0_214, %c0_215] : memref<9x196x784xbf16, #tpu.memory_space<vmem>>, vector<1x196x784xbf16>
    %293 = vector.shape_cast %292 : vector<1x196x784xbf16> to vector<196x784xbf16>
    %cst_216 = arith.constant dense<0.000000e+00> : vector<16x784xf32>
    %294 = tpu.matmul %291, %293, %cst_216 {dimension_numbers = #tpu.dot_dimension_numbers<[1], [0], [0], [1], [0, 0, 1, 1], [], []>} : vector<16x196xbf16>, vector<196x784xbf16>, vector<16x784xf32> -> vector<16x784xf32>
    %295 = arith.addf %288, %294 : vector<16x784xf32>
    %c0_217 = arith.constant 0 : index
    %c0_218 = arith.constant 0 : index
    %296 = vector.load %arg11[%c0_217, %c0_218] : memref<8x1xf32, #tpu.memory_space<vmem>>, vector<8x1xf32>
    %297 = tpu.concatenate %296, %296 in 0 : vector<8x1xf32>, vector<8x1xf32> -> vector<16x1xf32>
    %298 = vector.broadcast %297 : vector<16x1xf32> to vector<16x784xf32>
    %299 = arith.addf %295, %298 : vector<16x784xf32>
    %300 = vector.extract_strided_slice %299 {offsets = [0, 0], sizes = [3, 784], strides = [1, 1]} : vector<16x784xf32> to vector<3x784xf32>
    %301 = vector.extract_strided_slice %299 {offsets = [8, 0], sizes = [3, 784], strides = [1, 1]} : vector<16x784xf32> to vector<3x784xf32>
    %302 = tpu.concatenate %300, %301 in 0 : vector<3x784xf32>, vector<3x784xf32> -> vector<6x784xf32>
    %c0_219 = arith.constant 0 : index
    %c0_220 = arith.constant 0 : index
    %303 = vector.load %arg13[%c0_219, %c0_220] : memref<6x784xf32, #tpu.memory_space<vmem>>, vector<6x784xf32>
    tpu.vector_store %arg13[%c0_219, %c0_220], %302 {strides = array<i32>} : memref<6x784xf32, #tpu.memory_space<vmem>>, vector<6x784xf32>,
    return
  }
  func.func @transform_0(%arg0: i32) -> (i32, i32) {
    %c0_i32 = arith.constant 0 : i32
    %c0_i32_0 = arith.constant 0 : i32
    return %arg0, %c0_i32 : i32, i32
  }
  func.func @transform_1(%arg0: i32) -> (i32, i32) {
    %c0_i32 = arith.constant 0 : i32
    %c0_i32_0 = arith.constant 0 : i32
    %c0_i32_1 = arith.constant 0 : i32
    return %c0_i32, %c0_i32_0 : i32, i32
  }
  func.func @transform_2(%arg0: i32) -> (i32, i32) {
    %c0_i32 = arith.constant 0 : i32
    %c0_i32_0 = arith.constant 0 : i32
    %c0_i32_1 = arith.constant 0 : i32
    return %c0_i32, %c0_i32_0 : i32, i32
  }
  func.func @transform_3(%arg0: i32) -> (i32, i32) {
    %c0_i32 = arith.constant 0 : i32
    %c0_i32_0 = arith.constant 0 : i32
    %c0_i32_1 = arith.constant 0 : i32
    return %c0_i32, %c0_i32_0 : i32, i32
  }
  func.func @transform_4(%arg0: i32) -> (i32, i32, i32) {
    %c0_i32 = arith.constant 0 : i32
    %c0_i32_0 = arith.constant 0 : i32
    %c0_i32_1 = arith.constant 0 : i32
    %c0_i32_2 = arith.constant 0 : i32
    return %c0_i32, %c0_i32_0, %c0_i32_1 : i32, i32, i32
  }
  func.func @transform_5(%arg0: i32) -> (i32, i32) {
    %c0_i32 = arith.constant 0 : i32
    %c0_i32_0 = arith.constant 0 : i32
    %c0_i32_1 = arith.constant 0 : i32
    return %c0_i32, %c0_i32_0 : i32, i32
  }
  func.func @transform_6(%arg0: i32) -> (i32, i32) {
    %c0_i32 = arith.constant 0 : i32
    %c0_i32_0 = arith.constant 0 : i32
    %c0_i32_1 = arith.constant 0 : i32
    return %c0_i32, %c0_i32_0 : i32, i32
  }
  func.func @transform_7(%arg0: i32) -> (i32, i32, i32) {
    %c0_i32 = arith.constant 0 : i32
    %c0_i32_0 = arith.constant 0 : i32
    %c0_i32_1 = arith.constant 0 : i32
    %c0_i32_2 = arith.constant 0 : i32
    return %c0_i32, %c0_i32_0, %c0_i32_1 : i32, i32, i32
  }
  func.func @transform_8(%arg0: i32) -> (i32, i32) {
    %c0_i32 = arith.constant 0 : i32
    %c0_i32_0 = arith.constant 0 : i32
    %c0_i32_1 = arith.constant 0 : i32
    return %c0_i32, %c0_i32_0 : i32, i32
  }
  func.func @transform_9(%arg0: i32) -> (i32, i32) {
    %c0_i32 = arith.constant 0 : i32
    %c0_i32_0 = arith.constant 0 : i32
    %c0_i32_1 = arith.constant 0 : i32
    return %c0_i32, %c0_i32_0 : i32, i32
  }
  func.func @transform_10(%arg0: i32) -> (i32, i32) {
    %c0_i32 = arith.constant 0 : i32
    %c0_i32_0 = arith.constant 0 : i32
    %c0_i32_1 = arith.constant 0 : i32
    return %c0_i32, %c0_i32_0 : i32, i32
  }
  func.func @transform_12(%arg0: i32) -> (i32, i32) {
    %c0_i32 = arith.constant 0 : i32
    %c0_i32_0 = arith.constant 0 : i32
    return %arg0, %c0_i32 : i32, i32
  }
}

</mosaic_0001>

<llo_original>
// kernel: decoder_img_forward.1
$region0: #{decoder_img_forward.1}
  #allocation0 [shape = 'u32[]', space=smem, size = 0x4, offset = 0x4, fixed_abs, tag = 'smem constant byte address 0x4 - core index']
  #allocation1 [shape = 'u32[72,128]{1,0:T(1,128)}', space=vmem, size = 0x9000, scoped, tag = 'internal scratch']
  #allocation2 [shape = 'f32[2,576,16]{2,1,0:T(8,128)}', space=vmem, size = 0x90000, scoped, tag = 'scratch operand']
  #allocation3 [shape = 'f32[2,288,49]{2,1,0:T(8,128)}', space=vmem, size = 0x48000, scoped, tag = 'scratch operand']
  #allocation4 [shape = 'f32[2,72,196]{2,1,0:T(8,128)}', space=vmem, size = 0x24000, scoped, tag = 'scratch operand']
  #allocation5 [shape = 'bf16[9,196,784]{2,1,0:T(8,128)(2,1)}', space=vmem, size = 0x313800, scoped, tag = 'scratch operand']
  #allocation6 [shape = 's32[1]{0}', space=sflag, size = 0x4, scoped, tag = 'scratch operand']
  #allocation15 [shape = 's32[]', space=sflag, size = 0x4, offset = 0, fixed_abs, tag = 'sflag constant byte address 0x0 - dummy sync flag']
  #allocation16 [shape = 's32[]', space=sflag, size = 0x4, offset = 0, fixed_abs, tag = 'sflag constant byte address 0x0 - dummy sync flag']
  #allocation17 [shape = 'u32[]', space=smem, size = 0x4, offset = 0x44, fixed_abs, tag = 'smem constant byte address 0x44 - assertion arg 0']
  #allocation18 [shape = 'u32[]', space=smem, size = 0x4, offset = 0x48, fixed_abs, tag = 'smem constant byte address 0x48 - assertion arg 1']
  %s0 = inlined_call_operand.vmem [shape: f32[2,10], index: 0, kind: input, shape index: {}]
  %s1 = inlined_call_operand.hbm [shape: bf16[10,2048], index: 1, kind: input, shape index: {}]
  %s2 = inlined_call_operand.hbm [shape: f32[1,2048], index: 2, kind: input, shape index: {}]
  %s3 = inlined_call_operand.hbm [shape: bf16[576,128], index: 3, kind: input, shape index: {}]
  %s4 = inlined_call_operand.hbm [shape: bf16[9,16,49], index: 4, kind: input, shape index: {}]
  %s5 = inlined_call_operand.vmem [shape: f32[64,1], index: 5, kind: input, shape index: {}]
  %s6 = inlined_call_operand.vmem [shape: bf16[288,64], index: 6, kind: input, shape index: {}]
  %s7 = inlined_call_operand.hbm [shape: bf16[9,49,196], index: 7, kind: input, shape index: {}]
  %s8 = inlined_call_operand.vmem [shape: f32[32,1], index: 8, kind: input, shape index: {}]
  %s9 = inlined_call_operand.vmem [shape: bf16[72,32], index: 9, kind: input, shape index: {}]
  %s10 = inlined_call_operand.vmem [shape: f32[8,1], index: 10, kind: input, shape index: {}]
  %s11 = inlined_call_operand.hbm [shape: bf16[9,196,784], index: 11, kind: input, shape index: {}]
  %s12 = inlined_call_operand.vmem [shape: f32[6,784], index: 12, kind: output, shape index: {}]
  %s13 = sld [smem:[#allocation0]]
  $region86: #{decoder_img_forward.1} parent=0
    _
  %s15 = ssub.s32 1, %s13
  %s16 = scalar_select 0, %s15, %s13
  $region1: #{decoder_img_forward.1} parent=0
    #allocation7 [shape = 'u8[65536]{0}', space=vmem, size = 0x10000, scoped, tag = 'input window, operand 1, single buffered']
    #allocation8 [shape = 's32[1]{0}', space=sflag, size = 0x4, scoped, tag = 'scoped memory for decoder_img_forward.1']
    #allocation9 [shape = 'u8[8192]{0}', space=vmem, size = 0x2000, scoped, tag = 'input window, operand 2, single buffered']
    #allocation10 [shape = 's32[1]{0}', space=sflag, size = 0x4, scoped, tag = 'scoped memory for decoder_img_forward.1']
    #allocation11 [shape = 'u8[147456]{0}', space=vmem, size = 0x24000, scoped, tag = 'input window, operand 3, single buffered']
    #allocation12 [shape = 'u8[36864]{0}', space=vmem, size = 0x9000, scoped, tag = 'input window, operand 4, single buffered']
    #allocation13 [shape = 's32[1]{0}', space=sflag, size = 0x4, scoped, tag = 'scoped memory for decoder_img_forward.1']
    #allocation14 [shape = 'u8[258048]{0}', space=vmem, size = 0x3f000, scoped, tag = 'input window, operand 7, single buffered']
    %17 = vsyncpa [#allocation8], 0
    %18 = vsyncpa [#allocation10], 0
    %19 = vsyncpa [#allocation13], 0
    // Predicated region
    $region2: #{decoder_img_forward.1} parent=1 // pred_check
      _
    $region3: #{decoder_img_forward.1} parent=1 // pred_check_branch
      %21 = sbr.rel (0) target = $region5
    $region4: #{decoder_img_forward.1} parent=1 // pred_region
      _
    $region5: #{decoder_img_forward.1} parent=1 // pred_fallthru
      _
    // Predicated region
    $region6: #{decoder_img_forward.1} parent=1 // pred_check
      _
    $region7: #{decoder_img_forward.1} parent=1 // pred_check_branch
      %23 = sbr.rel (0) target = $region9
    $region8: #{decoder_img_forward.1} parent=1 // pred_region
      %25 = vsyncadd [#allocation8], 0
      %s26 = sshll.u32 %s1, 4
      %s27 = int_to_ptr.hbm [resolvable:$true] %s26
      %s28 = sshll.u32 [#allocation7], 4
      %s29 = int_to_ptr.vmem [resolvable:$true] %s28
      %34 = dma.hbm_to_vmem [thread:$0]  %s27, 2048, %s29, [#allocation8], 1024, 1024, 64
    $region9: #{decoder_img_forward.1} parent=1 // pred_fallthru
      _
    // Predicated region
    $region10: #{decoder_img_forward.1} parent=1 // pred_check
      _
    $region11: #{decoder_img_forward.1} parent=1 // pred_check_branch
      %36 = sbr.rel (0) target = $region13
    $region12: #{decoder_img_forward.1} parent=1 // pred_region
      %38 = vsyncadd [#allocation10], 0
      %s40 = sshll.u32 %s2, 4
      %s41 = int_to_ptr.hbm [resolvable:$true] %s40
      %s42 = sshll.u32 [#allocation9], 4
      %s43 = int_to_ptr.vmem [resolvable:$true] %s42
      %45 = dma.hbm_to_vmem [thread:$0]  %s41, 256, %s43, [#allocation10]
    $region13: #{decoder_img_forward.1} parent=1 // pred_fallthru
      _
    // Predicated region
    $region14: #{decoder_img_forward.1} parent=1 // pred_check
      _
    $region15: #{decoder_img_forward.1} parent=1 // pred_check_branch
      %47 = sbr.rel (0) target = $region17
    $region16: #{decoder_img_forward.1} parent=1 // pred_region
      %49 = vsyncadd [#allocation10], 0
      %s50 = sshll.u32 %s3, 4
      %s51 = int_to_ptr.hbm [resolvable:$true] %s50
      %s52 = sshll.u32 [#allocation11], 4
      %s53 = int_to_ptr.vmem [resolvable:$true] %s52
      %58 = dma.hbm_to_vmem [thread:$0]  %s51, 4608, %s53, [#allocation10], 64, 64, 4
    $region17: #{decoder_img_forward.1} parent=1 // pred_fallthru
      _
    // Predicated region
    $region18: #{decoder_img_forward.1} parent=1 // pred_check
      _
    $region19: #{decoder_img_forward.1} parent=1 // pred_check_branch
      %60 = sbr.rel (0) target = $region21
    $region20: #{decoder_img_forward.1} parent=1 // pred_region
      %62 = vsyncadd [#allocation13], 0
      %s63 = sshll.u32 %s4, 4
      %s64 = int_to_ptr.hbm [resolvable:$true] %s63
      %s65 = sshll.u32 [#allocation12], 4
      %s66 = int_to_ptr.vmem [resolvable:$true] %s65
      %71 = dma.hbm_to_vmem [thread:$0]  %s64, 1152, %s66, [#allocation13], 64, 64, 4
    $region21: #{decoder_img_forward.1} parent=1 // pred_fallthru
      _
    // Predicated region
    $region22: #{decoder_img_forward.1} parent=1 // pred_check
      _
    $region23: #{decoder_img_forward.1} parent=1 // pred_check_branch
      %73 = sbr.rel (0) target = $region25
    $region24: #{decoder_img_forward.1} parent=1 // pred_region
      _
    $region25: #{decoder_img_forward.1} parent=1 // pred_fallthru
      _
    // Predicated region
    $region26: #{decoder_img_forward.1} parent=1 // pred_check
      _
    $region27: #{decoder_img_forward.1} parent=1 // pred_check_branch
      %75 = sbr.rel (0) target = $region29
    $region28: #{decoder_img_forward.1} parent=1 // pred_region
      _
    $region29: #{decoder_img_forward.1} parent=1 // pred_fallthru
      _
    // Predicated region
    $region30: #{decoder_img_forward.1} parent=1 // pred_check
      _
    $region31: #{decoder_img_forward.1} parent=1 // pred_check_branch
      %77 = sbr.rel (0) target = $region33
    $region32: #{decoder_img_forward.1} parent=1 // pred_region
      %79 = vsyncadd [#allocation13], 0
      %s80 = sshll.u32 %s7, 4
      %s81 = int_to_ptr.hbm [resolvable:$true] %s80
      %s82 = sshll.u32 [#allocation14], 4
      %s83 = int_to_ptr.vmem [resolvable:$true] %s82
      %88 = dma.hbm_to_vmem [thread:$0]  %s81, 8064, %s83, [#allocation13], 128, 128, 8
    $region33: #{decoder_img_forward.1} parent=1 // pred_fallthru
      _
    // Predicated region
    $region34: #{decoder_img_forward.1} parent=1 // pred_check
      _
    $region35: #{decoder_img_forward.1} parent=1 // pred_check_branch
      %90 = sbr.rel (0) target = $region37
    $region36: #{decoder_img_forward.1} parent=1 // pred_region
      _
    $region37: #{decoder_img_forward.1} parent=1 // pred_fallthru
      _
    // Predicated region
    $region38: #{decoder_img_forward.1} parent=1 // pred_check
      _
    $region39: #{decoder_img_forward.1} parent=1 // pred_check_branch
      %92 = sbr.rel (0) target = $region41
    $region40: #{decoder_img_forward.1} parent=1 // pred_region
      _
    $region41: #{decoder_img_forward.1} parent=1 // pred_fallthru
      _
    // Predicated region
    $region42: #{decoder_img_forward.1} parent=1 // pred_check
      _
    $region43: #{decoder_img_forward.1} parent=1 // pred_check_branch
      %94 = sbr.rel (0) target = $region45
    $region44: #{decoder_img_forward.1} parent=1 // pred_region
      _
    $region45: #{decoder_img_forward.1} parent=1 // pred_fallthru
      _
    // Predicated region
    $region46: #{decoder_img_forward.1} parent=1 // pred_check
      _
    $region47: #{decoder_img_forward.1} parent=1 // pred_check_branch
      %96 = sbr.rel (0) target = $region49
    $region48: #{decoder_img_forward.1} parent=1 // pred_region
      %98 = dma.done [#allocation8], 2048
    $region49: #{decoder_img_forward.1} parent=1 // pred_fallthru
      _
    // Predicated region
    $region50: #{decoder_img_forward.1} parent=1 // pred_check
      _
    $region51: #{decoder_img_forward.1} parent=1 // pred_check_branch
      %100 = sbr.rel (0) target = $region53
    $region52: #{decoder_img_forward.1} parent=1 // pred_region
      %102 = dma.done [#allocation10], 256
    $region53: #{decoder_img_forward.1} parent=1 // pred_fallthru
      _
    // Predicated region
    $region54: #{decoder_img_forward.1} parent=1 // pred_check
      _
    $region55: #{decoder_img_forward.1} parent=1 // pred_check_branch
      %104 = sbr.rel (0) target = $region57
    $region56: #{decoder_img_forward.1} parent=1 // pred_region
      %106 = dma.done [#allocation10], 4608
    $region57: #{decoder_img_forward.1} parent=1 // pred_fallthru
      _
    // Predicated region
    $region58: #{decoder_img_forward.1} parent=1 // pred_check
      _
    $region59: #{decoder_img_forward.1} parent=1 // pred_check_branch
      %108 = sbr.rel (0) target = $region61
    $region60: #{decoder_img_forward.1} parent=1 // pred_region
      %110 = dma.done [#allocation13], 1152
    $region61: #{decoder_img_forward.1} parent=1 // pred_fallthru
      _
    // Predicated region
    $region62: #{decoder_img_forward.1} parent=1 // pred_check
      _
    $region63: #{decoder_img_forward.1} parent=1 // pred_check_branch
      %112 = sbr.rel (0) target = $region65
    $region64: #{decoder_img_forward.1} parent=1 // pred_region
      %114 = dma.done [#allocation13], 8064
    $region65: #{decoder_img_forward.1} parent=1 // pred_fallthru
      _
    %p116 = scmp.eq.s32.totalorder 0, 0
    // Predicated region
    $region66: #{decoder_img_forward.1} parent=1 // pred_check
      %p117 = pneg %p116
    $region67: #{decoder_img_forward.1} parent=1 // pred_check_branch
      %119 = sbr.rel (%p117) target = $region69
    $region68: #{decoder_img_forward.1} parent=1 // pred_region
      // Predicated region
      $region70: #{decoder_img_forward.1} parent=68 // pred_check
        _
      $region71: #{decoder_img_forward.1} parent=68 // pred_check_branch
        %121 = sbr.rel target = $region73
      $region72: #{decoder_img_forward.1} parent=68 // pred_region
        %122 = sst [smem:[#allocation17]] [#allocation16]
        %123 = sst [smem:[#allocation18]] [#allocation15]
      $region73: #{decoder_img_forward.1} parent=68 // pred_fallthru
        _
      %125 = shalt.err (0)
      %s127 = sshll.u32 %s11, 4
      %s128 = int_to_ptr.hbm [resolvable:$true] %s127
      %s129 = sshll.u32 [#allocation5], 4
      %s130 = int_to_ptr.vmem [resolvable:$true] %s129
      %132 = dma.hbm_to_vmem [thread:$0]  %s128, 100800, %s130, [#allocation6]
    $region69: #{decoder_img_forward.1} parent=1 // pred_fallthru
      _
    %v133 = vld [vmem:[%s0] sm:$0x3]
    %v134 = vpack.c.bf16 %v133, %v133
    %v135 = vld [vmem:[#allocation7] sm:$0xff]
    %v136 = vld [vmem:[#allocation7 + $0x8] sm:$0xff]
    %v137 = vld [vmem:[#allocation7 + $0x10] sm:$0xff]
    %v138 = vld [vmem:[#allocation7 + $0x18] sm:$0xff]
    %v139 = vld [vmem:[#allocation7 + $0x20] sm:$0xff]
    %v140 = vld [vmem:[#allocation7 + $0x28] sm:$0xff]
    %v141 = vld [vmem:[#allocation7 + $0x30] sm:$0xff]
    %v142 = vld [vmem:[#allocation7 + $0x38] sm:$0xff]
    %v143 = vld [vmem:[#allocation7 + $0x40] sm:$0x11]
    %v144 = vld [vmem:[#allocation7 + $0x48] sm:$0x11]
    %v145 = vld [vmem:[#allocation7 + $0x50] sm:$0x11]
    %v146 = vld [vmem:[#allocation7 + $0x58] sm:$0x11]
    %v147 = vld [vmem:[#allocation7 + $0x60] sm:$0x11]
    %v148 = vld [vmem:[#allocation7 + $0x68] sm:$0x11]
    %v149 = vld [vmem:[#allocation7 + $0x70] sm:$0x11]
    %v150 = vld [vmem:[#allocation7 + $0x78] sm:$0x11]
    %v151 = vld [vmem:[#allocation9] sm:$0xff]
    %v152 = vld [vmem:[#allocation9 + $0x8] sm:$0xff]
    %v155 = vperm.slane %v151, 0
    %v156 = vperm.slane %v151, 1
    %v157 = vperm.slane %v151, 2
    %v158 = vperm.slane %v151, 3
    %v159 = vperm.slane %v151, 4
    %v160 = vperm.slane %v151, 5
    %v161 = vperm.slane %v151, 6
    %v162 = vperm.slane %v151, 7
    %v163 = vperm.slane %v152, 0
    %v164 = vperm.slane %v152, 1
    %v165 = vperm.slane %v152, 2
    %v166 = vperm.slane %v152, 3
    %v167 = vperm.slane %v152, 4
    %v168 = vperm.slane %v152, 5
    %v169 = vperm.slane %v152, 6
    %v170 = vperm.slane %v152, 7
    %v203 = vunpack.c.l.b16 %v135
    %v204 = vunpack.c.h.b16 %v135
    %v205 = vunpack.c.l.b16 %v136
    %v206 = vunpack.c.h.b16 %v136
    %v207 = vunpack.c.l.b16 %v137
    %v208 = vunpack.c.h.b16 %v137
    %v209 = vunpack.c.l.b16 %v138
    %v210 = vunpack.c.h.b16 %v138
    %v211 = vunpack.c.l.b16 %v139
    %v212 = vunpack.c.h.b16 %v139
    %v213 = vunpack.c.l.b16 %v140
    %v214 = vunpack.c.h.b16 %v140
    %v215 = vunpack.c.l.b16 %v141
    %v216 = vunpack.c.h.b16 %v141
    %v217 = vunpack.c.l.b16 %v142
    %v218 = vunpack.c.h.b16 %v142
    %v219 = vunpack.c.l.b16 %v143
    %v220 = vunpack.c.h.b16 %v143
    %v221 = vunpack.c.l.b16 %v144
    %v222 = vunpack.c.h.b16 %v144
    %v223 = vunpack.c.l.b16 %v145
    %v224 = vunpack.c.h.b16 %v145
    %v225 = vunpack.c.l.b16 %v146
    %v226 = vunpack.c.h.b16 %v146
    %v227 = vunpack.c.l.b16 %v147
    %v228 = vunpack.c.h.b16 %v147
    %v229 = vunpack.c.l.b16 %v148
    %v230 = vunpack.c.h.b16 %v148
    %v231 = vunpack.c.l.b16 %v149
    %v232 = vunpack.c.h.b16 %v149
    %v233 = vunpack.c.l.b16 %v150
    %v234 = vunpack.c.h.b16 %v150
    %v235 = vpack.c.b16 %v219, %v203
    %v236 = vpack.c.b16 %v220, %v204
    %v237 = vpack.c.b16 %v221, %v205
    %v238 = vpack.c.b16 %v222, %v206
    %v239 = vpack.c.b16 %v223, %v207
    %v240 = vpack.c.b16 %v224, %v208
    %v241 = vpack.c.b16 %v225, %v209
    %v242 = vpack.c.b16 %v226, %v210
    %v243 = vpack.c.b16 %v227, %v211
    %v244 = vpack.c.b16 %v228, %v212
    %v245 = vpack.c.b16 %v229, %v213
    %v246 = vpack.c.b16 %v230, %v214
    %v247 = vpack.c.b16 %v231, %v215
    %v248 = vpack.c.b16 %v232, %v216
    %v249 = vpack.c.b16 %v233, %v217
    %v250 = vpack.c.b16 %v234, %v218
    %vm251 = vcmask 80896
    %v253 = vsel %vm251, %v134, 0
    %vm255 = vcmask 1044480
    %v257 = vsel %vm255, %v235, 0
    %v260 = vsel %vm255, %v236, 0
    %v263 = vsel %vm255, %v237, 0
    %v266 = vsel %vm255, %v238, 0
    %v269 = vsel %vm255, %v239, 0
    %v272 = vsel %vm255, %v240, 0
    %v275 = vsel %vm255, %v241, 0
    %v278 = vsel %vm255, %v242, 0
    %v281 = vsel %vm255, %v243, 0
    %v284 = vsel %vm255, %v244, 0
    %v287 = vsel %vm255, %v245, 0
    %v290 = vsel %vm255, %v246, 0
    %v293 = vsel %vm255, %v247, 0
    %v296 = vsel %vm255, %v248, 0
    %v299 = vsel %vm255, %v249, 0
    %v302 = vsel %vm255, %v250, 0
    %304 = vmatpush.bf16.msra.mxu0 0
    %305 = vmatpush.bf16.msra.mxu0 0
    %306 = vmatpush.bf16.msra.mxu0 0
    %307 = vmatpush.bf16.msra.mxu0 0
    %308 = vmatpush.bf16.msra.mxu0 0
    %309 = vmatpush.bf16.msra.mxu0 0
    %310 = vmatpush.bf16.msra.mxu0 0
    %311 = vmatpush.bf16.msra.mxu0 %v257
    %312 = vmatmul.bf16.gmra.mxu0 %v253
    %v313 = vpop.f32.mrf.mxu0
    %v314 = vadd.f32 %v155, %v313
    %v315 = vpop.f32.mrf.mxu0
    %316 = vdwg.mxu0
    %317 = vmatpush.bf16.msra.mxu0 0
    %318 = vmatpush.bf16.msra.mxu0 0
    %319 = vmatpush.bf16.msra.mxu0 0
    %320 = vmatpush.bf16.msra.mxu0 0
    %321 = vmatpush.bf16.msra.mxu0 0
    %322 = vmatpush.bf16.msra.mxu0 0
    %323 = vmatpush.bf16.msra.mxu0 0
    %324 = vmatpush.bf16.msra.mxu0 %v260
    %325 = vmatmul.bf16.gmra.mxu0 %v253
    %v326 = vpop.f32.mrf.mxu0
    %v327 = vadd.f32 %v156, %v326
    %v328 = vpop.f32.mrf.mxu0
    %329 = vdwg.mxu0
    %330 = vmatpush.bf16.msra.mxu0 0
    %331 = vmatpush.bf16.msra.mxu0 0
    %332 = vmatpush.bf16.msra.mxu0 0
    %333 = vmatpush.bf16.msra.mxu0 0
    %334 = vmatpush.bf16.msra.mxu0 0
    %335 = vmatpush.bf16.msra.mxu0 0
    %336 = vmatpush.bf16.msra.mxu0 0
    %337 = vmatpush.bf16.msra.mxu0 %v263
    %338 = vmatmul.bf16.gmra.mxu0 %v253
    %v339 = vpop.f32.mrf.mxu0
    %v340 = vadd.f32 %v157, %v339
    %v341 = vpop.f32.mrf.mxu0
    %342 = vdwg.mxu0
    %343 = vmatpush.bf16.msra.mxu0 0
    %344 = vmatpush.bf16.msra.mxu0 0
    %345 = vmatpush.bf16.msra.mxu0 0
    %346 = vmatpush.bf16.msra.mxu0 0
    %347 = vmatpush.bf16.msra.mxu0 0
    %348 = vmatpush.bf16.msra.mxu0 0
    %349 = vmatpush.bf16.msra.mxu0 0
    %350 = vmatpush.bf16.msra.mxu0 %v266
    %351 = vmatmul.bf16.gmra.mxu0 %v253
    %v352 = vpop.f32.mrf.mxu0
    %v353 = vadd.f32 %v158, %v352
    %v354 = vpop.f32.mrf.mxu0
    %355 = vdwg.mxu0
    %356 = vmatpush.bf16.msra.mxu0 0
    %357 = vmatpush.bf16.msra.mxu0 0
    %358 = vmatpush.bf16.msra.mxu0 0
    %359 = vmatpush.bf16.msra.mxu0 0
    %360 = vmatpush.bf16.msra.mxu0 0
    %361 = vmatpush.bf16.msra.mxu0 0
    %362 = vmatpush.bf16.msra.mxu0 0
    %363 = vmatpush.bf16.msra.mxu0 %v269
    %364 = vmatmul.bf16.gmra.mxu0 %v253
    %v365 = vpop.f32.mrf.mxu0
    %v366 = vadd.f32 %v159, %v365
    %v367 = vpop.f32.mrf.mxu0
    %368 = vdwg.mxu0
    %369 = vmatpush.bf16.msra.mxu0 0
    %370 = vmatpush.bf16.msra.mxu0 0
    %371 = vmatpush.bf16.msra.mxu0 0
    %372 = vmatpush.bf16.msra.mxu0 0
    %373 = vmatpush.bf16.msra.mxu0 0
    %374 = vmatpush.bf16.msra.mxu0 0
    %375 = vmatpush.bf16.msra.mxu0 0
    %376 = vmatpush.bf16.msra.mxu0 %v272
    %377 = vmatmul.bf16.gmra.mxu0 %v253
    %v378 = vpop.f32.mrf.mxu0
    %v379 = vadd.f32 %v160, %v378
    %v380 = vpop.f32.mrf.mxu0
    %381 = vdwg.mxu0
    %382 = vmatpush.bf16.msra.mxu0 0
    %383 = vmatpush.bf16.msra.mxu0 0
    %384 = vmatpush.bf16.msra.mxu0 0
    %385 = vmatpush.bf16.msra.mxu0 0
    %386 = vmatpush.bf16.msra.mxu0 0
    %387 = vmatpush.bf16.msra.mxu0 0
    %388 = vmatpush.bf16.msra.mxu0 0
    %389 = vmatpush.bf16.msra.mxu0 %v275
    %390 = vmatmul.bf16.gmra.mxu0 %v253
    %v391 = vpop.f32.mrf.mxu0
    %v392 = vadd.f32 %v161, %v391
    %v393 = vpop.f32.mrf.mxu0
    %394 = vdwg.mxu0
    %395 = vmatpush.bf16.msra.mxu0 0
    %396 = vmatpush.bf16.msra.mxu0 0
    %397 = vmatpush.bf16.msra.mxu0 0
    %398 = vmatpush.bf16.msra.mxu0 0
    %399 = vmatpush.bf16.msra.mxu0 0
    %400 = vmatpush.bf16.msra.mxu0 0
    %401 = vmatpush.bf16.msra.mxu0 0
    %402 = vmatpush.bf16.msra.mxu0 %v278
    %403 = vmatmul.bf16.gmra.mxu0 %v253
    %v404 = vpop.f32.mrf.mxu0
    %v405 = vadd.f32 %v162, %v404
    %v406 = vpop.f32.mrf.mxu0
    %407 = vdwg.mxu0
    %408 = vmatpush.bf16.msra.mxu0 0
    %409 = vmatpush.bf16.msra.mxu0 0
    %410 = vmatpush.bf16.msra.mxu0 0
    %411 = vmatpush.bf16.msra.mxu0 0
    %412 = vmatpush.bf16.msra.mxu0 0
    %413 = vmatpush.bf16.msra.mxu0 0
    %414 = vmatpush.bf16.msra.mxu0 0
    %415 = vmatpush.bf16.msra.mxu0 %v281
    %416 = vmatmul.bf16.gmra.mxu0 %v253
    %v417 = vpop.f32.mrf.mxu0
    %v418 = vadd.f32 %v163, %v417
    %v419 = vpop.f32.mrf.mxu0
    %420 = vdwg.mxu0
    %421 = vmatpush.bf16.msra.mxu0 0
    %422 = vmatpush.bf16.msra.mxu0 0
    %423 = vmatpush.bf16.msra.mxu0 0
    %424 = vmatpush.bf16.msra.mxu0 0
    %425 = vmatpush.bf16.msra.mxu0 0
    %426 = vmatpush.bf16.msra.mxu0 0
    %427 = vmatpush.bf16.msra.mxu0 0
    %428 = vmatpush.bf16.msra.mxu0 %v284
    %429 = vmatmul.bf16.gmra.mxu0 %v253
    %v430 = vpop.f32.mrf.mxu0
    %v431 = vadd.f32 %v164, %v430
    %v432 = vpop.f32.mrf.mxu0
    %433 = vdwg.mxu0
    %434 = vmatpush.bf16.msra.mxu0 0
    %435 = vmatpush.bf16.msra.mxu0 0
    %436 = vmatpush.bf16.msra.mxu0 0
    %437 = vmatpush.bf16.msra.mxu0 0
    %438 = vmatpush.bf16.msra.mxu0 0
    %439 = vmatpush.bf16.msra.mxu0 0
    %440 = vmatpush.bf16.msra.mxu0 0
    %441 = vmatpush.bf16.msra.mxu0 %v287
    %442 = vmatmul.bf16.gmra.mxu0 %v253
    %v443 = vpop.f32.mrf.mxu0
    %v444 = vadd.f32 %v165, %v443
    %v445 = vpop.f32.mrf.mxu0
    %446 = vdwg.mxu0
    %447 = vmatpush.bf16.msra.mxu0 0
    %448 = vmatpush.bf16.msra.mxu0 0
    %449 = vmatpush.bf16.msra.mxu0 0
    %450 = vmatpush.bf16.msra.mxu0 0
    %451 = vmatpush.bf16.msra.mxu0 0
    %452 = vmatpush.bf16.msra.mxu0 0
    %453 = vmatpush.bf16.msra.mxu0 0
    %454 = vmatpush.bf16.msra.mxu0 %v290
    %455 = vmatmul.bf16.gmra.mxu0 %v253
    %v456 = vpop.f32.mrf.mxu0
    %v457 = vadd.f32 %v166, %v456
    %v458 = vpop.f32.mrf.mxu0
    %459 = vdwg.mxu0
    %460 = vmatpush.bf16.msra.mxu0 0
    %461 = vmatpush.bf16.msra.mxu0 0
    %462 = vmatpush.bf16.msra.mxu0 0
    %463 = vmatpush.bf16.msra.mxu0 0
    %464 = vmatpush.bf16.msra.mxu0 0
    %465 = vmatpush.bf16.msra.mxu0 0
    %466 = vmatpush.bf16.msra.mxu0 0
    %467 = vmatpush.bf16.msra.mxu0 %v293
    %468 = vmatmul.bf16.gmra.mxu0 %v253
    %v469 = vpop.f32.mrf.mxu0
    %v470 = vadd.f32 %v167, %v469
    %v471 = vpop.f32.mrf.mxu0
    %472 = vdwg.mxu0
    %473 = vmatpush.bf16.msra.mxu0 0
    %474 = vmatpush.bf16.msra.mxu0 0
    %475 = vmatpush.bf16.msra.mxu0 0
    %476 = vmatpush.bf16.msra.mxu0 0
    %477 = vmatpush.bf16.msra.mxu0 0
    %478 = vmatpush.bf16.msra.mxu0 0
    %479 = vmatpush.bf16.msra.mxu0 0
    %480 = vmatpush.bf16.msra.mxu0 %v296
    %481 = vmatmul.bf16.gmra.mxu0 %v253
    %v482 = vpop.f32.mrf.mxu0
    %v483 = vadd.f32 %v168, %v482
    %v484 = vpop.f32.mrf.mxu0
    %485 = vdwg.mxu0
    %486 = vmatpush.bf16.msra.mxu0 0
    %487 = vmatpush.bf16.msra.mxu0 0
    %488 = vmatpush.bf16.msra.mxu0 0
    %489 = vmatpush.bf16.msra.mxu0 0
    %490 = vmatpush.bf16.msra.mxu0 0
    %491 = vmatpush.bf16.msra.mxu0 0
    %492 = vmatpush.bf16.msra.mxu0 0
    %493 = vmatpush.bf16.msra.mxu0 %v299
    %494 = vmatmul.bf16.gmra.mxu0 %v253
    %v495 = vpop.f32.mrf.mxu0
    %v496 = vadd.f32 %v169, %v495
    %v497 = vpop.f32.mrf.mxu0
    %498 = vdwg.mxu0
    %499 = vmatpush.bf16.msra.mxu0 0
    %500 = vmatpush.bf16.msra.mxu0 0
    %501 = vmatpush.bf16.msra.mxu0 0
    %502 = vmatpush.bf16.msra.mxu0 0
    %503 = vmatpush.bf16.msra.mxu0 0
    %504 = vmatpush.bf16.msra.mxu0 0
    %505 = vmatpush.bf16.msra.mxu0 0
    %506 = vmatpush.bf16.msra.mxu0 %v302
    %507 = vmatmul.bf16.gmra.mxu0 %v253
    %v508 = vpop.f32.mrf.mxu0
    %v509 = vadd.f32 %v170, %v508
    %v510 = vpop.f32.mrf.mxu0
    %511 = vdwg.mxu0
    %v512 = vmax.f32 %v314, 0.0
    %v513 = vmax.f32 %v327, 0.0
    %v514 = vmax.f32 %v340, 0.0
    %v515 = vmax.f32 %v353, 0.0
    %v516 = vmax.f32 %v366, 0.0
    %v517 = vmax.f32 %v379, 0.0
    %v518 = vmax.f32 %v392, 0.0
    %v519 = vmax.f32 %v405, 0.0
    %v520 = vmax.f32 %v418, 0.0
    %v521 = vmax.f32 %v431, 0.0
    %v522 = vmax.f32 %v444, 0.0
    %v523 = vmax.f32 %v457, 0.0
    %v524 = vmax.f32 %v470, 0.0
    %v525 = vmax.f32 %v483, 0.0
    %v526 = vmax.f32 %v496, 0.0
    %v527 = vmax.f32 %v509, 0.0
    %v529 = vrot.slane %v513, 7
    %v532 = vrot.slane %v514, 6
    %v535 = vrot.slane %v515, 5
    %v538 = vrot.slane %v516, 4
    %v541 = vrot.slane %v517, 3
    %v544 = vrot.slane %v518, 2
    %v547 = vrot.slane %v519, 1
    %v550 = vrot.slane %v521, 7
    %v553 = vrot.slane %v522, 6
    %v556 = vrot.slane %v523, 5
    %v559 = vrot.slane %v524, 4
    %v562 = vrot.slane %v525, 3
    %v565 = vrot.slane %v526, 2
    %v568 = vrot.slane %v527, 1
    %vm570 = vcmask 1040384
    %v571 = vsel %vm570, %v512, %v529
    %vm572 = vcmask 1041408
    %v573 = vsel %vm572, %v571, %v532
    %vm574 = vcmask 1042432
    %v575 = vsel %vm574, %v573, %v535
    %vm576 = vcmask 1043456
    %v577 = vsel %vm576, %v575, %v538
    %v578 = vsel %vm255, %v577, %v541
    %vm579 = vcmask 1045504
    %v580 = vsel %vm579, %v578, %v544
    %vm581 = vcmask 1046528
    %v582 = vsel %vm581, %v580, %v547
    %v583 = vsel %vm570, %v520, %v550
    %v584 = vsel %vm572, %v583, %v553
    %v585 = vsel %vm574, %v584, %v556
    %v586 = vsel %vm576, %v585, %v559
    %v587 = vsel %vm255, %v586, %v562
    %v588 = vsel %vm579, %v587, %v565
    %v589 = vsel %vm581, %v588, %v568
    %590 = vxpose.xlu0.b32.start [1/16] %v582, 128
    %591 = vxpose.xlu0.b32.cont [2/16] %v589, 128
    %592 = vxpose.xlu0.b32.cont [3/16] 0.0, 128
    %593 = vxpose.xlu0.b32.cont [4/16] 0.0, 128
    %594 = vxpose.xlu0.b32.cont [5/16] 0.0, 128
    %595 = vxpose.xlu0.b32.cont [6/16] 0.0, 128
    %596 = vxpose.xlu0.b32.cont [7/16] 0.0, 128
    %597 = vxpose.xlu0.b32.cont [8/16] 0.0, 128
    %598 = vxpose.xlu0.b32.cont [9/16] 0.0, 128
    %599 = vxpose.xlu0.b32.cont [10/16] 0.0, 128
    %600 = vxpose.xlu0.b32.cont [11/16] 0.0, 128
    %601 = vxpose.xlu0.b32.cont [12/16] 0.0, 128
    %602 = vxpose.xlu0.b32.cont [13/16] 0.0, 128
    %603 = vxpose.xlu0.b32.cont [14/16] 0.0, 128
    %604 = vxpose.xlu0.b32.cont [15/16] 0.0, 128
    %605 = vxpose.xlu0.b32.end [16/16] 0.0, 128
    %v606 = vpop.trf.xlu0
    %v607 = vpop.trf.xlu0
    %v608 = vpop.trf.xlu0
    %v609 = vpop.trf.xlu0
    %v610 = vpop.trf.xlu0
    %v611 = vpop.trf.xlu0
    %v612 = vpop.trf.xlu0
    %v613 = vpop.trf.xlu0
    %v614 = vpop.trf.xlu0
    %v615 = vpop.trf.xlu0
    %v616 = vpop.trf.xlu0
    %v617 = vpop.trf.xlu0
    %v618 = vpop.trf.xlu0
    %v619 = vpop.trf.xlu0
    %v620 = vpop.trf.xlu0
    %v621 = vpop.trf.xlu0
    %v622 = vpack.c.bf16 %v607, %v606
    %v623 = vpack.c.bf16 %v609, %v608
    %v624 = vpack.c.bf16 %v611, %v610
    %v625 = vpack.c.bf16 %v613, %v612
    %v626 = vpack.c.bf16 %v615, %v614
    %v627 = vpack.c.bf16 %v617, %v616
    %v628 = vpack.c.bf16 %v619, %v618
    %v629 = vpack.c.bf16 %v621, %v620
    %v630 = vld [vmem:[#allocation11] sm:$0xf]
    %v631 = vld [vmem:[#allocation11 + $0x4] sm:$0xf]
    %v632 = vld [vmem:[#allocation11 + $0x8] sm:$0xf]
    %v633 = vld [vmem:[#allocation11 + $0xc] sm:$0xf]
    %v634 = vld [vmem:[#allocation11 + $0x10] sm:$0xf]
    %v635 = vld [vmem:[#allocation11 + $0x14] sm:$0xf]
    %v636 = vld [vmem:[#allocation11 + $0x18] sm:$0xf]
    %v637 = vld [vmem:[#allocation11 + $0x1c] sm:$0xf]
    %v638 = vld [vmem:[#allocation11 + $0x20] sm:$0xf]
    %v639 = vld [vmem:[#allocation11 + $0x24] sm:$0xf]
    %v640 = vld [vmem:[#allocation11 + $0x28] sm:$0xf]
    %v641 = vld [vmem:[#allocation11 + $0x2c] sm:$0xf]
    %v642 = vld [vmem:[#allocation11 + $0x30] sm:$0xf]
    %v643 = vld [vmem:[#allocation11 + $0x34] sm:$0xf]
    %v644 = vld [vmem:[#allocation11 + $0x38] sm:$0xf]
    %v645 = vld [vmem:[#allocation11 + $0x3c] sm:$0xf]
    %v646 = vld [vmem:[#allocation11 + $0x40] sm:$0xf]
    %v647 = vld [vmem:[#allocation11 + $0x44] sm:$0xf]
    %v648 = vld [vmem:[#allocation11 + $0x48] sm:$0xf]
    %v649 = vld [vmem:[#allocation11 + $0x4c] sm:$0xf]
    %v650 = vld [vmem:[#allocation11 + $0x50] sm:$0xf]
    %v651 = vld [vmem:[#allocation11 + $0x54] sm:$0xf]
    %v652 = vld [vmem:[#allocation11 + $0x58] sm:$0xf]
    %v653 = vld [vmem:[#allocation11 + $0x5c] sm:$0xf]
    %v654 = vld [vmem:[#allocation11 + $0x60] sm:$0xf]
    %v655 = vld [vmem:[#allocation11 + $0x64] sm:$0xf]
    %v656 = vld [vmem:[#allocation11 + $0x68] sm:$0xf]
    %v657 = vld [vmem:[#allocation11 + $0x6c] sm:$0xf]
    %v658 = vld [vmem:[#allocation11 + $0x70] sm:$0xf]
    %v659 = vld [vmem:[#allocation11 + $0x74] sm:$0xf]
    %v660 = vld [vmem:[#allocation11 + $0x78] sm:$0xf]
    %v661 = vld [vmem:[#allocation11 + $0x7c] sm:$0xf]
    %v662 = vld [vmem:[#allocation11 + $0x80] sm:$0xf]
    %v663 = vld [vmem:[#allocation11 + $0x84] sm:$0xf]
    %v664 = vld [vmem:[#allocation11 + $0x88] sm:$0xf]
    %v665 = vld [vmem:[#allocation11 + $0x8c] sm:$0xf]
    %v666 = vld [vmem:[#allocation11 + $0x90] sm:$0xf]
    %v667 = vld [vmem:[#allocation11 + $0x94] sm:$0xf]
    %v668 = vld [vmem:[#allocation11 + $0x98] sm:$0xf]
    %v669 = vld [vmem:[#allocation11 + $0x9c] sm:$0xf]
    %v670 = vld [vmem:[#allocation11 + $0xa0] sm:$0xf]
    %v671 = vld [vmem:[#allocation11 + $0xa4] sm:$0xf]
    %v672 = vld [vmem:[#allocation11 + $0xa8] sm:$0xf]
    %v673 = vld [vmem:[#allocation11 + $0xac] sm:$0xf]
    %v674 = vld [vmem:[#allocation11 + $0xb0] sm:$0xf]
    %v675 = vld [vmem:[#allocation11 + $0xb4] sm:$0xf]
    %v676 = vld [vmem:[#allocation11 + $0xb8] sm:$0xf]
    %v677 = vld [vmem:[#allocation11 + $0xbc] sm:$0xf]
    %v678 = vld [vmem:[#allocation11 + $0xc0] sm:$0xf]
    %v679 = vld [vmem:[#allocation11 + $0xc4] sm:$0xf]
    %v680 = vld [vmem:[#allocation11 + $0xc8] sm:$0xf]
    %v681 = vld [vmem:[#allocation11 + $0xcc] sm:$0xf]
    %v682 = vld [vmem:[#allocation11 + $0xd0] sm:$0xf]
    %v683 = vld [vmem:[#allocation11 + $0xd4] sm:$0xf]
    %v684 = vld [vmem:[#allocation11 + $0xd8] sm:$0xf]
    %v685 = vld [vmem:[#allocation11 + $0xdc] sm:$0xf]
    %v686 = vld [vmem:[#allocation11 + $0xe0] sm:$0xf]
    %v687 = vld [vmem:[#allocation11 + $0xe4] sm:$0xf]
    %v688 = vld [vmem:[#allocation11 + $0xe8] sm:$0xf]
    %v689 = vld [vmem:[#allocation11 + $0xec] sm:$0xf]
    %v690 = vld [vmem:[#allocation11 + $0xf0] sm:$0xf]
    %v691 = vld [vmem:[#allocation11 + $0xf4] sm:$0xf]
    %v692 = vld [vmem:[#allocation11 + $0xf8] sm:$0xf]
    %v693 = vld [vmem:[#allocation11 + $0xfc] sm:$0xf]
    %v694 = vld [vmem:[#allocation11 + $0x100] sm:$0xf]
    %v695 = vld [vmem:[#allocation11 + $0x104] sm:$0xf]
    %v696 = vld [vmem:[#allocation11 + $0x108] sm:$0xf]
    %v697 = vld [vmem:[#allocation11 + $0x10c] sm:$0xf]
    %v698 = vld [vmem:[#allocation11 + $0x110] sm:$0xf]
    %v699 = vld [vmem:[#allocation11 + $0x114] sm:$0xf]
    %v700 = vld [vmem:[#allocation11 + $0x118] sm:$0xf]
    %v701 = vld [vmem:[#allocation11 + $0x11c] sm:$0xf]
    %v774 = vunpack.c.l.b16 %v630
    %v775 = vunpack.c.l.b16 %v631
    %v776 = vunpack.c.l.b16 %v632
    %v777 = vunpack.c.l.b16 %v633
    %v778 = vunpack.c.l.b16 %v634
    %v779 = vunpack.c.l.b16 %v635
    %v780 = vunpack.c.l.b16 %v636
    %v781 = vunpack.c.l.b16 %v637
    %v782 = vunpack.c.l.b16 %v638
    %v783 = vunpack.c.l.b16 %v639
    %v784 = vunpack.c.l.b16 %v640
    %v785 = vunpack.c.l.b16 %v641
    %v786 = vunpack.c.l.b16 %v642
    %v787 = vunpack.c.l.b16 %v643
    %v788 = vunpack.c.l.b16 %v644
    %v789 = vunpack.c.l.b16 %v645
    %v790 = vunpack.c.l.b16 %v646
    %v791 = vunpack.c.l.b16 %v647
    %v792 = vunpack.c.l.b16 %v648
    %v793 = vunpack.c.l.b16 %v649
    %v794 = vunpack.c.l.b16 %v650
    %v795 = vunpack.c.l.b16 %v651
    %v796 = vunpack.c.l.b16 %v652
    %v797 = vunpack.c.l.b16 %v653
    %v798 = vunpack.c.l.b16 %v654
    %v799 = vunpack.c.l.b16 %v655
    %v800 = vunpack.c.l.b16 %v656
    %v801 = vunpack.c.l.b16 %v657
    %v802 = vunpack.c.l.b16 %v658
    %v803 = vunpack.c.l.b16 %v659
    %v804 = vunpack.c.l.b16 %v660
    %v805 = vunpack.c.l.b16 %v661
    %v806 = vunpack.c.l.b16 %v662
    %v807 = vunpack.c.l.b16 %v663
    %v808 = vunpack.c.l.b16 %v664
    %v809 = vunpack.c.l.b16 %v665
    %v810 = vunpack.c.l.b16 %v666
    %v811 = vunpack.c.l.b16 %v667
    %v812 = vunpack.c.l.b16 %v668
    %v813 = vunpack.c.l.b16 %v669
    %v814 = vunpack.c.l.b16 %v670
    %v815 = vunpack.c.l.b16 %v671
    %v816 = vunpack.c.l.b16 %v672
    %v817 = vunpack.c.l.b16 %v673
    %v818 = vunpack.c.l.b16 %v674
    %v819 = vunpack.c.l.b16 %v675
    %v820 = vunpack.c.l.b16 %v676
    %v821 = vunpack.c.l.b16 %v677
    %v822 = vunpack.c.l.b16 %v678
    %v823 = vunpack.c.l.b16 %v679
    %v824 = vunpack.c.l.b16 %v680
    %v825 = vunpack.c.l.b16 %v681
    %v826 = vunpack.c.l.b16 %v682
    %v827 = vunpack.c.l.b16 %v683
    %v828 = vunpack.c.l.b16 %v684
    %v829 = vunpack.c.l.b16 %v685
    %v830 = vunpack.c.l.b16 %v686
    %v831 = vunpack.c.l.b16 %v687
    %v832 = vunpack.c.l.b16 %v688
    %v833 = vunpack.c.l.b16 %v689
    %v834 = vunpack.c.l.b16 %v690
    %v835 = vunpack.c.l.b16 %v691
    %v836 = vunpack.c.l.b16 %v692
    %v837 = vunpack.c.l.b16 %v693
    %v838 = vunpack.c.l.b16 %v694
    %v839 = vunpack.c.l.b16 %v695
    %v840 = vunpack.c.l.b16 %v696
    %v841 = vunpack.c.l.b16 %v697
    %v842 = vunpack.c.l.b16 %v698
    %v843 = vunpack.c.l.b16 %v699
    %v844 = vunpack.c.l.b16 %v700
    %v845 = vunpack.c.l.b16 %v701
    %v846 = vpack.c.b16 %v775, %v774
    %v847 = vpack.c.b16 %v777, %v776
    %v848 = vpack.c.b16 %v779, %v778
    %v849 = vpack.c.b16 %v781, %v780
    %v850 = vpack.c.b16 %v783, %v782
    %v851 = vpack.c.b16 %v785, %v784
    %v852 = vpack.c.b16 %v787, %v786
    %v853 = vpack.c.b16 %v789, %v788
    %v854 = vpack.c.b16 %v791, %v790
    %v855 = vpack.c.b16 %v793, %v792
    %v856 = vpack.c.b16 %v795, %v794
    %v857 = vpack.c.b16 %v797, %v796
    %v858 = vpack.c.b16 %v799, %v798
    %v859 = vpack.c.b16 %v801, %v800
    %v860 = vpack.c.b16 %v803, %v802
    %v861 = vpack.c.b16 %v805, %v804
    %v862 = vpack.c.b16 %v807, %v806
    %v863 = vpack.c.b16 %v809, %v808
    %v864 = vpack.c.b16 %v811, %v810
    %v865 = vpack.c.b16 %v813, %v812
    %v866 = vpack.c.b16 %v815, %v814
    %v867 = vpack.c.b16 %v817, %v816
    %v868 = vpack.c.b16 %v819, %v818
    %v869 = vpack.c.b16 %v821, %v820
    %v870 = vpack.c.b16 %v823, %v822
    %v871 = vpack.c.b16 %v825, %v824
    %v872 = vpack.c.b16 %v827, %v826
    %v873 = vpack.c.b16 %v829, %v828
    %v874 = vpack.c.b16 %v831, %v830
    %v875 = vpack.c.b16 %v833, %v832
    %v876 = vpack.c.b16 %v835, %v834
    %v877 = vpack.c.b16 %v837, %v836
    %v878 = vpack.c.b16 %v839, %v838
    %v879 = vpack.c.b16 %v841, %v840
    %v880 = vpack.c.b16 %v843, %v842
    %v881 = vpack.c.b16 %v845, %v844
    %918 = vmatpush.bf16.msra.mxu0 %v629
    %919 = vmatpush.bf16.msra.mxu0 %v628
    %920 = vmatpush.bf16.msra.mxu0 %v627
    %921 = vmatpush.bf16.msra.mxu0 %v626
    %922 = vmatpush.bf16.msra.mxu0 %v625
    %923 = vmatpush.bf16.msra.mxu0 %v624
    %924 = vmatpush.bf16.msra.mxu0 %v623
    %925 = vmatpush.bf16.msra.mxu0 %v622
    %926 = vmatmul.bf16.gmra.mxu0 %v846
    %v927 = vpop.f32.mrf.mxu0
    %v928 = vadd.f32 0.0, %v927
    %v929 = vpop.f32.mrf.mxu0
    %v930 = vadd.f32 0.0, %v929
    %931 = vmatmul.bf16.gmra.mxu0 %v847
    %v932 = vpop.f32.mrf.mxu0
    %v933 = vadd.f32 0.0, %v932
    %v934 = vpop.f32.mrf.mxu0
    %v935 = vadd.f32 0.0, %v934
    %936 = vmatmul.bf16.gmra.mxu0 %v848
    %v937 = vpop.f32.mrf.mxu0
    %v938 = vadd.f32 0.0, %v937
    %v939 = vpop.f32.mrf.mxu0
    %v940 = vadd.f32 0.0, %v939
    %941 = vmatmul.bf16.gmra.mxu0 %v849
    %v942 = vpop.f32.mrf.mxu0
    %v943 = vadd.f32 0.0, %v942
    %v944 = vpop.f32.mrf.mxu0
    %v945 = vadd.f32 0.0, %v944
    %946 = vmatmul.bf16.gmra.mxu0 %v850
    %v947 = vpop.f32.mrf.mxu0
    %v948 = vadd.f32 0.0, %v947
    %v949 = vpop.f32.mrf.mxu0
    %v950 = vadd.f32 0.0, %v949
    %951 = vmatmul.bf16.gmra.mxu0 %v851
    %v952 = vpop.f32.mrf.mxu0
    %v953 = vadd.f32 0.0, %v952
    %v954 = vpop.f32.mrf.mxu0
    %v955 = vadd.f32 0.0, %v954
    %956 = vmatmul.bf16.gmra.mxu0 %v852
    %v957 = vpop.f32.mrf.mxu0
    %v958 = vadd.f32 0.0, %v957
    %v959 = vpop.f32.mrf.mxu0
    %v960 = vadd.f32 0.0, %v959
    %961 = vmatmul.bf16.gmra.mxu0 %v853
    %v962 = vpop.f32.mrf.mxu0
    %v963 = vadd.f32 0.0, %v962
    %v964 = vpop.f32.mrf.mxu0
    %v965 = vadd.f32 0.0, %v964
    %966 = vmatmul.bf16.gmra.mxu0 %v854
    %v967 = vpop.f32.mrf.mxu0
    %v968 = vadd.f32 0.0, %v967
    %v969 = vpop.f32.mrf.mxu0
    %v970 = vadd.f32 0.0, %v969
    %971 = vmatmul.bf16.gmra.mxu0 %v855
    %v972 = vpop.f32.mrf.mxu0
    %v973 = vadd.f32 0.0, %v972
    %v974 = vpop.f32.mrf.mxu0
    %v975 = vadd.f32 0.0, %v974
    %976 = vmatmul.bf16.gmra.mxu0 %v856
    %v977 = vpop.f32.mrf.mxu0
    %v978 = vadd.f32 0.0, %v977
    %v979 = vpop.f32.mrf.mxu0
    %v980 = vadd.f32 0.0, %v979
    %981 = vmatmul.bf16.gmra.mxu0 %v857
    %v982 = vpop.f32.mrf.mxu0
    %v983 = vadd.f32 0.0, %v982
    %v984 = vpop.f32.mrf.mxu0
    %v985 = vadd.f32 0.0, %v984
    %986 = vmatmul.bf16.gmra.mxu0 %v858
    %v987 = vpop.f32.mrf.mxu0
    %v988 = vadd.f32 0.0, %v987
    %v989 = vpop.f32.mrf.mxu0
    %v990 = vadd.f32 0.0, %v989
    %991 = vmatmul.bf16.gmra.mxu0 %v859
    %v992 = vpop.f32.mrf.mxu0
    %v993 = vadd.f32 0.0, %v992
    %v994 = vpop.f32.mrf.mxu0
    %v995 = vadd.f32 0.0, %v994
    %996 = vmatmul.bf16.gmra.mxu0 %v860
    %v997 = vpop.f32.mrf.mxu0
    %v998 = vadd.f32 0.0, %v997
    %v999 = vpop.f32.mrf.mxu0
    %v1000 = vadd.f32 0.0, %v999
    %1001 = vmatmul.bf16.gmra.mxu0 %v861
    %v1002 = vpop.f32.mrf.mxu0
    %v1003 = vadd.f32 0.0, %v1002
    %v1004 = vpop.f32.mrf.mxu0
    %v1005 = vadd.f32 0.0, %v1004
    %1006 = vmatmul.bf16.gmra.mxu0 %v862
    %v1007 = vpop.f32.mrf.mxu0
    %v1008 = vadd.f32 0.0, %v1007
    %v1009 = vpop.f32.mrf.mxu0
    %v1010 = vadd.f32 0.0, %v1009
    %1011 = vmatmul.bf16.gmra.mxu0 %v863
    %v1012 = vpop.f32.mrf.mxu0
    %v1013 = vadd.f32 0.0, %v1012
    %v1014 = vpop.f32.mrf.mxu0
    %v1015 = vadd.f32 0.0, %v1014
    %1016 = vmatmul.bf16.gmra.mxu0 %v864
    %v1017 = vpop.f32.mrf.mxu0
    %v1018 = vadd.f32 0.0, %v1017
    %v1019 = vpop.f32.mrf.mxu0
    %v1020 = vadd.f32 0.0, %v1019
    %1021 = vmatmul.bf16.gmra.mxu0 %v865
    %v1022 = vpop.f32.mrf.mxu0
    %v1023 = vadd.f32 0.0, %v1022
    %v1024 = vpop.f32.mrf.mxu0
    %v1025 = vadd.f32 0.0, %v1024
    %1026 = vmatmul.bf16.gmra.mxu0 %v866
    %v1027 = vpop.f32.mrf.mxu0
    %v1028 = vadd.f32 0.0, %v1027
    %v1029 = vpop.f32.mrf.mxu0
    %v1030 = vadd.f32 0.0, %v1029
    %1031 = vmatmul.bf16.gmra.mxu0 %v867
    %v1032 = vpop.f32.mrf.mxu0
    %v1033 = vadd.f32 0.0, %v1032
    %v1034 = vpop.f32.mrf.mxu0
    %v1035 = vadd.f32 0.0, %v1034
    %1036 = vmatmul.bf16.gmra.mxu0 %v868
    %v1037 = vpop.f32.mrf.mxu0
    %v1038 = vadd.f32 0.0, %v1037
    %v1039 = vpop.f32.mrf.mxu0
    %v1040 = vadd.f32 0.0, %v1039
    %1041 = vmatmul.bf16.gmra.mxu0 %v869
    %v1042 = vpop.f32.mrf.mxu0
    %v1043 = vadd.f32 0.0, %v1042
    %v1044 = vpop.f32.mrf.mxu0
    %v1045 = vadd.f32 0.0, %v1044
    %1046 = vmatmul.bf16.gmra.mxu0 %v870
    %v1047 = vpop.f32.mrf.mxu0
    %v1048 = vadd.f32 0.0, %v1047
    %v1049 = vpop.f32.mrf.mxu0
    %v1050 = vadd.f32 0.0, %v1049
    %1051 = vmatmul.bf16.gmra.mxu0 %v871
    %v1052 = vpop.f32.mrf.mxu0
    %v1053 = vadd.f32 0.0, %v1052
    %v1054 = vpop.f32.mrf.mxu0
    %v1055 = vadd.f32 0.0, %v1054
    %1056 = vmatmul.bf16.gmra.mxu0 %v872
    %v1057 = vpop.f32.mrf.mxu0
    %v1058 = vadd.f32 0.0, %v1057
    %v1059 = vpop.f32.mrf.mxu0
    %v1060 = vadd.f32 0.0, %v1059
    %1061 = vmatmul.bf16.gmra.mxu0 %v873
    %v1062 = vpop.f32.mrf.mxu0
    %v1063 = vadd.f32 0.0, %v1062
    %v1064 = vpop.f32.mrf.mxu0
    %v1065 = vadd.f32 0.0, %v1064
    %1066 = vmatmul.bf16.gmra.mxu0 %v874
    %v1067 = vpop.f32.mrf.mxu0
    %v1068 = vadd.f32 0.0, %v1067
    %v1069 = vpop.f32.mrf.mxu0
    %v1070 = vadd.f32 0.0, %v1069
    %1071 = vmatmul.bf16.gmra.mxu0 %v875
    %v1072 = vpop.f32.mrf.mxu0
    %v1073 = vadd.f32 0.0, %v1072
    %v1074 = vpop.f32.mrf.mxu0
    %v1075 = vadd.f32 0.0, %v1074
    %1076 = vmatmul.bf16.gmra.mxu0 %v876
    %v1077 = vpop.f32.mrf.mxu0
    %v1078 = vadd.f32 0.0, %v1077
    %v1079 = vpop.f32.mrf.mxu0
    %v1080 = vadd.f32 0.0, %v1079
    %1081 = vmatmul.bf16.gmra.mxu0 %v877
    %v1082 = vpop.f32.mrf.mxu0
    %v1083 = vadd.f32 0.0, %v1082
    %v1084 = vpop.f32.mrf.mxu0
    %v1085 = vadd.f32 0.0, %v1084
    %1086 = vmatmul.bf16.gmra.mxu0 %v878
    %v1087 = vpop.f32.mrf.mxu0
    %v1088 = vadd.f32 0.0, %v1087
    %v1089 = vpop.f32.mrf.mxu0
    %v1090 = vadd.f32 0.0, %v1089
    %1091 = vmatmul.bf16.gmra.mxu0 %v879
    %v1092 = vpop.f32.mrf.mxu0
    %v1093 = vadd.f32 0.0, %v1092
    %v1094 = vpop.f32.mrf.mxu0
    %v1095 = vadd.f32 0.0, %v1094
    %1096 = vmatmul.bf16.gmra.mxu0 %v880
    %v1097 = vpop.f32.mrf.mxu0
    %v1098 = vadd.f32 0.0, %v1097
    %v1099 = vpop.f32.mrf.mxu0
    %v1100 = vadd.f32 0.0, %v1099
    %1101 = vmatmul.bf16.gmra.mxu0 %v881
    %v1102 = vpop.f32.mrf.mxu0
    %v1103 = vadd.f32 0.0, %v1102
    %v1104 = vpop.f32.mrf.mxu0
    %v1105 = vadd.f32 0.0, %v1104
    %1106 = vdwg.mxu0
    %vm1107 = vcmask 130048
    %1108 = vst.msk [vmem:[#allocation2] sm:$0xff] %vm1107, %v928
    %1109 = vst.msk [vmem:[#allocation2 + $0x8] sm:$0xff] %vm1107, %v930
    %1110 = vst.msk [vmem:[#allocation2 + $0x10] sm:$0xff] %vm1107, %v933
    %1111 = vst.msk [vmem:[#allocation2 + $0x18] sm:$0xff] %vm1107, %v935
    %1112 = vst.msk [vmem:[#allocation2 + $0x20] sm:$0xff] %vm1107, %v938
    %1113 = vst.msk [vmem:[#allocation2 + $0x28] sm:$0xff] %vm1107, %v940
    %1114 = vst.msk [vmem:[#allocation2 + $0x30] sm:$0xff] %vm1107, %v943
    %1115 = vst.msk [vmem:[#allocation2 + $0x38] sm:$0xff] %vm1107, %v945
    %1116 = vst.msk [vmem:[#allocation2 + $0x40] sm:$0xff] %vm1107, %v948
    %1117 = vst.msk [vmem:[#allocation2 + $0x48] sm:$0xff] %vm1107, %v950
    %1118 = vst.msk [vmem:[#allocation2 + $0x50] sm:$0xff] %vm1107, %v953
    %1119 = vst.msk [vmem:[#allocation2 + $0x58] sm:$0xff] %vm1107, %v955
    %1120 = vst.msk [vmem:[#allocation2 + $0x60] sm:$0xff] %vm1107, %v958
    %1121 = vst.msk [vmem:[#allocation2 + $0x68] sm:$0xff] %vm1107, %v960
    %1122 = vst.msk [vmem:[#allocation2 + $0x70] sm:$0xff] %vm1107, %v963
    %1123 = vst.msk [vmem:[#allocation2 + $0x78] sm:$0xff] %vm1107, %v965
    %1124 = vst.msk [vmem:[#allocation2 + $0x80] sm:$0xff] %vm1107, %v968
    %1125 = vst.msk [vmem:[#allocation2 + $0x88] sm:$0xff] %vm1107, %v970
    %1126 = vst.msk [vmem:[#allocation2 + $0x90] sm:$0xff] %vm1107, %v973
    %1127 = vst.msk [vmem:[#allocation2 + $0x98] sm:$0xff] %vm1107, %v975
    %1128 = vst.msk [vmem:[#allocation2 + $0xa0] sm:$0xff] %vm1107, %v978
    %1129 = vst.msk [vmem:[#allocation2 + $0xa8] sm:$0xff] %vm1107, %v980
    %1130 = vst.msk [vmem:[#allocation2 + $0xb0] sm:$0xff] %vm1107, %v983
    %1131 = vst.msk [vmem:[#allocation2 + $0xb8] sm:$0xff] %vm1107, %v985
    %1132 = vst.msk [vmem:[#allocation2 + $0xc0] sm:$0xff] %vm1107, %v988
    %1133 = vst.msk [vmem:[#allocation2 + $0xc8] sm:$0xff] %vm1107, %v990
    %1134 = vst.msk [vmem:[#allocation2 + $0xd0] sm:$0xff] %vm1107, %v993
    %1135 = vst.msk [vmem:[#allocation2 + $0xd8] sm:$0xff] %vm1107, %v995
    %1136 = vst.msk [vmem:[#allocation2 + $0xe0] sm:$0xff] %vm1107, %v998
    %1137 = vst.msk [vmem:[#allocation2 + $0xe8] sm:$0xff] %vm1107, %v1000
    %1138 = vst.msk [vmem:[#allocation2 + $0xf0] sm:$0xff] %vm1107, %v1003
    %1139 = vst.msk [vmem:[#allocation2 + $0xf8] sm:$0xff] %vm1107, %v1005
    %1140 = vst.msk [vmem:[#allocation2 + $0x100] sm:$0xff] %vm1107, %v1008
    %1141 = vst.msk [vmem:[#allocation2 + $0x108] sm:$0xff] %vm1107, %v1010
    %1142 = vst.msk [vmem:[#allocation2 + $0x110] sm:$0xff] %vm1107, %v1013
    %1143 = vst.msk [vmem:[#allocation2 + $0x118] sm:$0xff] %vm1107, %v1015
    %1144 = vst.msk [vmem:[#allocation2 + $0x120] sm:$0xff] %vm1107, %v1018
    %1145 = vst.msk [vmem:[#allocation2 + $0x128] sm:$0xff] %vm1107, %v1020
    %1146 = vst.msk [vmem:[#allocation2 + $0x130] sm:$0xff] %vm1107, %v1023
    %1147 = vst.msk [vmem:[#allocation2 + $0x138] sm:$0xff] %vm1107, %v1025
    %1148 = vst.msk [vmem:[#allocation2 + $0x140] sm:$0xff] %vm1107, %v1028
    %1149 = vst.msk [vmem:[#allocation2 + $0x148] sm:$0xff] %vm1107, %v1030
    %1150 = vst.msk [vmem:[#allocation2 + $0x150] sm:$0xff] %vm1107, %v1033
    %1151 = vst.msk [vmem:[#allocation2 + $0x158] sm:$0xff] %vm1107, %v1035
    %1152 = vst.msk [vmem:[#allocation2 + $0x160] sm:$0xff] %vm1107, %v1038
    %1153 = vst.msk [vmem:[#allocation2 + $0x168] sm:$0xff] %vm1107, %v1040
    %1154 = vst.msk [vmem:[#allocation2 + $0x170] sm:$0xff] %vm1107, %v1043
    %1155 = vst.msk [vmem:[#allocation2 + $0x178] sm:$0xff] %vm1107, %v1045
    %1156 = vst.msk [vmem:[#allocation2 + $0x180] sm:$0xff] %vm1107, %v1048
    %1157 = vst.msk [vmem:[#allocation2 + $0x188] sm:$0xff] %vm1107, %v1050
    %1158 = vst.msk [vmem:[#allocation2 + $0x190] sm:$0xff] %vm1107, %v1053
    %1159 = vst.msk [vmem:[#allocation2 + $0x198] sm:$0xff] %vm1107, %v1055
    %1160 = vst.msk [vmem:[#allocation2 + $0x1a0] sm:$0xff] %vm1107, %v1058
    %1161 = vst.msk [vmem:[#allocation2 + $0x1a8] sm:$0xff] %vm1107, %v1060
    %1162 = vst.msk [vmem:[#allocation2 + $0x1b0] sm:$0xff] %vm1107, %v1063
    %1163 = vst.msk [vmem:[#allocation2 + $0x1b8] sm:$0xff] %vm1107, %v1065
    %1164 = vst.msk [vmem:[#allocation2 + $0x1c0] sm:$0xff] %vm1107, %v1068
    %1165 = vst.msk [vmem:[#allocation2 + $0x1c8] sm:$0xff] %vm1107, %v1070
    %1166 = vst.msk [vmem:[#allocation2 + $0x1d0] sm:$0xff] %vm1107, %v1073
    %1167 = vst.msk [vmem:[#allocation2 + $0x1d8] sm:$0xff] %vm1107, %v1075
    %1168 = vst.msk [vmem:[#allocation2 + $0x1e0] sm:$0xff] %vm1107, %v1078
    %1169 = vst.msk [vmem:[#allocation2 + $0x1e8] sm:$0xff] %vm1107, %v1080
    %1170 = vst.msk [vmem:[#allocation2 + $0x1f0] sm:$0xff] %vm1107, %v1083
    %1171 = vst.msk [vmem:[#allocation2 + $0x1f8] sm:$0xff] %vm1107, %v1085
    %1172 = vst.msk [vmem:[#allocation2 + $0x200] sm:$0xff] %vm1107, %v1088
    %1173 = vst.msk [vmem:[#allocation2 + $0x208] sm:$0xff] %vm1107, %v1090
    %1174 = vst.msk [vmem:[#allocation2 + $0x210] sm:$0xff] %vm1107, %v1093
    %1175 = vst.msk [vmem:[#allocation2 + $0x218] sm:$0xff] %vm1107, %v1095
    %1176 = vst.msk [vmem:[#allocation2 + $0x220] sm:$0xff] %vm1107, %v1098
    %1177 = vst.msk [vmem:[#allocation2 + $0x228] sm:$0xff] %vm1107, %v1100
    %1178 = vst.msk [vmem:[#allocation2 + $0x230] sm:$0xff] %vm1107, %v1103
    %1179 = vst.msk [vmem:[#allocation2 + $0x238] sm:$0xff] %vm1107, %v1105
    %v1181 = vrot.slane %v512, 1
    %v1183 = vrot.slane %v514, 7
    %v1185 = vrot.slane %v515, 6
    %v1187 = vrot.slane %v516, 5
    %v1189 = vrot.slane %v517, 4
    %v1191 = vrot.slane %v518, 3
    %v1193 = vrot.slane %v519, 2
    %v1196 = vrot.slane %v520, 1
    %v1198 = vrot.slane %v522, 7
    %v1200 = vrot.slane %v523, 6
    %v1202 = vrot.slane %v524, 5
    %v1204 = vrot.slane %v525, 4
    %v1206 = vrot.slane %v526, 3
    %v1208 = vrot.slane %v527, 2
    %v1210 = vsel %vm570, %v1181, %v513
    %v1211 = vsel %vm572, %v1210, %v1183
    %v1212 = vsel %vm574, %v1211, %v1185
    %v1213 = vsel %vm576, %v1212, %v1187
    %v1214 = vsel %vm255, %v1213, %v1189
    %v1215 = vsel %vm579, %v1214, %v1191
    %v1216 = vsel %vm581, %v1215, %v1193
    %v1217 = vsel %vm570, %v1196, %v521
    %v1218 = vsel %vm572, %v1217, %v1198
    %v1219 = vsel %vm574, %v1218, %v1200
    %v1220 = vsel %vm576, %v1219, %v1202
    %v1221 = vsel %vm255, %v1220, %v1204
    %v1222 = vsel %vm579, %v1221, %v1206
    %v1223 = vsel %vm581, %v1222, %v1208
    %1224 = vxpose.xlu0.b32.start [1/16] %v1216, 128
    %1225 = vxpose.xlu0.b32.cont [2/16] %v1223, 128
    %1226 = vxpose.xlu0.b32.cont [3/16] 0.0, 128
    %1227 = vxpose.xlu0.b32.cont [4/16] 0.0, 128
    %1228 = vxpose.xlu0.b32.cont [5/16] 0.0, 128
    %1229 = vxpose.xlu0.b32.cont [6/16] 0.0, 128
    %1230 = vxpose.xlu0.b32.cont [7/16] 0.0, 128
    %1231 = vxpose.xlu0.b32.cont [8/16] 0.0, 128
    %1232 = vxpose.xlu0.b32.cont [9/16] 0.0, 128
    %1233 = vxpose.xlu0.b32.cont [10/16] 0.0, 128
    %1234 = vxpose.xlu0.b32.cont [11/16] 0.0, 128
    %1235 = vxpose.xlu0.b32.cont [12/16] 0.0, 128
    %1236 = vxpose.xlu0.b32.cont [13/16] 0.0, 128
    %1237 = vxpose.xlu0.b32.cont [14/16] 0.0, 128
    %1238 = vxpose.xlu0.b32.cont [15/16] 0.0, 128
    %1239 = vxpose.xlu0.b32.end [16/16] 0.0, 128
    %v1240 = vpop.trf.xlu0
    %v1241 = vpop.trf.xlu0
    %v1242 = vpop.trf.xlu0
    %v1243 = vpop.trf.xlu0
    %v1244 = vpop.trf.xlu0
    %v1245 = vpop.trf.xlu0
    %v1246 = vpop.trf.xlu0
    %v1247 = vpop.trf.xlu0
    %v1248 = vpop.trf.xlu0
    %v1249 = vpop.trf.xlu0
    %v1250 = vpop.trf.xlu0
    %v1251 = vpop.trf.xlu0
    %v1252 = vpop.trf.xlu0
    %v1253 = vpop.trf.xlu0
    %v1254 = vpop.trf.xlu0
    %v1255 = vpop.trf.xlu0
    %v1256 = vpack.c.bf16 %v1241, %v1240
    %v1257 = vpack.c.bf16 %v1243, %v1242
    %v1258 = vpack.c.bf16 %v1245, %v1244
    %v1259 = vpack.c.bf16 %v1247, %v1246
    %v1260 = vpack.c.bf16 %v1249, %v1248
    %v1261 = vpack.c.bf16 %v1251, %v1250
    %v1262 = vpack.c.bf16 %v1253, %v1252
    %v1263 = vpack.c.bf16 %v1255, %v1254
    %v1264 = vld [vmem:[#allocation11] sm:$0xf]
    %v1265 = vld [vmem:[#allocation11 + $0x4] sm:$0xf]
    %v1266 = vld [vmem:[#allocation11 + $0x8] sm:$0xf]
    %v1267 = vld [vmem:[#allocation11 + $0xc] sm:$0xf]
    %v1268 = vld [vmem:[#allocation11 + $0x10] sm:$0xf]
    %v1269 = vld [vmem:[#allocation11 + $0x14] sm:$0xf]
    %v1270 = vld [vmem:[#allocation11 + $0x18] sm:$0xf]
    %v1271 = vld [vmem:[#allocation11 + $0x1c] sm:$0xf]
    %v1272 = vld [vmem:[#allocation11 + $0x20] sm:$0xf]
    %v1273 = vld [vmem:[#allocation11 + $0x24] sm:$0xf]
    %v1274 = vld [vmem:[#allocation11 + $0x28] sm:$0xf]
    %v1275 = vld [vmem:[#allocation11 + $0x2c] sm:$0xf]
    %v1276 = vld [vmem:[#allocation11 + $0x30] sm:$0xf]
    %v1277 = vld [vmem:[#allocation11 + $0x34] sm:$0xf]
    %v1278 = vld [vmem:[#allocation11 + $0x38] sm:$0xf]
    %v1279 = vld [vmem:[#allocation11 + $0x3c] sm:$0xf]
    %v1280 = vld [vmem:[#allocation11 + $0x40] sm:$0xf]
    %v1281 = vld [vmem:[#allocation11 + $0x44] sm:$0xf]
    %v1282 = vld [vmem:[#allocation11 + $0x48] sm:$0xf]
    %v1283 = vld [vmem:[#allocation11 + $0x4c] sm:$0xf]
    %v1284 = vld [vmem:[#allocation11 + $0x50] sm:$0xf]
    %v1285 = vld [vmem:[#allocation11 + $0x54] sm:$0xf]
    %v1286 = vld [vmem:[#allocation11 + $0x58] sm:$0xf]
    %v1287 = vld [vmem:[#allocation11 + $0x5c] sm:$0xf]
    %v1288 = vld [vmem:[#allocation11 + $0x60] sm:$0xf]
    %v1289 = vld [vmem:[#allocation11 + $0x64] sm:$0xf]
    %v1290 = vld [vmem:[#allocation11 + $0x68] sm:$0xf]
    %v1291 = vld [vmem:[#allocation11 + $0x6c] sm:$0xf]
    %v1292 = vld [vmem:[#allocation11 + $0x70] sm:$0xf]
    %v1293 = vld [vmem:[#allocation11 + $0x74] sm:$0xf]
    %v1294 = vld [vmem:[#allocation11 + $0x78] sm:$0xf]
    %v1295 = vld [vmem:[#allocation11 + $0x7c] sm:$0xf]
    %v1296 = vld [vmem:[#allocation11 + $0x80] sm:$0xf]
    %v1297 = vld [vmem:[#allocation11 + $0x84] sm:$0xf]
    %v1298 = vld [vmem:[#allocation11 + $0x88] sm:$0xf]
    %v1299 = vld [vmem:[#allocation11 + $0x8c] sm:$0xf]
    %v1300 = vld [vmem:[#allocation11 + $0x90] sm:$0xf]
    %v1301 = vld [vmem:[#allocation11 + $0x94] sm:$0xf]
    %v1302 = vld [vmem:[#allocation11 + $0x98] sm:$0xf]
    %v1303 = vld [vmem:[#allocation11 + $0x9c] sm:$0xf]
    %v1304 = vld [vmem:[#allocation11 + $0xa0] sm:$0xf]
    %v1305 = vld [vmem:[#allocation11 + $0xa4] sm:$0xf]
    %v1306 = vld [vmem:[#allocation11 + $0xa8] sm:$0xf]
    %v1307 = vld [vmem:[#allocation11 + $0xac] sm:$0xf]
    %v1308 = vld [vmem:[#allocation11 + $0xb0] sm:$0xf]
    %v1309 = vld [vmem:[#allocation11 + $0xb4] sm:$0xf]
    %v1310 = vld [vmem:[#allocation11 + $0xb8] sm:$0xf]
    %v1311 = vld [vmem:[#allocation11 + $0xbc] sm:$0xf]
    %v1312 = vld [vmem:[#allocation11 + $0xc0] sm:$0xf]
    %v1313 = vld [vmem:[#allocation11 + $0xc4] sm:$0xf]
    %v1314 = vld [vmem:[#allocation11 + $0xc8] sm:$0xf]
    %v1315 = vld [vmem:[#allocation11 + $0xcc] sm:$0xf]
    %v1316 = vld [vmem:[#allocation11 + $0xd0] sm:$0xf]
    %v1317 = vld [vmem:[#allocation11 + $0xd4] sm:$0xf]
    %v1318 = vld [vmem:[#allocation11 + $0xd8] sm:$0xf]
    %v1319 = vld [vmem:[#allocation11 + $0xdc] sm:$0xf]
    %v1320 = vld [vmem:[#allocation11 + $0xe0] sm:$0xf]
    %v1321 = vld [vmem:[#allocation11 + $0xe4] sm:$0xf]
    %v1322 = vld [vmem:[#allocation11 + $0xe8] sm:$0xf]
    %v1323 = vld [vmem:[#allocation11 + $0xec] sm:$0xf]
    %v1324 = vld [vmem:[#allocation11 + $0xf0] sm:$0xf]
    %v1325 = vld [vmem:[#allocation11 + $0xf4] sm:$0xf]
    %v1326 = vld [vmem:[#allocation11 + $0xf8] sm:$0xf]
    %v1327 = vld [vmem:[#allocation11 + $0xfc] sm:$0xf]
    %v1328 = vld [vmem:[#allocation11 + $0x100] sm:$0xf]
    %v1329 = vld [vmem:[#allocation11 + $0x104] sm:$0xf]
    %v1330 = vld [vmem:[#allocation11 + $0x108] sm:$0xf]
    %v1331 = vld [vmem:[#allocation11 + $0x10c] sm:$0xf]
    %v1332 = vld [vmem:[#allocation11 + $0x110] sm:$0xf]
    %v1333 = vld [vmem:[#allocation11 + $0x114] sm:$0xf]
    %v1334 = vld [vmem:[#allocation11 + $0x118] sm:$0xf]
    %v1335 = vld [vmem:[#allocation11 + $0x11c] sm:$0xf]
    %v1408 = vunpack.c.l.b16 %v1264
    %v1409 = vunpack.c.l.b16 %v1265
    %v1410 = vunpack.c.l.b16 %v1266
    %v1411 = vunpack.c.l.b16 %v1267
    %v1412 = vunpack.c.l.b16 %v1268
    %v1413 = vunpack.c.l.b16 %v1269
    %v1414 = vunpack.c.l.b16 %v1270
    %v1415 = vunpack.c.l.b16 %v1271
    %v1416 = vunpack.c.l.b16 %v1272
    %v1417 = vunpack.c.l.b16 %v1273
    %v1418 = vunpack.c.l.b16 %v1274
    %v1419 = vunpack.c.l.b16 %v1275
    %v1420 = vunpack.c.l.b16 %v1276
    %v1421 = vunpack.c.l.b16 %v1277
    %v1422 = vunpack.c.l.b16 %v1278
    %v1423 = vunpack.c.l.b16 %v1279
    %v1424 = vunpack.c.l.b16 %v1280
    %v1425 = vunpack.c.l.b16 %v1281
    %v1426 = vunpack.c.l.b16 %v1282
    %v1427 = vunpack.c.l.b16 %v1283
    %v1428 = vunpack.c.l.b16 %v1284
    %v1429 = vunpack.c.l.b16 %v1285
    %v1430 = vunpack.c.l.b16 %v1286
    %v1431 = vunpack.c.l.b16 %v1287
    %v1432 = vunpack.c.l.b16 %v1288
    %v1433 = vunpack.c.l.b16 %v1289
    %v1434 = vunpack.c.l.b16 %v1290
    %v1435 = vunpack.c.l.b16 %v1291
    %v1436 = vunpack.c.l.b16 %v1292
    %v1437 = vunpack.c.l.b16 %v1293
    %v1438 = vunpack.c.l.b16 %v1294
    %v1439 = vunpack.c.l.b16 %v1295
    %v1440 = vunpack.c.l.b16 %v1296
    %v1441 = vunpack.c.l.b16 %v1297
    %v1442 = vunpack.c.l.b16 %v1298
    %v1443 = vunpack.c.l.b16 %v1299
    %v1444 = vunpack.c.l.b16 %v1300
    %v1445 = vunpack.c.l.b16 %v1301
    %v1446 = vunpack.c.l.b16 %v1302
    %v1447 = vunpack.c.l.b16 %v1303
    %v1448 = vunpack.c.l.b16 %v1304
    %v1449 = vunpack.c.l.b16 %v1305
    %v1450 = vunpack.c.l.b16 %v1306
    %v1451 = vunpack.c.l.b16 %v1307
    %v1452 = vunpack.c.l.b16 %v1308
    %v1453 = vunpack.c.l.b16 %v1309
    %v1454 = vunpack.c.l.b16 %v1310
    %v1455 = vunpack.c.l.b16 %v1311
    %v1456 = vunpack.c.l.b16 %v1312
    %v1457 = vunpack.c.l.b16 %v1313
    %v1458 = vunpack.c.l.b16 %v1314
    %v1459 = vunpack.c.l.b16 %v1315
    %v1460 = vunpack.c.l.b16 %v1316
    %v1461 = vunpack.c.l.b16 %v1317
    %v1462 = vunpack.c.l.b16 %v1318
    %v1463 = vunpack.c.l.b16 %v1319
    %v1464 = vunpack.c.l.b16 %v1320
    %v1465 = vunpack.c.l.b16 %v1321
    %v1466 = vunpack.c.l.b16 %v1322
    %v1467 = vunpack.c.l.b16 %v1323
    %v1468 = vunpack.c.l.b16 %v1324
    %v1469 = vunpack.c.l.b16 %v1325
    %v1470 = vunpack.c.l.b16 %v1326
    %v1471 = vunpack.c.l.b16 %v1327
    %v1472 = vunpack.c.l.b16 %v1328
    %v1473 = vunpack.c.l.b16 %v1329
    %v1474 = vunpack.c.l.b16 %v1330
    %v1475 = vunpack.c.l.b16 %v1331
    %v1476 = vunpack.c.l.b16 %v1332
    %v1477 = vunpack.c.l.b16 %v1333
    %v1478 = vunpack.c.l.b16 %v1334
    %v1479 = vunpack.c.l.b16 %v1335
    %v1480 = vpack.c.b16 %v1409, %v1408
    %v1481 = vpack.c.b16 %v1411, %v1410
    %v1482 = vpack.c.b16 %v1413, %v1412
    %v1483 = vpack.c.b16 %v1415, %v1414
    %v1484 = vpack.c.b16 %v1417, %v1416
    %v1485 = vpack.c.b16 %v1419, %v1418
    %v1486 = vpack.c.b16 %v1421, %v1420
    %v1487 = vpack.c.b16 %v1423, %v1422
    %v1488 = vpack.c.b16 %v1425, %v1424
    %v1489 = vpack.c.b16 %v1427, %v1426
    %v1490 = vpack.c.b16 %v1429, %v1428
    %v1491 = vpack.c.b16 %v1431, %v1430
    %v1492 = vpack.c.b16 %v1433, %v1432
    %v1493 = vpack.c.b16 %v1435, %v1434
    %v1494 = vpack.c.b16 %v1437, %v1436
    %v1495 = vpack.c.b16 %v1439, %v1438
    %v1496 = vpack.c.b16 %v1441, %v1440
    %v1497 = vpack.c.b16 %v1443, %v1442
    %v1498 = vpack.c.b16 %v1445, %v1444
    %v1499 = vpack.c.b16 %v1447, %v1446
    %v1500 = vpack.c.b16 %v1449, %v1448
    %v1501 = vpack.c.b16 %v1451, %v1450
    %v1502 = vpack.c.b16 %v1453, %v1452
    %v1503 = vpack.c.b16 %v1455, %v1454
    %v1504 = vpack.c.b16 %v1457, %v1456
    %v1505 = vpack.c.b16 %v1459, %v1458
    %v1506 = vpack.c.b16 %v1461, %v1460
    %v1507 = vpack.c.b16 %v1463, %v1462
    %v1508 = vpack.c.b16 %v1465, %v1464
    %v1509 = vpack.c.b16 %v1467, %v1466
    %v1510 = vpack.c.b16 %v1469, %v1468
    %v1511 = vpack.c.b16 %v1471, %v1470
    %v1512 = vpack.c.b16 %v1473, %v1472
    %v1513 = vpack.c.b16 %v1475, %v1474
    %v1514 = vpack.c.b16 %v1477, %v1476
    %v1515 = vpack.c.b16 %v1479, %v1478
    %1552 = vmatpush.bf16.msra.mxu0 %v1263
    %1553 = vmatpush.bf16.msra.mxu0 %v1262
    %1554 = vmatpush.bf16.msra.mxu0 %v1261
    %1555 = vmatpush.bf16.msra.mxu0 %v1260
    %1556 = vmatpush.bf16.msra.mxu0 %v1259
    %1557 = vmatpush.bf16.msra.mxu0 %v1258
    %1558 = vmatpush.bf16.msra.mxu0 %v1257
    %1559 = vmatpush.bf16.msra.mxu0 %v1256
    %1560 = vmatmul.bf16.gmra.mxu0 %v1480
    %v1561 = vpop.f32.mrf.mxu0
    %v1562 = vadd.f32 0.0, %v1561
    %v1563 = vpop.f32.mrf.mxu0
    %v1564 = vadd.f32 0.0, %v1563
    %1565 = vmatmul.bf16.gmra.mxu0 %v1481
    %v1566 = vpop.f32.mrf.mxu0
    %v1567 = vadd.f32 0.0, %v1566
    %v1568 = vpop.f32.mrf.mxu0
    %v1569 = vadd.f32 0.0, %v1568
    %1570 = vmatmul.bf16.gmra.mxu0 %v1482
    %v1571 = vpop.f32.mrf.mxu0
    %v1572 = vadd.f32 0.0, %v1571
    %v1573 = vpop.f32.mrf.mxu0
    %v1574 = vadd.f32 0.0, %v1573
    %1575 = vmatmul.bf16.gmra.mxu0 %v1483
    %v1576 = vpop.f32.mrf.mxu0
    %v1577 = vadd.f32 0.0, %v1576
    %v1578 = vpop.f32.mrf.mxu0
    %v1579 = vadd.f32 0.0, %v1578
    %1580 = vmatmul.bf16.gmra.mxu0 %v1484
    %v1581 = vpop.f32.mrf.mxu0
    %v1582 = vadd.f32 0.0, %v1581
    %v1583 = vpop.f32.mrf.mxu0
    %v1584 = vadd.f32 0.0, %v1583
    %1585 = vmatmul.bf16.gmra.mxu0 %v1485
    %v1586 = vpop.f32.mrf.mxu0
    %v1587 = vadd.f32 0.0, %v1586
    %v1588 = vpop.f32.mrf.mxu0
    %v1589 = vadd.f32 0.0, %v1588
    %1590 = vmatmul.bf16.gmra.mxu0 %v1486
    %v1591 = vpop.f32.mrf.mxu0
    %v1592 = vadd.f32 0.0, %v1591
    %v1593 = vpop.f32.mrf.mxu0
    %v1594 = vadd.f32 0.0, %v1593
    %1595 = vmatmul.bf16.gmra.mxu0 %v1487
    %v1596 = vpop.f32.mrf.mxu0
    %v1597 = vadd.f32 0.0, %v1596
    %v1598 = vpop.f32.mrf.mxu0
    %v1599 = vadd.f32 0.0, %v1598
    %1600 = vmatmul.bf16.gmra.mxu0 %v1488
    %v1601 = vpop.f32.mrf.mxu0
    %v1602 = vadd.f32 0.0, %v1601
    %v1603 = vpop.f32.mrf.mxu0
    %v1604 = vadd.f32 0.0, %v1603
    %1605 = vmatmul.bf16.gmra.mxu0 %v1489
    %v1606 = vpop.f32.mrf.mxu0
    %v1607 = vadd.f32 0.0, %v1606
    %v1608 = vpop.f32.mrf.mxu0
    %v1609 = vadd.f32 0.0, %v1608
    %1610 = vmatmul.bf16.gmra.mxu0 %v1490
    %v1611 = vpop.f32.mrf.mxu0
    %v1612 = vadd.f32 0.0, %v1611
    %v1613 = vpop.f32.mrf.mxu0
    %v1614 = vadd.f32 0.0, %v1613
    %1615 = vmatmul.bf16.gmra.mxu0 %v1491
    %v1616 = vpop.f32.mrf.mxu0
    %v1617 = vadd.f32 0.0, %v1616
    %v1618 = vpop.f32.mrf.mxu0
    %v1619 = vadd.f32 0.0, %v1618
    %1620 = vmatmul.bf16.gmra.mxu0 %v1492
    %v1621 = vpop.f32.mrf.mxu0
    %v1622 = vadd.f32 0.0, %v1621
    %v1623 = vpop.f32.mrf.mxu0
    %v1624 = vadd.f32 0.0, %v1623
    %1625 = vmatmul.bf16.gmra.mxu0 %v1493
    %v1626 = vpop.f32.mrf.mxu0
    %v1627 = vadd.f32 0.0, %v1626
    %v1628 = vpop.f32.mrf.mxu0
    %v1629 = vadd.f32 0.0, %v1628
    %1630 = vmatmul.bf16.gmra.mxu0 %v1494
    %v1631 = vpop.f32.mrf.mxu0
    %v1632 = vadd.f32 0.0, %v1631
    %v1633 = vpop.f32.mrf.mxu0
    %v1634 = vadd.f32 0.0, %v1633
    %1635 = vmatmul.bf16.gmra.mxu0 %v1495
    %v1636 = vpop.f32.mrf.mxu0
    %v1637 = vadd.f32 0.0, %v1636
    %v1638 = vpop.f32.mrf.mxu0
    %v1639 = vadd.f32 0.0, %v1638
    %1640 = vmatmul.bf16.gmra.mxu0 %v1496
    %v1641 = vpop.f32.mrf.mxu0
    %v1642 = vadd.f32 0.0, %v1641
    %v1643 = vpop.f32.mrf.mxu0
    %v1644 = vadd.f32 0.0, %v1643
    %1645 = vmatmul.bf16.gmra.mxu0 %v1497
    %v1646 = vpop.f32.mrf.mxu0
    %v1647 = vadd.f32 0.0, %v1646
    %v1648 = vpop.f32.mrf.mxu0
    %v1649 = vadd.f32 0.0, %v1648
    %1650 = vmatmul.bf16.gmra.mxu0 %v1498
    %v1651 = vpop.f32.mrf.mxu0
    %v1652 = vadd.f32 0.0, %v1651
    %v1653 = vpop.f32.mrf.mxu0
    %v1654 = vadd.f32 0.0, %v1653
    %1655 = vmatmul.bf16.gmra.mxu0 %v1499
    %v1656 = vpop.f32.mrf.mxu0
    %v1657 = vadd.f32 0.0, %v1656
    %v1658 = vpop.f32.mrf.mxu0
    %v1659 = vadd.f32 0.0, %v1658
    %1660 = vmatmul.bf16.gmra.mxu0 %v1500
    %v1661 = vpop.f32.mrf.mxu0
    %v1662 = vadd.f32 0.0, %v1661
    %v1663 = vpop.f32.mrf.mxu0
    %v1664 = vadd.f32 0.0, %v1663
    %1665 = vmatmul.bf16.gmra.mxu0 %v1501
    %v1666 = vpop.f32.mrf.mxu0
    %v1667 = vadd.f32 0.0, %v1666
    %v1668 = vpop.f32.mrf.mxu0
    %v1669 = vadd.f32 0.0, %v1668
    %1670 = vmatmul.bf16.gmra.mxu0 %v1502
    %v1671 = vpop.f32.mrf.mxu0
    %v1672 = vadd.f32 0.0, %v1671
    %v1673 = vpop.f32.mrf.mxu0
    %v1674 = vadd.f32 0.0, %v1673
    %1675 = vmatmul.bf16.gmra.mxu0 %v1503
    %v1676 = vpop.f32.mrf.mxu0
    %v1677 = vadd.f32 0.0, %v1676
    %v1678 = vpop.f32.mrf.mxu0
    %v1679 = vadd.f32 0.0, %v1678
    %1680 = vmatmul.bf16.gmra.mxu0 %v1504
    %v1681 = vpop.f32.mrf.mxu0
    %v1682 = vadd.f32 0.0, %v1681
    %v1683 = vpop.f32.mrf.mxu0
    %v1684 = vadd.f32 0.0, %v1683
    %1685 = vmatmul.bf16.gmra.mxu0 %v1505
    %v1686 = vpop.f32.mrf.mxu0
    %v1687 = vadd.f32 0.0, %v1686
    %v1688 = vpop.f32.mrf.mxu0
    %v1689 = vadd.f32 0.0, %v1688
    %1690 = vmatmul.bf16.gmra.mxu0 %v1506
    %v1691 = vpop.f32.mrf.mxu0
    %v1692 = vadd.f32 0.0, %v1691
    %v1693 = vpop.f32.mrf.mxu0
    %v1694 = vadd.f32 0.0, %v1693
    %1695 = vmatmul.bf16.gmra.mxu0 %v1507
    %v1696 = vpop.f32.mrf.mxu0
    %v1697 = vadd.f32 0.0, %v1696
    %v1698 = vpop.f32.mrf.mxu0
    %v1699 = vadd.f32 0.0, %v1698
    %1700 = vmatmul.bf16.gmra.mxu0 %v1508
    %v1701 = vpop.f32.mrf.mxu0
    %v1702 = vadd.f32 0.0, %v1701
    %v1703 = vpop.f32.mrf.mxu0
    %v1704 = vadd.f32 0.0, %v1703
    %1705 = vmatmul.bf16.gmra.mxu0 %v1509
    %v1706 = vpop.f32.mrf.mxu0
    %v1707 = vadd.f32 0.0, %v1706
    %v1708 = vpop.f32.mrf.mxu0
    %v1709 = vadd.f32 0.0, %v1708
    %1710 = vmatmul.bf16.gmra.mxu0 %v1510
    %v1711 = vpop.f32.mrf.mxu0
    %v1712 = vadd.f32 0.0, %v1711
    %v1713 = vpop.f32.mrf.mxu0
    %v1714 = vadd.f32 0.0, %v1713
    %1715 = vmatmul.bf16.gmra.mxu0 %v1511
    %v1716 = vpop.f32.mrf.mxu0
    %v1717 = vadd.f32 0.0, %v1716
    %v1718 = vpop.f32.mrf.mxu0
    %v1719 = vadd.f32 0.0, %v1718
    %1720 = vmatmul.bf16.gmra.mxu0 %v1512
    %v1721 = vpop.f32.mrf.mxu0
    %v1722 = vadd.f32 0.0, %v1721
    %v1723 = vpop.f32.mrf.mxu0
    %v1724 = vadd.f32 0.0, %v1723
    %1725 = vmatmul.bf16.gmra.mxu0 %v1513
    %v1726 = vpop.f32.mrf.mxu0
    %v1727 = vadd.f32 0.0, %v1726
    %v1728 = vpop.f32.mrf.mxu0
    %v1729 = vadd.f32 0.0, %v1728
    %1730 = vmatmul.bf16.gmra.mxu0 %v1514
    %v1731 = vpop.f32.mrf.mxu0
    %v1732 = vadd.f32 0.0, %v1731
    %v1733 = vpop.f32.mrf.mxu0
    %v1734 = vadd.f32 0.0, %v1733
    %1735 = vmatmul.bf16.gmra.mxu0 %v1515
    %v1736 = vpop.f32.mrf.mxu0
    %v1737 = vadd.f32 0.0, %v1736
    %v1738 = vpop.f32.mrf.mxu0
    %v1739 = vadd.f32 0.0, %v1738
    %1740 = vdwg.mxu0
    %s1741 = scalar_lea.vmem [#allocation2], 576
    %1742 = vst.msk [vmem:[%s1741] sm:$0xff] %vm1107, %v1562
    %1743 = vst.msk [vmem:[%s1741 + $0x8] sm:$0xff] %vm1107, %v1564
    %1744 = vst.msk [vmem:[%s1741 + $0x10] sm:$0xff] %vm1107, %v1567
    %1745 = vst.msk [vmem:[%s1741 + $0x18] sm:$0xff] %vm1107, %v1569
    %1746 = vst.msk [vmem:[%s1741 + $0x20] sm:$0xff] %vm1107, %v1572
    %1747 = vst.msk [vmem:[%s1741 + $0x28] sm:$0xff] %vm1107, %v1574
    %1748 = vst.msk [vmem:[%s1741 + $0x30] sm:$0xff] %vm1107, %v1577
    %1749 = vst.msk [vmem:[%s1741 + $0x38] sm:$0xff] %vm1107, %v1579
    %1750 = vst.msk [vmem:[%s1741 + $0x40] sm:$0xff] %vm1107, %v1582
    %1751 = vst.msk [vmem:[%s1741 + $0x48] sm:$0xff] %vm1107, %v1584
    %1752 = vst.msk [vmem:[%s1741 + $0x50] sm:$0xff] %vm1107, %v1587
    %1753 = vst.msk [vmem:[%s1741 + $0x58] sm:$0xff] %vm1107, %v1589
    %1754 = vst.msk [vmem:[%s1741 + $0x60] sm:$0xff] %vm1107, %v1592
    %1755 = vst.msk [vmem:[%s1741 + $0x68] sm:$0xff] %vm1107, %v1594
    %1756 = vst.msk [vmem:[%s1741 + $0x70] sm:$0xff] %vm1107, %v1597
    %1757 = vst.msk [vmem:[%s1741 + $0x78] sm:$0xff] %vm1107, %v1599
    %1758 = vst.msk [vmem:[%s1741 + $0x80] sm:$0xff] %vm1107, %v1602
    %1759 = vst.msk [vmem:[%s1741 + $0x88] sm:$0xff] %vm1107, %v1604
    %1760 = vst.msk [vmem:[%s1741 + $0x90] sm:$0xff] %vm1107, %v1607
    %1761 = vst.msk [vmem:[%s1741 + $0x98] sm:$0xff] %vm1107, %v1609
    %1762 = vst.msk [vmem:[%s1741 + $0xa0] sm:$0xff] %vm1107, %v1612
    %1763 = vst.msk [vmem:[%s1741 + $0xa8] sm:$0xff] %vm1107, %v1614
    %1764 = vst.msk [vmem:[%s1741 + $0xb0] sm:$0xff] %vm1107, %v1617
    %1765 = vst.msk [vmem:[%s1741 + $0xb8] sm:$0xff] %vm1107, %v1619
    %1766 = vst.msk [vmem:[%s1741 + $0xc0] sm:$0xff] %vm1107, %v1622
    %1767 = vst.msk [vmem:[%s1741 + $0xc8] sm:$0xff] %vm1107, %v1624
    %1768 = vst.msk [vmem:[%s1741 + $0xd0] sm:$0xff] %vm1107, %v1627
    %1769 = vst.msk [vmem:[%s1741 + $0xd8] sm:$0xff] %vm1107, %v1629
    %1770 = vst.msk [vmem:[%s1741 + $0xe0] sm:$0xff] %vm1107, %v1632
    %1771 = vst.msk [vmem:[%s1741 + $0xe8] sm:$0xff] %vm1107, %v1634
    %1772 = vst.msk [vmem:[%s1741 + $0xf0] sm:$0xff] %vm1107, %v1637
    %1773 = vst.msk [vmem:[%s1741 + $0xf8] sm:$0xff] %vm1107, %v1639
    %1774 = vst.msk [vmem:[%s1741 + $0x100] sm:$0xff] %vm1107, %v1642
    %1775 = vst.msk [vmem:[%s1741 + $0x108] sm:$0xff] %vm1107, %v1644
    %1776 = vst.msk [vmem:[%s1741 + $0x110] sm:$0xff] %vm1107, %v1647
    %1777 = vst.msk [vmem:[%s1741 + $0x118] sm:$0xff] %vm1107, %v1649
    %1778 = vst.msk [vmem:[%s1741 + $0x120] sm:$0xff] %vm1107, %v1652
    %1779 = vst.msk [vmem:[%s1741 + $0x128] sm:$0xff] %vm1107, %v1654
    %1780 = vst.msk [vmem:[%s1741 + $0x130] sm:$0xff] %vm1107, %v1657
    %1781 = vst.msk [vmem:[%s1741 + $0x138] sm:$0xff] %vm1107, %v1659
    %1782 = vst.msk [vmem:[%s1741 + $0x140] sm:$0xff] %vm1107, %v1662
    %1783 = vst.msk [vmem:[%s1741 + $0x148] sm:$0xff] %vm1107, %v1664
    %1784 = vst.msk [vmem:[%s1741 + $0x150] sm:$0xff] %vm1107, %v1667
    %1785 = vst.msk [vmem:[%s1741 + $0x158] sm:$0xff] %vm1107, %v1669
    %1786 = vst.msk [vmem:[%s1741 + $0x160] sm:$0xff] %vm1107, %v1672
    %1787 = vst.msk [vmem:[%s1741 + $0x168] sm:$0xff] %vm1107, %v1674
    %1788 = vst.msk [vmem:[%s1741 + $0x170] sm:$0xff] %vm1107, %v1677
    %1789 = vst.msk [vmem:[%s1741 + $0x178] sm:$0xff] %vm1107, %v1679
    %1790 = vst.msk [vmem:[%s1741 + $0x180] sm:$0xff] %vm1107, %v1682
    %1791 = vst.msk [vmem:[%s1741 + $0x188] sm:$0xff] %vm1107, %v1684
    %1792 = vst.msk [vmem:[%s1741 + $0x190] sm:$0xff] %vm1107, %v1687
    %1793 = vst.msk [vmem:[%s1741 + $0x198] sm:$0xff] %vm1107, %v1689
    %1794 = vst.msk [vmem:[%s1741 + $0x1a0] sm:$0xff] %vm1107, %v1692
    %1795 = vst.msk [vmem:[%s1741 + $0x1a8] sm:$0xff] %vm1107, %v1694
    %1796 = vst.msk [vmem:[%s1741 + $0x1b0] sm:$0xff] %vm1107, %v1697
    %1797 = vst.msk [vmem:[%s1741 + $0x1b8] sm:$0xff] %vm1107, %v1699
    %1798 = vst.msk [vmem:[%s1741 + $0x1c0] sm:$0xff] %vm1107, %v1702
    %1799 = vst.msk [vmem:[%s1741 + $0x1c8] sm:$0xff] %vm1107, %v1704
    %1800 = vst.msk [vmem:[%s1741 + $0x1d0] sm:$0xff] %vm1107, %v1707
    %1801 = vst.msk [vmem:[%s1741 + $0x1d8] sm:$0xff] %vm1107, %v1709
    %1802 = vst.msk [vmem:[%s1741 + $0x1e0] sm:$0xff] %vm1107, %v1712
    %1803 = vst.msk [vmem:[%s1741 + $0x1e8] sm:$0xff] %vm1107, %v1714
    %1804 = vst.msk [vmem:[%s1741 + $0x1f0] sm:$0xff] %vm1107, %v1717
    %1805 = vst.msk [vmem:[%s1741 + $0x1f8] sm:$0xff] %vm1107, %v1719
    %1806 = vst.msk [vmem:[%s1741 + $0x200] sm:$0xff] %vm1107, %v1722
    %1807 = vst.msk [vmem:[%s1741 + $0x208] sm:$0xff] %vm1107, %v1724
    %1808 = vst.msk [vmem:[%s1741 + $0x210] sm:$0xff] %vm1107, %v1727
    %1809 = vst.msk [vmem:[%s1741 + $0x218] sm:$0xff] %vm1107, %v1729
    %1810 = vst.msk [vmem:[%s1741 + $0x220] sm:$0xff] %vm1107, %v1732
    %1811 = vst.msk [vmem:[%s1741 + $0x228] sm:$0xff] %vm1107, %v1734
    %1812 = vst.msk [vmem:[%s1741 + $0x230] sm:$0xff] %vm1107, %v1737
    %1813 = vst.msk [vmem:[%s1741 + $0x238] sm:$0xff] %vm1107, %v1739
    %v1814 = vld [vmem:[#allocation2] sm:$0xff]
    %v1815 = vld [vmem:[#allocation2 + $0x8] sm:$0xff]
    %v1816 = vld [vmem:[#allocation2 + $0x10] sm:$0xff]
    %v1817 = vld [vmem:[#allocation2 + $0x18] sm:$0xff]
    %v1818 = vld [vmem:[#allocation2 + $0x20] sm:$0xff]
    %v1819 = vld [vmem:[#allocation2 + $0x28] sm:$0xff]
    %v1820 = vld [vmem:[#allocation2 + $0x30] sm:$0xff]
    %v1821 = vld [vmem:[#allocation2 + $0x38] sm:$0xff]
    %v1822 = vld [vmem:[#allocation2 + $0x240] sm:$0xff]
    %v1823 = vld [vmem:[#allocation2 + $0x248] sm:$0xff]
    %v1824 = vld [vmem:[#allocation2 + $0x250] sm:$0xff]
    %v1825 = vld [vmem:[#allocation2 + $0x258] sm:$0xff]
    %v1826 = vld [vmem:[#allocation2 + $0x260] sm:$0xff]
    %v1827 = vld [vmem:[#allocation2 + $0x268] sm:$0xff]
    %v1828 = vld [vmem:[#allocation2 + $0x270] sm:$0xff]
    %v1829 = vld [vmem:[#allocation2 + $0x278] sm:$0xff]
    %v1830 = vpack.c.bf16 %v1815, %v1814
    %v1831 = vpack.c.bf16 %v1817, %v1816
    %v1832 = vpack.c.bf16 %v1819, %v1818
    %v1833 = vpack.c.bf16 %v1821, %v1820
    %v1834 = vpack.c.bf16 %v1823, %v1822
    %v1835 = vpack.c.bf16 %v1825, %v1824
    %v1836 = vpack.c.bf16 %v1827, %v1826
    %v1837 = vpack.c.bf16 %v1829, %v1828
    %v1838 = vld [vmem:[#allocation12] sm:$0xf]
    %v1839 = vld [vmem:[#allocation12 + $0x4] sm:$0xf]
    %v1840 = vld [vmem:[#allocation2 + $0x40] sm:$0xff]
    %v1841 = vld [vmem:[#allocation2 + $0x48] sm:$0xff]
    %v1842 = vld [vmem:[#allocation2 + $0x50] sm:$0xff]
    %v1843 = vld [vmem:[#allocation2 + $0x58] sm:$0xff]
    %v1844 = vld [vmem:[#allocation2 + $0x60] sm:$0xff]
    %v1845 = vld [vmem:[#allocation2 + $0x68] sm:$0xff]
    %v1846 = vld [vmem:[#allocation2 + $0x70] sm:$0xff]
    %v1847 = vld [vmem:[#allocation2 + $0x78] sm:$0xff]
    %v1848 = vld [vmem:[#allocation2 + $0x280] sm:$0xff]
    %v1849 = vld [vmem:[#allocation2 + $0x288] sm:$0xff]
    %v1850 = vld [vmem:[#allocation2 + $0x290] sm:$0xff]
    %v1851 = vld [vmem:[#allocation2 + $0x298] sm:$0xff]
    %v1852 = vld [vmem:[#allocation2 + $0x2a0] sm:$0xff]
    %v1853 = vld [vmem:[#allocation2 + $0x2a8] sm:$0xff]
    %v1854 = vld [vmem:[#allocation2 + $0x2b0] sm:$0xff]
    %v1855 = vld [vmem:[#allocation2 + $0x2b8] sm:$0xff]
    %v1856 = vpack.c.bf16 %v1841, %v1840
    %v1857 = vpack.c.bf16 %v1843, %v1842
    %v1858 = vpack.c.bf16 %v1845, %v1844
    %v1859 = vpack.c.bf16 %v1847, %v1846
    %v1860 = vpack.c.bf16 %v1849, %v1848
    %v1861 = vpack.c.bf16 %v1851, %v1850
    %v1862 = vpack.c.bf16 %v1853, %v1852
    %v1863 = vpack.c.bf16 %v1855, %v1854
    %s1864 = scalar_lea.vmem [#allocation12], 8
    %v1865 = vld [vmem:[%s1864] sm:$0xf]
    %v1866 = vld [vmem:[%s1864 + $0x4] sm:$0xf]
    %v1869 = vunpack.c.l.b16 %v1865
    %v1870 = vunpack.c.l.b16 %v1866
    %v1871 = vpack.c.b16 %v1870, %v1869
    %v1874 = vsel %vm1107, %v1856, 0
    %v1877 = vsel %vm1107, %v1857, 0
    %v1880 = vsel %vm1107, %v1858, 0
    %v1883 = vsel %vm1107, %v1859, 0
    %v1886 = vsel %vm1107, %v1860, 0
    %v1889 = vsel %vm1107, %v1861, 0
    %v1892 = vsel %vm1107, %v1862, 0
    %v1895 = vsel %vm1107, %v1863, 0
    %1897 = vmatpush.bf16.msra.mxu0 0
    %1898 = vmatpush.bf16.msra.mxu0 0
    %1899 = vmatpush.bf16.msra.mxu0 0
    %1900 = vmatpush.bf16.msra.mxu0 0
    %1901 = vmatpush.bf16.msra.mxu0 0
    %1902 = vmatpush.bf16.msra.mxu0 0
    %1903 = vmatpush.bf16.msra.mxu0 0
    %1904 = vmatpush.bf16.msra.mxu0 %v1871
    %1905 = vmatmul.bf16.gmra.mxu0 %v1874
    %v1906 = vpop.f32.mrf.mxu0
    %v1907 = vadd.f32 0.0, %v1906
    %v1908 = vpop.f32.mrf.mxu0
    %v1909 = vadd.f32 0.0, %v1908
    %1910 = vmatmul.bf16.gmra.mxu0 %v1877
    %v1911 = vpop.f32.mrf.mxu0
    %v1912 = vadd.f32 0.0, %v1911
    %v1913 = vpop.f32.mrf.mxu0
    %v1914 = vadd.f32 0.0, %v1913
    %1915 = vmatmul.bf16.gmra.mxu0 %v1880
    %v1916 = vpop.f32.mrf.mxu0
    %v1917 = vadd.f32 0.0, %v1916
    %v1918 = vpop.f32.mrf.mxu0
    %v1919 = vadd.f32 0.0, %v1918
    %1920 = vmatmul.bf16.gmra.mxu0 %v1883
    %v1921 = vpop.f32.mrf.mxu0
    %v1922 = vadd.f32 0.0, %v1921
    %v1923 = vpop.f32.mrf.mxu0
    %v1924 = vadd.f32 0.0, %v1923
    %1925 = vmatmul.bf16.gmra.mxu0 %v1886
    %v1926 = vpop.f32.mrf.mxu0
    %v1927 = vadd.f32 0.0, %v1926
    %v1928 = vpop.f32.mrf.mxu0
    %v1929 = vadd.f32 0.0, %v1928
    %1930 = vmatmul.bf16.gmra.mxu0 %v1889
    %v1931 = vpop.f32.mrf.mxu0
    %v1932 = vadd.f32 0.0, %v1931
    %v1933 = vpop.f32.mrf.mxu0
    %v1934 = vadd.f32 0.0, %v1933
    %1935 = vmatmul.bf16.gmra.mxu0 %v1892
    %v1936 = vpop.f32.mrf.mxu0
    %v1937 = vadd.f32 0.0, %v1936
    %v1938 = vpop.f32.mrf.mxu0
    %v1939 = vadd.f32 0.0, %v1938
    %1940 = vmatmul.bf16.gmra.mxu0 %v1895
    %v1941 = vpop.f32.mrf.mxu0
    %v1942 = vadd.f32 0.0, %v1941
    %v1943 = vpop.f32.mrf.mxu0
    %v1944 = vadd.f32 0.0, %v1943
    %1945 = vdwg.mxu0
    %v1948 = vunpack.c.l.b16 %v1838
    %v1949 = vunpack.c.l.b16 %v1839
    %v1950 = vpack.c.b16 %v1949, %v1948
    %v1953 = vsel %vm1107, %v1830, 0
    %v1956 = vsel %vm1107, %v1831, 0
    %v1959 = vsel %vm1107, %v1832, 0
    %v1962 = vsel %vm1107, %v1833, 0
    %v1965 = vsel %vm1107, %v1834, 0
    %v1968 = vsel %vm1107, %v1835, 0
    %v1971 = vsel %vm1107, %v1836, 0
    %v1974 = vsel %vm1107, %v1837, 0
    %1976 = vmatpush.bf16.msra.mxu0 0
    %1977 = vmatpush.bf16.msra.mxu0 0
    %1978 = vmatpush.bf16.msra.mxu0 0
    %1979 = vmatpush.bf16.msra.mxu0 0
    %1980 = vmatpush.bf16.msra.mxu0 0
    %1981 = vmatpush.bf16.msra.mxu0 0
    %1982 = vmatpush.bf16.msra.mxu0 0
    %1983 = vmatpush.bf16.msra.mxu0 %v1950
    %1984 = vmatmul.bf16.gmra.mxu0 %v1953
    %v1985 = vpop.f32.mrf.mxu0
    %v1986 = vadd.f32 %v1907, %v1985
    %v1987 = vpop.f32.mrf.mxu0
    %v1988 = vadd.f32 %v1909, %v1987
    %1989 = vmatmul.bf16.gmra.mxu0 %v1956
    %v1990 = vpop.f32.mrf.mxu0
    %v1991 = vadd.f32 %v1912, %v1990
    %v1992 = vpop.f32.mrf.mxu0
    %v1993 = vadd.f32 %v1914, %v1992
    %1994 = vmatmul.bf16.gmra.mxu0 %v1959
    %v1995 = vpop.f32.mrf.mxu0
    %v1996 = vadd.f32 %v1917, %v1995
    %v1997 = vpop.f32.mrf.mxu0
    %v1998 = vadd.f32 %v1919, %v1997
    %1999 = vmatmul.bf16.gmra.mxu0 %v1962
    %v2000 = vpop.f32.mrf.mxu0
    %v2001 = vadd.f32 %v1922, %v2000
    %v2002 = vpop.f32.mrf.mxu0
    %v2003 = vadd.f32 %v1924, %v2002
    %2004 = vmatmul.bf16.gmra.mxu0 %v1965
    %v2005 = vpop.f32.mrf.mxu0
    %v2006 = vadd.f32 %v1927, %v2005
    %v2007 = vpop.f32.mrf.mxu0
    %v2008 = vadd.f32 %v1929, %v2007
    %2009 = vmatmul.bf16.gmra.mxu0 %v1968
    %v2010 = vpop.f32.mrf.mxu0
    %v2011 = vadd.f32 %v1932, %v2010
    %v2012 = vpop.f32.mrf.mxu0
    %v2013 = vadd.f32 %v1934, %v2012
    %2014 = vmatmul.bf16.gmra.mxu0 %v1971
    %v2015 = vpop.f32.mrf.mxu0
    %v2016 = vadd.f32 %v1937, %v2015
    %v2017 = vpop.f32.mrf.mxu0
    %v2018 = vadd.f32 %v1939, %v2017
    %2019 = vmatmul.bf16.gmra.mxu0 %v1974
    %v2020 = vpop.f32.mrf.mxu0
    %v2021 = vadd.f32 %v1942, %v2020
    %v2022 = vpop.f32.mrf.mxu0
    %v2023 = vadd.f32 %v1944, %v2022
    %2024 = vdwg.mxu0
    %v2025 = vld [vmem:[#allocation2 + $0x80] sm:$0xff]
    %v2026 = vld [vmem:[#allocation2 + $0x88] sm:$0xff]
    %v2027 = vld [vmem:[#allocation2 + $0x90] sm:$0xff]
    %v2028 = vld [vmem:[#allocation2 + $0x98] sm:$0xff]
    %v2029 = vld [vmem:[#allocation2 + $0xa0] sm:$0xff]
    %v2030 = vld [vmem:[#allocation2 + $0xa8] sm:$0xff]
    %v2031 = vld [vmem:[#allocation2 + $0xb0] sm:$0xff]
    %v2032 = vld [vmem:[#allocation2 + $0xb8] sm:$0xff]
    %v2033 = vld [vmem:[#allocation2 + $0x2c0] sm:$0xff]
    %v2034 = vld [vmem:[#allocation2 + $0x2c8] sm:$0xff]
    %v2035 = vld [vmem:[#allocation2 + $0x2d0] sm:$0xff]
    %v2036 = vld [vmem:[#allocation2 + $0x2d8] sm:$0xff]
    %v2037 = vld [vmem:[#allocation2 + $0x2e0] sm:$0xff]
    %v2038 = vld [vmem:[#allocation2 + $0x2e8] sm:$0xff]
    %v2039 = vld [vmem:[#allocation2 + $0x2f0] sm:$0xff]
    %v2040 = vld [vmem:[#allocation2 + $0x2f8] sm:$0xff]
    %v2041 = vpack.c.bf16 %v2026, %v2025
    %v2042 = vpack.c.bf16 %v2028, %v2027
    %v2043 = vpack.c.bf16 %v2030, %v2029
    %v2044 = vpack.c.bf16 %v2032, %v2031
    %v2045 = vpack.c.bf16 %v2034, %v2033
    %v2046 = vpack.c.bf16 %v2036, %v2035
    %v2047 = vpack.c.bf16 %v2038, %v2037
    %v2048 = vpack.c.bf16 %v2040, %v2039
    %s2049 = scalar_lea.vmem [#allocation12], 16
    %v2050 = vld [vmem:[%s2049] sm:$0xf]
    %v2051 = vld [vmem:[%s2049 + $0x4] sm:$0xf]
    %v2054 = vunpack.c.l.b16 %v2050
    %v2055 = vunpack.c.l.b16 %v2051
    %v2056 = vpack.c.b16 %v2055, %v2054
    %v2059 = vsel %vm1107, %v2041, 0
    %v2062 = vsel %vm1107, %v2042, 0
    %v2065 = vsel %vm1107, %v2043, 0
    %v2068 = vsel %vm1107, %v2044, 0
    %v2071 = vsel %vm1107, %v2045, 0
    %v2074 = vsel %vm1107, %v2046, 0
    %v2077 = vsel %vm1107, %v2047, 0
    %v2080 = vsel %vm1107, %v2048, 0
    %2082 = vmatpush.bf16.msra.mxu0 0
    %2083 = vmatpush.bf16.msra.mxu0 0
    %2084 = vmatpush.bf16.msra.mxu0 0
    %2085 = vmatpush.bf16.msra.mxu0 0
    %2086 = vmatpush.bf16.msra.mxu0 0
    %2087 = vmatpush.bf16.msra.mxu0 0
    %2088 = vmatpush.bf16.msra.mxu0 0
    %2089 = vmatpush.bf16.msra.mxu0 %v2056
    %2090 = vmatmul.bf16.gmra.mxu0 %v2059
    %v2091 = vpop.f32.mrf.mxu0
    %v2092 = vadd.f32 0.0, %v2091
    %v2093 = vpop.f32.mrf.mxu0
    %v2094 = vadd.f32 0.0, %v2093
    %2095 = vmatmul.bf16.gmra.mxu0 %v2062
    %v2096 = vpop.f32.mrf.mxu0
    %v2097 = vadd.f32 0.0, %v2096
    %v2098 = vpop.f32.mrf.mxu0
    %v2099 = vadd.f32 0.0, %v2098
    %2100 = vmatmul.bf16.gmra.mxu0 %v2065
    %v2101 = vpop.f32.mrf.mxu0
    %v2102 = vadd.f32 0.0, %v2101
    %v2103 = vpop.f32.mrf.mxu0
    %v2104 = vadd.f32 0.0, %v2103
    %2105 = vmatmul.bf16.gmra.mxu0 %v2068
    %v2106 = vpop.f32.mrf.mxu0
    %v2107 = vadd.f32 0.0, %v2106
    %v2108 = vpop.f32.mrf.mxu0
    %v2109 = vadd.f32 0.0, %v2108
    %2110 = vmatmul.bf16.gmra.mxu0 %v2071
    %v2111 = vpop.f32.mrf.mxu0
    %v2112 = vadd.f32 0.0, %v2111
    %v2113 = vpop.f32.mrf.mxu0
    %v2114 = vadd.f32 0.0, %v2113
    %2115 = vmatmul.bf16.gmra.mxu0 %v2074
    %v2116 = vpop.f32.mrf.mxu0
    %v2117 = vadd.f32 0.0, %v2116
    %v2118 = vpop.f32.mrf.mxu0
    %v2119 = vadd.f32 0.0, %v2118
    %2120 = vmatmul.bf16.gmra.mxu0 %v2077
    %v2121 = vpop.f32.mrf.mxu0
    %v2122 = vadd.f32 0.0, %v2121
    %v2123 = vpop.f32.mrf.mxu0
    %v2124 = vadd.f32 0.0, %v2123
    %2125 = vmatmul.bf16.gmra.mxu0 %v2080
    %v2126 = vpop.f32.mrf.mxu0
    %v2127 = vadd.f32 0.0, %v2126
    %v2128 = vpop.f32.mrf.mxu0
    %v2129 = vadd.f32 0.0, %v2128
    %2130 = vdwg.mxu0
    %v2131 = vadd.f32 %v1986, %v2092
    %v2132 = vadd.f32 %v1988, %v2094
    %v2133 = vadd.f32 %v1991, %v2097
    %v2134 = vadd.f32 %v1993, %v2099
    %v2135 = vadd.f32 %v1996, %v2102
    %v2136 = vadd.f32 %v1998, %v2104
    %v2137 = vadd.f32 %v2001, %v2107
    %v2138 = vadd.f32 %v2003, %v2109
    %v2139 = vadd.f32 %v2006, %v2112
    %v2140 = vadd.f32 %v2008, %v2114
    %v2141 = vadd.f32 %v2011, %v2117
    %v2142 = vadd.f32 %v2013, %v2119
    %v2143 = vadd.f32 %v2016, %v2122
    %v2144 = vadd.f32 %v2018, %v2124
    %v2145 = vadd.f32 %v2021, %v2127
    %v2146 = vadd.f32 %v2023, %v2129
    %v2147 = vld [vmem:[#allocation2 + $0xc0] sm:$0xff]
    %v2148 = vld [vmem:[#allocation2 + $0xc8] sm:$0xff]
    %v2149 = vld [vmem:[#allocation2 + $0xd0] sm:$0xff]
    %v2150 = vld [vmem:[#allocation2 + $0xd8] sm:$0xff]
    %v2151 = vld [vmem:[#allocation2 + $0xe0] sm:$0xff]
    %v2152 = vld [vmem:[#allocation2 + $0xe8] sm:$0xff]
    %v2153 = vld [vmem:[#allocation2 + $0xf0] sm:$0xff]
    %v2154 = vld [vmem:[#allocation2 + $0xf8] sm:$0xff]
    %v2155 = vld [vmem:[#allocation2 + $0x300] sm:$0xff]
    %v2156 = vld [vmem:[#allocation2 + $0x308] sm:$0xff]
    %v2157 = vld [vmem:[#allocation2 + $0x310] sm:$0xff]
    %v2158 = vld [vmem:[#allocation2 + $0x318] sm:$0xff]
    %v2159 = vld [vmem:[#allocation2 + $0x320] sm:$0xff]
    %v2160 = vld [vmem:[#allocation2 + $0x328] sm:$0xff]
    %v2161 = vld [vmem:[#allocation2 + $0x330] sm:$0xff]
    %v2162 = vld [vmem:[#allocation2 + $0x338] sm:$0xff]
    %v2163 = vpack.c.bf16 %v2148, %v2147
    %v2164 = vpack.c.bf16 %v2150, %v2149
    %v2165 = vpack.c.bf16 %v2152, %v2151
    %v2166 = vpack.c.bf16 %v2154, %v2153
    %v2167 = vpack.c.bf16 %v2156, %v2155
    %v2168 = vpack.c.bf16 %v2158, %v2157
    %v2169 = vpack.c.bf16 %v2160, %v2159
    %v2170 = vpack.c.bf16 %v2162, %v2161
    %s2171 = scalar_lea.vmem [#allocation12], 24
    %v2172 = vld [vmem:[%s2171] sm:$0xf]
    %v2173 = vld [vmem:[%s2171 + $0x4] sm:$0xf]
    %v2176 = vunpack.c.l.b16 %v2172
    %v2177 = vunpack.c.l.b16 %v2173
    %v2178 = vpack.c.b16 %v2177, %v2176
    %v2181 = vsel %vm1107, %v2163, 0
    %v2184 = vsel %vm1107, %v2164, 0
    %v2187 = vsel %vm1107, %v2165, 0
    %v2190 = vsel %vm1107, %v2166, 0
    %v2193 = vsel %vm1107, %v2167, 0
    %v2196 = vsel %vm1107, %v2168, 0
    %v2199 = vsel %vm1107, %v2169, 0
    %v2202 = vsel %vm1107, %v2170, 0
    %2204 = vmatpush.bf16.msra.mxu0 0
    %2205 = vmatpush.bf16.msra.mxu0 0
    %2206 = vmatpush.bf16.msra.mxu0 0
    %2207 = vmatpush.bf16.msra.mxu0 0
    %2208 = vmatpush.bf16.msra.mxu0 0
    %2209 = vmatpush.bf16.msra.mxu0 0
    %2210 = vmatpush.bf16.msra.mxu0 0
    %2211 = vmatpush.bf16.msra.mxu0 %v2178
    %2212 = vmatmul.bf16.gmra.mxu0 %v2181
    %v2213 = vpop.f32.mrf.mxu0
    %v2214 = vadd.f32 0.0, %v2213
    %v2215 = vpop.f32.mrf.mxu0
    %v2216 = vadd.f32 0.0, %v2215
    %2217 = vmatmul.bf16.gmra.mxu0 %v2184
    %v2218 = vpop.f32.mrf.mxu0
    %v2219 = vadd.f32 0.0, %v2218
    %v2220 = vpop.f32.mrf.mxu0
    %v2221 = vadd.f32 0.0, %v2220
    %2222 = vmatmul.bf16.gmra.mxu0 %v2187
    %v2223 = vpop.f32.mrf.mxu0
    %v2224 = vadd.f32 0.0, %v2223
    %v2225 = vpop.f32.mrf.mxu0
    %v2226 = vadd.f32 0.0, %v2225
    %2227 = vmatmul.bf16.gmra.mxu0 %v2190
    %v2228 = vpop.f32.mrf.mxu0
    %v2229 = vadd.f32 0.0, %v2228
    %v2230 = vpop.f32.mrf.mxu0
    %v2231 = vadd.f32 0.0, %v2230
    %2232 = vmatmul.bf16.gmra.mxu0 %v2193
    %v2233 = vpop.f32.mrf.mxu0
    %v2234 = vadd.f32 0.0, %v2233
    %v2235 = vpop.f32.mrf.mxu0
    %v2236 = vadd.f32 0.0, %v2235
    %2237 = vmatmul.bf16.gmra.mxu0 %v2196
    %v2238 = vpop.f32.mrf.mxu0
    %v2239 = vadd.f32 0.0, %v2238
    %v2240 = vpop.f32.mrf.mxu0
    %v2241 = vadd.f32 0.0, %v2240
    %2242 = vmatmul.bf16.gmra.mxu0 %v2199
    %v2243 = vpop.f32.mrf.mxu0
    %v2244 = vadd.f32 0.0, %v2243
    %v2245 = vpop.f32.mrf.mxu0
    %v2246 = vadd.f32 0.0, %v2245
    %2247 = vmatmul.bf16.gmra.mxu0 %v2202
    %v2248 = vpop.f32.mrf.mxu0
    %v2249 = vadd.f32 0.0, %v2248
    %v2250 = vpop.f32.mrf.mxu0
    %v2251 = vadd.f32 0.0, %v2250
    %2252 = vdwg.mxu0
    %v2253 = vadd.f32 %v2131, %v2214
    %v2254 = vadd.f32 %v2132, %v2216
    %v2255 = vadd.f32 %v2133, %v2219
    %v2256 = vadd.f32 %v2134, %v2221
    %v2257 = vadd.f32 %v2135, %v2224
    %v2258 = vadd.f32 %v2136, %v2226
    %v2259 = vadd.f32 %v2137, %v2229
    %v2260 = vadd.f32 %v2138, %v2231
    %v2261 = vadd.f32 %v2139, %v2234
    %v2262 = vadd.f32 %v2140, %v2236
    %v2263 = vadd.f32 %v2141, %v2239
    %v2264 = vadd.f32 %v2142, %v2241
    %v2265 = vadd.f32 %v2143, %v2244
    %v2266 = vadd.f32 %v2144, %v2246
    %v2267 = vadd.f32 %v2145, %v2249
    %v2268 = vadd.f32 %v2146, %v2251
    %v2269 = vld [vmem:[#allocation2 + $0x100] sm:$0xff]
    %v2270 = vld [vmem:[#allocation2 + $0x108] sm:$0xff]
    %v2271 = vld [vmem:[#allocation2 + $0x110] sm:$0xff]
    %v2272 = vld [vmem:[#allocation2 + $0x118] sm:$0xff]
    %v2273 = vld [vmem:[#allocation2 + $0x120] sm:$0xff]
    %v2274 = vld [vmem:[#allocation2 + $0x128] sm:$0xff]
    %v2275 = vld [vmem:[#allocation2 + $0x130] sm:$0xff]
    %v2276 = vld [vmem:[#allocation2 + $0x138] sm:$0xff]
    %v2277 = vld [vmem:[#allocation2 + $0x340] sm:$0xff]
    %v2278 = vld [vmem:[#allocation2 + $0x348] sm:$0xff]
    %v2279 = vld [vmem:[#allocation2 + $0x350] sm:$0xff]
    %v2280 = vld [vmem:[#allocation2 + $0x358] sm:$0xff]
    %v2281 = vld [vmem:[#allocation2 + $0x360] sm:$0xff]
    %v2282 = vld [vmem:[#allocation2 + $0x368] sm:$0xff]
    %v2283 = vld [vmem:[#allocation2 + $0x370] sm:$0xff]
    %v2284 = vld [vmem:[#allocation2 + $0x378] sm:$0xff]
    %v2285 = vpack.c.bf16 %v2270, %v2269
    %v2286 = vpack.c.bf16 %v2272, %v2271
    %v2287 = vpack.c.bf16 %v2274, %v2273
    %v2288 = vpack.c.bf16 %v2276, %v2275
    %v2289 = vpack.c.bf16 %v2278, %v2277
    %v2290 = vpack.c.bf16 %v2280, %v2279
    %v2291 = vpack.c.bf16 %v2282, %v2281
    %v2292 = vpack.c.bf16 %v2284, %v2283
    %s2293 = scalar_lea.vmem [#allocation12], 32
    %v2294 = vld [vmem:[%s2293] sm:$0xf]
    %v2295 = vld [vmem:[%s2293 + $0x4] sm:$0xf]
    %v2298 = vunpack.c.l.b16 %v2294
    %v2299 = vunpack.c.l.b16 %v2295
    %v2300 = vpack.c.b16 %v2299, %v2298
    %v2303 = vsel %vm1107, %v2285, 0
    %v2306 = vsel %vm1107, %v2286, 0
    %v2309 = vsel %vm1107, %v2287, 0
    %v2312 = vsel %vm1107, %v2288, 0
    %v2315 = vsel %vm1107, %v2289, 0
    %v2318 = vsel %vm1107, %v2290, 0
    %v2321 = vsel %vm1107, %v2291, 0
    %v2324 = vsel %vm1107, %v2292, 0
    %2326 = vmatpush.bf16.msra.mxu0 0
    %2327 = vmatpush.bf16.msra.mxu0 0
    %2328 = vmatpush.bf16.msra.mxu0 0
    %2329 = vmatpush.bf16.msra.mxu0 0
    %2330 = vmatpush.bf16.msra.mxu0 0
    %2331 = vmatpush.bf16.msra.mxu0 0
    %2332 = vmatpush.bf16.msra.mxu0 0
    %2333 = vmatpush.bf16.msra.mxu0 %v2300
    %2334 = vmatmul.bf16.gmra.mxu0 %v2303
    %v2335 = vpop.f32.mrf.mxu0
    %v2336 = vadd.f32 0.0, %v2335
    %v2337 = vpop.f32.mrf.mxu0
    %v2338 = vadd.f32 0.0, %v2337
    %2339 = vmatmul.bf16.gmra.mxu0 %v2306
    %v2340 = vpop.f32.mrf.mxu0
    %v2341 = vadd.f32 0.0, %v2340
    %v2342 = vpop.f32.mrf.mxu0
    %v2343 = vadd.f32 0.0, %v2342
    %2344 = vmatmul.bf16.gmra.mxu0 %v2309
    %v2345 = vpop.f32.mrf.mxu0
    %v2346 = vadd.f32 0.0, %v2345
    %v2347 = vpop.f32.mrf.mxu0
    %v2348 = vadd.f32 0.0, %v2347
    %2349 = vmatmul.bf16.gmra.mxu0 %v2312
    %v2350 = vpop.f32.mrf.mxu0
    %v2351 = vadd.f32 0.0, %v2350
    %v2352 = vpop.f32.mrf.mxu0
    %v2353 = vadd.f32 0.0, %v2352
    %2354 = vmatmul.bf16.gmra.mxu0 %v2315
    %v2355 = vpop.f32.mrf.mxu0
    %v2356 = vadd.f32 0.0, %v2355
    %v2357 = vpop.f32.mrf.mxu0
    %v2358 = vadd.f32 0.0, %v2357
    %2359 = vmatmul.bf16.gmra.mxu0 %v2318
    %v2360 = vpop.f32.mrf.mxu0
    %v2361 = vadd.f32 0.0, %v2360
    %v2362 = vpop.f32.mrf.mxu0
    %v2363 = vadd.f32 0.0, %v2362
    %2364 = vmatmul.bf16.gmra.mxu0 %v2321
    %v2365 = vpop.f32.mrf.mxu0
    %v2366 = vadd.f32 0.0, %v2365
    %v2367 = vpop.f32.mrf.mxu0
    %v2368 = vadd.f32 0.0, %v2367
    %2369 = vmatmul.bf16.gmra.mxu0 %v2324
    %v2370 = vpop.f32.mrf.mxu0
    %v2371 = vadd.f32 0.0, %v2370
    %v2372 = vpop.f32.mrf.mxu0
    %v2373 = vadd.f32 0.0, %v2372
    %2374 = vdwg.mxu0
    %v2375 = vadd.f32 %v2253, %v2336
    %v2376 = vadd.f32 %v2254, %v2338
    %v2377 = vadd.f32 %v2255, %v2341
    %v2378 = vadd.f32 %v2256, %v2343
    %v2379 = vadd.f32 %v2257, %v2346
    %v2380 = vadd.f32 %v2258, %v2348
    %v2381 = vadd.f32 %v2259, %v2351
    %v2382 = vadd.f32 %v2260, %v2353
    %v2383 = vadd.f32 %v2261, %v2356
    %v2384 = vadd.f32 %v2262, %v2358
    %v2385 = vadd.f32 %v2263, %v2361
    %v2386 = vadd.f32 %v2264, %v2363
    %v2387 = vadd.f32 %v2265, %v2366
    %v2388 = vadd.f32 %v2266, %v2368
    %v2389 = vadd.f32 %v2267, %v2371
    %v2390 = vadd.f32 %v2268, %v2373
    %v2391 = vld [vmem:[#allocation2 + $0x140] sm:$0xff]
    %v2392 = vld [vmem:[#allocation2 + $0x148] sm:$0xff]
    %v2393 = vld [vmem:[#allocation2 + $0x150] sm:$0xff]
    %v2394 = vld [vmem:[#allocation2 + $0x158] sm:$0xff]
    %v2395 = vld [vmem:[#allocation2 + $0x160] sm:$0xff]
    %v2396 = vld [vmem:[#allocation2 + $0x168] sm:$0xff]
    %v2397 = vld [vmem:[#allocation2 + $0x170] sm:$0xff]
    %v2398 = vld [vmem:[#allocation2 + $0x178] sm:$0xff]
    %v2399 = vld [vmem:[#allocation2 + $0x380] sm:$0xff]
    %v2400 = vld [vmem:[#allocation2 + $0x388] sm:$0xff]
    %v2401 = vld [vmem:[#allocation2 + $0x390] sm:$0xff]
    %v2402 = vld [vmem:[#allocation2 + $0x398] sm:$0xff]
    %v2403 = vld [vmem:[#allocation2 + $0x3a0] sm:$0xff]
    %v2404 = vld [vmem:[#allocation2 + $0x3a8] sm:$0xff]
    %v2405 = vld [vmem:[#allocation2 + $0x3b0] sm:$0xff]
    %v2406 = vld [vmem:[#allocation2 + $0x3b8] sm:$0xff]
    %v2407 = vpack.c.bf16 %v2392, %v2391
    %v2408 = vpack.c.bf16 %v2394, %v2393
    %v2409 = vpack.c.bf16 %v2396, %v2395
    %v2410 = vpack.c.bf16 %v2398, %v2397
    %v2411 = vpack.c.bf16 %v2400, %v2399
    %v2412 = vpack.c.bf16 %v2402, %v2401
    %v2413 = vpack.c.bf16 %v2404, %v2403
    %v2414 = vpack.c.bf16 %v2406, %v2405
    %s2415 = scalar_lea.vmem [#allocation12], 40
    %v2416 = vld [vmem:[%s2415] sm:$0xf]
    %v2417 = vld [vmem:[%s2415 + $0x4] sm:$0xf]
    %v2420 = vunpack.c.l.b16 %v2416
    %v2421 = vunpack.c.l.b16 %v2417
    %v2422 = vpack.c.b16 %v2421, %v2420
    %v2425 = vsel %vm1107, %v2407, 0
    %v2428 = vsel %vm1107, %v2408, 0
    %v2431 = vsel %vm1107, %v2409, 0
    %v2434 = vsel %vm1107, %v2410, 0
    %v2437 = vsel %vm1107, %v2411, 0
    %v2440 = vsel %vm1107, %v2412, 0
    %v2443 = vsel %vm1107, %v2413, 0
    %v2446 = vsel %vm1107, %v2414, 0
    %2448 = vmatpush.bf16.msra.mxu0 0
    %2449 = vmatpush.bf16.msra.mxu0 0
    %2450 = vmatpush.bf16.msra.mxu0 0
    %2451 = vmatpush.bf16.msra.mxu0 0
    %2452 = vmatpush.bf16.msra.mxu0 0
    %2453 = vmatpush.bf16.msra.mxu0 0
    %2454 = vmatpush.bf16.msra.mxu0 0
    %2455 = vmatpush.bf16.msra.mxu0 %v2422
    %2456 = vmatmul.bf16.gmra.mxu0 %v2425
    %v2457 = vpop.f32.mrf.mxu0
    %v2458 = vadd.f32 0.0, %v2457
    %v2459 = vpop.f32.mrf.mxu0
    %v2460 = vadd.f32 0.0, %v2459
    %2461 = vmatmul.bf16.gmra.mxu0 %v2428
    %v2462 = vpop.f32.mrf.mxu0
    %v2463 = vadd.f32 0.0, %v2462
    %v2464 = vpop.f32.mrf.mxu0
    %v2465 = vadd.f32 0.0, %v2464
    %2466 = vmatmul.bf16.gmra.mxu0 %v2431
    %v2467 = vpop.f32.mrf.mxu0
    %v2468 = vadd.f32 0.0, %v2467
    %v2469 = vpop.f32.mrf.mxu0
    %v2470 = vadd.f32 0.0, %v2469
    %2471 = vmatmul.bf16.gmra.mxu0 %v2434
    %v2472 = vpop.f32.mrf.mxu0
    %v2473 = vadd.f32 0.0, %v2472
    %v2474 = vpop.f32.mrf.mxu0
    %v2475 = vadd.f32 0.0, %v2474
    %2476 = vmatmul.bf16.gmra.mxu0 %v2437
    %v2477 = vpop.f32.mrf.mxu0
    %v2478 = vadd.f32 0.0, %v2477
    %v2479 = vpop.f32.mrf.mxu0
    %v2480 = vadd.f32 0.0, %v2479
    %2481 = vmatmul.bf16.gmra.mxu0 %v2440
    %v2482 = vpop.f32.mrf.mxu0
    %v2483 = vadd.f32 0.0, %v2482
    %v2484 = vpop.f32.mrf.mxu0
    %v2485 = vadd.f32 0.0, %v2484
    %2486 = vmatmul.bf16.gmra.mxu0 %v2443
    %v2487 = vpop.f32.mrf.mxu0
    %v2488 = vadd.f32 0.0, %v2487
    %v2489 = vpop.f32.mrf.mxu0
    %v2490 = vadd.f32 0.0, %v2489
    %2491 = vmatmul.bf16.gmra.mxu0 %v2446
    %v2492 = vpop.f32.mrf.mxu0
    %v2493 = vadd.f32 0.0, %v2492
    %v2494 = vpop.f32.mrf.mxu0
    %v2495 = vadd.f32 0.0, %v2494
    %2496 = vdwg.mxu0
    %v2497 = vadd.f32 %v2375, %v2458
    %v2498 = vadd.f32 %v2376, %v2460
    %v2499 = vadd.f32 %v2377, %v2463
    %v2500 = vadd.f32 %v2378, %v2465
    %v2501 = vadd.f32 %v2379, %v2468
    %v2502 = vadd.f32 %v2380, %v2470
    %v2503 = vadd.f32 %v2381, %v2473
    %v2504 = vadd.f32 %v2382, %v2475
    %v2505 = vadd.f32 %v2383, %v2478
    %v2506 = vadd.f32 %v2384, %v2480
    %v2507 = vadd.f32 %v2385, %v2483
    %v2508 = vadd.f32 %v2386, %v2485
    %v2509 = vadd.f32 %v2387, %v2488
    %v2510 = vadd.f32 %v2388, %v2490
    %v2511 = vadd.f32 %v2389, %v2493
    %v2512 = vadd.f32 %v2390, %v2495
    %v2513 = vld [vmem:[#allocation2 + $0x180] sm:$0xff]
    %v2514 = vld [vmem:[#allocation2 + $0x188] sm:$0xff]
    %v2515 = vld [vmem:[#allocation2 + $0x190] sm:$0xff]
    %v2516 = vld [vmem:[#allocation2 + $0x198] sm:$0xff]
    %v2517 = vld [vmem:[#allocation2 + $0x1a0] sm:$0xff]
    %v2518 = vld [vmem:[#allocation2 + $0x1a8] sm:$0xff]
    %v2519 = vld [vmem:[#allocation2 + $0x1b0] sm:$0xff]
    %v2520 = vld [vmem:[#allocation2 + $0x1b8] sm:$0xff]
    %v2521 = vld [vmem:[#allocation2 + $0x3c0] sm:$0xff]
    %v2522 = vld [vmem:[#allocation2 + $0x3c8] sm:$0xff]
    %v2523 = vld [vmem:[#allocation2 + $0x3d0] sm:$0xff]
    %v2524 = vld [vmem:[#allocation2 + $0x3d8] sm:$0xff]
    %v2525 = vld [vmem:[#allocation2 + $0x3e0] sm:$0xff]
    %v2526 = vld [vmem:[#allocation2 + $0x3e8] sm:$0xff]
    %v2527 = vld [vmem:[#allocation2 + $0x3f0] sm:$0xff]
    %v2528 = vld [vmem:[#allocation2 + $0x3f8] sm:$0xff]
    %v2529 = vpack.c.bf16 %v2514, %v2513
    %v2530 = vpack.c.bf16 %v2516, %v2515
    %v2531 = vpack.c.bf16 %v2518, %v2517
    %v2532 = vpack.c.bf16 %v2520, %v2519
    %v2533 = vpack.c.bf16 %v2522, %v2521
    %v2534 = vpack.c.bf16 %v2524, %v2523
    %v2535 = vpack.c.bf16 %v2526, %v2525
    %v2536 = vpack.c.bf16 %v2528, %v2527
    %s2537 = scalar_lea.vmem [#allocation12], 48
    %v2538 = vld [vmem:[%s2537] sm:$0xf]
    %v2539 = vld [vmem:[%s2537 + $0x4] sm:$0xf]
    %v2542 = vunpack.c.l.b16 %v2538
    %v2543 = vunpack.c.l.b16 %v2539
    %v2544 = vpack.c.b16 %v2543, %v2542
    %v2547 = vsel %vm1107, %v2529, 0
    %v2550 = vsel %vm1107, %v2530, 0
    %v2553 = vsel %vm1107, %v2531, 0
    %v2556 = vsel %vm1107, %v2532, 0
    %v2559 = vsel %vm1107, %v2533, 0
    %v2562 = vsel %vm1107, %v2534, 0
    %v2565 = vsel %vm1107, %v2535, 0
    %v2568 = vsel %vm1107, %v2536, 0
    %2570 = vmatpush.bf16.msra.mxu0 0
    %2571 = vmatpush.bf16.msra.mxu0 0
    %2572 = vmatpush.bf16.msra.mxu0 0
    %2573 = vmatpush.bf16.msra.mxu0 0
    %2574 = vmatpush.bf16.msra.mxu0 0
    %2575 = vmatpush.bf16.msra.mxu0 0
    %2576 = vmatpush.bf16.msra.mxu0 0
    %2577 = vmatpush.bf16.msra.mxu0 %v2544
    %2578 = vmatmul.bf16.gmra.mxu0 %v2547
    %v2579 = vpop.f32.mrf.mxu0
    %v2580 = vadd.f32 0.0, %v2579
    %v2581 = vpop.f32.mrf.mxu0
    %v2582 = vadd.f32 0.0, %v2581
    %2583 = vmatmul.bf16.gmra.mxu0 %v2550
    %v2584 = vpop.f32.mrf.mxu0
    %v2585 = vadd.f32 0.0, %v2584
    %v2586 = vpop.f32.mrf.mxu0
    %v2587 = vadd.f32 0.0, %v2586
    %2588 = vmatmul.bf16.gmra.mxu0 %v2553
    %v2589 = vpop.f32.mrf.mxu0
    %v2590 = vadd.f32 0.0, %v2589
    %v2591 = vpop.f32.mrf.mxu0
    %v2592 = vadd.f32 0.0, %v2591
    %2593 = vmatmul.bf16.gmra.mxu0 %v2556
    %v2594 = vpop.f32.mrf.mxu0
    %v2595 = vadd.f32 0.0, %v2594
    %v2596 = vpop.f32.mrf.mxu0
    %v2597 = vadd.f32 0.0, %v2596
    %2598 = vmatmul.bf16.gmra.mxu0 %v2559
    %v2599 = vpop.f32.mrf.mxu0
    %v2600 = vadd.f32 0.0, %v2599
    %v2601 = vpop.f32.mrf.mxu0
    %v2602 = vadd.f32 0.0, %v2601
    %2603 = vmatmul.bf16.gmra.mxu0 %v2562
    %v2604 = vpop.f32.mrf.mxu0
    %v2605 = vadd.f32 0.0, %v2604
    %v2606 = vpop.f32.mrf.mxu0
    %v2607 = vadd.f32 0.0, %v2606
    %2608 = vmatmul.bf16.gmra.mxu0 %v2565
    %v2609 = vpop.f32.mrf.mxu0
    %v2610 = vadd.f32 0.0, %v2609
    %v2611 = vpop.f32.mrf.mxu0
    %v2612 = vadd.f32 0.0, %v2611
    %2613 = vmatmul.bf16.gmra.mxu0 %v2568
    %v2614 = vpop.f32.mrf.mxu0
    %v2615 = vadd.f32 0.0, %v2614
    %v2616 = vpop.f32.mrf.mxu0
    %v2617 = vadd.f32 0.0, %v2616
    %2618 = vdwg.mxu0
    %v2619 = vadd.f32 %v2497, %v2580
    %v2620 = vadd.f32 %v2498, %v2582
    %v2621 = vadd.f32 %v2499, %v2585
    %v2622 = vadd.f32 %v2500, %v2587
    %v2623 = vadd.f32 %v2501, %v2590
    %v2624 = vadd.f32 %v2502, %v2592
    %v2625 = vadd.f32 %v2503, %v2595
    %v2626 = vadd.f32 %v2504, %v2597
    %v2627 = vadd.f32 %v2505, %v2600
    %v2628 = vadd.f32 %v2506, %v2602
    %v2629 = vadd.f32 %v2507, %v2605
    %v2630 = vadd.f32 %v2508, %v2607
    %v2631 = vadd.f32 %v2509, %v2610
    %v2632 = vadd.f32 %v2510, %v2612
    %v2633 = vadd.f32 %v2511, %v2615
    %v2634 = vadd.f32 %v2512, %v2617
    %v2635 = vld [vmem:[#allocation2 + $0x1c0] sm:$0xff]
    %v2636 = vld [vmem:[#allocation2 + $0x1c8] sm:$0xff]
    %v2637 = vld [vmem:[#allocation2 + $0x1d0] sm:$0xff]
    %v2638 = vld [vmem:[#allocation2 + $0x1d8] sm:$0xff]
    %v2639 = vld [vmem:[#allocation2 + $0x1e0] sm:$0xff]
    %v2640 = vld [vmem:[#allocation2 + $0x1e8] sm:$0xff]
    %v2641 = vld [vmem:[#allocation2 + $0x1f0] sm:$0xff]
    %v2642 = vld [vmem:[#allocation2 + $0x1f8] sm:$0xff]
    %v2643 = vld [vmem:[#allocation2 + $0x400] sm:$0xff]
    %v2644 = vld [vmem:[#allocation2 + $0x408] sm:$0xff]
    %v2645 = vld [vmem:[#allocation2 + $0x410] sm:$0xff]
    %v2646 = vld [vmem:[#allocation2 + $0x418] sm:$0xff]
    %v2647 = vld [vmem:[#allocation2 + $0x420] sm:$0xff]
    %v2648 = vld [vmem:[#allocation2 + $0x428] sm:$0xff]
    %v2649 = vld [vmem:[#allocation2 + $0x430] sm:$0xff]
    %v2650 = vld [vmem:[#allocation2 + $0x438] sm:$0xff]
    %v2651 = vpack.c.bf16 %v2636, %v2635
    %v2652 = vpack.c.bf16 %v2638, %v2637
    %v2653 = vpack.c.bf16 %v2640, %v2639
    %v2654 = vpack.c.bf16 %v2642, %v2641
    %v2655 = vpack.c.bf16 %v2644, %v2643
    %v2656 = vpack.c.bf16 %v2646, %v2645
    %v2657 = vpack.c.bf16 %v2648, %v2647
    %v2658 = vpack.c.bf16 %v2650, %v2649
    %s2659 = scalar_lea.vmem [#allocation12], 56
    %v2660 = vld [vmem:[%s2659] sm:$0xf]
    %v2661 = vld [vmem:[%s2659 + $0x4] sm:$0xf]
    %v2664 = vunpack.c.l.b16 %v2660
    %v2665 = vunpack.c.l.b16 %v2661
    %v2666 = vpack.c.b16 %v2665, %v2664
    %v2669 = vsel %vm1107, %v2651, 0
    %v2672 = vsel %vm1107, %v2652, 0
    %v2675 = vsel %vm1107, %v2653, 0
    %v2678 = vsel %vm1107, %v2654, 0
    %v2681 = vsel %vm1107, %v2655, 0
    %v2684 = vsel %vm1107, %v2656, 0
    %v2687 = vsel %vm1107, %v2657, 0
    %v2690 = vsel %vm1107, %v2658, 0
    %2692 = vmatpush.bf16.msra.mxu0 0
    %2693 = vmatpush.bf16.msra.mxu0 0
    %2694 = vmatpush.bf16.msra.mxu0 0
    %2695 = vmatpush.bf16.msra.mxu0 0
    %2696 = vmatpush.bf16.msra.mxu0 0
    %2697 = vmatpush.bf16.msra.mxu0 0
    %2698 = vmatpush.bf16.msra.mxu0 0
    %2699 = vmatpush.bf16.msra.mxu0 %v2666
    %2700 = vmatmul.bf16.gmra.mxu0 %v2669
    %v2701 = vpop.f32.mrf.mxu0
    %v2702 = vadd.f32 0.0, %v2701
    %v2703 = vpop.f32.mrf.mxu0
    %v2704 = vadd.f32 0.0, %v2703
    %2705 = vmatmul.bf16.gmra.mxu0 %v2672
    %v2706 = vpop.f32.mrf.mxu0
    %v2707 = vadd.f32 0.0, %v2706
    %v2708 = vpop.f32.mrf.mxu0
    %v2709 = vadd.f32 0.0, %v2708
    %2710 = vmatmul.bf16.gmra.mxu0 %v2675
    %v2711 = vpop.f32.mrf.mxu0
    %v2712 = vadd.f32 0.0, %v2711
    %v2713 = vpop.f32.mrf.mxu0
    %v2714 = vadd.f32 0.0, %v2713
    %2715 = vmatmul.bf16.gmra.mxu0 %v2678
    %v2716 = vpop.f32.mrf.mxu0
    %v2717 = vadd.f32 0.0, %v2716
    %v2718 = vpop.f32.mrf.mxu0
    %v2719 = vadd.f32 0.0, %v2718
    %2720 = vmatmul.bf16.gmra.mxu0 %v2681
    %v2721 = vpop.f32.mrf.mxu0
    %v2722 = vadd.f32 0.0, %v2721
    %v2723 = vpop.f32.mrf.mxu0
    %v2724 = vadd.f32 0.0, %v2723
    %2725 = vmatmul.bf16.gmra.mxu0 %v2684
    %v2726 = vpop.f32.mrf.mxu0
    %v2727 = vadd.f32 0.0, %v2726
    %v2728 = vpop.f32.mrf.mxu0
    %v2729 = vadd.f32 0.0, %v2728
    %2730 = vmatmul.bf16.gmra.mxu0 %v2687
    %v2731 = vpop.f32.mrf.mxu0
    %v2732 = vadd.f32 0.0, %v2731
    %v2733 = vpop.f32.mrf.mxu0
    %v2734 = vadd.f32 0.0, %v2733
    %2735 = vmatmul.bf16.gmra.mxu0 %v2690
    %v2736 = vpop.f32.mrf.mxu0
    %v2737 = vadd.f32 0.0, %v2736
    %v2738 = vpop.f32.mrf.mxu0
    %v2739 = vadd.f32 0.0, %v2738
    %2740 = vdwg.mxu0
    %v2741 = vadd.f32 %v2619, %v2702
    %v2742 = vadd.f32 %v2620, %v2704
    %v2743 = vadd.f32 %v2621, %v2707
    %v2744 = vadd.f32 %v2622, %v2709
    %v2745 = vadd.f32 %v2623, %v2712
    %v2746 = vadd.f32 %v2624, %v2714
    %v2747 = vadd.f32 %v2625, %v2717
    %v2748 = vadd.f32 %v2626, %v2719
    %v2749 = vadd.f32 %v2627, %v2722
    %v2750 = vadd.f32 %v2628, %v2724
    %v2751 = vadd.f32 %v2629, %v2727
    %v2752 = vadd.f32 %v2630, %v2729
    %v2753 = vadd.f32 %v2631, %v2732
    %v2754 = vadd.f32 %v2632, %v2734
    %v2755 = vadd.f32 %v2633, %v2737
    %v2756 = vadd.f32 %v2634, %v2739
    %v2757 = vld [vmem:[#allocation2 + $0x200] sm:$0xff]
    %v2758 = vld [vmem:[#allocation2 + $0x208] sm:$0xff]
    %v2759 = vld [vmem:[#allocation2 + $0x210] sm:$0xff]
    %v2760 = vld [vmem:[#allocation2 + $0x218] sm:$0xff]
    %v2761 = vld [vmem:[#allocation2 + $0x220] sm:$0xff]
    %v2762 = vld [vmem:[#allocation2 + $0x228] sm:$0xff]
    %v2763 = vld [vmem:[#allocation2 + $0x230] sm:$0xff]
    %v2764 = vld [vmem:[#allocation2 + $0x238] sm:$0xff]
    %v2765 = vld [vmem:[#allocation2 + $0x440] sm:$0xff]
    %v2766 = vld [vmem:[#allocation2 + $0x448] sm:$0xff]
    %v2767 = vld [vmem:[#allocation2 + $0x450] sm:$0xff]
    %v2768 = vld [vmem:[#allocation2 + $0x458] sm:$0xff]
    %v2769 = vld [vmem:[#allocation2 + $0x460] sm:$0xff]
    %v2770 = vld [vmem:[#allocation2 + $0x468] sm:$0xff]
    %v2771 = vld [vmem:[#allocation2 + $0x470] sm:$0xff]
    %v2772 = vld [vmem:[#allocation2 + $0x478] sm:$0xff]
    %v2773 = vpack.c.bf16 %v2758, %v2757
    %v2774 = vpack.c.bf16 %v2760, %v2759
    %v2775 = vpack.c.bf16 %v2762, %v2761
    %v2776 = vpack.c.bf16 %v2764, %v2763
    %v2777 = vpack.c.bf16 %v2766, %v2765
    %v2778 = vpack.c.bf16 %v2768, %v2767
    %v2779 = vpack.c.bf16 %v2770, %v2769
    %v2780 = vpack.c.bf16 %v2772, %v2771
    %s2781 = scalar_lea.vmem [#allocation12], 64
    %v2782 = vld [vmem:[%s2781] sm:$0xf]
    %v2783 = vld [vmem:[%s2781 + $0x4] sm:$0xf]
    %v2786 = vunpack.c.l.b16 %v2782
    %v2787 = vunpack.c.l.b16 %v2783
    %v2788 = vpack.c.b16 %v2787, %v2786
    %v2791 = vsel %vm1107, %v2773, 0
    %v2794 = vsel %vm1107, %v2774, 0
    %v2797 = vsel %vm1107, %v2775, 0
    %v2800 = vsel %vm1107, %v2776, 0
    %v2803 = vsel %vm1107, %v2777, 0
    %v2806 = vsel %vm1107, %v2778, 0
    %v2809 = vsel %vm1107, %v2779, 0
    %v2812 = vsel %vm1107, %v2780, 0
    %2814 = vmatpush.bf16.msra.mxu0 0
    %2815 = vmatpush.bf16.msra.mxu0 0
    %2816 = vmatpush.bf16.msra.mxu0 0
    %2817 = vmatpush.bf16.msra.mxu0 0
    %2818 = vmatpush.bf16.msra.mxu0 0
    %2819 = vmatpush.bf16.msra.mxu0 0
    %2820 = vmatpush.bf16.msra.mxu0 0
    %2821 = vmatpush.bf16.msra.mxu0 %v2788
    %2822 = vmatmul.bf16.gmra.mxu0 %v2791
    %v2823 = vpop.f32.mrf.mxu0
    %v2824 = vadd.f32 0.0, %v2823
    %v2825 = vpop.f32.mrf.mxu0
    %v2826 = vadd.f32 0.0, %v2825
    %2827 = vmatmul.bf16.gmra.mxu0 %v2794
    %v2828 = vpop.f32.mrf.mxu0
    %v2829 = vadd.f32 0.0, %v2828
    %v2830 = vpop.f32.mrf.mxu0
    %v2831 = vadd.f32 0.0, %v2830
    %2832 = vmatmul.bf16.gmra.mxu0 %v2797
    %v2833 = vpop.f32.mrf.mxu0
    %v2834 = vadd.f32 0.0, %v2833
    %v2835 = vpop.f32.mrf.mxu0
    %v2836 = vadd.f32 0.0, %v2835
    %2837 = vmatmul.bf16.gmra.mxu0 %v2800
    %v2838 = vpop.f32.mrf.mxu0
    %v2839 = vadd.f32 0.0, %v2838
    %v2840 = vpop.f32.mrf.mxu0
    %v2841 = vadd.f32 0.0, %v2840
    %2842 = vmatmul.bf16.gmra.mxu0 %v2803
    %v2843 = vpop.f32.mrf.mxu0
    %v2844 = vadd.f32 0.0, %v2843
    %v2845 = vpop.f32.mrf.mxu0
    %v2846 = vadd.f32 0.0, %v2845
    %2847 = vmatmul.bf16.gmra.mxu0 %v2806
    %v2848 = vpop.f32.mrf.mxu0
    %v2849 = vadd.f32 0.0, %v2848
    %v2850 = vpop.f32.mrf.mxu0
    %v2851 = vadd.f32 0.0, %v2850
    %2852 = vmatmul.bf16.gmra.mxu0 %v2809
    %v2853 = vpop.f32.mrf.mxu0
    %v2854 = vadd.f32 0.0, %v2853
    %v2855 = vpop.f32.mrf.mxu0
    %v2856 = vadd.f32 0.0, %v2855
    %2857 = vmatmul.bf16.gmra.mxu0 %v2812
    %v2858 = vpop.f32.mrf.mxu0
    %v2859 = vadd.f32 0.0, %v2858
    %v2860 = vpop.f32.mrf.mxu0
    %v2861 = vadd.f32 0.0, %v2860
    %2862 = vdwg.mxu0
    %v2863 = vadd.f32 %v2741, %v2824
    %v2864 = vadd.f32 %v2742, %v2826
    %v2865 = vadd.f32 %v2743, %v2829
    %v2866 = vadd.f32 %v2744, %v2831
    %v2867 = vadd.f32 %v2745, %v2834
    %v2868 = vadd.f32 %v2746, %v2836
    %v2869 = vadd.f32 %v2747, %v2839
    %v2870 = vadd.f32 %v2748, %v2841
    %v2871 = vadd.f32 %v2749, %v2844
    %v2872 = vadd.f32 %v2750, %v2846
    %v2873 = vadd.f32 %v2751, %v2849
    %v2874 = vadd.f32 %v2752, %v2851
    %v2875 = vadd.f32 %v2753, %v2854
    %v2876 = vadd.f32 %v2754, %v2856
    %v2877 = vadd.f32 %v2755, %v2859
    %v2878 = vadd.f32 %v2756, %v2861
    %v2879 = vld [vmem:[%s5] sm:$0xff]
    %v2880 = vld [vmem:[%s5 + $0x8] sm:$0xff]
    %v2881 = vld [vmem:[%s5 + $0x10] sm:$0xff]
    %v2882 = vld [vmem:[%s5 + $0x18] sm:$0xff]
    %v2883 = vld [vmem:[%s5 + $0x20] sm:$0xff]
    %v2884 = vld [vmem:[%s5 + $0x28] sm:$0xff]
    %v2885 = vld [vmem:[%s5 + $0x30] sm:$0xff]
    %v2886 = vld [vmem:[%s5 + $0x38] sm:$0xff]
    %2888 = vset.pattern.permute.xlu0 0
    %2889 = vperm.xlu0 %2888, %v2879
    %v2890 = vpop.permute.xlu0 %2889
    %2893 = vset.pattern.permute.xlu0 0
    %2894 = vperm.xlu0 %2893, %v2880
    %v2895 = vpop.permute.xlu0 %2894
    %2898 = vset.pattern.permute.xlu0 0
    %2899 = vperm.xlu0 %2898, %v2881
    %v2900 = vpop.permute.xlu0 %2899
    %2903 = vset.pattern.permute.xlu0 0
    %2904 = vperm.xlu0 %2903, %v2882
    %v2905 = vpop.permute.xlu0 %2904
    %2908 = vset.pattern.permute.xlu0 0
    %2909 = vperm.xlu0 %2908, %v2883
    %v2910 = vpop.permute.xlu0 %2909
    %2913 = vset.pattern.permute.xlu0 0
    %2914 = vperm.xlu0 %2913, %v2884
    %v2915 = vpop.permute.xlu0 %2914
    %2918 = vset.pattern.permute.xlu0 0
    %2919 = vperm.xlu0 %2918, %v2885
    %v2920 = vpop.permute.xlu0 %2919
    %2923 = vset.pattern.permute.xlu0 0
    %2924 = vperm.xlu0 %2923, %v2886
    %v2925 = vpop.permute.xlu0 %2924
    %v2927 = vadd.f32 %v2863, %v2890
    %v2928 = vadd.f32 %v2864, %v2895
    %v2929 = vadd.f32 %v2865, %v2900
    %v2930 = vadd.f32 %v2866, %v2905
    %v2931 = vadd.f32 %v2867, %v2910
    %v2932 = vadd.f32 %v2868, %v2915
    %v2933 = vadd.f32 %v2869, %v2920
    %v2934 = vadd.f32 %v2870, %v2925
    %v2935 = vadd.f32 %v2871, %v2890
    %v2936 = vadd.f32 %v2872, %v2895
    %v2937 = vadd.f32 %v2873, %v2900
    %v2938 = vadd.f32 %v2874, %v2905
    %v2939 = vadd.f32 %v2875, %v2910
    %v2940 = vadd.f32 %v2876, %v2915
    %v2941 = vadd.f32 %v2877, %v2920
    %v2942 = vadd.f32 %v2878, %v2925
    %v2943 = vmax.f32 %v2927, 0.0
    %v2944 = vmax.f32 %v2928, 0.0
    %v2945 = vmax.f32 %v2929, 0.0
    %v2946 = vmax.f32 %v2930, 0.0
    %v2947 = vmax.f32 %v2931, 0.0
    %v2948 = vmax.f32 %v2932, 0.0
    %v2949 = vmax.f32 %v2933, 0.0
    %v2950 = vmax.f32 %v2934, 0.0
    %v2951 = vmax.f32 %v2935, 0.0
    %v2952 = vmax.f32 %v2936, 0.0
    %v2953 = vmax.f32 %v2937, 0.0
    %v2954 = vmax.f32 %v2938, 0.0
    %v2955 = vmax.f32 %v2939, 0.0
    %v2956 = vmax.f32 %v2940, 0.0
    %v2957 = vmax.f32 %v2941, 0.0
    %v2958 = vmax.f32 %v2942, 0.0
    %v2959 = vpack.c.bf16 %v2944, %v2943
    %v2960 = vpack.c.bf16 %v2946, %v2945
    %v2961 = vpack.c.bf16 %v2948, %v2947
    %v2962 = vpack.c.bf16 %v2950, %v2949
    %v2963 = vld [vmem:[%s6] sm:$0xf]
    %v2964 = vld [vmem:[%s6 + $0x4] sm:$0xf]
    %v2965 = vld [vmem:[%s6 + $0x8] sm:$0xf]
    %v2966 = vld [vmem:[%s6 + $0xc] sm:$0xf]
    %v2967 = vld [vmem:[%s6 + $0x10] sm:$0xf]
    %v2968 = vld [vmem:[%s6 + $0x14] sm:$0xf]
    %v2969 = vld [vmem:[%s6 + $0x18] sm:$0xf]
    %v2970 = vld [vmem:[%s6 + $0x1c] sm:$0xf]
    %v2971 = vld [vmem:[%s6 + $0x20] sm:$0xf]
    %v2972 = vld [vmem:[%s6 + $0x24] sm:$0xf]
    %v2973 = vld [vmem:[%s6 + $0x28] sm:$0xf]
    %v2974 = vld [vmem:[%s6 + $0x2c] sm:$0xf]
    %v2975 = vld [vmem:[%s6 + $0x30] sm:$0xf]
    %v2976 = vld [vmem:[%s6 + $0x34] sm:$0xf]
    %v2977 = vld [vmem:[%s6 + $0x38] sm:$0xf]
    %v2978 = vld [vmem:[%s6 + $0x3c] sm:$0xf]
    %v2979 = vld [vmem:[%s6 + $0x40] sm:$0xf]
    %v2980 = vld [vmem:[%s6 + $0x44] sm:$0xf]
    %v2981 = vld [vmem:[%s6 + $0x48] sm:$0xf]
    %v2982 = vld [vmem:[%s6 + $0x4c] sm:$0xf]
    %v2983 = vld [vmem:[%s6 + $0x50] sm:$0xf]
    %v2984 = vld [vmem:[%s6 + $0x54] sm:$0xf]
    %v2985 = vld [vmem:[%s6 + $0x58] sm:$0xf]
    %v2986 = vld [vmem:[%s6 + $0x5c] sm:$0xf]
    %v2987 = vld [vmem:[%s6 + $0x60] sm:$0xf]
    %v2988 = vld [vmem:[%s6 + $0x64] sm:$0xf]
    %v2989 = vld [vmem:[%s6 + $0x68] sm:$0xf]
    %v2990 = vld [vmem:[%s6 + $0x6c] sm:$0xf]
    %v2991 = vld [vmem:[%s6 + $0x70] sm:$0xf]
    %v2992 = vld [vmem:[%s6 + $0x74] sm:$0xf]
    %v2993 = vld [vmem:[%s6 + $0x78] sm:$0xf]
    %v2994 = vld [vmem:[%s6 + $0x7c] sm:$0xf]
    %v2995 = vld [vmem:[%s6 + $0x80] sm:$0xf]
    %v2996 = vld [vmem:[%s6 + $0x84] sm:$0xf]
    %v2997 = vld [vmem:[%s6 + $0x88] sm:$0xf]
    %v2998 = vld [vmem:[%s6 + $0x8c] sm:$0xf]
    %v3035 = vunpack.c.l.b16 %v2963
    %v3036 = vunpack.c.l.b16 %v2964
    %v3037 = vunpack.c.l.b16 %v2965
    %v3038 = vunpack.c.l.b16 %v2966
    %v3039 = vunpack.c.l.b16 %v2967
    %v3040 = vunpack.c.l.b16 %v2968
    %v3041 = vunpack.c.l.b16 %v2969
    %v3042 = vunpack.c.l.b16 %v2970
    %v3043 = vunpack.c.l.b16 %v2971
    %v3044 = vunpack.c.l.b16 %v2972
    %v3045 = vunpack.c.l.b16 %v2973
    %v3046 = vunpack.c.l.b16 %v2974
    %v3047 = vunpack.c.l.b16 %v2975
    %v3048 = vunpack.c.l.b16 %v2976
    %v3049 = vunpack.c.l.b16 %v2977
    %v3050 = vunpack.c.l.b16 %v2978
    %v3051 = vunpack.c.l.b16 %v2979
    %v3052 = vunpack.c.l.b16 %v2980
    %v3053 = vunpack.c.l.b16 %v2981
    %v3054 = vunpack.c.l.b16 %v2982
    %v3055 = vunpack.c.l.b16 %v2983
    %v3056 = vunpack.c.l.b16 %v2984
    %v3057 = vunpack.c.l.b16 %v2985
    %v3058 = vunpack.c.l.b16 %v2986
    %v3059 = vunpack.c.l.b16 %v2987
    %v3060 = vunpack.c.l.b16 %v2988
    %v3061 = vunpack.c.l.b16 %v2989
    %v3062 = vunpack.c.l.b16 %v2990
    %v3063 = vunpack.c.l.b16 %v2991
    %v3064 = vunpack.c.l.b16 %v2992
    %v3065 = vunpack.c.l.b16 %v2993
    %v3066 = vunpack.c.l.b16 %v2994
    %v3067 = vunpack.c.l.b16 %v2995
    %v3068 = vunpack.c.l.b16 %v2996
    %v3069 = vunpack.c.l.b16 %v2997
    %v3070 = vunpack.c.l.b16 %v2998
    %v3071 = vpack.c.b16 %v3036, %v3035
    %v3072 = vpack.c.b16 %v3038, %v3037
    %v3073 = vpack.c.b16 %v3040, %v3039
    %v3074 = vpack.c.b16 %v3042, %v3041
    %v3075 = vpack.c.b16 %v3044, %v3043
    %v3076 = vpack.c.b16 %v3046, %v3045
    %v3077 = vpack.c.b16 %v3048, %v3047
    %v3078 = vpack.c.b16 %v3050, %v3049
    %v3079 = vpack.c.b16 %v3052, %v3051
    %v3080 = vpack.c.b16 %v3054, %v3053
    %v3081 = vpack.c.b16 %v3056, %v3055
    %v3082 = vpack.c.b16 %v3058, %v3057
    %v3083 = vpack.c.b16 %v3060, %v3059
    %v3084 = vpack.c.b16 %v3062, %v3061
    %v3085 = vpack.c.b16 %v3064, %v3063
    %v3086 = vpack.c.b16 %v3066, %v3065
    %v3087 = vpack.c.b16 %v3068, %v3067
    %v3088 = vpack.c.b16 %v3070, %v3069
    %vm3089 = vcmask 523264
    %v3091 = vsel %vm3089, %v3071, 0
    %v3094 = vsel %vm3089, %v3072, 0
    %v3097 = vsel %vm3089, %v3073, 0
    %v3100 = vsel %vm3089, %v3074, 0
    %v3103 = vsel %vm3089, %v3075, 0
    %v3106 = vsel %vm3089, %v3076, 0
    %v3109 = vsel %vm3089, %v3077, 0
    %v3112 = vsel %vm3089, %v3078, 0
    %v3115 = vsel %vm3089, %v3079, 0
    %v3118 = vsel %vm3089, %v3080, 0
    %v3121 = vsel %vm3089, %v3081, 0
    %v3124 = vsel %vm3089, %v3082, 0
    %v3127 = vsel %vm3089, %v3083, 0
    %v3130 = vsel %vm3089, %v3084, 0
    %v3133 = vsel %vm3089, %v3085, 0
    %v3136 = vsel %vm3089, %v3086, 0
    %v3139 = vsel %vm3089, %v3087, 0
    %v3142 = vsel %vm3089, %v3088, 0
    %3144 = vmatpush.bf16.msra.mxu0 0
    %3145 = vmatpush.bf16.msra.mxu0 0
    %3146 = vmatpush.bf16.msra.mxu0 0
    %3147 = vmatpush.bf16.msra.mxu0 0
    %3148 = vmatpush.bf16.msra.mxu0 %v2962
    %3149 = vmatpush.bf16.msra.mxu0 %v2961
    %3150 = vmatpush.bf16.msra.mxu0 %v2960
    %3151 = vmatpush.bf16.msra.mxu0 %v2959
    %3152 = vmatmul.bf16.gmra.mxu0 %v3091
    %v3153 = vpop.f32.mrf.mxu0
    %v3154 = vadd.f32 0.0, %v3153
    %v3155 = vpop.f32.mrf.mxu0
    %v3156 = vadd.f32 0.0, %v3155
    %3157 = vmatmul.bf16.gmra.mxu0 %v3094
    %v3158 = vpop.f32.mrf.mxu0
    %v3159 = vadd.f32 0.0, %v3158
    %v3160 = vpop.f32.mrf.mxu0
    %v3161 = vadd.f32 0.0, %v3160
    %3162 = vmatmul.bf16.gmra.mxu0 %v3097
    %v3163 = vpop.f32.mrf.mxu0
    %v3164 = vadd.f32 0.0, %v3163
    %v3165 = vpop.f32.mrf.mxu0
    %v3166 = vadd.f32 0.0, %v3165
    %3167 = vmatmul.bf16.gmra.mxu0 %v3100
    %v3168 = vpop.f32.mrf.mxu0
    %v3169 = vadd.f32 0.0, %v3168
    %v3170 = vpop.f32.mrf.mxu0
    %v3171 = vadd.f32 0.0, %v3170
    %3172 = vmatmul.bf16.gmra.mxu0 %v3103
    %v3173 = vpop.f32.mrf.mxu0
    %v3174 = vadd.f32 0.0, %v3173
    %v3175 = vpop.f32.mrf.mxu0
    %v3176 = vadd.f32 0.0, %v3175
    %3177 = vmatmul.bf16.gmra.mxu0 %v3106
    %v3178 = vpop.f32.mrf.mxu0
    %v3179 = vadd.f32 0.0, %v3178
    %v3180 = vpop.f32.mrf.mxu0
    %v3181 = vadd.f32 0.0, %v3180
    %3182 = vmatmul.bf16.gmra.mxu0 %v3109
    %v3183 = vpop.f32.mrf.mxu0
    %v3184 = vadd.f32 0.0, %v3183
    %v3185 = vpop.f32.mrf.mxu0
    %v3186 = vadd.f32 0.0, %v3185
    %3187 = vmatmul.bf16.gmra.mxu0 %v3112
    %v3188 = vpop.f32.mrf.mxu0
    %v3189 = vadd.f32 0.0, %v3188
    %v3190 = vpop.f32.mrf.mxu0
    %v3191 = vadd.f32 0.0, %v3190
    %3192 = vmatmul.bf16.gmra.mxu0 %v3115
    %v3193 = vpop.f32.mrf.mxu0
    %v3194 = vadd.f32 0.0, %v3193
    %v3195 = vpop.f32.mrf.mxu0
    %v3196 = vadd.f32 0.0, %v3195
    %3197 = vmatmul.bf16.gmra.mxu0 %v3118
    %v3198 = vpop.f32.mrf.mxu0
    %v3199 = vadd.f32 0.0, %v3198
    %v3200 = vpop.f32.mrf.mxu0
    %v3201 = vadd.f32 0.0, %v3200
    %3202 = vmatmul.bf16.gmra.mxu0 %v3121
    %v3203 = vpop.f32.mrf.mxu0
    %v3204 = vadd.f32 0.0, %v3203
    %v3205 = vpop.f32.mrf.mxu0
    %v3206 = vadd.f32 0.0, %v3205
    %3207 = vmatmul.bf16.gmra.mxu0 %v3124
    %v3208 = vpop.f32.mrf.mxu0
    %v3209 = vadd.f32 0.0, %v3208
    %v3210 = vpop.f32.mrf.mxu0
    %v3211 = vadd.f32 0.0, %v3210
    %3212 = vmatmul.bf16.gmra.mxu0 %v3127
    %v3213 = vpop.f32.mrf.mxu0
    %v3214 = vadd.f32 0.0, %v3213
    %v3215 = vpop.f32.mrf.mxu0
    %v3216 = vadd.f32 0.0, %v3215
    %3217 = vmatmul.bf16.gmra.mxu0 %v3130
    %v3218 = vpop.f32.mrf.mxu0
    %v3219 = vadd.f32 0.0, %v3218
    %v3220 = vpop.f32.mrf.mxu0
    %v3221 = vadd.f32 0.0, %v3220
    %3222 = vmatmul.bf16.gmra.mxu0 %v3133
    %v3223 = vpop.f32.mrf.mxu0
    %v3224 = vadd.f32 0.0, %v3223
    %v3225 = vpop.f32.mrf.mxu0
    %v3226 = vadd.f32 0.0, %v3225
    %3227 = vmatmul.bf16.gmra.mxu0 %v3136
    %v3228 = vpop.f32.mrf.mxu0
    %v3229 = vadd.f32 0.0, %v3228
    %v3230 = vpop.f32.mrf.mxu0
    %v3231 = vadd.f32 0.0, %v3230
    %3232 = vmatmul.bf16.gmra.mxu0 %v3139
    %v3233 = vpop.f32.mrf.mxu0
    %v3234 = vadd.f32 0.0, %v3233
    %v3235 = vpop.f32.mrf.mxu0
    %v3236 = vadd.f32 0.0, %v3235
    %3237 = vmatmul.bf16.gmra.mxu0 %v3142
    %v3238 = vpop.f32.mrf.mxu0
    %v3239 = vadd.f32 0.0, %v3238
    %v3240 = vpop.f32.mrf.mxu0
    %v3241 = vadd.f32 0.0, %v3240
    %3242 = vdwg.mxu0
    %vm3243 = vcmask 400384
    %3244 = vst.msk [vmem:[#allocation3] sm:$0xff] %vm3243, %v3154
    %3245 = vst.msk [vmem:[#allocation3 + $0x8] sm:$0xff] %vm3243, %v3156
    %3246 = vst.msk [vmem:[#allocation3 + $0x10] sm:$0xff] %vm3243, %v3159
    %3247 = vst.msk [vmem:[#allocation3 + $0x18] sm:$0xff] %vm3243, %v3161
    %3248 = vst.msk [vmem:[#allocation3 + $0x20] sm:$0xff] %vm3243, %v3164
    %3249 = vst.msk [vmem:[#allocation3 + $0x28] sm:$0xff] %vm3243, %v3166
    %3250 = vst.msk [vmem:[#allocation3 + $0x30] sm:$0xff] %vm3243, %v3169
    %3251 = vst.msk [vmem:[#allocation3 + $0x38] sm:$0xff] %vm3243, %v3171
    %3252 = vst.msk [vmem:[#allocation3 + $0x40] sm:$0xff] %vm3243, %v3174
    %3253 = vst.msk [vmem:[#allocation3 + $0x48] sm:$0xff] %vm3243, %v3176
    %3254 = vst.msk [vmem:[#allocation3 + $0x50] sm:$0xff] %vm3243, %v3179
    %3255 = vst.msk [vmem:[#allocation3 + $0x58] sm:$0xff] %vm3243, %v3181
    %3256 = vst.msk [vmem:[#allocation3 + $0x60] sm:$0xff] %vm3243, %v3184
    %3257 = vst.msk [vmem:[#allocation3 + $0x68] sm:$0xff] %vm3243, %v3186
    %3258 = vst.msk [vmem:[#allocation3 + $0x70] sm:$0xff] %vm3243, %v3189
    %3259 = vst.msk [vmem:[#allocation3 + $0x78] sm:$0xff] %vm3243, %v3191
    %3260 = vst.msk [vmem:[#allocation3 + $0x80] sm:$0xff] %vm3243, %v3194
    %3261 = vst.msk [vmem:[#allocation3 + $0x88] sm:$0xff] %vm3243, %v3196
    %3262 = vst.msk [vmem:[#allocation3 + $0x90] sm:$0xff] %vm3243, %v3199
    %3263 = vst.msk [vmem:[#allocation3 + $0x98] sm:$0xff] %vm3243, %v3201
    %3264 = vst.msk [vmem:[#allocation3 + $0xa0] sm:$0xff] %vm3243, %v3204
    %3265 = vst.msk [vmem:[#allocation3 + $0xa8] sm:$0xff] %vm3243, %v3206
    %3266 = vst.msk [vmem:[#allocation3 + $0xb0] sm:$0xff] %vm3243, %v3209
    %3267 = vst.msk [vmem:[#allocation3 + $0xb8] sm:$0xff] %vm3243, %v3211
    %3268 = vst.msk [vmem:[#allocation3 + $0xc0] sm:$0xff] %vm3243, %v3214
    %3269 = vst.msk [vmem:[#allocation3 + $0xc8] sm:$0xff] %vm3243, %v3216
    %3270 = vst.msk [vmem:[#allocation3 + $0xd0] sm:$0xff] %vm3243, %v3219
    %3271 = vst.msk [vmem:[#allocation3 + $0xd8] sm:$0xff] %vm3243, %v3221
    %3272 = vst.msk [vmem:[#allocation3 + $0xe0] sm:$0xff] %vm3243, %v3224
    %3273 = vst.msk [vmem:[#allocation3 + $0xe8] sm:$0xff] %vm3243, %v3226
    %3274 = vst.msk [vmem:[#allocation3 + $0xf0] sm:$0xff] %vm3243, %v3229
    %3275 = vst.msk [vmem:[#allocation3 + $0xf8] sm:$0xff] %vm3243, %v3231
    %3276 = vst.msk [vmem:[#allocation3 + $0x100] sm:$0xff] %vm3243, %v3234
    %3277 = vst.msk [vmem:[#allocation3 + $0x108] sm:$0xff] %vm3243, %v3236
    %3278 = vst.msk [vmem:[#allocation3 + $0x110] sm:$0xff] %vm3243, %v3239
    %3279 = vst.msk [vmem:[#allocation3 + $0x118] sm:$0xff] %vm3243, %v3241
    %v3280 = vpack.c.bf16 %v2952, %v2951
    %v3281 = vpack.c.bf16 %v2954, %v2953
    %v3282 = vpack.c.bf16 %v2956, %v2955
    %v3283 = vpack.c.bf16 %v2958, %v2957
    %v3284 = vld [vmem:[%s6] sm:$0xf]
    %v3285 = vld [vmem:[%s6 + $0x4] sm:$0xf]
    %v3286 = vld [vmem:[%s6 + $0x8] sm:$0xf]
    %v3287 = vld [vmem:[%s6 + $0xc] sm:$0xf]
    %v3288 = vld [vmem:[%s6 + $0x10] sm:$0xf]
    %v3289 = vld [vmem:[%s6 + $0x14] sm:$0xf]
    %v3290 = vld [vmem:[%s6 + $0x18] sm:$0xf]
    %v3291 = vld [vmem:[%s6 + $0x1c] sm:$0xf]
    %v3292 = vld [vmem:[%s6 + $0x20] sm:$0xf]
    %v3293 = vld [vmem:[%s6 + $0x24] sm:$0xf]
    %v3294 = vld [vmem:[%s6 + $0x28] sm:$0xf]
    %v3295 = vld [vmem:[%s6 + $0x2c] sm:$0xf]
    %v3296 = vld [vmem:[%s6 + $0x30] sm:$0xf]
    %v3297 = vld [vmem:[%s6 + $0x34] sm:$0xf]
    %v3298 = vld [vmem:[%s6 + $0x38] sm:$0xf]
    %v3299 = vld [vmem:[%s6 + $0x3c] sm:$0xf]
    %v3300 = vld [vmem:[%s6 + $0x40] sm:$0xf]
    %v3301 = vld [vmem:[%s6 + $0x44] sm:$0xf]
    %v3302 = vld [vmem:[%s6 + $0x48] sm:$0xf]
    %v3303 = vld [vmem:[%s6 + $0x4c] sm:$0xf]
    %v3304 = vld [vmem:[%s6 + $0x50] sm:$0xf]
    %v3305 = vld [vmem:[%s6 + $0x54] sm:$0xf]
    %v3306 = vld [vmem:[%s6 + $0x58] sm:$0xf]
    %v3307 = vld [vmem:[%s6 + $0x5c] sm:$0xf]
    %v3308 = vld [vmem:[%s6 + $0x60] sm:$0xf]
    %v3309 = vld [vmem:[%s6 + $0x64] sm:$0xf]
    %v3310 = vld [vmem:[%s6 + $0x68] sm:$0xf]
    %v3311 = vld [vmem:[%s6 + $0x6c] sm:$0xf]
    %v3312 = vld [vmem:[%s6 + $0x70] sm:$0xf]
    %v3313 = vld [vmem:[%s6 + $0x74] sm:$0xf]
    %v3314 = vld [vmem:[%s6 + $0x78] sm:$0xf]
    %v3315 = vld [vmem:[%s6 + $0x7c] sm:$0xf]
    %v3316 = vld [vmem:[%s6 + $0x80] sm:$0xf]
    %v3317 = vld [vmem:[%s6 + $0x84] sm:$0xf]
    %v3318 = vld [vmem:[%s6 + $0x88] sm:$0xf]
    %v3319 = vld [vmem:[%s6 + $0x8c] sm:$0xf]
    %v3356 = vunpack.c.l.b16 %v3284
    %v3357 = vunpack.c.l.b16 %v3285
    %v3358 = vunpack.c.l.b16 %v3286
    %v3359 = vunpack.c.l.b16 %v3287
    %v3360 = vunpack.c.l.b16 %v3288
    %v3361 = vunpack.c.l.b16 %v3289
    %v3362 = vunpack.c.l.b16 %v3290
    %v3363 = vunpack.c.l.b16 %v3291
    %v3364 = vunpack.c.l.b16 %v3292
    %v3365 = vunpack.c.l.b16 %v3293
    %v3366 = vunpack.c.l.b16 %v3294
    %v3367 = vunpack.c.l.b16 %v3295
    %v3368 = vunpack.c.l.b16 %v3296
    %v3369 = vunpack.c.l.b16 %v3297
    %v3370 = vunpack.c.l.b16 %v3298
    %v3371 = vunpack.c.l.b16 %v3299
    %v3372 = vunpack.c.l.b16 %v3300
    %v3373 = vunpack.c.l.b16 %v3301
    %v3374 = vunpack.c.l.b16 %v3302
    %v3375 = vunpack.c.l.b16 %v3303
    %v3376 = vunpack.c.l.b16 %v3304
    %v3377 = vunpack.c.l.b16 %v3305
    %v3378 = vunpack.c.l.b16 %v3306
    %v3379 = vunpack.c.l.b16 %v3307
    %v3380 = vunpack.c.l.b16 %v3308
    %v3381 = vunpack.c.l.b16 %v3309
    %v3382 = vunpack.c.l.b16 %v3310
    %v3383 = vunpack.c.l.b16 %v3311
    %v3384 = vunpack.c.l.b16 %v3312
    %v3385 = vunpack.c.l.b16 %v3313
    %v3386 = vunpack.c.l.b16 %v3314
    %v3387 = vunpack.c.l.b16 %v3315
    %v3388 = vunpack.c.l.b16 %v3316
    %v3389 = vunpack.c.l.b16 %v3317
    %v3390 = vunpack.c.l.b16 %v3318
    %v3391 = vunpack.c.l.b16 %v3319
    %v3392 = vpack.c.b16 %v3357, %v3356
    %v3393 = vpack.c.b16 %v3359, %v3358
    %v3394 = vpack.c.b16 %v3361, %v3360
    %v3395 = vpack.c.b16 %v3363, %v3362
    %v3396 = vpack.c.b16 %v3365, %v3364
    %v3397 = vpack.c.b16 %v3367, %v3366
    %v3398 = vpack.c.b16 %v3369, %v3368
    %v3399 = vpack.c.b16 %v3371, %v3370
    %v3400 = vpack.c.b16 %v3373, %v3372
    %v3401 = vpack.c.b16 %v3375, %v3374
    %v3402 = vpack.c.b16 %v3377, %v3376
    %v3403 = vpack.c.b16 %v3379, %v3378
    %v3404 = vpack.c.b16 %v3381, %v3380
    %v3405 = vpack.c.b16 %v3383, %v3382
    %v3406 = vpack.c.b16 %v3385, %v3384
    %v3407 = vpack.c.b16 %v3387, %v3386
    %v3408 = vpack.c.b16 %v3389, %v3388
    %v3409 = vpack.c.b16 %v3391, %v3390
    %v3411 = vsel %vm3089, %v3392, 0
    %v3414 = vsel %vm3089, %v3393, 0
    %v3417 = vsel %vm3089, %v3394, 0
    %v3420 = vsel %vm3089, %v3395, 0
    %v3423 = vsel %vm3089, %v3396, 0
    %v3426 = vsel %vm3089, %v3397, 0
    %v3429 = vsel %vm3089, %v3398, 0
    %v3432 = vsel %vm3089, %v3399, 0
    %v3435 = vsel %vm3089, %v3400, 0
    %v3438 = vsel %vm3089, %v3401, 0
    %v3441 = vsel %vm3089, %v3402, 0
    %v3444 = vsel %vm3089, %v3403, 0
    %v3447 = vsel %vm3089, %v3404, 0
    %v3450 = vsel %vm3089, %v3405, 0
    %v3453 = vsel %vm3089, %v3406, 0
    %v3456 = vsel %vm3089, %v3407, 0
    %v3459 = vsel %vm3089, %v3408, 0
    %v3462 = vsel %vm3089, %v3409, 0
    %3464 = vmatpush.bf16.msra.mxu0 0
    %3465 = vmatpush.bf16.msra.mxu0 0
    %3466 = vmatpush.bf16.msra.mxu0 0
    %3467 = vmatpush.bf16.msra.mxu0 0
    %3468 = vmatpush.bf16.msra.mxu0 %v3283
    %3469 = vmatpush.bf16.msra.mxu0 %v3282
    %3470 = vmatpush.bf16.msra.mxu0 %v3281
    %3471 = vmatpush.bf16.msra.mxu0 %v3280
    %3472 = vmatmul.bf16.gmra.mxu0 %v3411
    %v3473 = vpop.f32.mrf.mxu0
    %v3474 = vadd.f32 0.0, %v3473
    %v3475 = vpop.f32.mrf.mxu0
    %v3476 = vadd.f32 0.0, %v3475
    %3477 = vmatmul.bf16.gmra.mxu0 %v3414
    %v3478 = vpop.f32.mrf.mxu0
    %v3479 = vadd.f32 0.0, %v3478
    %v3480 = vpop.f32.mrf.mxu0
    %v3481 = vadd.f32 0.0, %v3480
    %3482 = vmatmul.bf16.gmra.mxu0 %v3417
    %v3483 = vpop.f32.mrf.mxu0
    %v3484 = vadd.f32 0.0, %v3483
    %v3485 = vpop.f32.mrf.mxu0
    %v3486 = vadd.f32 0.0, %v3485
    %3487 = vmatmul.bf16.gmra.mxu0 %v3420
    %v3488 = vpop.f32.mrf.mxu0
    %v3489 = vadd.f32 0.0, %v3488
    %v3490 = vpop.f32.mrf.mxu0
    %v3491 = vadd.f32 0.0, %v3490
    %3492 = vmatmul.bf16.gmra.mxu0 %v3423
    %v3493 = vpop.f32.mrf.mxu0
    %v3494 = vadd.f32 0.0, %v3493
    %v3495 = vpop.f32.mrf.mxu0
    %v3496 = vadd.f32 0.0, %v3495
    %3497 = vmatmul.bf16.gmra.mxu0 %v3426
    %v3498 = vpop.f32.mrf.mxu0
    %v3499 = vadd.f32 0.0, %v3498
    %v3500 = vpop.f32.mrf.mxu0
    %v3501 = vadd.f32 0.0, %v3500
    %3502 = vmatmul.bf16.gmra.mxu0 %v3429
    %v3503 = vpop.f32.mrf.mxu0
    %v3504 = vadd.f32 0.0, %v3503
    %v3505 = vpop.f32.mrf.mxu0
    %v3506 = vadd.f32 0.0, %v3505
    %3507 = vmatmul.bf16.gmra.mxu0 %v3432
    %v3508 = vpop.f32.mrf.mxu0
    %v3509 = vadd.f32 0.0, %v3508
    %v3510 = vpop.f32.mrf.mxu0
    %v3511 = vadd.f32 0.0, %v3510
    %3512 = vmatmul.bf16.gmra.mxu0 %v3435
    %v3513 = vpop.f32.mrf.mxu0
    %v3514 = vadd.f32 0.0, %v3513
    %v3515 = vpop.f32.mrf.mxu0
    %v3516 = vadd.f32 0.0, %v3515
    %3517 = vmatmul.bf16.gmra.mxu0 %v3438
    %v3518 = vpop.f32.mrf.mxu0
    %v3519 = vadd.f32 0.0, %v3518
    %v3520 = vpop.f32.mrf.mxu0
    %v3521 = vadd.f32 0.0, %v3520
    %3522 = vmatmul.bf16.gmra.mxu0 %v3441
    %v3523 = vpop.f32.mrf.mxu0
    %v3524 = vadd.f32 0.0, %v3523
    %v3525 = vpop.f32.mrf.mxu0
    %v3526 = vadd.f32 0.0, %v3525
    %3527 = vmatmul.bf16.gmra.mxu0 %v3444
    %v3528 = vpop.f32.mrf.mxu0
    %v3529 = vadd.f32 0.0, %v3528
    %v3530 = vpop.f32.mrf.mxu0
    %v3531 = vadd.f32 0.0, %v3530
    %3532 = vmatmul.bf16.gmra.mxu0 %v3447
    %v3533 = vpop.f32.mrf.mxu0
    %v3534 = vadd.f32 0.0, %v3533
    %v3535 = vpop.f32.mrf.mxu0
    %v3536 = vadd.f32 0.0, %v3535
    %3537 = vmatmul.bf16.gmra.mxu0 %v3450
    %v3538 = vpop.f32.mrf.mxu0
    %v3539 = vadd.f32 0.0, %v3538
    %v3540 = vpop.f32.mrf.mxu0
    %v3541 = vadd.f32 0.0, %v3540
    %3542 = vmatmul.bf16.gmra.mxu0 %v3453
    %v3543 = vpop.f32.mrf.mxu0
    %v3544 = vadd.f32 0.0, %v3543
    %v3545 = vpop.f32.mrf.mxu0
    %v3546 = vadd.f32 0.0, %v3545
    %3547 = vmatmul.bf16.gmra.mxu0 %v3456
    %v3548 = vpop.f32.mrf.mxu0
    %v3549 = vadd.f32 0.0, %v3548
    %v3550 = vpop.f32.mrf.mxu0
    %v3551 = vadd.f32 0.0, %v3550
    %3552 = vmatmul.bf16.gmra.mxu0 %v3459
    %v3553 = vpop.f32.mrf.mxu0
    %v3554 = vadd.f32 0.0, %v3553
    %v3555 = vpop.f32.mrf.mxu0
    %v3556 = vadd.f32 0.0, %v3555
    %3557 = vmatmul.bf16.gmra.mxu0 %v3462
    %v3558 = vpop.f32.mrf.mxu0
    %v3559 = vadd.f32 0.0, %v3558
    %v3560 = vpop.f32.mrf.mxu0
    %v3561 = vadd.f32 0.0, %v3560
    %3562 = vdwg.mxu0
    %s3563 = scalar_lea.vmem [#allocation3], 288
    %3564 = vst.msk [vmem:[%s3563] sm:$0xff] %vm3243, %v3474
    %3565 = vst.msk [vmem:[%s3563 + $0x8] sm:$0xff] %vm3243, %v3476
    %3566 = vst.msk [vmem:[%s3563 + $0x10] sm:$0xff] %vm3243, %v3479
    %3567 = vst.msk [vmem:[%s3563 + $0x18] sm:$0xff] %vm3243, %v3481
    %3568 = vst.msk [vmem:[%s3563 + $0x20] sm:$0xff] %vm3243, %v3484
    %3569 = vst.msk [vmem:[%s3563 + $0x28] sm:$0xff] %vm3243, %v3486
    %3570 = vst.msk [vmem:[%s3563 + $0x30] sm:$0xff] %vm3243, %v3489
    %3571 = vst.msk [vmem:[%s3563 + $0x38] sm:$0xff] %vm3243, %v3491
    %3572 = vst.msk [vmem:[%s3563 + $0x40] sm:$0xff] %vm3243, %v3494
    %3573 = vst.msk [vmem:[%s3563 + $0x48] sm:$0xff] %vm3243, %v3496
    %3574 = vst.msk [vmem:[%s3563 + $0x50] sm:$0xff] %vm3243, %v3499
    %3575 = vst.msk [vmem:[%s3563 + $0x58] sm:$0xff] %vm3243, %v3501
    %3576 = vst.msk [vmem:[%s3563 + $0x60] sm:$0xff] %vm3243, %v3504
    %3577 = vst.msk [vmem:[%s3563 + $0x68] sm:$0xff] %vm3243, %v3506
    %3578 = vst.msk [vmem:[%s3563 + $0x70] sm:$0xff] %vm3243, %v3509
    %3579 = vst.msk [vmem:[%s3563 + $0x78] sm:$0xff] %vm3243, %v3511
    %3580 = vst.msk [vmem:[%s3563 + $0x80] sm:$0xff] %vm3243, %v3514
    %3581 = vst.msk [vmem:[%s3563 + $0x88] sm:$0xff] %vm3243, %v3516
    %3582 = vst.msk [vmem:[%s3563 + $0x90] sm:$0xff] %vm3243, %v3519
    %3583 = vst.msk [vmem:[%s3563 + $0x98] sm:$0xff] %vm3243, %v3521
    %3584 = vst.msk [vmem:[%s3563 + $0xa0] sm:$0xff] %vm3243, %v3524
    %3585 = vst.msk [vmem:[%s3563 + $0xa8] sm:$0xff] %vm3243, %v3526
    %3586 = vst.msk [vmem:[%s3563 + $0xb0] sm:$0xff] %vm3243, %v3529
    %3587 = vst.msk [vmem:[%s3563 + $0xb8] sm:$0xff] %vm3243, %v3531
    %3588 = vst.msk [vmem:[%s3563 + $0xc0] sm:$0xff] %vm3243, %v3534
    %3589 = vst.msk [vmem:[%s3563 + $0xc8] sm:$0xff] %vm3243, %v3536
    %3590 = vst.msk [vmem:[%s3563 + $0xd0] sm:$0xff] %vm3243, %v3539
    %3591 = vst.msk [vmem:[%s3563 + $0xd8] sm:$0xff] %vm3243, %v3541
    %3592 = vst.msk [vmem:[%s3563 + $0xe0] sm:$0xff] %vm3243, %v3544
    %3593 = vst.msk [vmem:[%s3563 + $0xe8] sm:$0xff] %vm3243, %v3546
    %3594 = vst.msk [vmem:[%s3563 + $0xf0] sm:$0xff] %vm3243, %v3549
    %3595 = vst.msk [vmem:[%s3563 + $0xf8] sm:$0xff] %vm3243, %v3551
    %3596 = vst.msk [vmem:[%s3563 + $0x100] sm:$0xff] %vm3243, %v3554
    %3597 = vst.msk [vmem:[%s3563 + $0x108] sm:$0xff] %vm3243, %v3556
    %3598 = vst.msk [vmem:[%s3563 + $0x110] sm:$0xff] %vm3243, %v3559
    %3599 = vst.msk [vmem:[%s3563 + $0x118] sm:$0xff] %vm3243, %v3561
    %v3600 = vld [vmem:[#allocation3] sm:$0xff]
    %v3601 = vld [vmem:[#allocation3 + $0x8] sm:$0xff]
    %v3602 = vld [vmem:[#allocation3 + $0x10] sm:$0xff]
    %v3603 = vld [vmem:[#allocation3 + $0x18] sm:$0xff]
    %v3604 = vld [vmem:[#allocation3 + $0x120] sm:$0xff]
    %v3605 = vld [vmem:[#allocation3 + $0x128] sm:$0xff]
    %v3606 = vld [vmem:[#allocation3 + $0x130] sm:$0xff]
    %v3607 = vld [vmem:[#allocation3 + $0x138] sm:$0xff]
    %v3608 = vpack.c.bf16 %v3601, %v3600
    %v3609 = vpack.c.bf16 %v3603, %v3602
    %v3610 = vpack.c.bf16 %v3605, %v3604
    %v3611 = vpack.c.bf16 %v3607, %v3606
    %v3612 = vld [vmem:[#allocation14] sm:$0xff]
    %v3613 = vld [vmem:[#allocation14 + $0x8] sm:$0xff]
    %v3614 = vld [vmem:[#allocation14 + $0x10] sm:$0xff]
    %v3615 = vld [vmem:[#allocation14 + $0x18] sm:$0xff]
    %v3616 = vld [vmem:[#allocation14 + $0x20] sm:$0xff]
    %v3617 = vld [vmem:[#allocation14 + $0x28] sm:$0xff]
    %v3618 = vld [vmem:[#allocation14 + $0x30] sm:$0x11]
    %v3619 = vld [vmem:[#allocation3 + $0x20] sm:$0xff]
    %v3620 = vld [vmem:[#allocation3 + $0x28] sm:$0xff]
    %v3621 = vld [vmem:[#allocation3 + $0x30] sm:$0xff]
    %v3622 = vld [vmem:[#allocation3 + $0x38] sm:$0xff]
    %v3623 = vld [vmem:[#allocation3 + $0x140] sm:$0xff]
    %v3624 = vld [vmem:[#allocation3 + $0x148] sm:$0xff]
    %v3625 = vld [vmem:[#allocation3 + $0x150] sm:$0xff]
    %v3626 = vld [vmem:[#allocation3 + $0x158] sm:$0xff]
    %v3627 = vpack.c.bf16 %v3620, %v3619
    %v3628 = vpack.c.bf16 %v3622, %v3621
    %v3629 = vpack.c.bf16 %v3624, %v3623
    %v3630 = vpack.c.bf16 %v3626, %v3625
    %s3631 = scalar_lea.vmem [#allocation14], 56
    %v3632 = vld [vmem:[%s3631] sm:$0xff]
    %v3633 = vld [vmem:[%s3631 + $0x8] sm:$0xff]
    %v3634 = vld [vmem:[%s3631 + $0x10] sm:$0xff]
    %v3635 = vld [vmem:[%s3631 + $0x18] sm:$0xff]
    %v3636 = vld [vmem:[%s3631 + $0x20] sm:$0xff]
    %v3637 = vld [vmem:[%s3631 + $0x28] sm:$0xff]
    %v3638 = vld [vmem:[%s3631 + $0x30] sm:$0x11]
    %v3646 = vunpack.c.l.b16 %v3632
    %v3647 = vunpack.c.h.b16 %v3632
    %v3648 = vunpack.c.l.b16 %v3633
    %v3649 = vunpack.c.h.b16 %v3633
    %v3650 = vunpack.c.l.b16 %v3634
    %v3651 = vunpack.c.h.b16 %v3634
    %v3652 = vunpack.c.l.b16 %v3635
    %v3653 = vunpack.c.h.b16 %v3635
    %v3654 = vunpack.c.l.b16 %v3636
    %v3655 = vunpack.c.h.b16 %v3636
    %v3656 = vunpack.c.l.b16 %v3637
    %v3657 = vunpack.c.h.b16 %v3637
    %v3658 = vunpack.c.l.b16 %v3638
    %v3659 = vunpack.c.h.b16 %v3638
    %v3660 = vpack.c.b16 %v3648, %v3646
    %v3661 = vpack.c.b16 %v3649, %v3647
    %v3662 = vpack.c.b16 %v3652, %v3650
    %v3663 = vpack.c.b16 %v3653, %v3651
    %v3664 = vpack.c.b16 %v3656, %v3654
    %v3665 = vpack.c.b16 %v3657, %v3655
    %v3666 = vpack.c.b16 %v3658, %v3658
    %v3667 = vpack.c.b16 %v3659, %v3659
    %v3675 = vsel %vm3243, %v3627, 0
    %v3678 = vsel %vm3243, %v3628, 0
    %v3681 = vsel %vm3243, %v3629, 0
    %v3684 = vsel %vm3243, %v3630, 0
    %v3686 = vsel 0, 4294967295, 65535
    %v3687 = vsel %vm570, %v3686, 0
    %v3689 = vand.u32 %v3666, %v3687
    %v3692 = vand.u32 %v3667, %v3687
    %3694 = vmatpush.bf16.msra.mxu0 0
    %3695 = vmatpush.bf16.msra.mxu0 0
    %3696 = vmatpush.bf16.msra.mxu0 0
    %3697 = vmatpush.bf16.msra.mxu0 0
    %3698 = vmatpush.bf16.msra.mxu0 %v3689
    %3699 = vmatpush.bf16.msra.mxu0 %v3664
    %3700 = vmatpush.bf16.msra.mxu0 %v3662
    %3701 = vmatpush.bf16.msra.mxu0 %v3660
    %3702 = vmatmul.bf16.gmra.mxu0 %v3675
    %v3703 = vpop.f32.mrf.mxu0
    %v3704 = vadd.f32 0.0, %v3703
    %v3705 = vpop.f32.mrf.mxu0
    %v3706 = vadd.f32 0.0, %v3705
    %3707 = vmatmul.bf16.gmra.mxu0 %v3678
    %v3708 = vpop.f32.mrf.mxu0
    %v3709 = vadd.f32 0.0, %v3708
    %v3710 = vpop.f32.mrf.mxu0
    %v3711 = vadd.f32 0.0, %v3710
    %3712 = vmatmul.bf16.gmra.mxu0 %v3681
    %v3713 = vpop.f32.mrf.mxu0
    %v3714 = vadd.f32 0.0, %v3713
    %v3715 = vpop.f32.mrf.mxu0
    %v3716 = vadd.f32 0.0, %v3715
    %3717 = vmatmul.bf16.gmra.mxu0 %v3684
    %v3718 = vpop.f32.mrf.mxu0
    %v3719 = vadd.f32 0.0, %v3718
    %v3720 = vpop.f32.mrf.mxu0
    %v3721 = vadd.f32 0.0, %v3720
    %3722 = vdwg.mxu0
    %3723 = vmatpush.bf16.msra.mxu0 0
    %3724 = vmatpush.bf16.msra.mxu0 0
    %3725 = vmatpush.bf16.msra.mxu0 0
    %3726 = vmatpush.bf16.msra.mxu0 0
    %3727 = vmatpush.bf16.msra.mxu0 %v3692
    %3728 = vmatpush.bf16.msra.mxu0 %v3665
    %3729 = vmatpush.bf16.msra.mxu0 %v3663
    %3730 = vmatpush.bf16.msra.mxu0 %v3661
    %3731 = vmatmul.bf16.gmra.mxu0 %v3675
    %v3732 = vpop.f32.mrf.mxu0
    %v3733 = vadd.f32 0.0, %v3732
    %v3734 = vpop.f32.mrf.mxu0
    %v3735 = vadd.f32 0.0, %v3734
    %3736 = vmatmul.bf16.gmra.mxu0 %v3678
    %v3737 = vpop.f32.mrf.mxu0
    %v3738 = vadd.f32 0.0, %v3737
    %v3739 = vpop.f32.mrf.mxu0
    %v3740 = vadd.f32 0.0, %v3739
    %3741 = vmatmul.bf16.gmra.mxu0 %v3681
    %v3742 = vpop.f32.mrf.mxu0
    %v3743 = vadd.f32 0.0, %v3742
    %v3744 = vpop.f32.mrf.mxu0
    %v3745 = vadd.f32 0.0, %v3744
    %3746 = vmatmul.bf16.gmra.mxu0 %v3684
    %v3747 = vpop.f32.mrf.mxu0
    %v3748 = vadd.f32 0.0, %v3747
    %v3749 = vpop.f32.mrf.mxu0
    %v3750 = vadd.f32 0.0, %v3749
    %3751 = vdwg.mxu0
    %v3759 = vunpack.c.l.b16 %v3612
    %v3760 = vunpack.c.h.b16 %v3612
    %v3761 = vunpack.c.l.b16 %v3613
    %v3762 = vunpack.c.h.b16 %v3613
    %v3763 = vunpack.c.l.b16 %v3614
    %v3764 = vunpack.c.h.b16 %v3614
    %v3765 = vunpack.c.l.b16 %v3615
    %v3766 = vunpack.c.h.b16 %v3615
    %v3767 = vunpack.c.l.b16 %v3616
    %v3768 = vunpack.c.h.b16 %v3616
    %v3769 = vunpack.c.l.b16 %v3617
    %v3770 = vunpack.c.h.b16 %v3617
    %v3771 = vunpack.c.l.b16 %v3618
    %v3772 = vunpack.c.h.b16 %v3618
    %v3773 = vpack.c.b16 %v3761, %v3759
    %v3774 = vpack.c.b16 %v3762, %v3760
    %v3775 = vpack.c.b16 %v3765, %v3763
    %v3776 = vpack.c.b16 %v3766, %v3764
    %v3777 = vpack.c.b16 %v3769, %v3767
    %v3778 = vpack.c.b16 %v3770, %v3768
    %v3779 = vpack.c.b16 %v3771, %v3771
    %v3780 = vpack.c.b16 %v3772, %v3772
    %v3788 = vsel %vm3243, %v3608, 0
    %v3791 = vsel %vm3243, %v3609, 0
    %v3794 = vsel %vm3243, %v3610, 0
    %v3797 = vsel %vm3243, %v3611, 0
    %v3800 = vand.u32 %v3779, %v3687
    %v3803 = vand.u32 %v3780, %v3687
    %3805 = vmatpush.bf16.msra.mxu0 0
    %3806 = vmatpush.bf16.msra.mxu0 0
    %3807 = vmatpush.bf16.msra.mxu0 0
    %3808 = vmatpush.bf16.msra.mxu0 0
    %3809 = vmatpush.bf16.msra.mxu0 %v3800
    %3810 = vmatpush.bf16.msra.mxu0 %v3777
    %3811 = vmatpush.bf16.msra.mxu0 %v3775
    %3812 = vmatpush.bf16.msra.mxu0 %v3773
    %3813 = vmatmul.bf16.gmra.mxu0 %v3788
    %v3814 = vpop.f32.mrf.mxu0
    %v3815 = vadd.f32 %v3704, %v3814
    %v3816 = vpop.f32.mrf.mxu0
    %v3817 = vadd.f32 %v3706, %v3816
    %3818 = vmatmul.bf16.gmra.mxu0 %v3791
    %v3819 = vpop.f32.mrf.mxu0
    %v3820 = vadd.f32 %v3709, %v3819
    %v3821 = vpop.f32.mrf.mxu0
    %v3822 = vadd.f32 %v3711, %v3821
    %3823 = vmatmul.bf16.gmra.mxu0 %v3794
    %v3824 = vpop.f32.mrf.mxu0
    %v3825 = vadd.f32 %v3714, %v3824
    %v3826 = vpop.f32.mrf.mxu0
    %v3827 = vadd.f32 %v3716, %v3826
    %3828 = vmatmul.bf16.gmra.mxu0 %v3797
    %v3829 = vpop.f32.mrf.mxu0
    %v3830 = vadd.f32 %v3719, %v3829
    %v3831 = vpop.f32.mrf.mxu0
    %v3832 = vadd.f32 %v3721, %v3831
    %3833 = vdwg.mxu0
    %3834 = vmatpush.bf16.msra.mxu0 0
    %3835 = vmatpush.bf16.msra.mxu0 0
    %3836 = vmatpush.bf16.msra.mxu0 0
    %3837 = vmatpush.bf16.msra.mxu0 0
    %3838 = vmatpush.bf16.msra.mxu0 %v3803
    %3839 = vmatpush.bf16.msra.mxu0 %v3778
    %3840 = vmatpush.bf16.msra.mxu0 %v3776
    %3841 = vmatpush.bf16.msra.mxu0 %v3774
    %3842 = vmatmul.bf16.gmra.mxu0 %v3788
    %v3843 = vpop.f32.mrf.mxu0
    %v3844 = vadd.f32 %v3733, %v3843
    %v3845 = vpop.f32.mrf.mxu0
    %v3846 = vadd.f32 %v3735, %v3845
    %3847 = vmatmul.bf16.gmra.mxu0 %v3791
    %v3848 = vpop.f32.mrf.mxu0
    %v3849 = vadd.f32 %v3738, %v3848
    %v3850 = vpop.f32.mrf.mxu0
    %v3851 = vadd.f32 %v3740, %v3850
    %3852 = vmatmul.bf16.gmra.mxu0 %v3794
    %v3853 = vpop.f32.mrf.mxu0
    %v3854 = vadd.f32 %v3743, %v3853
    %v3855 = vpop.f32.mrf.mxu0
    %v3856 = vadd.f32 %v3745, %v3855
    %3857 = vmatmul.bf16.gmra.mxu0 %v3797
    %v3858 = vpop.f32.mrf.mxu0
    %v3859 = vadd.f32 %v3748, %v3858
    %v3860 = vpop.f32.mrf.mxu0
    %v3861 = vadd.f32 %v3750, %v3860
    %3862 = vdwg.mxu0
    %v3863 = vld [vmem:[#allocation3 + $0x40] sm:$0xff]
    %v3864 = vld [vmem:[#allocation3 + $0x48] sm:$0xff]
    %v3865 = vld [vmem:[#allocation3 + $0x50] sm:$0xff]
    %v3866 = vld [vmem:[#allocation3 + $0x58] sm:$0xff]
    %v3867 = vld [vmem:[#allocation3 + $0x160] sm:$0xff]
    %v3868 = vld [vmem:[#allocation3 + $0x168] sm:$0xff]
    %v3869 = vld [vmem:[#allocation3 + $0x170] sm:$0xff]
    %v3870 = vld [vmem:[#allocation3 + $0x178] sm:$0xff]
    %v3871 = vpack.c.bf16 %v3864, %v3863
    %v3872 = vpack.c.bf16 %v3866, %v3865
    %v3873 = vpack.c.bf16 %v3868, %v3867
    %v3874 = vpack.c.bf16 %v3870, %v3869
    %s3875 = scalar_lea.vmem [#allocation14], 112
    %v3876 = vld [vmem:[%s3875] sm:$0xff]
    %v3877 = vld [vmem:[%s3875 + $0x8] sm:$0xff]
    %v3878 = vld [vmem:[%s3875 + $0x10] sm:$0xff]
    %v3879 = vld [vmem:[%s3875 + $0x18] sm:$0xff]
    %v3880 = vld [vmem:[%s3875 + $0x20] sm:$0xff]
    %v3881 = vld [vmem:[%s3875 + $0x28] sm:$0xff]
    %v3882 = vld [vmem:[%s3875 + $0x30] sm:$0x11]
    %v3890 = vunpack.c.l.b16 %v3876
    %v3891 = vunpack.c.h.b16 %v3876
    %v3892 = vunpack.c.l.b16 %v3877
    %v3893 = vunpack.c.h.b16 %v3877
    %v3894 = vunpack.c.l.b16 %v3878
    %v3895 = vunpack.c.h.b16 %v3878
    %v3896 = vunpack.c.l.b16 %v3879
    %v3897 = vunpack.c.h.b16 %v3879
    %v3898 = vunpack.c.l.b16 %v3880
    %v3899 = vunpack.c.h.b16 %v3880
    %v3900 = vunpack.c.l.b16 %v3881
    %v3901 = vunpack.c.h.b16 %v3881
    %v3902 = vunpack.c.l.b16 %v3882
    %v3903 = vunpack.c.h.b16 %v3882
    %v3904 = vpack.c.b16 %v3892, %v3890
    %v3905 = vpack.c.b16 %v3893, %v3891
    %v3906 = vpack.c.b16 %v3896, %v3894
    %v3907 = vpack.c.b16 %v3897, %v3895
    %v3908 = vpack.c.b16 %v3900, %v3898
    %v3909 = vpack.c.b16 %v3901, %v3899
    %v3910 = vpack.c.b16 %v3902, %v3902
    %v3911 = vpack.c.b16 %v3903, %v3903
    %v3919 = vsel %vm3243, %v3871, 0
    %v3922 = vsel %vm3243, %v3872, 0
    %v3925 = vsel %vm3243, %v3873, 0
    %v3928 = vsel %vm3243, %v3874, 0
    %v3931 = vand.u32 %v3910, %v3687
    %v3934 = vand.u32 %v3911, %v3687
    %3936 = vmatpush.bf16.msra.mxu0 0
    %3937 = vmatpush.bf16.msra.mxu0 0
    %3938 = vmatpush.bf16.msra.mxu0 0
    %3939 = vmatpush.bf16.msra.mxu0 0
    %3940 = vmatpush.bf16.msra.mxu0 %v3931
    %3941 = vmatpush.bf16.msra.mxu0 %v3908
    %3942 = vmatpush.bf16.msra.mxu0 %v3906
    %3943 = vmatpush.bf16.msra.mxu0 %v3904
    %3944 = vmatmul.bf16.gmra.mxu0 %v3919
    %v3945 = vpop.f32.mrf.mxu0
    %v3946 = vadd.f32 0.0, %v3945
    %v3947 = vpop.f32.mrf.mxu0
    %v3948 = vadd.f32 0.0, %v3947
    %3949 = vmatmul.bf16.gmra.mxu0 %v3922
    %v3950 = vpop.f32.mrf.mxu0
    %v3951 = vadd.f32 0.0, %v3950
    %v3952 = vpop.f32.mrf.mxu0
    %v3953 = vadd.f32 0.0, %v3952
    %3954 = vmatmul.bf16.gmra.mxu0 %v3925
    %v3955 = vpop.f32.mrf.mxu0
    %v3956 = vadd.f32 0.0, %v3955
    %v3957 = vpop.f32.mrf.mxu0
    %v3958 = vadd.f32 0.0, %v3957
    %3959 = vmatmul.bf16.gmra.mxu0 %v3928
    %v3960 = vpop.f32.mrf.mxu0
    %v3961 = vadd.f32 0.0, %v3960
    %v3962 = vpop.f32.mrf.mxu0
    %v3963 = vadd.f32 0.0, %v3962
    %3964 = vdwg.mxu0
    %3965 = vmatpush.bf16.msra.mxu0 0
    %3966 = vmatpush.bf16.msra.mxu0 0
    %3967 = vmatpush.bf16.msra.mxu0 0
    %3968 = vmatpush.bf16.msra.mxu0 0
    %3969 = vmatpush.bf16.msra.mxu0 %v3934
    %3970 = vmatpush.bf16.msra.mxu0 %v3909
    %3971 = vmatpush.bf16.msra.mxu0 %v3907
    %3972 = vmatpush.bf16.msra.mxu0 %v3905
    %3973 = vmatmul.bf16.gmra.mxu0 %v3919
    %v3974 = vpop.f32.mrf.mxu0
    %v3975 = vadd.f32 0.0, %v3974
    %v3976 = vpop.f32.mrf.mxu0
    %v3977 = vadd.f32 0.0, %v3976
    %3978 = vmatmul.bf16.gmra.mxu0 %v3922
    %v3979 = vpop.f32.mrf.mxu0
    %v3980 = vadd.f32 0.0, %v3979
    %v3981 = vpop.f32.mrf.mxu0
    %v3982 = vadd.f32 0.0, %v3981
    %3983 = vmatmul.bf16.gmra.mxu0 %v3925
    %v3984 = vpop.f32.mrf.mxu0
    %v3985 = vadd.f32 0.0, %v3984
    %v3986 = vpop.f32.mrf.mxu0
    %v3987 = vadd.f32 0.0, %v3986
    %3988 = vmatmul.bf16.gmra.mxu0 %v3928
    %v3989 = vpop.f32.mrf.mxu0
    %v3990 = vadd.f32 0.0, %v3989
    %v3991 = vpop.f32.mrf.mxu0
    %v3992 = vadd.f32 0.0, %v3991
    %3993 = vdwg.mxu0
    %v3994 = vadd.f32 %v3815, %v3946
    %v3995 = vadd.f32 %v3844, %v3975
    %v3996 = vadd.f32 %v3817, %v3948
    %v3997 = vadd.f32 %v3846, %v3977
    %v3998 = vadd.f32 %v3820, %v3951
    %v3999 = vadd.f32 %v3849, %v3980
    %v4000 = vadd.f32 %v3822, %v3953
    %v4001 = vadd.f32 %v3851, %v3982
    %v4002 = vadd.f32 %v3825, %v3956
    %v4003 = vadd.f32 %v3854, %v3985
    %v4004 = vadd.f32 %v3827, %v3958
    %v4005 = vadd.f32 %v3856, %v3987
    %v4006 = vadd.f32 %v3830, %v3961
    %v4007 = vadd.f32 %v3859, %v3990
    %v4008 = vadd.f32 %v3832, %v3963
    %v4009 = vadd.f32 %v3861, %v3992
    %v4010 = vld [vmem:[#allocation3 + $0x60] sm:$0xff]
    %v4011 = vld [vmem:[#allocation3 + $0x68] sm:$0xff]
    %v4012 = vld [vmem:[#allocation3 + $0x70] sm:$0xff]
    %v4013 = vld [vmem:[#allocation3 + $0x78] sm:$0xff]
    %v4014 = vld [vmem:[#allocation3 + $0x180] sm:$0xff]
    %v4015 = vld [vmem:[#allocation3 + $0x188] sm:$0xff]
    %v4016 = vld [vmem:[#allocation3 + $0x190] sm:$0xff]
    %v4017 = vld [vmem:[#allocation3 + $0x198] sm:$0xff]
    %v4018 = vpack.c.bf16 %v4011, %v4010
    %v4019 = vpack.c.bf16 %v4013, %v4012
    %v4020 = vpack.c.bf16 %v4015, %v4014
    %v4021 = vpack.c.bf16 %v4017, %v4016
    %s4022 = scalar_lea.vmem [#allocation14], 168
    %v4023 = vld [vmem:[%s4022] sm:$0xff]
    %v4024 = vld [vmem:[%s4022 + $0x8] sm:$0xff]
    %v4025 = vld [vmem:[%s4022 + $0x10] sm:$0xff]
    %v4026 = vld [vmem:[%s4022 + $0x18] sm:$0xff]
    %v4027 = vld [vmem:[%s4022 + $0x20] sm:$0xff]
    %v4028 = vld [vmem:[%s4022 + $0x28] sm:$0xff]
    %v4029 = vld [vmem:[%s4022 + $0x30] sm:$0x11]
    %v4037 = vunpack.c.l.b16 %v4023
    %v4038 = vunpack.c.h.b16 %v4023
    %v4039 = vunpack.c.l.b16 %v4024
    %v4040 = vunpack.c.h.b16 %v4024
    %v4041 = vunpack.c.l.b16 %v4025
    %v4042 = vunpack.c.h.b16 %v4025
    %v4043 = vunpack.c.l.b16 %v4026
    %v4044 = vunpack.c.h.b16 %v4026
    %v4045 = vunpack.c.l.b16 %v4027
    %v4046 = vunpack.c.h.b16 %v4027
    %v4047 = vunpack.c.l.b16 %v4028
    %v4048 = vunpack.c.h.b16 %v4028
    %v4049 = vunpack.c.l.b16 %v4029
    %v4050 = vunpack.c.h.b16 %v4029
    %v4051 = vpack.c.b16 %v4039, %v4037
    %v4052 = vpack.c.b16 %v4040, %v4038
    %v4053 = vpack.c.b16 %v4043, %v4041
    %v4054 = vpack.c.b16 %v4044, %v4042
    %v4055 = vpack.c.b16 %v4047, %v4045
    %v4056 = vpack.c.b16 %v4048, %v4046
    %v4057 = vpack.c.b16 %v4049, %v4049
    %v4058 = vpack.c.b16 %v4050, %v4050
    %v4066 = vsel %vm3243, %v4018, 0
    %v4069 = vsel %vm3243, %v4019, 0
    %v4072 = vsel %vm3243, %v4020, 0
    %v4075 = vsel %vm3243, %v4021, 0
    %v4078 = vand.u32 %v4057, %v3687
    %v4081 = vand.u32 %v4058, %v3687
    %4083 = vmatpush.bf16.msra.mxu0 0
    %4084 = vmatpush.bf16.msra.mxu0 0
    %4085 = vmatpush.bf16.msra.mxu0 0
    %4086 = vmatpush.bf16.msra.mxu0 0
    %4087 = vmatpush.bf16.msra.mxu0 %v4078
    %4088 = vmatpush.bf16.msra.mxu0 %v4055
    %4089 = vmatpush.bf16.msra.mxu0 %v4053
    %4090 = vmatpush.bf16.msra.mxu0 %v4051
    %4091 = vmatmul.bf16.gmra.mxu0 %v4066
    %v4092 = vpop.f32.mrf.mxu0
    %v4093 = vadd.f32 0.0, %v4092
    %v4094 = vpop.f32.mrf.mxu0
    %v4095 = vadd.f32 0.0, %v4094
    %4096 = vmatmul.bf16.gmra.mxu0 %v4069
    %v4097 = vpop.f32.mrf.mxu0
    %v4098 = vadd.f32 0.0, %v4097
    %v4099 = vpop.f32.mrf.mxu0
    %v4100 = vadd.f32 0.0, %v4099
    %4101 = vmatmul.bf16.gmra.mxu0 %v4072
    %v4102 = vpop.f32.mrf.mxu0
    %v4103 = vadd.f32 0.0, %v4102
    %v4104 = vpop.f32.mrf.mxu0
    %v4105 = vadd.f32 0.0, %v4104
    %4106 = vmatmul.bf16.gmra.mxu0 %v4075
    %v4107 = vpop.f32.mrf.mxu0
    %v4108 = vadd.f32 0.0, %v4107
    %v4109 = vpop.f32.mrf.mxu0
    %v4110 = vadd.f32 0.0, %v4109
    %4111 = vdwg.mxu0
    %4112 = vmatpush.bf16.msra.mxu0 0
    %4113 = vmatpush.bf16.msra.mxu0 0
    %4114 = vmatpush.bf16.msra.mxu0 0
    %4115 = vmatpush.bf16.msra.mxu0 0
    %4116 = vmatpush.bf16.msra.mxu0 %v4081
    %4117 = vmatpush.bf16.msra.mxu0 %v4056
    %4118 = vmatpush.bf16.msra.mxu0 %v4054
    %4119 = vmatpush.bf16.msra.mxu0 %v4052
    %4120 = vmatmul.bf16.gmra.mxu0 %v4066
    %v4121 = vpop.f32.mrf.mxu0
    %v4122 = vadd.f32 0.0, %v4121
    %v4123 = vpop.f32.mrf.mxu0
    %v4124 = vadd.f32 0.0, %v4123
    %4125 = vmatmul.bf16.gmra.mxu0 %v4069
    %v4126 = vpop.f32.mrf.mxu0
    %v4127 = vadd.f32 0.0, %v4126
    %v4128 = vpop.f32.mrf.mxu0
    %v4129 = vadd.f32 0.0, %v4128
    %4130 = vmatmul.bf16.gmra.mxu0 %v4072
    %v4131 = vpop.f32.mrf.mxu0
    %v4132 = vadd.f32 0.0, %v4131
    %v4133 = vpop.f32.mrf.mxu0
    %v4134 = vadd.f32 0.0, %v4133
    %4135 = vmatmul.bf16.gmra.mxu0 %v4075
    %v4136 = vpop.f32.mrf.mxu0
    %v4137 = vadd.f32 0.0, %v4136
    %v4138 = vpop.f32.mrf.mxu0
    %v4139 = vadd.f32 0.0, %v4138
    %4140 = vdwg.mxu0
    %v4141 = vadd.f32 %v3994, %v4093
    %v4142 = vadd.f32 %v3995, %v4122
    %v4143 = vadd.f32 %v3996, %v4095
    %v4144 = vadd.f32 %v3997, %v4124
    %v4145 = vadd.f32 %v3998, %v4098
    %v4146 = vadd.f32 %v3999, %v4127
    %v4147 = vadd.f32 %v4000, %v4100
    %v4148 = vadd.f32 %v4001, %v4129
    %v4149 = vadd.f32 %v4002, %v4103
    %v4150 = vadd.f32 %v4003, %v4132
    %v4151 = vadd.f32 %v4004, %v4105
    %v4152 = vadd.f32 %v4005, %v4134
    %v4153 = vadd.f32 %v4006, %v4108
    %v4154 = vadd.f32 %v4007, %v4137
    %v4155 = vadd.f32 %v4008, %v4110
    %v4156 = vadd.f32 %v4009, %v4139
    %v4157 = vld [vmem:[#allocation3 + $0x80] sm:$0xff]
    %v4158 = vld [vmem:[#allocation3 + $0x88] sm:$0xff]
    %v4159 = vld [vmem:[#allocation3 + $0x90] sm:$0xff]
    %v4160 = vld [vmem:[#allocation3 + $0x98] sm:$0xff]
    %v4161 = vld [vmem:[#allocation3 + $0x1a0] sm:$0xff]
    %v4162 = vld [vmem:[#allocation3 + $0x1a8] sm:$0xff]
    %v4163 = vld [vmem:[#allocation3 + $0x1b0] sm:$0xff]
    %v4164 = vld [vmem:[#allocation3 + $0x1b8] sm:$0xff]
    %v4165 = vpack.c.bf16 %v4158, %v4157
    %v4166 = vpack.c.bf16 %v4160, %v4159
    %v4167 = vpack.c.bf16 %v4162, %v4161
    %v4168 = vpack.c.bf16 %v4164, %v4163
    %s4169 = scalar_lea.vmem [#allocation14], 224
    %v4170 = vld [vmem:[%s4169] sm:$0xff]
    %v4171 = vld [vmem:[%s4169 + $0x8] sm:$0xff]
    %v4172 = vld [vmem:[%s4169 + $0x10] sm:$0xff]
    %v4173 = vld [vmem:[%s4169 + $0x18] sm:$0xff]
    %v4174 = vld [vmem:[%s4169 + $0x20] sm:$0xff]
    %v4175 = vld [vmem:[%s4169 + $0x28] sm:$0xff]
    %v4176 = vld [vmem:[%s4169 + $0x30] sm:$0x11]
    %v4184 = vunpack.c.l.b16 %v4170
    %v4185 = vunpack.c.h.b16 %v4170
    %v4186 = vunpack.c.l.b16 %v4171
    %v4187 = vunpack.c.h.b16 %v4171
    %v4188 = vunpack.c.l.b16 %v4172
    %v4189 = vunpack.c.h.b16 %v4172
    %v4190 = vunpack.c.l.b16 %v4173
    %v4191 = vunpack.c.h.b16 %v4173
    %v4192 = vunpack.c.l.b16 %v4174
    %v4193 = vunpack.c.h.b16 %v4174
    %v4194 = vunpack.c.l.b16 %v4175
    %v4195 = vunpack.c.h.b16 %v4175
    %v4196 = vunpack.c.l.b16 %v4176
    %v4197 = vunpack.c.h.b16 %v4176
    %v4198 = vpack.c.b16 %v4186, %v4184
    %v4199 = vpack.c.b16 %v4187, %v4185
    %v4200 = vpack.c.b16 %v4190, %v4188
    %v4201 = vpack.c.b16 %v4191, %v4189
    %v4202 = vpack.c.b16 %v4194, %v4192
    %v4203 = vpack.c.b16 %v4195, %v4193
    %v4204 = vpack.c.b16 %v4196, %v4196
    %v4205 = vpack.c.b16 %v4197, %v4197
    %v4213 = vsel %vm3243, %v4165, 0
    %v4216 = vsel %vm3243, %v4166, 0
    %v4219 = vsel %vm3243, %v4167, 0
    %v4222 = vsel %vm3243, %v4168, 0
    %v4225 = vand.u32 %v4204, %v3687
    %v4228 = vand.u32 %v4205, %v3687
    %4230 = vmatpush.bf16.msra.mxu0 0
    %4231 = vmatpush.bf16.msra.mxu0 0
    %4232 = vmatpush.bf16.msra.mxu0 0
    %4233 = vmatpush.bf16.msra.mxu0 0
    %4234 = vmatpush.bf16.msra.mxu0 %v4225
    %4235 = vmatpush.bf16.msra.mxu0 %v4202
    %4236 = vmatpush.bf16.msra.mxu0 %v4200
    %4237 = vmatpush.bf16.msra.mxu0 %v4198
    %4238 = vmatmul.bf16.gmra.mxu0 %v4213
    %v4239 = vpop.f32.mrf.mxu0
    %v4240 = vadd.f32 0.0, %v4239
    %v4241 = vpop.f32.mrf.mxu0
    %v4242 = vadd.f32 0.0, %v4241
    %4243 = vmatmul.bf16.gmra.mxu0 %v4216
    %v4244 = vpop.f32.mrf.mxu0
    %v4245 = vadd.f32 0.0, %v4244
    %v4246 = vpop.f32.mrf.mxu0
    %v4247 = vadd.f32 0.0, %v4246
    %4248 = vmatmul.bf16.gmra.mxu0 %v4219
    %v4249 = vpop.f32.mrf.mxu0
    %v4250 = vadd.f32 0.0, %v4249
    %v4251 = vpop.f32.mrf.mxu0
    %v4252 = vadd.f32 0.0, %v4251
    %4253 = vmatmul.bf16.gmra.mxu0 %v4222
    %v4254 = vpop.f32.mrf.mxu0
    %v4255 = vadd.f32 0.0, %v4254
    %v4256 = vpop.f32.mrf.mxu0
    %v4257 = vadd.f32 0.0, %v4256
    %4258 = vdwg.mxu0
    %4259 = vmatpush.bf16.msra.mxu0 0
    %4260 = vmatpush.bf16.msra.mxu0 0
    %4261 = vmatpush.bf16.msra.mxu0 0
    %4262 = vmatpush.bf16.msra.mxu0 0
    %4263 = vmatpush.bf16.msra.mxu0 %v4228
    %4264 = vmatpush.bf16.msra.mxu0 %v4203
    %4265 = vmatpush.bf16.msra.mxu0 %v4201
    %4266 = vmatpush.bf16.msra.mxu0 %v4199
    %4267 = vmatmul.bf16.gmra.mxu0 %v4213
    %v4268 = vpop.f32.mrf.mxu0
    %v4269 = vadd.f32 0.0, %v4268
    %v4270 = vpop.f32.mrf.mxu0
    %v4271 = vadd.f32 0.0, %v4270
    %4272 = vmatmul.bf16.gmra.mxu0 %v4216
    %v4273 = vpop.f32.mrf.mxu0
    %v4274 = vadd.f32 0.0, %v4273
    %v4275 = vpop.f32.mrf.mxu0
    %v4276 = vadd.f32 0.0, %v4275
    %4277 = vmatmul.bf16.gmra.mxu0 %v4219
    %v4278 = vpop.f32.mrf.mxu0
    %v4279 = vadd.f32 0.0, %v4278
    %v4280 = vpop.f32.mrf.mxu0
    %v4281 = vadd.f32 0.0, %v4280
    %4282 = vmatmul.bf16.gmra.mxu0 %v4222
    %v4283 = vpop.f32.mrf.mxu0
    %v4284 = vadd.f32 0.0, %v4283
    %v4285 = vpop.f32.mrf.mxu0
    %v4286 = vadd.f32 0.0, %v4285
    %4287 = vdwg.mxu0
    %v4288 = vadd.f32 %v4141, %v4240
    %v4289 = vadd.f32 %v4142, %v4269
    %v4290 = vadd.f32 %v4143, %v4242
    %v4291 = vadd.f32 %v4144, %v4271
    %v4292 = vadd.f32 %v4145, %v4245
    %v4293 = vadd.f32 %v4146, %v4274
    %v4294 = vadd.f32 %v4147, %v4247
    %v4295 = vadd.f32 %v4148, %v4276
    %v4296 = vadd.f32 %v4149, %v4250
    %v4297 = vadd.f32 %v4150, %v4279
    %v4298 = vadd.f32 %v4151, %v4252
    %v4299 = vadd.f32 %v4152, %v4281
    %v4300 = vadd.f32 %v4153, %v4255
    %v4301 = vadd.f32 %v4154, %v4284
    %v4302 = vadd.f32 %v4155, %v4257
    %v4303 = vadd.f32 %v4156, %v4286
    %v4304 = vld [vmem:[#allocation3 + $0xa0] sm:$0xff]
    %v4305 = vld [vmem:[#allocation3 + $0xa8] sm:$0xff]
    %v4306 = vld [vmem:[#allocation3 + $0xb0] sm:$0xff]
    %v4307 = vld [vmem:[#allocation3 + $0xb8] sm:$0xff]
    %v4308 = vld [vmem:[#allocation3 + $0x1c0] sm:$0xff]
    %v4309 = vld [vmem:[#allocation3 + $0x1c8] sm:$0xff]
    %v4310 = vld [vmem:[#allocation3 + $0x1d0] sm:$0xff]
    %v4311 = vld [vmem:[#allocation3 + $0x1d8] sm:$0xff]
    %v4312 = vpack.c.bf16 %v4305, %v4304
    %v4313 = vpack.c.bf16 %v4307, %v4306
    %v4314 = vpack.c.bf16 %v4309, %v4308
    %v4315 = vpack.c.bf16 %v4311, %v4310
    %s4316 = scalar_lea.vmem [#allocation14], 280
    %v4317 = vld [vmem:[%s4316] sm:$0xff]
    %v4318 = vld [vmem:[%s4316 + $0x8] sm:$0xff]
    %v4319 = vld [vmem:[%s4316 + $0x10] sm:$0xff]
    %v4320 = vld [vmem:[%s4316 + $0x18] sm:$0xff]
    %v4321 = vld [vmem:[%s4316 + $0x20] sm:$0xff]
    %v4322 = vld [vmem:[%s4316 + $0x28] sm:$0xff]
    %v4323 = vld [vmem:[%s4316 + $0x30] sm:$0x11]
    %v4331 = vunpack.c.l.b16 %v4317
    %v4332 = vunpack.c.h.b16 %v4317
    %v4333 = vunpack.c.l.b16 %v4318
    %v4334 = vunpack.c.h.b16 %v4318
    %v4335 = vunpack.c.l.b16 %v4319
    %v4336 = vunpack.c.h.b16 %v4319
    %v4337 = vunpack.c.l.b16 %v4320
    %v4338 = vunpack.c.h.b16 %v4320
    %v4339 = vunpack.c.l.b16 %v4321
    %v4340 = vunpack.c.h.b16 %v4321
    %v4341 = vunpack.c.l.b16 %v4322
    %v4342 = vunpack.c.h.b16 %v4322
    %v4343 = vunpack.c.l.b16 %v4323
    %v4344 = vunpack.c.h.b16 %v4323
    %v4345 = vpack.c.b16 %v4333, %v4331
    %v4346 = vpack.c.b16 %v4334, %v4332
    %v4347 = vpack.c.b16 %v4337, %v4335
    %v4348 = vpack.c.b16 %v4338, %v4336
    %v4349 = vpack.c.b16 %v4341, %v4339
    %v4350 = vpack.c.b16 %v4342, %v4340
    %v4351 = vpack.c.b16 %v4343, %v4343
    %v4352 = vpack.c.b16 %v4344, %v4344
    %v4360 = vsel %vm3243, %v4312, 0
    %v4363 = vsel %vm3243, %v4313, 0
    %v4366 = vsel %vm3243, %v4314, 0
    %v4369 = vsel %vm3243, %v4315, 0
    %v4372 = vand.u32 %v4351, %v3687
    %v4375 = vand.u32 %v4352, %v3687
    %4377 = vmatpush.bf16.msra.mxu0 0
    %4378 = vmatpush.bf16.msra.mxu0 0
    %4379 = vmatpush.bf16.msra.mxu0 0
    %4380 = vmatpush.bf16.msra.mxu0 0
    %4381 = vmatpush.bf16.msra.mxu0 %v4372
    %4382 = vmatpush.bf16.msra.mxu0 %v4349
    %4383 = vmatpush.bf16.msra.mxu0 %v4347
    %4384 = vmatpush.bf16.msra.mxu0 %v4345
    %4385 = vmatmul.bf16.gmra.mxu0 %v4360
    %v4386 = vpop.f32.mrf.mxu0
    %v4387 = vadd.f32 0.0, %v4386
    %v4388 = vpop.f32.mrf.mxu0
    %v4389 = vadd.f32 0.0, %v4388
    %4390 = vmatmul.bf16.gmra.mxu0 %v4363
    %v4391 = vpop.f32.mrf.mxu0
    %v4392 = vadd.f32 0.0, %v4391
    %v4393 = vpop.f32.mrf.mxu0
    %v4394 = vadd.f32 0.0, %v4393
    %4395 = vmatmul.bf16.gmra.mxu0 %v4366
    %v4396 = vpop.f32.mrf.mxu0
    %v4397 = vadd.f32 0.0, %v4396
    %v4398 = vpop.f32.mrf.mxu0
    %v4399 = vadd.f32 0.0, %v4398
    %4400 = vmatmul.bf16.gmra.mxu0 %v4369
    %v4401 = vpop.f32.mrf.mxu0
    %v4402 = vadd.f32 0.0, %v4401
    %v4403 = vpop.f32.mrf.mxu0
    %v4404 = vadd.f32 0.0, %v4403
    %4405 = vdwg.mxu0
    %4406 = vmatpush.bf16.msra.mxu0 0
    %4407 = vmatpush.bf16.msra.mxu0 0
    %4408 = vmatpush.bf16.msra.mxu0 0
    %4409 = vmatpush.bf16.msra.mxu0 0
    %4410 = vmatpush.bf16.msra.mxu0 %v4375
    %4411 = vmatpush.bf16.msra.mxu0 %v4350
    %4412 = vmatpush.bf16.msra.mxu0 %v4348
    %4413 = vmatpush.bf16.msra.mxu0 %v4346
    %4414 = vmatmul.bf16.gmra.mxu0 %v4360
    %v4415 = vpop.f32.mrf.mxu0
    %v4416 = vadd.f32 0.0, %v4415
    %v4417 = vpop.f32.mrf.mxu0
    %v4418 = vadd.f32 0.0, %v4417
    %4419 = vmatmul.bf16.gmra.mxu0 %v4363
    %v4420 = vpop.f32.mrf.mxu0
    %v4421 = vadd.f32 0.0, %v4420
    %v4422 = vpop.f32.mrf.mxu0
    %v4423 = vadd.f32 0.0, %v4422
    %4424 = vmatmul.bf16.gmra.mxu0 %v4366
    %v4425 = vpop.f32.mrf.mxu0
    %v4426 = vadd.f32 0.0, %v4425
    %v4427 = vpop.f32.mrf.mxu0
    %v4428 = vadd.f32 0.0, %v4427
    %4429 = vmatmul.bf16.gmra.mxu0 %v4369
    %v4430 = vpop.f32.mrf.mxu0
    %v4431 = vadd.f32 0.0, %v4430
    %v4432 = vpop.f32.mrf.mxu0
    %v4433 = vadd.f32 0.0, %v4432
    %4434 = vdwg.mxu0
    %v4435 = vadd.f32 %v4288, %v4387
    %v4436 = vadd.f32 %v4289, %v4416
    %v4437 = vadd.f32 %v4290, %v4389
    %v4438 = vadd.f32 %v4291, %v4418
    %v4439 = vadd.f32 %v4292, %v4392
    %v4440 = vadd.f32 %v4293, %v4421
    %v4441 = vadd.f32 %v4294, %v4394
    %v4442 = vadd.f32 %v4295, %v4423
    %v4443 = vadd.f32 %v4296, %v4397
    %v4444 = vadd.f32 %v4297, %v4426
    %v4445 = vadd.f32 %v4298, %v4399
    %v4446 = vadd.f32 %v4299, %v4428
    %v4447 = vadd.f32 %v4300, %v4402
    %v4448 = vadd.f32 %v4301, %v4431
    %v4449 = vadd.f32 %v4302, %v4404
    %v4450 = vadd.f32 %v4303, %v4433
    %v4451 = vld [vmem:[#allocation3 + $0xc0] sm:$0xff]
    %v4452 = vld [vmem:[#allocation3 + $0xc8] sm:$0xff]
    %v4453 = vld [vmem:[#allocation3 + $0xd0] sm:$0xff]
    %v4454 = vld [vmem:[#allocation3 + $0xd8] sm:$0xff]
    %v4455 = vld [vmem:[#allocation3 + $0x1e0] sm:$0xff]
    %v4456 = vld [vmem:[#allocation3 + $0x1e8] sm:$0xff]
    %v4457 = vld [vmem:[#allocation3 + $0x1f0] sm:$0xff]
    %v4458 = vld [vmem:[#allocation3 + $0x1f8] sm:$0xff]
    %v4459 = vpack.c.bf16 %v4452, %v4451
    %v4460 = vpack.c.bf16 %v4454, %v4453
    %v4461 = vpack.c.bf16 %v4456, %v4455
    %v4462 = vpack.c.bf16 %v4458, %v4457
    %s4463 = scalar_lea.vmem [#allocation14], 336
    %v4464 = vld [vmem:[%s4463] sm:$0xff]
    %v4465 = vld [vmem:[%s4463 + $0x8] sm:$0xff]
    %v4466 = vld [vmem:[%s4463 + $0x10] sm:$0xff]
    %v4467 = vld [vmem:[%s4463 + $0x18] sm:$0xff]
    %v4468 = vld [vmem:[%s4463 + $0x20] sm:$0xff]
    %v4469 = vld [vmem:[%s4463 + $0x28] sm:$0xff]
    %v4470 = vld [vmem:[%s4463 + $0x30] sm:$0x11]
    %v4478 = vunpack.c.l.b16 %v4464
    %v4479 = vunpack.c.h.b16 %v4464
    %v4480 = vunpack.c.l.b16 %v4465
    %v4481 = vunpack.c.h.b16 %v4465
    %v4482 = vunpack.c.l.b16 %v4466
    %v4483 = vunpack.c.h.b16 %v4466
    %v4484 = vunpack.c.l.b16 %v4467
    %v4485 = vunpack.c.h.b16 %v4467
    %v4486 = vunpack.c.l.b16 %v4468
    %v4487 = vunpack.c.h.b16 %v4468
    %v4488 = vunpack.c.l.b16 %v4469
    %v4489 = vunpack.c.h.b16 %v4469
    %v4490 = vunpack.c.l.b16 %v4470
    %v4491 = vunpack.c.h.b16 %v4470
    %v4492 = vpack.c.b16 %v4480, %v4478
    %v4493 = vpack.c.b16 %v4481, %v4479
    %v4494 = vpack.c.b16 %v4484, %v4482
    %v4495 = vpack.c.b16 %v4485, %v4483
    %v4496 = vpack.c.b16 %v4488, %v4486
    %v4497 = vpack.c.b16 %v4489, %v4487
    %v4498 = vpack.c.b16 %v4490, %v4490
    %v4499 = vpack.c.b16 %v4491, %v4491
    %v4507 = vsel %vm3243, %v4459, 0
    %v4510 = vsel %vm3243, %v4460, 0
    %v4513 = vsel %vm3243, %v4461, 0
    %v4516 = vsel %vm3243, %v4462, 0
    %v4519 = vand.u32 %v4498, %v3687
    %v4522 = vand.u32 %v4499, %v3687
    %4524 = vmatpush.bf16.msra.mxu0 0
    %4525 = vmatpush.bf16.msra.mxu0 0
    %4526 = vmatpush.bf16.msra.mxu0 0
    %4527 = vmatpush.bf16.msra.mxu0 0
    %4528 = vmatpush.bf16.msra.mxu0 %v4519
    %4529 = vmatpush.bf16.msra.mxu0 %v4496
    %4530 = vmatpush.bf16.msra.mxu0 %v4494
    %4531 = vmatpush.bf16.msra.mxu0 %v4492
    %4532 = vmatmul.bf16.gmra.mxu0 %v4507
    %v4533 = vpop.f32.mrf.mxu0
    %v4534 = vadd.f32 0.0, %v4533
    %v4535 = vpop.f32.mrf.mxu0
    %v4536 = vadd.f32 0.0, %v4535
    %4537 = vmatmul.bf16.gmra.mxu0 %v4510
    %v4538 = vpop.f32.mrf.mxu0
    %v4539 = vadd.f32 0.0, %v4538
    %v4540 = vpop.f32.mrf.mxu0
    %v4541 = vadd.f32 0.0, %v4540
    %4542 = vmatmul.bf16.gmra.mxu0 %v4513
    %v4543 = vpop.f32.mrf.mxu0
    %v4544 = vadd.f32 0.0, %v4543
    %v4545 = vpop.f32.mrf.mxu0
    %v4546 = vadd.f32 0.0, %v4545
    %4547 = vmatmul.bf16.gmra.mxu0 %v4516
    %v4548 = vpop.f32.mrf.mxu0
    %v4549 = vadd.f32 0.0, %v4548
    %v4550 = vpop.f32.mrf.mxu0
    %v4551 = vadd.f32 0.0, %v4550
    %4552 = vdwg.mxu0
    %4553 = vmatpush.bf16.msra.mxu0 0
    %4554 = vmatpush.bf16.msra.mxu0 0
    %4555 = vmatpush.bf16.msra.mxu0 0
    %4556 = vmatpush.bf16.msra.mxu0 0
    %4557 = vmatpush.bf16.msra.mxu0 %v4522
    %4558 = vmatpush.bf16.msra.mxu0 %v4497
    %4559 = vmatpush.bf16.msra.mxu0 %v4495
    %4560 = vmatpush.bf16.msra.mxu0 %v4493
    %4561 = vmatmul.bf16.gmra.mxu0 %v4507
    %v4562 = vpop.f32.mrf.mxu0
    %v4563 = vadd.f32 0.0, %v4562
    %v4564 = vpop.f32.mrf.mxu0
    %v4565 = vadd.f32 0.0, %v4564
    %4566 = vmatmul.bf16.gmra.mxu0 %v4510
    %v4567 = vpop.f32.mrf.mxu0
    %v4568 = vadd.f32 0.0, %v4567
    %v4569 = vpop.f32.mrf.mxu0
    %v4570 = vadd.f32 0.0, %v4569
    %4571 = vmatmul.bf16.gmra.mxu0 %v4513
    %v4572 = vpop.f32.mrf.mxu0
    %v4573 = vadd.f32 0.0, %v4572
    %v4574 = vpop.f32.mrf.mxu0
    %v4575 = vadd.f32 0.0, %v4574
    %4576 = vmatmul.bf16.gmra.mxu0 %v4516
    %v4577 = vpop.f32.mrf.mxu0
    %v4578 = vadd.f32 0.0, %v4577
    %v4579 = vpop.f32.mrf.mxu0
    %v4580 = vadd.f32 0.0, %v4579
    %4581 = vdwg.mxu0
    %v4582 = vadd.f32 %v4435, %v4534
    %v4583 = vadd.f32 %v4436, %v4563
    %v4584 = vadd.f32 %v4437, %v4536
    %v4585 = vadd.f32 %v4438, %v4565
    %v4586 = vadd.f32 %v4439, %v4539
    %v4587 = vadd.f32 %v4440, %v4568
    %v4588 = vadd.f32 %v4441, %v4541
    %v4589 = vadd.f32 %v4442, %v4570
    %v4590 = vadd.f32 %v4443, %v4544
    %v4591 = vadd.f32 %v4444, %v4573
    %v4592 = vadd.f32 %v4445, %v4546
    %v4593 = vadd.f32 %v4446, %v4575
    %v4594 = vadd.f32 %v4447, %v4549
    %v4595 = vadd.f32 %v4448, %v4578
    %v4596 = vadd.f32 %v4449, %v4551
    %v4597 = vadd.f32 %v4450, %v4580
    %v4598 = vld [vmem:[#allocation3 + $0xe0] sm:$0xff]
    %v4599 = vld [vmem:[#allocation3 + $0xe8] sm:$0xff]
    %v4600 = vld [vmem:[#allocation3 + $0xf0] sm:$0xff]
    %v4601 = vld [vmem:[#allocation3 + $0xf8] sm:$0xff]
    %v4602 = vld [vmem:[#allocation3 + $0x200] sm:$0xff]
    %v4603 = vld [vmem:[#allocation3 + $0x208] sm:$0xff]
    %v4604 = vld [vmem:[#allocation3 + $0x210] sm:$0xff]
    %v4605 = vld [vmem:[#allocation3 + $0x218] sm:$0xff]
    %v4606 = vpack.c.bf16 %v4599, %v4598
    %v4607 = vpack.c.bf16 %v4601, %v4600
    %v4608 = vpack.c.bf16 %v4603, %v4602
    %v4609 = vpack.c.bf16 %v4605, %v4604
    %s4610 = scalar_lea.vmem [#allocation14], 392
    %v4611 = vld [vmem:[%s4610] sm:$0xff]
    %v4612 = vld [vmem:[%s4610 + $0x8] sm:$0xff]
    %v4613 = vld [vmem:[%s4610 + $0x10] sm:$0xff]
    %v4614 = vld [vmem:[%s4610 + $0x18] sm:$0xff]
    %v4615 = vld [vmem:[%s4610 + $0x20] sm:$0xff]
    %v4616 = vld [vmem:[%s4610 + $0x28] sm:$0xff]
    %v4617 = vld [vmem:[%s4610 + $0x30] sm:$0x11]
    %v4625 = vunpack.c.l.b16 %v4611
    %v4626 = vunpack.c.h.b16 %v4611
    %v4627 = vunpack.c.l.b16 %v4612
    %v4628 = vunpack.c.h.b16 %v4612
    %v4629 = vunpack.c.l.b16 %v4613
    %v4630 = vunpack.c.h.b16 %v4613
    %v4631 = vunpack.c.l.b16 %v4614
    %v4632 = vunpack.c.h.b16 %v4614
    %v4633 = vunpack.c.l.b16 %v4615
    %v4634 = vunpack.c.h.b16 %v4615
    %v4635 = vunpack.c.l.b16 %v4616
    %v4636 = vunpack.c.h.b16 %v4616
    %v4637 = vunpack.c.l.b16 %v4617
    %v4638 = vunpack.c.h.b16 %v4617
    %v4639 = vpack.c.b16 %v4627, %v4625
    %v4640 = vpack.c.b16 %v4628, %v4626
    %v4641 = vpack.c.b16 %v4631, %v4629
    %v4642 = vpack.c.b16 %v4632, %v4630
    %v4643 = vpack.c.b16 %v4635, %v4633
    %v4644 = vpack.c.b16 %v4636, %v4634
    %v4645 = vpack.c.b16 %v4637, %v4637
    %v4646 = vpack.c.b16 %v4638, %v4638
    %v4654 = vsel %vm3243, %v4606, 0
    %v4657 = vsel %vm3243, %v4607, 0
    %v4660 = vsel %vm3243, %v4608, 0
    %v4663 = vsel %vm3243, %v4609, 0
    %v4666 = vand.u32 %v4645, %v3687
    %v4669 = vand.u32 %v4646, %v3687
    %4671 = vmatpush.bf16.msra.mxu0 0
    %4672 = vmatpush.bf16.msra.mxu0 0
    %4673 = vmatpush.bf16.msra.mxu0 0
    %4674 = vmatpush.bf16.msra.mxu0 0
    %4675 = vmatpush.bf16.msra.mxu0 %v4666
    %4676 = vmatpush.bf16.msra.mxu0 %v4643
    %4677 = vmatpush.bf16.msra.mxu0 %v4641
    %4678 = vmatpush.bf16.msra.mxu0 %v4639
    %4679 = vmatmul.bf16.gmra.mxu0 %v4654
    %v4680 = vpop.f32.mrf.mxu0
    %v4681 = vadd.f32 0.0, %v4680
    %v4682 = vpop.f32.mrf.mxu0
    %v4683 = vadd.f32 0.0, %v4682
    %4684 = vmatmul.bf16.gmra.mxu0 %v4657
    %v4685 = vpop.f32.mrf.mxu0
    %v4686 = vadd.f32 0.0, %v4685
    %v4687 = vpop.f32.mrf.mxu0
    %v4688 = vadd.f32 0.0, %v4687
    %4689 = vmatmul.bf16.gmra.mxu0 %v4660
    %v4690 = vpop.f32.mrf.mxu0
    %v4691 = vadd.f32 0.0, %v4690
    %v4692 = vpop.f32.mrf.mxu0
    %v4693 = vadd.f32 0.0, %v4692
    %4694 = vmatmul.bf16.gmra.mxu0 %v4663
    %v4695 = vpop.f32.mrf.mxu0
    %v4696 = vadd.f32 0.0, %v4695
    %v4697 = vpop.f32.mrf.mxu0
    %v4698 = vadd.f32 0.0, %v4697
    %4699 = vdwg.mxu0
    %4700 = vmatpush.bf16.msra.mxu0 0
    %4701 = vmatpush.bf16.msra.mxu0 0
    %4702 = vmatpush.bf16.msra.mxu0 0
    %4703 = vmatpush.bf16.msra.mxu0 0
    %4704 = vmatpush.bf16.msra.mxu0 %v4669
    %4705 = vmatpush.bf16.msra.mxu0 %v4644
    %4706 = vmatpush.bf16.msra.mxu0 %v4642
    %4707 = vmatpush.bf16.msra.mxu0 %v4640
    %4708 = vmatmul.bf16.gmra.mxu0 %v4654
    %v4709 = vpop.f32.mrf.mxu0
    %v4710 = vadd.f32 0.0, %v4709
    %v4711 = vpop.f32.mrf.mxu0
    %v4712 = vadd.f32 0.0, %v4711
    %4713 = vmatmul.bf16.gmra.mxu0 %v4657
    %v4714 = vpop.f32.mrf.mxu0
    %v4715 = vadd.f32 0.0, %v4714
    %v4716 = vpop.f32.mrf.mxu0
    %v4717 = vadd.f32 0.0, %v4716
    %4718 = vmatmul.bf16.gmra.mxu0 %v4660
    %v4719 = vpop.f32.mrf.mxu0
    %v4720 = vadd.f32 0.0, %v4719
    %v4721 = vpop.f32.mrf.mxu0
    %v4722 = vadd.f32 0.0, %v4721
    %4723 = vmatmul.bf16.gmra.mxu0 %v4663
    %v4724 = vpop.f32.mrf.mxu0
    %v4725 = vadd.f32 0.0, %v4724
    %v4726 = vpop.f32.mrf.mxu0
    %v4727 = vadd.f32 0.0, %v4726
    %4728 = vdwg.mxu0
    %v4729 = vadd.f32 %v4582, %v4681
    %v4730 = vadd.f32 %v4583, %v4710
    %v4731 = vadd.f32 %v4584, %v4683
    %v4732 = vadd.f32 %v4585, %v4712
    %v4733 = vadd.f32 %v4586, %v4686
    %v4734 = vadd.f32 %v4587, %v4715
    %v4735 = vadd.f32 %v4588, %v4688
    %v4736 = vadd.f32 %v4589, %v4717
    %v4737 = vadd.f32 %v4590, %v4691
    %v4738 = vadd.f32 %v4591, %v4720
    %v4739 = vadd.f32 %v4592, %v4693
    %v4740 = vadd.f32 %v4593, %v4722
    %v4741 = vadd.f32 %v4594, %v4696
    %v4742 = vadd.f32 %v4595, %v4725
    %v4743 = vadd.f32 %v4596, %v4698
    %v4744 = vadd.f32 %v4597, %v4727
    %v4745 = vld [vmem:[#allocation3 + $0x100] sm:$0xff]
    %v4746 = vld [vmem:[#allocation3 + $0x108] sm:$0xff]
    %v4747 = vld [vmem:[#allocation3 + $0x110] sm:$0xff]
    %v4748 = vld [vmem:[#allocation3 + $0x118] sm:$0xff]
    %v4749 = vld [vmem:[#allocation3 + $0x220] sm:$0xff]
    %v4750 = vld [vmem:[#allocation3 + $0x228] sm:$0xff]
    %v4751 = vld [vmem:[#allocation3 + $0x230] sm:$0xff]
    %v4752 = vld [vmem:[#allocation3 + $0x238] sm:$0xff]
    %v4753 = vpack.c.bf16 %v4746, %v4745
    %v4754 = vpack.c.bf16 %v4748, %v4747
    %v4755 = vpack.c.bf16 %v4750, %v4749
    %v4756 = vpack.c.bf16 %v4752, %v4751
    %s4757 = scalar_lea.vmem [#allocation14], 448
    %v4758 = vld [vmem:[%s4757] sm:$0xff]
    %v4759 = vld [vmem:[%s4757 + $0x8] sm:$0xff]
    %v4760 = vld [vmem:[%s4757 + $0x10] sm:$0xff]
    %v4761 = vld [vmem:[%s4757 + $0x18] sm:$0xff]
    %v4762 = vld [vmem:[%s4757 + $0x20] sm:$0xff]
    %v4763 = vld [vmem:[%s4757 + $0x28] sm:$0xff]
    %v4764 = vld [vmem:[%s4757 + $0x30] sm:$0x11]
    %v4772 = vunpack.c.l.b16 %v4758
    %v4773 = vunpack.c.h.b16 %v4758
    %v4774 = vunpack.c.l.b16 %v4759
    %v4775 = vunpack.c.h.b16 %v4759
    %v4776 = vunpack.c.l.b16 %v4760
    %v4777 = vunpack.c.h.b16 %v4760
    %v4778 = vunpack.c.l.b16 %v4761
    %v4779 = vunpack.c.h.b16 %v4761
    %v4780 = vunpack.c.l.b16 %v4762
    %v4781 = vunpack.c.h.b16 %v4762
    %v4782 = vunpack.c.l.b16 %v4763
    %v4783 = vunpack.c.h.b16 %v4763
    %v4784 = vunpack.c.l.b16 %v4764
    %v4785 = vunpack.c.h.b16 %v4764
    %v4786 = vpack.c.b16 %v4774, %v4772
    %v4787 = vpack.c.b16 %v4775, %v4773
    %v4788 = vpack.c.b16 %v4778, %v4776
    %v4789 = vpack.c.b16 %v4779, %v4777
    %v4790 = vpack.c.b16 %v4782, %v4780
    %v4791 = vpack.c.b16 %v4783, %v4781
    %v4792 = vpack.c.b16 %v4784, %v4784
    %v4793 = vpack.c.b16 %v4785, %v4785
    %v4801 = vsel %vm3243, %v4753, 0
    %v4804 = vsel %vm3243, %v4754, 0
    %v4807 = vsel %vm3243, %v4755, 0
    %v4810 = vsel %vm3243, %v4756, 0
    %v4813 = vand.u32 %v4792, %v3687
    %v4816 = vand.u32 %v4793, %v3687
    %4818 = vmatpush.bf16.msra.mxu0 0
    %4819 = vmatpush.bf16.msra.mxu0 0
    %4820 = vmatpush.bf16.msra.mxu0 0
    %4821 = vmatpush.bf16.msra.mxu0 0
    %4822 = vmatpush.bf16.msra.mxu0 %v4813
    %4823 = vmatpush.bf16.msra.mxu0 %v4790
    %4824 = vmatpush.bf16.msra.mxu0 %v4788
    %4825 = vmatpush.bf16.msra.mxu0 %v4786
    %4826 = vmatmul.bf16.gmra.mxu0 %v4801
    %v4827 = vpop.f32.mrf.mxu0
    %v4828 = vadd.f32 0.0, %v4827
    %v4829 = vpop.f32.mrf.mxu0
    %v4830 = vadd.f32 0.0, %v4829
    %4831 = vmatmul.bf16.gmra.mxu0 %v4804
    %v4832 = vpop.f32.mrf.mxu0
    %v4833 = vadd.f32 0.0, %v4832
    %v4834 = vpop.f32.mrf.mxu0
    %v4835 = vadd.f32 0.0, %v4834
    %4836 = vmatmul.bf16.gmra.mxu0 %v4807
    %v4837 = vpop.f32.mrf.mxu0
    %v4838 = vadd.f32 0.0, %v4837
    %v4839 = vpop.f32.mrf.mxu0
    %v4840 = vadd.f32 0.0, %v4839
    %4841 = vmatmul.bf16.gmra.mxu0 %v4810
    %v4842 = vpop.f32.mrf.mxu0
    %v4843 = vadd.f32 0.0, %v4842
    %v4844 = vpop.f32.mrf.mxu0
    %v4845 = vadd.f32 0.0, %v4844
    %4846 = vdwg.mxu0
    %4847 = vmatpush.bf16.msra.mxu0 0
    %4848 = vmatpush.bf16.msra.mxu0 0
    %4849 = vmatpush.bf16.msra.mxu0 0
    %4850 = vmatpush.bf16.msra.mxu0 0
    %4851 = vmatpush.bf16.msra.mxu0 %v4816
    %4852 = vmatpush.bf16.msra.mxu0 %v4791
    %4853 = vmatpush.bf16.msra.mxu0 %v4789
    %4854 = vmatpush.bf16.msra.mxu0 %v4787
    %4855 = vmatmul.bf16.gmra.mxu0 %v4801
    %v4856 = vpop.f32.mrf.mxu0
    %v4857 = vadd.f32 0.0, %v4856
    %v4858 = vpop.f32.mrf.mxu0
    %v4859 = vadd.f32 0.0, %v4858
    %4860 = vmatmul.bf16.gmra.mxu0 %v4804
    %v4861 = vpop.f32.mrf.mxu0
    %v4862 = vadd.f32 0.0, %v4861
    %v4863 = vpop.f32.mrf.mxu0
    %v4864 = vadd.f32 0.0, %v4863
    %4865 = vmatmul.bf16.gmra.mxu0 %v4807
    %v4866 = vpop.f32.mrf.mxu0
    %v4867 = vadd.f32 0.0, %v4866
    %v4868 = vpop.f32.mrf.mxu0
    %v4869 = vadd.f32 0.0, %v4868
    %4870 = vmatmul.bf16.gmra.mxu0 %v4810
    %v4871 = vpop.f32.mrf.mxu0
    %v4872 = vadd.f32 0.0, %v4871
    %v4873 = vpop.f32.mrf.mxu0
    %v4874 = vadd.f32 0.0, %v4873
    %4875 = vdwg.mxu0
    %v4876 = vadd.f32 %v4729, %v4828
    %v4877 = vadd.f32 %v4730, %v4857
    %v4878 = vadd.f32 %v4731, %v4830
    %v4879 = vadd.f32 %v4732, %v4859
    %v4880 = vadd.f32 %v4733, %v4833
    %v4881 = vadd.f32 %v4734, %v4862
    %v4882 = vadd.f32 %v4735, %v4835
    %v4883 = vadd.f32 %v4736, %v4864
    %v4884 = vadd.f32 %v4737, %v4838
    %v4885 = vadd.f32 %v4738, %v4867
    %v4886 = vadd.f32 %v4739, %v4840
    %v4887 = vadd.f32 %v4740, %v4869
    %v4888 = vadd.f32 %v4741, %v4843
    %v4889 = vadd.f32 %v4742, %v4872
    %v4890 = vadd.f32 %v4743, %v4845
    %v4891 = vadd.f32 %v4744, %v4874
    %v4892 = vld [vmem:[%s8] sm:$0xff]
    %v4893 = vld [vmem:[%s8 + $0x8] sm:$0xff]
    %v4894 = vld [vmem:[%s8 + $0x10] sm:$0xff]
    %v4895 = vld [vmem:[%s8 + $0x18] sm:$0xff]
    %4897 = vset.pattern.permute.xlu0 0
    %4898 = vperm.xlu0 %4897, %v4892
    %v4899 = vpop.permute.xlu0 %4898
    %4902 = vset.pattern.permute.xlu0 0
    %4903 = vperm.xlu0 %4902, %v4893
    %v4904 = vpop.permute.xlu0 %4903
    %4907 = vset.pattern.permute.xlu0 0
    %4908 = vperm.xlu0 %4907, %v4894
    %v4909 = vpop.permute.xlu0 %4908
    %4912 = vset.pattern.permute.xlu0 0
    %4913 = vperm.xlu0 %4912, %v4895
    %v4914 = vpop.permute.xlu0 %4913
    %v4916 = vadd.f32 %v4876, %v4899
    %v4917 = vadd.f32 %v4877, %v4899
    %v4918 = vadd.f32 %v4878, %v4904
    %v4919 = vadd.f32 %v4879, %v4904
    %v4920 = vadd.f32 %v4880, %v4909
    %v4921 = vadd.f32 %v4881, %v4909
    %v4922 = vadd.f32 %v4882, %v4914
    %v4923 = vadd.f32 %v4883, %v4914
    %v4924 = vadd.f32 %v4884, %v4899
    %v4925 = vadd.f32 %v4885, %v4899
    %v4926 = vadd.f32 %v4886, %v4904
    %v4927 = vadd.f32 %v4887, %v4904
    %v4928 = vadd.f32 %v4888, %v4909
    %v4929 = vadd.f32 %v4889, %v4909
    %v4930 = vadd.f32 %v4890, %v4914
    %v4931 = vadd.f32 %v4891, %v4914
    %v4932 = vmax.f32 %v4916, 0.0
    %v4933 = vmax.f32 %v4917, 0.0
    %v4934 = vmax.f32 %v4918, 0.0
    %v4935 = vmax.f32 %v4919, 0.0
    %v4936 = vmax.f32 %v4920, 0.0
    %v4937 = vmax.f32 %v4921, 0.0
    %v4938 = vmax.f32 %v4922, 0.0
    %v4939 = vmax.f32 %v4923, 0.0
    %v4940 = vmax.f32 %v4924, 0.0
    %v4941 = vmax.f32 %v4925, 0.0
    %v4942 = vmax.f32 %v4926, 0.0
    %v4943 = vmax.f32 %v4927, 0.0
    %v4944 = vmax.f32 %v4928, 0.0
    %v4945 = vmax.f32 %v4929, 0.0
    %v4946 = vmax.f32 %v4930, 0.0
    %v4947 = vmax.f32 %v4931, 0.0
    %v4948 = vpack.c.bf16 %v4934, %v4932
    %v4949 = vpack.c.bf16 %v4935, %v4933
    %v4950 = vpack.c.bf16 %v4938, %v4936
    %v4951 = vpack.c.bf16 %v4939, %v4937
    %v4952 = vld [vmem:[%s9] sm:$0xf]
    %v4953 = vld [vmem:[%s9 + $0x4] sm:$0xf]
    %v4954 = vld [vmem:[%s9 + $0x8] sm:$0xf]
    %v4955 = vld [vmem:[%s9 + $0xc] sm:$0xf]
    %v4956 = vld [vmem:[%s9 + $0x10] sm:$0xf]
    %v4957 = vld [vmem:[%s9 + $0x14] sm:$0xf]
    %v4958 = vld [vmem:[%s9 + $0x18] sm:$0xf]
    %v4959 = vld [vmem:[%s9 + $0x1c] sm:$0xf]
    %v4960 = vld [vmem:[%s9 + $0x20] sm:$0xf]
    %v4970 = vunpack.c.l.b16 %v4952
    %v4971 = vunpack.c.l.b16 %v4953
    %v4972 = vunpack.c.l.b16 %v4954
    %v4973 = vunpack.c.l.b16 %v4955
    %v4974 = vunpack.c.l.b16 %v4956
    %v4975 = vunpack.c.l.b16 %v4957
    %v4976 = vunpack.c.l.b16 %v4958
    %v4977 = vunpack.c.l.b16 %v4959
    %v4978 = vunpack.c.l.b16 %v4960
    %v4979 = vpack.c.b16 %v4971, %v4970
    %v4980 = vpack.c.b16 %v4973, %v4972
    %v4981 = vpack.c.b16 %v4975, %v4974
    %v4982 = vpack.c.b16 %v4977, %v4976
    %v4983 = vpack.c.b16 %v4978, %v4978
    %vm4984 = vcmask 261120
    %v4986 = vsel %vm4984, %v4979, 0
    %v4989 = vsel %vm4984, %v4980, 0
    %v4992 = vsel %vm4984, %v4981, 0
    %v4995 = vsel %vm4984, %v4982, 0
    %v4998 = vsel %vm4984, %v4983, 0
    %5000 = vmatpush.bf16.msra.mxu0 0
    %5001 = vmatpush.bf16.msra.mxu0 0
    %5002 = vmatpush.bf16.msra.mxu0 0
    %5003 = vmatpush.bf16.msra.mxu0 0
    %5004 = vmatpush.bf16.msra.mxu0 0
    %5005 = vmatpush.bf16.msra.mxu0 0
    %5006 = vmatpush.bf16.msra.mxu0 %v4950
    %5007 = vmatpush.bf16.msra.mxu0 %v4948
    %5008 = vmatmul.bf16.gmra.mxu0 %v4986
    %v5009 = vpop.f32.mrf.mxu0
    %v5010 = vadd.f32 0.0, %v5009
    %v5011 = vpop.f32.mrf.mxu0
    %v5012 = vadd.f32 0.0, %v5011
    %5013 = vmatmul.bf16.gmra.mxu0 %v4989
    %v5014 = vpop.f32.mrf.mxu0
    %v5015 = vadd.f32 0.0, %v5014
    %v5016 = vpop.f32.mrf.mxu0
    %v5017 = vadd.f32 0.0, %v5016
    %5018 = vmatmul.bf16.gmra.mxu0 %v4992
    %v5019 = vpop.f32.mrf.mxu0
    %v5020 = vadd.f32 0.0, %v5019
    %v5021 = vpop.f32.mrf.mxu0
    %v5022 = vadd.f32 0.0, %v5021
    %5023 = vmatmul.bf16.gmra.mxu0 %v4995
    %v5024 = vpop.f32.mrf.mxu0
    %v5025 = vadd.f32 0.0, %v5024
    %v5026 = vpop.f32.mrf.mxu0
    %v5027 = vadd.f32 0.0, %v5026
    %5028 = vmatmul.bf16.gmra.mxu0 %v4998
    %v5029 = vpop.f32.mrf.mxu0
    %v5030 = vadd.f32 0.0, %v5029
    %v5031 = vpop.f32.mrf.mxu0
    %5032 = vdwg.mxu0
    %5033 = vmatpush.bf16.msra.mxu0 0
    %5034 = vmatpush.bf16.msra.mxu0 0
    %5035 = vmatpush.bf16.msra.mxu0 0
    %5036 = vmatpush.bf16.msra.mxu0 0
    %5037 = vmatpush.bf16.msra.mxu0 0
    %5038 = vmatpush.bf16.msra.mxu0 0
    %5039 = vmatpush.bf16.msra.mxu0 %v4951
    %5040 = vmatpush.bf16.msra.mxu0 %v4949
    %5041 = vmatmul.bf16.gmra.mxu0 %v4986
    %v5042 = vpop.f32.mrf.mxu0
    %v5043 = vadd.f32 0.0, %v5042
    %v5044 = vpop.f32.mrf.mxu0
    %v5045 = vadd.f32 0.0, %v5044
    %5046 = vmatmul.bf16.gmra.mxu0 %v4989
    %v5047 = vpop.f32.mrf.mxu0
    %v5048 = vadd.f32 0.0, %v5047
    %v5049 = vpop.f32.mrf.mxu0
    %v5050 = vadd.f32 0.0, %v5049
    %5051 = vmatmul.bf16.gmra.mxu0 %v4992
    %v5052 = vpop.f32.mrf.mxu0
    %v5053 = vadd.f32 0.0, %v5052
    %v5054 = vpop.f32.mrf.mxu0
    %v5055 = vadd.f32 0.0, %v5054
    %5056 = vmatmul.bf16.gmra.mxu0 %v4995
    %v5057 = vpop.f32.mrf.mxu0
    %v5058 = vadd.f32 0.0, %v5057
    %v5059 = vpop.f32.mrf.mxu0
    %v5060 = vadd.f32 0.0, %v5059
    %5061 = vmatmul.bf16.gmra.mxu0 %v4998
    %v5062 = vpop.f32.mrf.mxu0
    %v5063 = vadd.f32 0.0, %v5062
    %v5064 = vpop.f32.mrf.mxu0
    %5065 = vdwg.mxu0
    %5066 = vst [vmem:[#allocation4] sm:$0xff] %v5010
    %vm5067 = vcmask 556032
    %5068 = vst.msk [vmem:[#allocation4 + $0x8] sm:$0xff] %vm5067, %v5043
    %5069 = vst [vmem:[#allocation4 + $0x10] sm:$0xff] %v5012
    %5070 = vst.msk [vmem:[#allocation4 + $0x18] sm:$0xff] %vm5067, %v5045
    %5071 = vst [vmem:[#allocation4 + $0x20] sm:$0xff] %v5015
    %5072 = vst.msk [vmem:[#allocation4 + $0x28] sm:$0xff] %vm5067, %v5048
    %5073 = vst [vmem:[#allocation4 + $0x30] sm:$0xff] %v5017
    %5074 = vst.msk [vmem:[#allocation4 + $0x38] sm:$0xff] %vm5067, %v5050
    %5075 = vst [vmem:[#allocation4 + $0x40] sm:$0xff] %v5020
    %5076 = vst.msk [vmem:[#allocation4 + $0x48] sm:$0xff] %vm5067, %v5053
    %5077 = vst [vmem:[#allocation4 + $0x50] sm:$0xff] %v5022
    %5078 = vst.msk [vmem:[#allocation4 + $0x58] sm:$0xff] %vm5067, %v5055
    %5079 = vst [vmem:[#allocation4 + $0x60] sm:$0xff] %v5025
    %5080 = vst.msk [vmem:[#allocation4 + $0x68] sm:$0xff] %vm5067, %v5058
    %5081 = vst [vmem:[#allocation4 + $0x70] sm:$0xff] %v5027
    %5082 = vst.msk [vmem:[#allocation4 + $0x78] sm:$0xff] %vm5067, %v5060
    %5083 = vst [vmem:[#allocation4 + $0x80] sm:$0xff] %v5030
    %5084 = vst.msk [vmem:[#allocation4 + $0x88] sm:$0xff] %vm5067, %v5063
    %v5085 = vpack.c.bf16 %v4942, %v4940
    %v5086 = vpack.c.bf16 %v4943, %v4941
    %v5087 = vpack.c.bf16 %v4946, %v4944
    %v5088 = vpack.c.bf16 %v4947, %v4945
    %v5089 = vld [vmem:[%s9] sm:$0xf]
    %v5090 = vld [vmem:[%s9 + $0x4] sm:$0xf]
    %v5091 = vld [vmem:[%s9 + $0x8] sm:$0xf]
    %v5092 = vld [vmem:[%s9 + $0xc] sm:$0xf]
    %v5093 = vld [vmem:[%s9 + $0x10] sm:$0xf]
    %v5094 = vld [vmem:[%s9 + $0x14] sm:$0xf]
    %v5095 = vld [vmem:[%s9 + $0x18] sm:$0xf]
    %v5096 = vld [vmem:[%s9 + $0x1c] sm:$0xf]
    %v5097 = vld [vmem:[%s9 + $0x20] sm:$0xf]
    %v5107 = vunpack.c.l.b16 %v5089
    %v5108 = vunpack.c.l.b16 %v5090
    %v5109 = vunpack.c.l.b16 %v5091
    %v5110 = vunpack.c.l.b16 %v5092
    %v5111 = vunpack.c.l.b16 %v5093
    %v5112 = vunpack.c.l.b16 %v5094
    %v5113 = vunpack.c.l.b16 %v5095
    %v5114 = vunpack.c.l.b16 %v5096
    %v5115 = vunpack.c.l.b16 %v5097
    %v5116 = vpack.c.b16 %v5108, %v5107
    %v5117 = vpack.c.b16 %v5110, %v5109
    %v5118 = vpack.c.b16 %v5112, %v5111
    %v5119 = vpack.c.b16 %v5114, %v5113
    %v5120 = vpack.c.b16 %v5115, %v5115
    %v5122 = vsel %vm4984, %v5116, 0
    %v5125 = vsel %vm4984, %v5117, 0
    %v5128 = vsel %vm4984, %v5118, 0
    %v5131 = vsel %vm4984, %v5119, 0
    %v5134 = vsel %vm4984, %v5120, 0
    %5136 = vmatpush.bf16.msra.mxu0 0
    %5137 = vmatpush.bf16.msra.mxu0 0
    %5138 = vmatpush.bf16.msra.mxu0 0
    %5139 = vmatpush.bf16.msra.mxu0 0
    %5140 = vmatpush.bf16.msra.mxu0 0
    %5141 = vmatpush.bf16.msra.mxu0 0
    %5142 = vmatpush.bf16.msra.mxu0 %v5087
    %5143 = vmatpush.bf16.msra.mxu0 %v5085
    %5144 = vmatmul.bf16.gmra.mxu0 %v5122
    %v5145 = vpop.f32.mrf.mxu0
    %v5146 = vadd.f32 0.0, %v5145
    %v5147 = vpop.f32.mrf.mxu0
    %v5148 = vadd.f32 0.0, %v5147
    %5149 = vmatmul.bf16.gmra.mxu0 %v5125
    %v5150 = vpop.f32.mrf.mxu0
    %v5151 = vadd.f32 0.0, %v5150
    %v5152 = vpop.f32.mrf.mxu0
    %v5153 = vadd.f32 0.0, %v5152
    %5154 = vmatmul.bf16.gmra.mxu0 %v5128
    %v5155 = vpop.f32.mrf.mxu0
    %v5156 = vadd.f32 0.0, %v5155
    %v5157 = vpop.f32.mrf.mxu0
    %v5158 = vadd.f32 0.0, %v5157
    %5159 = vmatmul.bf16.gmra.mxu0 %v5131
    %v5160 = vpop.f32.mrf.mxu0
    %v5161 = vadd.f32 0.0, %v5160
    %v5162 = vpop.f32.mrf.mxu0
    %v5163 = vadd.f32 0.0, %v5162
    %5164 = vmatmul.bf16.gmra.mxu0 %v5134
    %v5165 = vpop.f32.mrf.mxu0
    %v5166 = vadd.f32 0.0, %v5165
    %v5167 = vpop.f32.mrf.mxu0
    %5168 = vdwg.mxu0
    %5169 = vmatpush.bf16.msra.mxu0 0
    %5170 = vmatpush.bf16.msra.mxu0 0
    %5171 = vmatpush.bf16.msra.mxu0 0
    %5172 = vmatpush.bf16.msra.mxu0 0
    %5173 = vmatpush.bf16.msra.mxu0 0
    %5174 = vmatpush.bf16.msra.mxu0 0
    %5175 = vmatpush.bf16.msra.mxu0 %v5088
    %5176 = vmatpush.bf16.msra.mxu0 %v5086
    %5177 = vmatmul.bf16.gmra.mxu0 %v5122
    %v5178 = vpop.f32.mrf.mxu0
    %v5179 = vadd.f32 0.0, %v5178
    %v5180 = vpop.f32.mrf.mxu0
    %v5181 = vadd.f32 0.0, %v5180
    %5182 = vmatmul.bf16.gmra.mxu0 %v5125
    %v5183 = vpop.f32.mrf.mxu0
    %v5184 = vadd.f32 0.0, %v5183
    %v5185 = vpop.f32.mrf.mxu0
    %v5186 = vadd.f32 0.0, %v5185
    %5187 = vmatmul.bf16.gmra.mxu0 %v5128
    %v5188 = vpop.f32.mrf.mxu0
    %v5189 = vadd.f32 0.0, %v5188
    %v5190 = vpop.f32.mrf.mxu0
    %v5191 = vadd.f32 0.0, %v5190
    %5192 = vmatmul.bf16.gmra.mxu0 %v5131
    %v5193 = vpop.f32.mrf.mxu0
    %v5194 = vadd.f32 0.0, %v5193
    %v5195 = vpop.f32.mrf.mxu0
    %v5196 = vadd.f32 0.0, %v5195
    %5197 = vmatmul.bf16.gmra.mxu0 %v5134
    %v5198 = vpop.f32.mrf.mxu0
    %v5199 = vadd.f32 0.0, %v5198
    %v5200 = vpop.f32.mrf.mxu0
    %5201 = vdwg.mxu0
    %s5202 = scalar_lea.vmem [#allocation4], 144
    %5203 = vst [vmem:[%s5202] sm:$0xff] %v5146
    %5204 = vst.msk [vmem:[%s5202 + $0x8] sm:$0xff] %vm5067, %v5179
    %5205 = vst [vmem:[%s5202 + $0x10] sm:$0xff] %v5148
    %5206 = vst.msk [vmem:[%s5202 + $0x18] sm:$0xff] %vm5067, %v5181
    %5207 = vst [vmem:[%s5202 + $0x20] sm:$0xff] %v5151
    %5208 = vst.msk [vmem:[%s5202 + $0x28] sm:$0xff] %vm5067, %v5184
    %5209 = vst [vmem:[%s5202 + $0x30] sm:$0xff] %v5153
    %5210 = vst.msk [vmem:[%s5202 + $0x38] sm:$0xff] %vm5067, %v5186
    %5211 = vst [vmem:[%s5202 + $0x40] sm:$0xff] %v5156
    %5212 = vst.msk [vmem:[%s5202 + $0x48] sm:$0xff] %vm5067, %v5189
    %5213 = vst [vmem:[%s5202 + $0x50] sm:$0xff] %v5158
    %5214 = vst.msk [vmem:[%s5202 + $0x58] sm:$0xff] %vm5067, %v5191
    %5215 = vst [vmem:[%s5202 + $0x60] sm:$0xff] %v5161
    %5216 = vst.msk [vmem:[%s5202 + $0x68] sm:$0xff] %vm5067, %v5194
    %5217 = vst [vmem:[%s5202 + $0x70] sm:$0xff] %v5163
    %5218 = vst.msk [vmem:[%s5202 + $0x78] sm:$0xff] %vm5067, %v5196
    %5219 = vst [vmem:[%s5202 + $0x80] sm:$0xff] %v5166
    %5220 = vst.msk [vmem:[%s5202 + $0x88] sm:$0xff] %vm5067, %v5199
    // Predicated region
    $region74: #{decoder_img_forward.1} parent=1 // pred_check
      %p5221 = pneg %p116
    $region75: #{decoder_img_forward.1} parent=1 // pred_check_branch
      %5223 = sbr.rel (%p5221) target = $region77
    $region76: #{decoder_img_forward.1} parent=1 // pred_region
      %s5224 = smul.u32 4, 9
      %s5225 = smul.u32 %s5224, 25
      %s5226 = smul.u32 %s5225, 7
      %s5227 = sshll.u32 %s5226, 4
      %5228 = dma.done [#allocation6], %s5227
    $region77: #{decoder_img_forward.1} parent=1 // pred_fallthru
      _
    %v5229 = vld [vmem:[#allocation4] sm:$0xff]
    %v5230 = vld [vmem:[#allocation4 + $0x8] sm:$0xff]
    %v5231 = vld [vmem:[#allocation4 + $0x90] sm:$0xff]
    %v5232 = vld [vmem:[#allocation4 + $0x98] sm:$0xff]
    %v5233 = vpack.c.bf16 %v5231, %v5229
    %v5234 = vpack.c.bf16 %v5232, %v5230
    %v5235 = vld [vmem:[#allocation5] sm:$0xff]
    %v5236 = vld [vmem:[#allocation5 + $0x8] sm:$0xff]
    %v5237 = vld [vmem:[#allocation5 + $0x10] sm:$0xff]
    %v5238 = vld [vmem:[#allocation5 + $0x18] sm:$0xf]
    %v5239 = vld [vmem:[#allocation5 + $0x1c] sm:$0xff]
    %v5240 = vld [vmem:[#allocation5 + $0x24] sm:$0xff]
    %v5241 = vld [vmem:[#allocation5 + $0x2c] sm:$0xff]
    %v5242 = vld [vmem:[#allocation5 + $0x34] sm:$0xf]
    %v5243 = vld [vmem:[#allocation5 + $0x38] sm:$0xff]
    %v5244 = vld [vmem:[#allocation5 + $0x40] sm:$0xff]
    %v5245 = vld [vmem:[#allocation5 + $0x48] sm:$0xff]
    %v5246 = vld [vmem:[#allocation5 + $0x50] sm:$0xf]
    %v5247 = vld [vmem:[#allocation5 + $0x54] sm:$0xff]
    %v5248 = vld [vmem:[#allocation5 + $0x5c] sm:$0xff]
    %v5249 = vld [vmem:[#allocation5 + $0x64] sm:$0xff]
    %v5250 = vld [vmem:[#allocation5 + $0x6c] sm:$0xf]
    %v5251 = vld [vmem:[#allocation5 + $0x70] sm:$0xff]
    %v5252 = vld [vmem:[#allocation5 + $0x78] sm:$0xff]
    %v5253 = vld [vmem:[#allocation5 + $0x80] sm:$0xff]
    %v5254 = vld [vmem:[#allocation5 + $0x88] sm:$0xf]
    %v5255 = vld [vmem:[#allocation5 + $0x8c] sm:$0xff]
    %v5256 = vld [vmem:[#allocation5 + $0x94] sm:$0xff]
    %v5257 = vld [vmem:[#allocation5 + $0x9c] sm:$0xff]
    %v5258 = vld [vmem:[#allocation5 + $0xa4] sm:$0xf]
    %v5259 = vld [vmem:[#allocation5 + $0xa8] sm:$0xff]
    %v5260 = vld [vmem:[#allocation5 + $0xb0] sm:$0xff]
    %v5261 = vld [vmem:[#allocation5 + $0xb8] sm:$0xff]
    %v5262 = vld [vmem:[#allocation5 + $0xc0] sm:$0xf]
    %v5263 = vld [vmem:[#allocation5 + $0xc4] sm:$0xff]
    %v5264 = vld [vmem:[#allocation5 + $0xcc] sm:$0xff]
    %v5265 = vld [vmem:[#allocation5 + $0xd4] sm:$0xff]
    %v5266 = vld [vmem:[#allocation5 + $0xdc] sm:$0xf]
    %v5267 = vld [vmem:[#allocation5 + $0xe0] sm:$0xff]
    %v5268 = vld [vmem:[#allocation5 + $0xe8] sm:$0xff]
    %v5269 = vld [vmem:[#allocation5 + $0xf0] sm:$0xff]
    %v5270 = vld [vmem:[#allocation5 + $0xf8] sm:$0xf]
    %v5271 = vld [vmem:[#allocation5 + $0xfc] sm:$0xff]
    %v5272 = vld [vmem:[#allocation5 + $0x104] sm:$0xff]
    %v5273 = vld [vmem:[#allocation5 + $0x10c] sm:$0xff]
    %v5274 = vld [vmem:[#allocation5 + $0x114] sm:$0xf]
    %v5275 = vld [vmem:[#allocation5 + $0x118] sm:$0xff]
    %v5276 = vld [vmem:[#allocation5 + $0x120] sm:$0xff]
    %v5277 = vld [vmem:[#allocation5 + $0x128] sm:$0xff]
    %v5278 = vld [vmem:[#allocation5 + $0x130] sm:$0xf]
    %v5279 = vld [vmem:[#allocation5 + $0x134] sm:$0xff]
    %v5280 = vld [vmem:[#allocation5 + $0x13c] sm:$0xff]
    %v5281 = vld [vmem:[#allocation5 + $0x144] sm:$0xff]
    %v5282 = vld [vmem:[#allocation5 + $0x14c] sm:$0xf]
    %v5283 = vld [vmem:[#allocation5 + $0x150] sm:$0xff]
    %v5284 = vld [vmem:[#allocation5 + $0x158] sm:$0xff]
    %v5285 = vld [vmem:[#allocation5 + $0x160] sm:$0xff]
    %v5286 = vld [vmem:[#allocation5 + $0x168] sm:$0xf]
    %v5287 = vld [vmem:[#allocation5 + $0x16c] sm:$0xff]
    %v5288 = vld [vmem:[#allocation5 + $0x174] sm:$0xff]
    %v5289 = vld [vmem:[#allocation5 + $0x17c] sm:$0xff]
    %v5290 = vld [vmem:[#allocation5 + $0x184] sm:$0xf]
    %v5291 = vld [vmem:[#allocation5 + $0x188] sm:$0xff]
    %v5292 = vld [vmem:[#allocation5 + $0x190] sm:$0xff]
    %v5293 = vld [vmem:[#allocation5 + $0x198] sm:$0xff]
    %v5294 = vld [vmem:[#allocation5 + $0x1a0] sm:$0xf]
    %v5295 = vld [vmem:[#allocation5 + $0x1a4] sm:$0xff]
    %v5296 = vld [vmem:[#allocation5 + $0x1ac] sm:$0xff]
    %v5297 = vld [vmem:[#allocation5 + $0x1b4] sm:$0xff]
    %v5298 = vld [vmem:[#allocation5 + $0x1bc] sm:$0xf]
    %v5299 = vld [vmem:[#allocation5 + $0x1c0] sm:$0xff]
    %v5300 = vld [vmem:[#allocation5 + $0x1c8] sm:$0xff]
    %v5301 = vld [vmem:[#allocation5 + $0x1d0] sm:$0xff]
    %v5302 = vld [vmem:[#allocation5 + $0x1d8] sm:$0xf]
    %v5303 = vld [vmem:[#allocation5 + $0x1dc] sm:$0xff]
    %v5304 = vld [vmem:[#allocation5 + $0x1e4] sm:$0xff]
    %v5305 = vld [vmem:[#allocation5 + $0x1ec] sm:$0xff]
    %v5306 = vld [vmem:[#allocation5 + $0x1f4] sm:$0xf]
    %v5307 = vld [vmem:[#allocation5 + $0x1f8] sm:$0xff]
    %v5308 = vld [vmem:[#allocation5 + $0x200] sm:$0xff]
    %v5309 = vld [vmem:[#allocation5 + $0x208] sm:$0xff]
    %v5310 = vld [vmem:[#allocation5 + $0x210] sm:$0xf]
    %v5311 = vld [vmem:[#allocation5 + $0x214] sm:$0xff]
    %v5312 = vld [vmem:[#allocation5 + $0x21c] sm:$0xff]
    %v5313 = vld [vmem:[#allocation5 + $0x224] sm:$0xff]
    %v5314 = vld [vmem:[#allocation5 + $0x22c] sm:$0xf]
    %v5315 = vld [vmem:[#allocation5 + $0x230] sm:$0xff]
    %v5316 = vld [vmem:[#allocation5 + $0x238] sm:$0xff]
    %v5317 = vld [vmem:[#allocation5 + $0x240] sm:$0xff]
    %v5318 = vld [vmem:[#allocation5 + $0x248] sm:$0xf]
    %v5319 = vld [vmem:[#allocation5 + $0x24c] sm:$0xff]
    %v5320 = vld [vmem:[#allocation5 + $0x254] sm:$0xff]
    %v5321 = vld [vmem:[#allocation5 + $0x25c] sm:$0xff]
    %v5322 = vld [vmem:[#allocation5 + $0x264] sm:$0xf]
    %v5323 = vld [vmem:[#allocation5 + $0x268] sm:$0xff]
    %v5324 = vld [vmem:[#allocation5 + $0x270] sm:$0xff]
    %v5325 = vld [vmem:[#allocation5 + $0x278] sm:$0xff]
    %v5326 = vld [vmem:[#allocation5 + $0x280] sm:$0xf]
    %v5327 = vld [vmem:[#allocation5 + $0x284] sm:$0xff]
    %v5328 = vld [vmem:[#allocation5 + $0x28c] sm:$0xff]
    %v5329 = vld [vmem:[#allocation5 + $0x294] sm:$0xff]
    %v5330 = vld [vmem:[#allocation5 + $0x29c] sm:$0xf]
    %v5331 = vld [vmem:[#allocation5 + $0x2a0] sm:$0x33]
    %v5332 = vld [vmem:[#allocation5 + $0x2a8] sm:$0x33]
    %v5333 = vld [vmem:[#allocation5 + $0x2b0] sm:$0x33]
    %v5334 = vld [vmem:[#allocation5 + $0x2b8] sm:$0x3]
    %v5335 = vld [vmem:[#allocation4 + $0x10] sm:$0xff]
    %v5336 = vld [vmem:[#allocation4 + $0x18] sm:$0xff]
    %v5337 = vld [vmem:[#allocation4 + $0xa0] sm:$0xff]
    %v5338 = vld [vmem:[#allocation4 + $0xa8] sm:$0xff]
    %v5339 = vpack.c.bf16 %v5337, %v5335
    %v5340 = vpack.c.bf16 %v5338, %v5336
    %s5341 = scalar_lea.vmem [#allocation5], 700
    %v5342 = vld [vmem:[%s5341] sm:$0xff]
    %v5343 = vld [vmem:[%s5341 + $0x8] sm:$0xff]
    %v5344 = vld [vmem:[%s5341 + $0x10] sm:$0xff]
    %v5345 = vld [vmem:[%s5341 + $0x18] sm:$0xf]
    %v5346 = vld [vmem:[%s5341 + $0x1c] sm:$0xff]
    %v5347 = vld [vmem:[%s5341 + $0x24] sm:$0xff]
    %v5348 = vld [vmem:[%s5341 + $0x2c] sm:$0xff]
    %v5349 = vld [vmem:[%s5341 + $0x34] sm:$0xf]
    %v5350 = vld [vmem:[%s5341 + $0x38] sm:$0xff]
    %v5351 = vld [vmem:[%s5341 + $0x40] sm:$0xff]
    %v5352 = vld [vmem:[%s5341 + $0x48] sm:$0xff]
    %v5353 = vld [vmem:[%s5341 + $0x50] sm:$0xf]
    %v5354 = vld [vmem:[%s5341 + $0x54] sm:$0xff]
    %v5355 = vld [vmem:[%s5341 + $0x5c] sm:$0xff]
    %v5356 = vld [vmem:[%s5341 + $0x64] sm:$0xff]
    %v5357 = vld [vmem:[%s5341 + $0x6c] sm:$0xf]
    %v5358 = vld [vmem:[%s5341 + $0x70] sm:$0xff]
    %v5359 = vld [vmem:[%s5341 + $0x78] sm:$0xff]
    %v5360 = vld [vmem:[%s5341 + $0x80] sm:$0xff]
    %v5361 = vld [vmem:[%s5341 + $0x88] sm:$0xf]
    %v5362 = vld [vmem:[%s5341 + $0x8c] sm:$0xff]
    %v5363 = vld [vmem:[%s5341 + $0x94] sm:$0xff]
    %v5364 = vld [vmem:[%s5341 + $0x9c] sm:$0xff]
    %v5365 = vld [vmem:[%s5341 + $0xa4] sm:$0xf]
    %v5366 = vld [vmem:[%s5341 + $0xa8] sm:$0xff]
    %v5367 = vld [vmem:[%s5341 + $0xb0] sm:$0xff]
    %v5368 = vld [vmem:[%s5341 + $0xb8] sm:$0xff]
    %v5369 = vld [vmem:[%s5341 + $0xc0] sm:$0xf]
    %v5370 = vld [vmem:[%s5341 + $0xc4] sm:$0xff]
    %v5371 = vld [vmem:[%s5341 + $0xcc] sm:$0xff]
    %v5372 = vld [vmem:[%s5341 + $0xd4] sm:$0xff]
    %v5373 = vld [vmem:[%s5341 + $0xdc] sm:$0xf]
    %v5374 = vld [vmem:[%s5341 + $0xe0] sm:$0xff]
    %v5375 = vld [vmem:[%s5341 + $0xe8] sm:$0xff]
    %v5376 = vld [vmem:[%s5341 + $0xf0] sm:$0xff]
    %v5377 = vld [vmem:[%s5341 + $0xf8] sm:$0xf]
    %v5378 = vld [vmem:[%s5341 + $0xfc] sm:$0xff]
    %v5379 = vld [vmem:[%s5341 + $0x104] sm:$0xff]
    %v5380 = vld [vmem:[%s5341 + $0x10c] sm:$0xff]
    %v5381 = vld [vmem:[%s5341 + $0x114] sm:$0xf]
    %v5382 = vld [vmem:[%s5341 + $0x118] sm:$0xff]
    %v5383 = vld [vmem:[%s5341 + $0x120] sm:$0xff]
    %v5384 = vld [vmem:[%s5341 + $0x128] sm:$0xff]
    %v5385 = vld [vmem:[%s5341 + $0x130] sm:$0xf]
    %v5386 = vld [vmem:[%s5341 + $0x134] sm:$0xff]
    %v5387 = vld [vmem:[%s5341 + $0x13c] sm:$0xff]
    %v5388 = vld [vmem:[%s5341 + $0x144] sm:$0xff]
    %v5389 = vld [vmem:[%s5341 + $0x14c] sm:$0xf]
    %v5390 = vld [vmem:[%s5341 + $0x150] sm:$0xff]
    %v5391 = vld [vmem:[%s5341 + $0x158] sm:$0xff]
    %v5392 = vld [vmem:[%s5341 + $0x160] sm:$0xff]
    %v5393 = vld [vmem:[%s5341 + $0x168] sm:$0xf]
    %v5394 = vld [vmem:[%s5341 + $0x16c] sm:$0xff]
    %v5395 = vld [vmem:[%s5341 + $0x174] sm:$0xff]
    %v5396 = vld [vmem:[%s5341 + $0x17c] sm:$0xff]
    %v5397 = vld [vmem:[%s5341 + $0x184] sm:$0xf]
    %v5398 = vld [vmem:[%s5341 + $0x188] sm:$0xff]
    %v5399 = vld [vmem:[%s5341 + $0x190] sm:$0xff]
    %v5400 = vld [vmem:[%s5341 + $0x198] sm:$0xff]
    %v5401 = vld [vmem:[%s5341 + $0x1a0] sm:$0xf]
    %v5402 = vld [vmem:[%s5341 + $0x1a4] sm:$0xff]
    %v5403 = vld [vmem:[%s5341 + $0x1ac] sm:$0xff]
    %v5404 = vld [vmem:[%s5341 + $0x1b4] sm:$0xff]
    %v5405 = vld [vmem:[%s5341 + $0x1bc] sm:$0xf]
    %v5406 = vld [vmem:[%s5341 + $0x1c0] sm:$0xff]
    %v5407 = vld [vmem:[%s5341 + $0x1c8] sm:$0xff]
    %v5408 = vld [vmem:[%s5341 + $0x1d0] sm:$0xff]
    %v5409 = vld [vmem:[%s5341 + $0x1d8] sm:$0xf]
    %v5410 = vld [vmem:[%s5341 + $0x1dc] sm:$0xff]
    %v5411 = vld [vmem:[%s5341 + $0x1e4] sm:$0xff]
    %v5412 = vld [vmem:[%s5341 + $0x1ec] sm:$0xff]
    %v5413 = vld [vmem:[%s5341 + $0x1f4] sm:$0xf]
    %v5414 = vld [vmem:[%s5341 + $0x1f8] sm:$0xff]
    %v5415 = vld [vmem:[%s5341 + $0x200] sm:$0xff]
    %v5416 = vld [vmem:[%s5341 + $0x208] sm:$0xff]
    %v5417 = vld [vmem:[%s5341 + $0x210] sm:$0xf]
    %v5418 = vld [vmem:[%s5341 + $0x214] sm:$0xff]
    %v5419 = vld [vmem:[%s5341 + $0x21c] sm:$0xff]
    %v5420 = vld [vmem:[%s5341 + $0x224] sm:$0xff]
    %v5421 = vld [vmem:[%s5341 + $0x22c] sm:$0xf]
    %v5422 = vld [vmem:[%s5341 + $0x230] sm:$0xff]
    %v5423 = vld [vmem:[%s5341 + $0x238] sm:$0xff]
    %v5424 = vld [vmem:[%s5341 + $0x240] sm:$0xff]
    %v5425 = vld [vmem:[%s5341 + $0x248] sm:$0xf]
    %v5426 = vld [vmem:[%s5341 + $0x24c] sm:$0xff]
    %v5427 = vld [vmem:[%s5341 + $0x254] sm:$0xff]
    %v5428 = vld [vmem:[%s5341 + $0x25c] sm:$0xff]
    %v5429 = vld [vmem:[%s5341 + $0x264] sm:$0xf]
    %v5430 = vld [vmem:[%s5341 + $0x268] sm:$0xff]
    %v5431 = vld [vmem:[%s5341 + $0x270] sm:$0xff]
    %v5432 = vld [vmem:[%s5341 + $0x278] sm:$0xff]
    %v5433 = vld [vmem:[%s5341 + $0x280] sm:$0xf]
    %v5434 = vld [vmem:[%s5341 + $0x284] sm:$0xff]
    %v5435 = vld [vmem:[%s5341 + $0x28c] sm:$0xff]
    %v5436 = vld [vmem:[%s5341 + $0x294] sm:$0xff]
    %v5437 = vld [vmem:[%s5341 + $0x29c] sm:$0xf]
    %v5438 = vld [vmem:[%s5341 + $0x2a0] sm:$0x33]
    %v5439 = vld [vmem:[%s5341 + $0x2a8] sm:$0x33]
    %v5440 = vld [vmem:[%s5341 + $0x2b0] sm:$0x33]
    %v5441 = vld [vmem:[%s5341 + $0x2b8] sm:$0x3]
    %v5542 = vunpack.c.l.b16 %v5342
    %v5543 = vunpack.c.h.b16 %v5342
    %v5544 = vunpack.c.l.b16 %v5343
    %v5545 = vunpack.c.h.b16 %v5343
    %v5546 = vunpack.c.l.b16 %v5344
    %v5547 = vunpack.c.h.b16 %v5344
    %v5548 = vunpack.c.l.b16 %v5345
    %v5549 = vunpack.c.l.b16 %v5346
    %v5550 = vunpack.c.h.b16 %v5346
    %v5551 = vunpack.c.l.b16 %v5347
    %v5552 = vunpack.c.h.b16 %v5347
    %v5553 = vunpack.c.l.b16 %v5348
    %v5554 = vunpack.c.h.b16 %v5348
    %v5555 = vunpack.c.l.b16 %v5349
    %v5556 = vunpack.c.l.b16 %v5350
    %v5557 = vunpack.c.h.b16 %v5350
    %v5558 = vunpack.c.l.b16 %v5351
    %v5559 = vunpack.c.h.b16 %v5351
    %v5560 = vunpack.c.l.b16 %v5352
    %v5561 = vunpack.c.h.b16 %v5352
    %v5562 = vunpack.c.l.b16 %v5353
    %v5563 = vunpack.c.l.b16 %v5354
    %v5564 = vunpack.c.h.b16 %v5354
    %v5565 = vunpack.c.l.b16 %v5355
    %v5566 = vunpack.c.h.b16 %v5355
    %v5567 = vunpack.c.l.b16 %v5356
    %v5568 = vunpack.c.h.b16 %v5356
    %v5569 = vunpack.c.l.b16 %v5357
    %v5570 = vunpack.c.l.b16 %v5358
    %v5571 = vunpack.c.h.b16 %v5358
    %v5572 = vunpack.c.l.b16 %v5359
    %v5573 = vunpack.c.h.b16 %v5359
    %v5574 = vunpack.c.l.b16 %v5360
    %v5575 = vunpack.c.h.b16 %v5360
    %v5576 = vunpack.c.l.b16 %v5361
    %v5577 = vunpack.c.l.b16 %v5362
    %v5578 = vunpack.c.h.b16 %v5362
    %v5579 = vunpack.c.l.b16 %v5363
    %v5580 = vunpack.c.h.b16 %v5363
    %v5581 = vunpack.c.l.b16 %v5364
    %v5582 = vunpack.c.h.b16 %v5364
    %v5583 = vunpack.c.l.b16 %v5365
    %v5584 = vunpack.c.l.b16 %v5366
    %v5585 = vunpack.c.h.b16 %v5366
    %v5586 = vunpack.c.l.b16 %v5367
    %v5587 = vunpack.c.h.b16 %v5367
    %v5588 = vunpack.c.l.b16 %v5368
    %v5589 = vunpack.c.h.b16 %v5368
    %v5590 = vunpack.c.l.b16 %v5369
    %v5591 = vunpack.c.l.b16 %v5370
    %v5592 = vunpack.c.h.b16 %v5370
    %v5593 = vunpack.c.l.b16 %v5371
    %v5594 = vunpack.c.h.b16 %v5371
    %v5595 = vunpack.c.l.b16 %v5372
    %v5596 = vunpack.c.h.b16 %v5372
    %v5597 = vunpack.c.l.b16 %v5373
    %v5598 = vunpack.c.l.b16 %v5374
    %v5599 = vunpack.c.h.b16 %v5374
    %v5600 = vunpack.c.l.b16 %v5375
    %v5601 = vunpack.c.h.b16 %v5375
    %v5602 = vunpack.c.l.b16 %v5376
    %v5603 = vunpack.c.h.b16 %v5376
    %v5604 = vunpack.c.l.b16 %v5377
    %v5605 = vunpack.c.l.b16 %v5378
    %v5606 = vunpack.c.h.b16 %v5378
    %v5607 = vunpack.c.l.b16 %v5379
    %v5608 = vunpack.c.h.b16 %v5379
    %v5609 = vunpack.c.l.b16 %v5380
    %v5610 = vunpack.c.h.b16 %v5380
    %v5611 = vunpack.c.l.b16 %v5381
    %v5612 = vunpack.c.l.b16 %v5382
    %v5613 = vunpack.c.h.b16 %v5382
    %v5614 = vunpack.c.l.b16 %v5383
    %v5615 = vunpack.c.h.b16 %v5383
    %v5616 = vunpack.c.l.b16 %v5384
    %v5617 = vunpack.c.h.b16 %v5384
    %v5618 = vunpack.c.l.b16 %v5385
    %v5619 = vunpack.c.l.b16 %v5386
    %v5620 = vunpack.c.h.b16 %v5386
    %v5621 = vunpack.c.l.b16 %v5387
    %v5622 = vunpack.c.h.b16 %v5387
    %v5623 = vunpack.c.l.b16 %v5388
    %v5624 = vunpack.c.h.b16 %v5388
    %v5625 = vunpack.c.l.b16 %v5389
    %v5626 = vunpack.c.l.b16 %v5390
    %v5627 = vunpack.c.h.b16 %v5390
    %v5628 = vunpack.c.l.b16 %v5391
    %v5629 = vunpack.c.h.b16 %v5391
    %v5630 = vunpack.c.l.b16 %v5392
    %v5631 = vunpack.c.h.b16 %v5392
    %v5632 = vunpack.c.l.b16 %v5393
    %v5633 = vunpack.c.l.b16 %v5394
    %v5634 = vunpack.c.h.b16 %v5394
    %v5635 = vunpack.c.l.b16 %v5395
    %v5636 = vunpack.c.h.b16 %v5395
    %v5637 = vunpack.c.l.b16 %v5396
    %v5638 = vunpack.c.h.b16 %v5396
    %v5639 = vunpack.c.l.b16 %v5397
    %v5640 = vunpack.c.l.b16 %v5398
    %v5641 = vunpack.c.h.b16 %v5398
    %v5642 = vunpack.c.l.b16 %v5399
    %v5643 = vunpack.c.h.b16 %v5399
    %v5644 = vunpack.c.l.b16 %v5400
    %v5645 = vunpack.c.h.b16 %v5400
    %v5646 = vunpack.c.l.b16 %v5401
    %v5647 = vunpack.c.l.b16 %v5402
    %v5648 = vunpack.c.h.b16 %v5402
    %v5649 = vunpack.c.l.b16 %v5403
    %v5650 = vunpack.c.h.b16 %v5403
    %v5651 = vunpack.c.l.b16 %v5404
    %v5652 = vunpack.c.h.b16 %v5404
    %v5653 = vunpack.c.l.b16 %v5405
    %v5654 = vunpack.c.l.b16 %v5406
    %v5655 = vunpack.c.h.b16 %v5406
    %v5656 = vunpack.c.l.b16 %v5407
    %v5657 = vunpack.c.h.b16 %v5407
    %v5658 = vunpack.c.l.b16 %v5408
    %v5659 = vunpack.c.h.b16 %v5408
    %v5660 = vunpack.c.l.b16 %v5409
    %v5661 = vunpack.c.l.b16 %v5410
    %v5662 = vunpack.c.h.b16 %v5410
    %v5663 = vunpack.c.l.b16 %v5411
    %v5664 = vunpack.c.h.b16 %v5411
    %v5665 = vunpack.c.l.b16 %v5412
    %v5666 = vunpack.c.h.b16 %v5412
    %v5667 = vunpack.c.l.b16 %v5413
    %v5668 = vunpack.c.l.b16 %v5414
    %v5669 = vunpack.c.h.b16 %v5414
    %v5670 = vunpack.c.l.b16 %v5415
    %v5671 = vunpack.c.h.b16 %v5415
    %v5672 = vunpack.c.l.b16 %v5416
    %v5673 = vunpack.c.h.b16 %v5416
    %v5674 = vunpack.c.l.b16 %v5417
    %v5675 = vunpack.c.l.b16 %v5418
    %v5676 = vunpack.c.h.b16 %v5418
    %v5677 = vunpack.c.l.b16 %v5419
    %v5678 = vunpack.c.h.b16 %v5419
    %v5679 = vunpack.c.l.b16 %v5420
    %v5680 = vunpack.c.h.b16 %v5420
    %v5681 = vunpack.c.l.b16 %v5421
    %v5682 = vunpack.c.l.b16 %v5422
    %v5683 = vunpack.c.h.b16 %v5422
    %v5684 = vunpack.c.l.b16 %v5423
    %v5685 = vunpack.c.h.b16 %v5423
    %v5686 = vunpack.c.l.b16 %v5424
    %v5687 = vunpack.c.h.b16 %v5424
    %v5688 = vunpack.c.l.b16 %v5425
    %v5689 = vunpack.c.l.b16 %v5426
    %v5690 = vunpack.c.h.b16 %v5426
    %v5691 = vunpack.c.l.b16 %v5427
    %v5692 = vunpack.c.h.b16 %v5427
    %v5693 = vunpack.c.l.b16 %v5428
    %v5694 = vunpack.c.h.b16 %v5428
    %v5695 = vunpack.c.l.b16 %v5429
    %v5696 = vunpack.c.l.b16 %v5430
    %v5697 = vunpack.c.h.b16 %v5430
    %v5698 = vunpack.c.l.b16 %v5431
    %v5699 = vunpack.c.h.b16 %v5431
    %v5700 = vunpack.c.l.b16 %v5432
    %v5701 = vunpack.c.h.b16 %v5432
    %v5702 = vunpack.c.l.b16 %v5433
    %v5703 = vunpack.c.l.b16 %v5434
    %v5704 = vunpack.c.h.b16 %v5434
    %v5705 = vunpack.c.l.b16 %v5435
    %v5706 = vunpack.c.h.b16 %v5435
    %v5707 = vunpack.c.l.b16 %v5436
    %v5708 = vunpack.c.h.b16 %v5436
    %v5709 = vunpack.c.l.b16 %v5437
    %v5710 = vunpack.c.l.b16 %v5438
    %v5711 = vunpack.c.h.b16 %v5438
    %v5712 = vunpack.c.l.b16 %v5439
    %v5713 = vunpack.c.h.b16 %v5439
    %v5714 = vunpack.c.l.b16 %v5440
    %v5715 = vunpack.c.h.b16 %v5440
    %v5716 = vunpack.c.l.b16 %v5441
    %v5717 = vpack.c.b16 %v5549, %v5542
    %v5718 = vpack.c.b16 %v5550, %v5543
    %v5719 = vpack.c.b16 %v5551, %v5544
    %v5720 = vpack.c.b16 %v5552, %v5545
    %v5721 = vpack.c.b16 %v5553, %v5546
    %v5722 = vpack.c.b16 %v5554, %v5547
    %v5723 = vpack.c.b16 %v5555, %v5548
    %v5724 = vpack.c.b16 %v5563, %v5556
    %v5725 = vpack.c.b16 %v5564, %v5557
    %v5726 = vpack.c.b16 %v5565, %v5558
    %v5727 = vpack.c.b16 %v5566, %v5559
    %v5728 = vpack.c.b16 %v5567, %v5560
    %v5729 = vpack.c.b16 %v5568, %v5561
    %v5730 = vpack.c.b16 %v5569, %v5562
    %v5731 = vpack.c.b16 %v5577, %v5570
    %v5732 = vpack.c.b16 %v5578, %v5571
    %v5733 = vpack.c.b16 %v5579, %v5572
    %v5734 = vpack.c.b16 %v5580, %v5573
    %v5735 = vpack.c.b16 %v5581, %v5574
    %v5736 = vpack.c.b16 %v5582, %v5575
    %v5737 = vpack.c.b16 %v5583, %v5576
    %v5738 = vpack.c.b16 %v5591, %v5584
    %v5739 = vpack.c.b16 %v5592, %v5585
    %v5740 = vpack.c.b16 %v5593, %v5586
    %v5741 = vpack.c.b16 %v5594, %v5587
    %v5742 = vpack.c.b16 %v5595, %v5588
    %v5743 = vpack.c.b16 %v5596, %v5589
    %v5744 = vpack.c.b16 %v5597, %v5590
    %v5745 = vpack.c.b16 %v5605, %v5598
    %v5746 = vpack.c.b16 %v5606, %v5599
    %v5747 = vpack.c.b16 %v5607, %v5600
    %v5748 = vpack.c.b16 %v5608, %v5601
    %v5749 = vpack.c.b16 %v5609, %v5602
    %v5750 = vpack.c.b16 %v5610, %v5603
    %v5751 = vpack.c.b16 %v5611, %v5604
    %v5752 = vpack.c.b16 %v5619, %v5612
    %v5753 = vpack.c.b16 %v5620, %v5613
    %v5754 = vpack.c.b16 %v5621, %v5614
    %v5755 = vpack.c.b16 %v5622, %v5615
    %v5756 = vpack.c.b16 %v5623, %v5616
    %v5757 = vpack.c.b16 %v5624, %v5617
    %v5758 = vpack.c.b16 %v5625, %v5618
    %v5759 = vpack.c.b16 %v5633, %v5626
    %v5760 = vpack.c.b16 %v5634, %v5627
    %v5761 = vpack.c.b16 %v5635, %v5628
    %v5762 = vpack.c.b16 %v5636, %v5629
    %v5763 = vpack.c.b16 %v5637, %v5630
    %v5764 = vpack.c.b16 %v5638, %v5631
    %v5765 = vpack.c.b16 %v5639, %v5632
    %v5766 = vpack.c.b16 %v5647, %v5640
    %v5767 = vpack.c.b16 %v5648, %v5641
    %v5768 = vpack.c.b16 %v5649, %v5642
    %v5769 = vpack.c.b16 %v5650, %v5643
    %v5770 = vpack.c.b16 %v5651, %v5644
    %v5771 = vpack.c.b16 %v5652, %v5645
    %v5772 = vpack.c.b16 %v5653, %v5646
    %v5773 = vpack.c.b16 %v5661, %v5654
    %v5774 = vpack.c.b16 %v5662, %v5655
    %v5775 = vpack.c.b16 %v5663, %v5656
    %v5776 = vpack.c.b16 %v5664, %v5657
    %v5777 = vpack.c.b16 %v5665, %v5658
    %v5778 = vpack.c.b16 %v5666, %v5659
    %v5779 = vpack.c.b16 %v5667, %v5660
    %v5780 = vpack.c.b16 %v5675, %v5668
    %v5781 = vpack.c.b16 %v5676, %v5669
    %v5782 = vpack.c.b16 %v5677, %v5670
    %v5783 = vpack.c.b16 %v5678, %v5671
    %v5784 = vpack.c.b16 %v5679, %v5672
    %v5785 = vpack.c.b16 %v5680, %v5673
    %v5786 = vpack.c.b16 %v5681, %v5674
    %v5787 = vpack.c.b16 %v5689, %v5682
    %v5788 = vpack.c.b16 %v5690, %v5683
    %v5789 = vpack.c.b16 %v5691, %v5684
    %v5790 = vpack.c.b16 %v5692, %v5685
    %v5791 = vpack.c.b16 %v5693, %v5686
    %v5792 = vpack.c.b16 %v5694, %v5687
    %v5793 = vpack.c.b16 %v5695, %v5688
    %v5794 = vpack.c.b16 %v5703, %v5696
    %v5795 = vpack.c.b16 %v5704, %v5697
    %v5796 = vpack.c.b16 %v5705, %v5698
    %v5797 = vpack.c.b16 %v5706, %v5699
    %v5798 = vpack.c.b16 %v5707, %v5700
    %v5799 = vpack.c.b16 %v5708, %v5701
    %v5800 = vpack.c.b16 %v5709, %v5702
    %v5801 = vpack.c.b16 %v5710, %v5710
    %v5802 = vpack.c.b16 %v5711, %v5711
    %v5803 = vpack.c.b16 %v5712, %v5712
    %v5804 = vpack.c.b16 %v5713, %v5713
    %v5805 = vpack.c.b16 %v5714, %v5714
    %v5806 = vpack.c.b16 %v5715, %v5715
    %v5807 = vpack.c.b16 %v5716, %v5716
    %v5893 = vsel %vm5067, %v5340, 0
    %v5896 = vsel %vm572, %v5801, 0
    %v5899 = vsel %vm572, %v5802, 0
    %v5902 = vsel %vm572, %v5803, 0
    %v5905 = vsel %vm572, %v5804, 0
    %v5908 = vsel %vm572, %v5805, 0
    %v5911 = vsel %vm572, %v5806, 0
    %v5914 = vsel %vm572, %v5807, 0
    %5916 = vmatpush.bf16.msra.mxu0 %v5766
    %5917 = vmatpush.bf16.msra.mxu0 %v5759
    %5918 = vmatpush.bf16.msra.mxu0 %v5752
    %5919 = vmatpush.bf16.msra.mxu0 %v5745
    %5920 = vmatpush.bf16.msra.mxu0 %v5738
    %5921 = vmatpush.bf16.msra.mxu0 %v5731
    %5922 = vmatpush.bf16.msra.mxu0 %v5724
    %5923 = vmatpush.bf16.msra.mxu0 %v5717
    %5924 = vmatmul.bf16.gmra.mxu0 %v5339
    %v5925 = vpop.f32.mrf.mxu0
    %v5926 = vadd.f32 0.0, %v5925
    %v5927 = vpop.f32.mrf.mxu0
    %v5928 = vadd.f32 0.0, %v5927
    %5929 = vdwg.mxu0
    %5930 = vmatpush.bf16.msra.mxu0 0
    %5931 = vmatpush.bf16.msra.mxu0 0
    %5932 = vmatpush.bf16.msra.mxu0 0
    %5933 = vmatpush.bf16.msra.mxu0 %v5896
    %5934 = vmatpush.bf16.msra.mxu0 %v5794
    %5935 = vmatpush.bf16.msra.mxu0 %v5787
    %5936 = vmatpush.bf16.msra.mxu0 %v5780
    %5937 = vmatpush.bf16.msra.mxu0 %v5773
    %5938 = vmatmul.bf16.gmra.mxu0 %v5893
    %v5939 = vpop.f32.mrf.mxu0
    %v5940 = vadd.f32 %v5926, %v5939
    %v5941 = vpop.f32.mrf.mxu0
    %v5942 = vadd.f32 %v5928, %v5941
    %5943 = vdwg.mxu0
    %5944 = vmatpush.bf16.msra.mxu0 %v5767
    %5945 = vmatpush.bf16.msra.mxu0 %v5760
    %5946 = vmatpush.bf16.msra.mxu0 %v5753
    %5947 = vmatpush.bf16.msra.mxu0 %v5746
    %5948 = vmatpush.bf16.msra.mxu0 %v5739
    %5949 = vmatpush.bf16.msra.mxu0 %v5732
    %5950 = vmatpush.bf16.msra.mxu0 %v5725
    %5951 = vmatpush.bf16.msra.mxu0 %v5718
    %5952 = vmatmul.bf16.gmra.mxu0 %v5339
    %v5953 = vpop.f32.mrf.mxu0
    %v5954 = vadd.f32 0.0, %v5953
    %v5955 = vpop.f32.mrf.mxu0
    %v5956 = vadd.f32 0.0, %v5955
    %5957 = vdwg.mxu0
    %5958 = vmatpush.bf16.msra.mxu0 0
    %5959 = vmatpush.bf16.msra.mxu0 0
    %5960 = vmatpush.bf16.msra.mxu0 0
    %5961 = vmatpush.bf16.msra.mxu0 %v5899
    %5962 = vmatpush.bf16.msra.mxu0 %v5795
    %5963 = vmatpush.bf16.msra.mxu0 %v5788
    %5964 = vmatpush.bf16.msra.mxu0 %v5781
    %5965 = vmatpush.bf16.msra.mxu0 %v5774
    %5966 = vmatmul.bf16.gmra.mxu0 %v5893
    %v5967 = vpop.f32.mrf.mxu0
    %v5968 = vadd.f32 %v5954, %v5967
    %v5969 = vpop.f32.mrf.mxu0
    %v5970 = vadd.f32 %v5956, %v5969
    %5971 = vdwg.mxu0
    %5972 = vmatpush.bf16.msra.mxu0 %v5768
    %5973 = vmatpush.bf16.msra.mxu0 %v5761
    %5974 = vmatpush.bf16.msra.mxu0 %v5754
    %5975 = vmatpush.bf16.msra.mxu0 %v5747
    %5976 = vmatpush.bf16.msra.mxu0 %v5740
    %5977 = vmatpush.bf16.msra.mxu0 %v5733
    %5978 = vmatpush.bf16.msra.mxu0 %v5726
    %5979 = vmatpush.bf16.msra.mxu0 %v5719
    %5980 = vmatmul.bf16.gmra.mxu0 %v5339
    %v5981 = vpop.f32.mrf.mxu0
    %v5982 = vadd.f32 0.0, %v5981
    %v5983 = vpop.f32.mrf.mxu0
    %v5984 = vadd.f32 0.0, %v5983
    %5985 = vdwg.mxu0
    %5986 = vmatpush.bf16.msra.mxu0 0
    %5987 = vmatpush.bf16.msra.mxu0 0
    %5988 = vmatpush.bf16.msra.mxu0 0
    %5989 = vmatpush.bf16.msra.mxu0 %v5902
    %5990 = vmatpush.bf16.msra.mxu0 %v5796
    %5991 = vmatpush.bf16.msra.mxu0 %v5789
    %5992 = vmatpush.bf16.msra.mxu0 %v5782
    %5993 = vmatpush.bf16.msra.mxu0 %v5775
    %5994 = vmatmul.bf16.gmra.mxu0 %v5893
    %v5995 = vpop.f32.mrf.mxu0
    %v5996 = vadd.f32 %v5982, %v5995
    %v5997 = vpop.f32.mrf.mxu0
    %v5998 = vadd.f32 %v5984, %v5997
    %5999 = vdwg.mxu0
    %6000 = vmatpush.bf16.msra.mxu0 %v5769
    %6001 = vmatpush.bf16.msra.mxu0 %v5762
    %6002 = vmatpush.bf16.msra.mxu0 %v5755
    %6003 = vmatpush.bf16.msra.mxu0 %v5748
    %6004 = vmatpush.bf16.msra.mxu0 %v5741
    %6005 = vmatpush.bf16.msra.mxu0 %v5734
    %6006 = vmatpush.bf16.msra.mxu0 %v5727
    %6007 = vmatpush.bf16.msra.mxu0 %v5720
    %6008 = vmatmul.bf16.gmra.mxu0 %v5339
    %v6009 = vpop.f32.mrf.mxu0
    %v6010 = vadd.f32 0.0, %v6009
    %v6011 = vpop.f32.mrf.mxu0
    %v6012 = vadd.f32 0.0, %v6011
    %6013 = vdwg.mxu0
    %6014 = vmatpush.bf16.msra.mxu0 0
    %6015 = vmatpush.bf16.msra.mxu0 0
    %6016 = vmatpush.bf16.msra.mxu0 0
    %6017 = vmatpush.bf16.msra.mxu0 %v5905
    %6018 = vmatpush.bf16.msra.mxu0 %v5797
    %6019 = vmatpush.bf16.msra.mxu0 %v5790
    %6020 = vmatpush.bf16.msra.mxu0 %v5783
    %6021 = vmatpush.bf16.msra.mxu0 %v5776
    %6022 = vmatmul.bf16.gmra.mxu0 %v5893
    %v6023 = vpop.f32.mrf.mxu0
    %v6024 = vadd.f32 %v6010, %v6023
    %v6025 = vpop.f32.mrf.mxu0
    %v6026 = vadd.f32 %v6012, %v6025
    %6027 = vdwg.mxu0
    %6028 = vmatpush.bf16.msra.mxu0 %v5770
    %6029 = vmatpush.bf16.msra.mxu0 %v5763
    %6030 = vmatpush.bf16.msra.mxu0 %v5756
    %6031 = vmatpush.bf16.msra.mxu0 %v5749
    %6032 = vmatpush.bf16.msra.mxu0 %v5742
    %6033 = vmatpush.bf16.msra.mxu0 %v5735
    %6034 = vmatpush.bf16.msra.mxu0 %v5728
    %6035 = vmatpush.bf16.msra.mxu0 %v5721
    %6036 = vmatmul.bf16.gmra.mxu0 %v5339
    %v6037 = vpop.f32.mrf.mxu0
    %v6038 = vadd.f32 0.0, %v6037
    %v6039 = vpop.f32.mrf.mxu0
    %v6040 = vadd.f32 0.0, %v6039
    %6041 = vdwg.mxu0
    %6042 = vmatpush.bf16.msra.mxu0 0
    %6043 = vmatpush.bf16.msra.mxu0 0
    %6044 = vmatpush.bf16.msra.mxu0 0
    %6045 = vmatpush.bf16.msra.mxu0 %v5908
    %6046 = vmatpush.bf16.msra.mxu0 %v5798
    %6047 = vmatpush.bf16.msra.mxu0 %v5791
    %6048 = vmatpush.bf16.msra.mxu0 %v5784
    %6049 = vmatpush.bf16.msra.mxu0 %v5777
    %6050 = vmatmul.bf16.gmra.mxu0 %v5893
    %v6051 = vpop.f32.mrf.mxu0
    %v6052 = vadd.f32 %v6038, %v6051
    %v6053 = vpop.f32.mrf.mxu0
    %v6054 = vadd.f32 %v6040, %v6053
    %6055 = vdwg.mxu0
    %6056 = vmatpush.bf16.msra.mxu0 %v5771
    %6057 = vmatpush.bf16.msra.mxu0 %v5764
    %6058 = vmatpush.bf16.msra.mxu0 %v5757
    %6059 = vmatpush.bf16.msra.mxu0 %v5750
    %6060 = vmatpush.bf16.msra.mxu0 %v5743
    %6061 = vmatpush.bf16.msra.mxu0 %v5736
    %6062 = vmatpush.bf16.msra.mxu0 %v5729
    %6063 = vmatpush.bf16.msra.mxu0 %v5722
    %6064 = vmatmul.bf16.gmra.mxu0 %v5339
    %v6065 = vpop.f32.mrf.mxu0
    %v6066 = vadd.f32 0.0, %v6065
    %v6067 = vpop.f32.mrf.mxu0
    %v6068 = vadd.f32 0.0, %v6067
    %6069 = vdwg.mxu0
    %6070 = vmatpush.bf16.msra.mxu0 0
    %6071 = vmatpush.bf16.msra.mxu0 0
    %6072 = vmatpush.bf16.msra.mxu0 0
    %6073 = vmatpush.bf16.msra.mxu0 %v5911
    %6074 = vmatpush.bf16.msra.mxu0 %v5799
    %6075 = vmatpush.bf16.msra.mxu0 %v5792
    %6076 = vmatpush.bf16.msra.mxu0 %v5785
    %6077 = vmatpush.bf16.msra.mxu0 %v5778
    %6078 = vmatmul.bf16.gmra.mxu0 %v5893
    %v6079 = vpop.f32.mrf.mxu0
    %v6080 = vadd.f32 %v6066, %v6079
    %v6081 = vpop.f32.mrf.mxu0
    %v6082 = vadd.f32 %v6068, %v6081
    %6083 = vdwg.mxu0
    %6084 = vmatpush.bf16.msra.mxu0 %v5772
    %6085 = vmatpush.bf16.msra.mxu0 %v5765
    %6086 = vmatpush.bf16.msra.mxu0 %v5758
    %6087 = vmatpush.bf16.msra.mxu0 %v5751
    %6088 = vmatpush.bf16.msra.mxu0 %v5744
    %6089 = vmatpush.bf16.msra.mxu0 %v5737
    %6090 = vmatpush.bf16.msra.mxu0 %v5730
    %6091 = vmatpush.bf16.msra.mxu0 %v5723
    %6092 = vmatmul.bf16.gmra.mxu0 %v5339
    %v6093 = vpop.f32.mrf.mxu0
    %v6094 = vadd.f32 0.0, %v6093
    %v6095 = vpop.f32.mrf.mxu0
    %v6096 = vadd.f32 0.0, %v6095
    %6097 = vdwg.mxu0
    %6098 = vmatpush.bf16.msra.mxu0 0
    %6099 = vmatpush.bf16.msra.mxu0 0
    %6100 = vmatpush.bf16.msra.mxu0 0
    %6101 = vmatpush.bf16.msra.mxu0 %v5914
    %6102 = vmatpush.bf16.msra.mxu0 %v5800
    %6103 = vmatpush.bf16.msra.mxu0 %v5793
    %6104 = vmatpush.bf16.msra.mxu0 %v5786
    %6105 = vmatpush.bf16.msra.mxu0 %v5779
    %6106 = vmatmul.bf16.gmra.mxu0 %v5893
    %v6107 = vpop.f32.mrf.mxu0
    %v6108 = vadd.f32 %v6094, %v6107
    %v6109 = vpop.f32.mrf.mxu0
    %v6110 = vadd.f32 %v6096, %v6109
    %6111 = vdwg.mxu0
    %v6212 = vunpack.c.l.b16 %v5235
    %v6213 = vunpack.c.h.b16 %v5235
    %v6214 = vunpack.c.l.b16 %v5236
    %v6215 = vunpack.c.h.b16 %v5236
    %v6216 = vunpack.c.l.b16 %v5237
    %v6217 = vunpack.c.h.b16 %v5237
    %v6218 = vunpack.c.l.b16 %v5238
    %v6219 = vunpack.c.l.b16 %v5239
    %v6220 = vunpack.c.h.b16 %v5239
    %v6221 = vunpack.c.l.b16 %v5240
    %v6222 = vunpack.c.h.b16 %v5240
    %v6223 = vunpack.c.l.b16 %v5241
    %v6224 = vunpack.c.h.b16 %v5241
    %v6225 = vunpack.c.l.b16 %v5242
    %v6226 = vunpack.c.l.b16 %v5243
    %v6227 = vunpack.c.h.b16 %v5243
    %v6228 = vunpack.c.l.b16 %v5244
    %v6229 = vunpack.c.h.b16 %v5244
    %v6230 = vunpack.c.l.b16 %v5245
    %v6231 = vunpack.c.h.b16 %v5245
    %v6232 = vunpack.c.l.b16 %v5246
    %v6233 = vunpack.c.l.b16 %v5247
    %v6234 = vunpack.c.h.b16 %v5247
    %v6235 = vunpack.c.l.b16 %v5248
    %v6236 = vunpack.c.h.b16 %v5248
    %v6237 = vunpack.c.l.b16 %v5249
    %v6238 = vunpack.c.h.b16 %v5249
    %v6239 = vunpack.c.l.b16 %v5250
    %v6240 = vunpack.c.l.b16 %v5251
    %v6241 = vunpack.c.h.b16 %v5251
    %v6242 = vunpack.c.l.b16 %v5252
    %v6243 = vunpack.c.h.b16 %v5252
    %v6244 = vunpack.c.l.b16 %v5253
    %v6245 = vunpack.c.h.b16 %v5253
    %v6246 = vunpack.c.l.b16 %v5254
    %v6247 = vunpack.c.l.b16 %v5255
    %v6248 = vunpack.c.h.b16 %v5255
    %v6249 = vunpack.c.l.b16 %v5256
    %v6250 = vunpack.c.h.b16 %v5256
    %v6251 = vunpack.c.l.b16 %v5257
    %v6252 = vunpack.c.h.b16 %v5257
    %v6253 = vunpack.c.l.b16 %v5258
    %v6254 = vunpack.c.l.b16 %v5259
    %v6255 = vunpack.c.h.b16 %v5259
    %v6256 = vunpack.c.l.b16 %v5260
    %v6257 = vunpack.c.h.b16 %v5260
    %v6258 = vunpack.c.l.b16 %v5261
    %v6259 = vunpack.c.h.b16 %v5261
    %v6260 = vunpack.c.l.b16 %v5262
    %v6261 = vunpack.c.l.b16 %v5263
    %v6262 = vunpack.c.h.b16 %v5263
    %v6263 = vunpack.c.l.b16 %v5264
    %v6264 = vunpack.c.h.b16 %v5264
    %v6265 = vunpack.c.l.b16 %v5265
    %v6266 = vunpack.c.h.b16 %v5265
    %v6267 = vunpack.c.l.b16 %v5266
    %v6268 = vunpack.c.l.b16 %v5267
    %v6269 = vunpack.c.h.b16 %v5267
    %v6270 = vunpack.c.l.b16 %v5268
    %v6271 = vunpack.c.h.b16 %v5268
    %v6272 = vunpack.c.l.b16 %v5269
    %v6273 = vunpack.c.h.b16 %v5269
    %v6274 = vunpack.c.l.b16 %v5270
    %v6275 = vunpack.c.l.b16 %v5271
    %v6276 = vunpack.c.h.b16 %v5271
    %v6277 = vunpack.c.l.b16 %v5272
    %v6278 = vunpack.c.h.b16 %v5272
    %v6279 = vunpack.c.l.b16 %v5273
    %v6280 = vunpack.c.h.b16 %v5273
    %v6281 = vunpack.c.l.b16 %v5274
    %v6282 = vunpack.c.l.b16 %v5275
    %v6283 = vunpack.c.h.b16 %v5275
    %v6284 = vunpack.c.l.b16 %v5276
    %v6285 = vunpack.c.h.b16 %v5276
    %v6286 = vunpack.c.l.b16 %v5277
    %v6287 = vunpack.c.h.b16 %v5277
    %v6288 = vunpack.c.l.b16 %v5278
    %v6289 = vunpack.c.l.b16 %v5279
    %v6290 = vunpack.c.h.b16 %v5279
    %v6291 = vunpack.c.l.b16 %v5280
    %v6292 = vunpack.c.h.b16 %v5280
    %v6293 = vunpack.c.l.b16 %v5281
    %v6294 = vunpack.c.h.b16 %v5281
    %v6295 = vunpack.c.l.b16 %v5282
    %v6296 = vunpack.c.l.b16 %v5283
    %v6297 = vunpack.c.h.b16 %v5283
    %v6298 = vunpack.c.l.b16 %v5284
    %v6299 = vunpack.c.h.b16 %v5284
    %v6300 = vunpack.c.l.b16 %v5285
    %v6301 = vunpack.c.h.b16 %v5285
    %v6302 = vunpack.c.l.b16 %v5286
    %v6303 = vunpack.c.l.b16 %v5287
    %v6304 = vunpack.c.h.b16 %v5287
    %v6305 = vunpack.c.l.b16 %v5288
    %v6306 = vunpack.c.h.b16 %v5288
    %v6307 = vunpack.c.l.b16 %v5289
    %v6308 = vunpack.c.h.b16 %v5289
    %v6309 = vunpack.c.l.b16 %v5290
    %v6310 = vunpack.c.l.b16 %v5291
    %v6311 = vunpack.c.h.b16 %v5291
    %v6312 = vunpack.c.l.b16 %v5292
    %v6313 = vunpack.c.h.b16 %v5292
    %v6314 = vunpack.c.l.b16 %v5293
    %v6315 = vunpack.c.h.b16 %v5293
    %v6316 = vunpack.c.l.b16 %v5294
    %v6317 = vunpack.c.l.b16 %v5295
    %v6318 = vunpack.c.h.b16 %v5295
    %v6319 = vunpack.c.l.b16 %v5296
    %v6320 = vunpack.c.h.b16 %v5296
    %v6321 = vunpack.c.l.b16 %v5297
    %v6322 = vunpack.c.h.b16 %v5297
    %v6323 = vunpack.c.l.b16 %v5298
    %v6324 = vunpack.c.l.b16 %v5299
    %v6325 = vunpack.c.h.b16 %v5299
    %v6326 = vunpack.c.l.b16 %v5300
    %v6327 = vunpack.c.h.b16 %v5300
    %v6328 = vunpack.c.l.b16 %v5301
    %v6329 = vunpack.c.h.b16 %v5301
    %v6330 = vunpack.c.l.b16 %v5302
    %v6331 = vunpack.c.l.b16 %v5303
    %v6332 = vunpack.c.h.b16 %v5303
    %v6333 = vunpack.c.l.b16 %v5304
    %v6334 = vunpack.c.h.b16 %v5304
    %v6335 = vunpack.c.l.b16 %v5305
    %v6336 = vunpack.c.h.b16 %v5305
    %v6337 = vunpack.c.l.b16 %v5306
    %v6338 = vunpack.c.l.b16 %v5307
    %v6339 = vunpack.c.h.b16 %v5307
    %v6340 = vunpack.c.l.b16 %v5308
    %v6341 = vunpack.c.h.b16 %v5308
    %v6342 = vunpack.c.l.b16 %v5309
    %v6343 = vunpack.c.h.b16 %v5309
    %v6344 = vunpack.c.l.b16 %v5310
    %v6345 = vunpack.c.l.b16 %v5311
    %v6346 = vunpack.c.h.b16 %v5311
    %v6347 = vunpack.c.l.b16 %v5312
    %v6348 = vunpack.c.h.b16 %v5312
    %v6349 = vunpack.c.l.b16 %v5313
    %v6350 = vunpack.c.h.b16 %v5313
    %v6351 = vunpack.c.l.b16 %v5314
    %v6352 = vunpack.c.l.b16 %v5315
    %v6353 = vunpack.c.h.b16 %v5315
    %v6354 = vunpack.c.l.b16 %v5316
    %v6355 = vunpack.c.h.b16 %v5316
    %v6356 = vunpack.c.l.b16 %v5317
    %v6357 = vunpack.c.h.b16 %v5317
    %v6358 = vunpack.c.l.b16 %v5318
    %v6359 = vunpack.c.l.b16 %v5319
    %v6360 = vunpack.c.h.b16 %v5319
    %v6361 = vunpack.c.l.b16 %v5320
    %v6362 = vunpack.c.h.b16 %v5320
    %v6363 = vunpack.c.l.b16 %v5321
    %v6364 = vunpack.c.h.b16 %v5321
    %v6365 = vunpack.c.l.b16 %v5322
    %v6366 = vunpack.c.l.b16 %v5323
    %v6367 = vunpack.c.h.b16 %v5323
    %v6368 = vunpack.c.l.b16 %v5324
    %v6369 = vunpack.c.h.b16 %v5324
    %v6370 = vunpack.c.l.b16 %v5325
    %v6371 = vunpack.c.h.b16 %v5325
    %v6372 = vunpack.c.l.b16 %v5326
    %v6373 = vunpack.c.l.b16 %v5327
    %v6374 = vunpack.c.h.b16 %v5327
    %v6375 = vunpack.c.l.b16 %v5328
    %v6376 = vunpack.c.h.b16 %v5328
    %v6377 = vunpack.c.l.b16 %v5329
    %v6378 = vunpack.c.h.b16 %v5329
    %v6379 = vunpack.c.l.b16 %v5330
    %v6380 = vunpack.c.l.b16 %v5331
    %v6381 = vunpack.c.h.b16 %v5331
    %v6382 = vunpack.c.l.b16 %v5332
    %v6383 = vunpack.c.h.b16 %v5332
    %v6384 = vunpack.c.l.b16 %v5333
    %v6385 = vunpack.c.h.b16 %v5333
    %v6386 = vunpack.c.l.b16 %v5334
    %v6387 = vpack.c.b16 %v6219, %v6212
    %v6388 = vpack.c.b16 %v6220, %v6213
    %v6389 = vpack.c.b16 %v6221, %v6214
    %v6390 = vpack.c.b16 %v6222, %v6215
    %v6391 = vpack.c.b16 %v6223, %v6216
    %v6392 = vpack.c.b16 %v6224, %v6217
    %v6393 = vpack.c.b16 %v6225, %v6218
    %v6394 = vpack.c.b16 %v6233, %v6226
    %v6395 = vpack.c.b16 %v6234, %v6227
    %v6396 = vpack.c.b16 %v6235, %v6228
    %v6397 = vpack.c.b16 %v6236, %v6229
    %v6398 = vpack.c.b16 %v6237, %v6230
    %v6399 = vpack.c.b16 %v6238, %v6231
    %v6400 = vpack.c.b16 %v6239, %v6232
    %v6401 = vpack.c.b16 %v6247, %v6240
    %v6402 = vpack.c.b16 %v6248, %v6241
    %v6403 = vpack.c.b16 %v6249, %v6242
    %v6404 = vpack.c.b16 %v6250, %v6243
    %v6405 = vpack.c.b16 %v6251, %v6244
    %v6406 = vpack.c.b16 %v6252, %v6245
    %v6407 = vpack.c.b16 %v6253, %v6246
    %v6408 = vpack.c.b16 %v6261, %v6254
    %v6409 = vpack.c.b16 %v6262, %v6255
    %v6410 = vpack.c.b16 %v6263, %v6256
    %v6411 = vpack.c.b16 %v6264, %v6257
    %v6412 = vpack.c.b16 %v6265, %v6258
    %v6413 = vpack.c.b16 %v6266, %v6259
    %v6414 = vpack.c.b16 %v6267, %v6260
    %v6415 = vpack.c.b16 %v6275, %v6268
    %v6416 = vpack.c.b16 %v6276, %v6269
    %v6417 = vpack.c.b16 %v6277, %v6270
    %v6418 = vpack.c.b16 %v6278, %v6271
    %v6419 = vpack.c.b16 %v6279, %v6272
    %v6420 = vpack.c.b16 %v6280, %v6273
    %v6421 = vpack.c.b16 %v6281, %v6274
    %v6422 = vpack.c.b16 %v6289, %v6282
    %v6423 = vpack.c.b16 %v6290, %v6283
    %v6424 = vpack.c.b16 %v6291, %v6284
    %v6425 = vpack.c.b16 %v6292, %v6285
    %v6426 = vpack.c.b16 %v6293, %v6286
    %v6427 = vpack.c.b16 %v6294, %v6287
    %v6428 = vpack.c.b16 %v6295, %v6288
    %v6429 = vpack.c.b16 %v6303, %v6296
    %v6430 = vpack.c.b16 %v6304, %v6297
    %v6431 = vpack.c.b16 %v6305, %v6298
    %v6432 = vpack.c.b16 %v6306, %v6299
    %v6433 = vpack.c.b16 %v6307, %v6300
    %v6434 = vpack.c.b16 %v6308, %v6301
    %v6435 = vpack.c.b16 %v6309, %v6302
    %v6436 = vpack.c.b16 %v6317, %v6310
    %v6437 = vpack.c.b16 %v6318, %v6311
    %v6438 = vpack.c.b16 %v6319, %v6312
    %v6439 = vpack.c.b16 %v6320, %v6313
    %v6440 = vpack.c.b16 %v6321, %v6314
    %v6441 = vpack.c.b16 %v6322, %v6315
    %v6442 = vpack.c.b16 %v6323, %v6316
    %v6443 = vpack.c.b16 %v6331, %v6324
    %v6444 = vpack.c.b16 %v6332, %v6325
    %v6445 = vpack.c.b16 %v6333, %v6326
    %v6446 = vpack.c.b16 %v6334, %v6327
    %v6447 = vpack.c.b16 %v6335, %v6328
    %v6448 = vpack.c.b16 %v6336, %v6329
    %v6449 = vpack.c.b16 %v6337, %v6330
    %v6450 = vpack.c.b16 %v6345, %v6338
    %v6451 = vpack.c.b16 %v6346, %v6339
    %v6452 = vpack.c.b16 %v6347, %v6340
    %v6453 = vpack.c.b16 %v6348, %v6341
    %v6454 = vpack.c.b16 %v6349, %v6342
    %v6455 = vpack.c.b16 %v6350, %v6343
    %v6456 = vpack.c.b16 %v6351, %v6344
    %v6457 = vpack.c.b16 %v6359, %v6352
    %v6458 = vpack.c.b16 %v6360, %v6353
    %v6459 = vpack.c.b16 %v6361, %v6354
    %v6460 = vpack.c.b16 %v6362, %v6355
    %v6461 = vpack.c.b16 %v6363, %v6356
    %v6462 = vpack.c.b16 %v6364, %v6357
    %v6463 = vpack.c.b16 %v6365, %v6358
    %v6464 = vpack.c.b16 %v6373, %v6366
    %v6465 = vpack.c.b16 %v6374, %v6367
    %v6466 = vpack.c.b16 %v6375, %v6368
    %v6467 = vpack.c.b16 %v6376, %v6369
    %v6468 = vpack.c.b16 %v6377, %v6370
    %v6469 = vpack.c.b16 %v6378, %v6371
    %v6470 = vpack.c.b16 %v6379, %v6372
    %v6471 = vpack.c.b16 %v6380, %v6380
    %v6472 = vpack.c.b16 %v6381, %v6381
    %v6473 = vpack.c.b16 %v6382, %v6382
    %v6474 = vpack.c.b16 %v6383, %v6383
    %v6475 = vpack.c.b16 %v6384, %v6384
    %v6476 = vpack.c.b16 %v6385, %v6385
    %v6477 = vpack.c.b16 %v6386, %v6386
    %v6563 = vsel %vm5067, %v5234, 0
    %v6566 = vsel %vm572, %v6471, 0
    %v6569 = vsel %vm572, %v6472, 0
    %v6572 = vsel %vm572, %v6473, 0
    %v6575 = vsel %vm572, %v6474, 0
    %v6578 = vsel %vm572, %v6475, 0
    %v6581 = vsel %vm572, %v6476, 0
    %v6584 = vsel %vm572, %v6477, 0
    %6586 = vmatpush.bf16.msra.mxu0 %v6436
    %6587 = vmatpush.bf16.msra.mxu0 %v6429
    %6588 = vmatpush.bf16.msra.mxu0 %v6422
    %6589 = vmatpush.bf16.msra.mxu0 %v6415
    %6590 = vmatpush.bf16.msra.mxu0 %v6408
    %6591 = vmatpush.bf16.msra.mxu0 %v6401
    %6592 = vmatpush.bf16.msra.mxu0 %v6394
    %6593 = vmatpush.bf16.msra.mxu0 %v6387
    %6594 = vmatmul.bf16.gmra.mxu0 %v5233
    %v6595 = vpop.f32.mrf.mxu0
    %v6596 = vadd.f32 %v5940, %v6595
    %v6597 = vpop.f32.mrf.mxu0
    %v6598 = vadd.f32 %v5942, %v6597
    %6599 = vdwg.mxu0
    %6600 = vmatpush.bf16.msra.mxu0 0
    %6601 = vmatpush.bf16.msra.mxu0 0
    %6602 = vmatpush.bf16.msra.mxu0 0
    %6603 = vmatpush.bf16.msra.mxu0 %v6566
    %6604 = vmatpush.bf16.msra.mxu0 %v6464
    %6605 = vmatpush.bf16.msra.mxu0 %v6457
    %6606 = vmatpush.bf16.msra.mxu0 %v6450
    %6607 = vmatpush.bf16.msra.mxu0 %v6443
    %6608 = vmatmul.bf16.gmra.mxu0 %v6563
    %v6609 = vpop.f32.mrf.mxu0
    %v6610 = vadd.f32 %v6596, %v6609
    %v6611 = vpop.f32.mrf.mxu0
    %v6612 = vadd.f32 %v6598, %v6611
    %6613 = vdwg.mxu0
    %6614 = vmatpush.bf16.msra.mxu0 %v6437
    %6615 = vmatpush.bf16.msra.mxu0 %v6430
    %6616 = vmatpush.bf16.msra.mxu0 %v6423
    %6617 = vmatpush.bf16.msra.mxu0 %v6416
    %6618 = vmatpush.bf16.msra.mxu0 %v6409
    %6619 = vmatpush.bf16.msra.mxu0 %v6402
    %6620 = vmatpush.bf16.msra.mxu0 %v6395
    %6621 = vmatpush.bf16.msra.mxu0 %v6388
    %6622 = vmatmul.bf16.gmra.mxu0 %v5233
    %v6623 = vpop.f32.mrf.mxu0
    %v6624 = vadd.f32 %v5968, %v6623
    %v6625 = vpop.f32.mrf.mxu0
    %v6626 = vadd.f32 %v5970, %v6625
    %6627 = vdwg.mxu0
    %6628 = vmatpush.bf16.msra.mxu0 0
    %6629 = vmatpush.bf16.msra.mxu0 0
    %6630 = vmatpush.bf16.msra.mxu0 0
    %6631 = vmatpush.bf16.msra.mxu0 %v6569
    %6632 = vmatpush.bf16.msra.mxu0 %v6465
    %6633 = vmatpush.bf16.msra.mxu0 %v6458
    %6634 = vmatpush.bf16.msra.mxu0 %v6451
    %6635 = vmatpush.bf16.msra.mxu0 %v6444
    %6636 = vmatmul.bf16.gmra.mxu0 %v6563
    %v6637 = vpop.f32.mrf.mxu0
    %v6638 = vadd.f32 %v6624, %v6637
    %v6639 = vpop.f32.mrf.mxu0
    %v6640 = vadd.f32 %v6626, %v6639
    %6641 = vdwg.mxu0
    %6642 = vmatpush.bf16.msra.mxu0 %v6438
    %6643 = vmatpush.bf16.msra.mxu0 %v6431
    %6644 = vmatpush.bf16.msra.mxu0 %v6424
    %6645 = vmatpush.bf16.msra.mxu0 %v6417
    %6646 = vmatpush.bf16.msra.mxu0 %v6410
    %6647 = vmatpush.bf16.msra.mxu0 %v6403
    %6648 = vmatpush.bf16.msra.mxu0 %v6396
    %6649 = vmatpush.bf16.msra.mxu0 %v6389
    %6650 = vmatmul.bf16.gmra.mxu0 %v5233
    %v6651 = vpop.f32.mrf.mxu0
    %v6652 = vadd.f32 %v5996, %v6651
    %v6653 = vpop.f32.mrf.mxu0
    %v6654 = vadd.f32 %v5998, %v6653
    %6655 = vdwg.mxu0
    %6656 = vmatpush.bf16.msra.mxu0 0
    %6657 = vmatpush.bf16.msra.mxu0 0
    %6658 = vmatpush.bf16.msra.mxu0 0
    %6659 = vmatpush.bf16.msra.mxu0 %v6572
    %6660 = vmatpush.bf16.msra.mxu0 %v6466
    %6661 = vmatpush.bf16.msra.mxu0 %v6459
    %6662 = vmatpush.bf16.msra.mxu0 %v6452
    %6663 = vmatpush.bf16.msra.mxu0 %v6445
    %6664 = vmatmul.bf16.gmra.mxu0 %v6563
    %v6665 = vpop.f32.mrf.mxu0
    %v6666 = vadd.f32 %v6652, %v6665
    %v6667 = vpop.f32.mrf.mxu0
    %v6668 = vadd.f32 %v6654, %v6667
    %6669 = vdwg.mxu0
    %6670 = vmatpush.bf16.msra.mxu0 %v6439
    %6671 = vmatpush.bf16.msra.mxu0 %v6432
    %6672 = vmatpush.bf16.msra.mxu0 %v6425
    %6673 = vmatpush.bf16.msra.mxu0 %v6418
    %6674 = vmatpush.bf16.msra.mxu0 %v6411
    %6675 = vmatpush.bf16.msra.mxu0 %v6404
    %6676 = vmatpush.bf16.msra.mxu0 %v6397
    %6677 = vmatpush.bf16.msra.mxu0 %v6390
    %6678 = vmatmul.bf16.gmra.mxu0 %v5233
    %v6679 = vpop.f32.mrf.mxu0
    %v6680 = vadd.f32 %v6024, %v6679
    %v6681 = vpop.f32.mrf.mxu0
    %v6682 = vadd.f32 %v6026, %v6681
    %6683 = vdwg.mxu0
    %6684 = vmatpush.bf16.msra.mxu0 0
    %6685 = vmatpush.bf16.msra.mxu0 0
    %6686 = vmatpush.bf16.msra.mxu0 0
    %6687 = vmatpush.bf16.msra.mxu0 %v6575
    %6688 = vmatpush.bf16.msra.mxu0 %v6467
    %6689 = vmatpush.bf16.msra.mxu0 %v6460
    %6690 = vmatpush.bf16.msra.mxu0 %v6453
    %6691 = vmatpush.bf16.msra.mxu0 %v6446
    %6692 = vmatmul.bf16.gmra.mxu0 %v6563
    %v6693 = vpop.f32.mrf.mxu0
    %v6694 = vadd.f32 %v6680, %v6693
    %v6695 = vpop.f32.mrf.mxu0
    %v6696 = vadd.f32 %v6682, %v6695
    %6697 = vdwg.mxu0
    %6698 = vmatpush.bf16.msra.mxu0 %v6440
    %6699 = vmatpush.bf16.msra.mxu0 %v6433
    %6700 = vmatpush.bf16.msra.mxu0 %v6426
    %6701 = vmatpush.bf16.msra.mxu0 %v6419
    %6702 = vmatpush.bf16.msra.mxu0 %v6412
    %6703 = vmatpush.bf16.msra.mxu0 %v6405
    %6704 = vmatpush.bf16.msra.mxu0 %v6398
    %6705 = vmatpush.bf16.msra.mxu0 %v6391
    %6706 = vmatmul.bf16.gmra.mxu0 %v5233
    %v6707 = vpop.f32.mrf.mxu0
    %v6708 = vadd.f32 %v6052, %v6707
    %v6709 = vpop.f32.mrf.mxu0
    %v6710 = vadd.f32 %v6054, %v6709
    %6711 = vdwg.mxu0
    %6712 = vmatpush.bf16.msra.mxu0 0
    %6713 = vmatpush.bf16.msra.mxu0 0
    %6714 = vmatpush.bf16.msra.mxu0 0
    %6715 = vmatpush.bf16.msra.mxu0 %v6578
    %6716 = vmatpush.bf16.msra.mxu0 %v6468
    %6717 = vmatpush.bf16.msra.mxu0 %v6461
    %6718 = vmatpush.bf16.msra.mxu0 %v6454
    %6719 = vmatpush.bf16.msra.mxu0 %v6447
    %6720 = vmatmul.bf16.gmra.mxu0 %v6563
    %v6721 = vpop.f32.mrf.mxu0
    %v6722 = vadd.f32 %v6708, %v6721
    %v6723 = vpop.f32.mrf.mxu0
    %v6724 = vadd.f32 %v6710, %v6723
    %6725 = vdwg.mxu0
    %6726 = vmatpush.bf16.msra.mxu0 %v6441
    %6727 = vmatpush.bf16.msra.mxu0 %v6434
    %6728 = vmatpush.bf16.msra.mxu0 %v6427
    %6729 = vmatpush.bf16.msra.mxu0 %v6420
    %6730 = vmatpush.bf16.msra.mxu0 %v6413
    %6731 = vmatpush.bf16.msra.mxu0 %v6406
    %6732 = vmatpush.bf16.msra.mxu0 %v6399
    %6733 = vmatpush.bf16.msra.mxu0 %v6392
    %6734 = vmatmul.bf16.gmra.mxu0 %v5233
    %v6735 = vpop.f32.mrf.mxu0
    %v6736 = vadd.f32 %v6080, %v6735
    %v6737 = vpop.f32.mrf.mxu0
    %v6738 = vadd.f32 %v6082, %v6737
    %6739 = vdwg.mxu0
    %6740 = vmatpush.bf16.msra.mxu0 0
    %6741 = vmatpush.bf16.msra.mxu0 0
    %6742 = vmatpush.bf16.msra.mxu0 0
    %6743 = vmatpush.bf16.msra.mxu0 %v6581
    %6744 = vmatpush.bf16.msra.mxu0 %v6469
    %6745 = vmatpush.bf16.msra.mxu0 %v6462
    %6746 = vmatpush.bf16.msra.mxu0 %v6455
    %6747 = vmatpush.bf16.msra.mxu0 %v6448
    %6748 = vmatmul.bf16.gmra.mxu0 %v6563
    %v6749 = vpop.f32.mrf.mxu0
    %v6750 = vadd.f32 %v6736, %v6749
    %v6751 = vpop.f32.mrf.mxu0
    %v6752 = vadd.f32 %v6738, %v6751
    %6753 = vdwg.mxu0
    %6754 = vmatpush.bf16.msra.mxu0 %v6442
    %6755 = vmatpush.bf16.msra.mxu0 %v6435
    %6756 = vmatpush.bf16.msra.mxu0 %v6428
    %6757 = vmatpush.bf16.msra.mxu0 %v6421
    %6758 = vmatpush.bf16.msra.mxu0 %v6414
    %6759 = vmatpush.bf16.msra.mxu0 %v6407
    %6760 = vmatpush.bf16.msra.mxu0 %v6400
    %6761 = vmatpush.bf16.msra.mxu0 %v6393
    %6762 = vmatmul.bf16.gmra.mxu0 %v5233
    %v6763 = vpop.f32.mrf.mxu0
    %v6764 = vadd.f32 %v6108, %v6763
    %v6765 = vpop.f32.mrf.mxu0
    %v6766 = vadd.f32 %v6110, %v6765
    %6767 = vdwg.mxu0
    %6768 = vmatpush.bf16.msra.mxu0 0
    %6769 = vmatpush.bf16.msra.mxu0 0
    %6770 = vmatpush.bf16.msra.mxu0 0
    %6771 = vmatpush.bf16.msra.mxu0 %v6584
    %6772 = vmatpush.bf16.msra.mxu0 %v6470
    %6773 = vmatpush.bf16.msra.mxu0 %v6463
    %6774 = vmatpush.bf16.msra.mxu0 %v6456
    %6775 = vmatpush.bf16.msra.mxu0 %v6449
    %6776 = vmatmul.bf16.gmra.mxu0 %v6563
    %v6777 = vpop.f32.mrf.mxu0
    %v6778 = vadd.f32 %v6764, %v6777
    %v6779 = vpop.f32.mrf.mxu0
    %v6780 = vadd.f32 %v6766, %v6779
    %6781 = vdwg.mxu0
    %v6782 = vld [vmem:[#allocation4 + $0x20] sm:$0xff]
    %v6783 = vld [vmem:[#allocation4 + $0x28] sm:$0xff]
    %v6784 = vld [vmem:[#allocation4 + $0xb0] sm:$0xff]
    %v6785 = vld [vmem:[#allocation4 + $0xb8] sm:$0xff]
    %v6786 = vpack.c.bf16 %v6784, %v6782
    %v6787 = vpack.c.bf16 %v6785, %v6783
    %s6788 = scalar_lea.vmem [#allocation5], 1400
    %v6789 = vld [vmem:[%s6788] sm:$0xff]
    %v6790 = vld [vmem:[%s6788 + $0x8] sm:$0xff]
    %v6791 = vld [vmem:[%s6788 + $0x10] sm:$0xff]
    %v6792 = vld [vmem:[%s6788 + $0x18] sm:$0xf]
    %v6793 = vld [vmem:[%s6788 + $0x1c] sm:$0xff]
    %v6794 = vld [vmem:[%s6788 + $0x24] sm:$0xff]
    %v6795 = vld [vmem:[%s6788 + $0x2c] sm:$0xff]
    %v6796 = vld [vmem:[%s6788 + $0x34] sm:$0xf]
    %v6797 = vld [vmem:[%s6788 + $0x38] sm:$0xff]
    %v6798 = vld [vmem:[%s6788 + $0x40] sm:$0xff]
    %v6799 = vld [vmem:[%s6788 + $0x48] sm:$0xff]
    %v6800 = vld [vmem:[%s6788 + $0x50] sm:$0xf]
    %v6801 = vld [vmem:[%s6788 + $0x54] sm:$0xff]
    %v6802 = vld [vmem:[%s6788 + $0x5c] sm:$0xff]
    %v6803 = vld [vmem:[%s6788 + $0x64] sm:$0xff]
    %v6804 = vld [vmem:[%s6788 + $0x6c] sm:$0xf]
    %v6805 = vld [vmem:[%s6788 + $0x70] sm:$0xff]
    %v6806 = vld [vmem:[%s6788 + $0x78] sm:$0xff]
    %v6807 = vld [vmem:[%s6788 + $0x80] sm:$0xff]
    %v6808 = vld [vmem:[%s6788 + $0x88] sm:$0xf]
    %v6809 = vld [vmem:[%s6788 + $0x8c] sm:$0xff]
    %v6810 = vld [vmem:[%s6788 + $0x94] sm:$0xff]
    %v6811 = vld [vmem:[%s6788 + $0x9c] sm:$0xff]
    %v6812 = vld [vmem:[%s6788 + $0xa4] sm:$0xf]
    %v6813 = vld [vmem:[%s6788 + $0xa8] sm:$0xff]
    %v6814 = vld [vmem:[%s6788 + $0xb0] sm:$0xff]
    %v6815 = vld [vmem:[%s6788 + $0xb8] sm:$0xff]
    %v6816 = vld [vmem:[%s6788 + $0xc0] sm:$0xf]
    %v6817 = vld [vmem:[%s6788 + $0xc4] sm:$0xff]
    %v6818 = vld [vmem:[%s6788 + $0xcc] sm:$0xff]
    %v6819 = vld [vmem:[%s6788 + $0xd4] sm:$0xff]
    %v6820 = vld [vmem:[%s6788 + $0xdc] sm:$0xf]
    %v6821 = vld [vmem:[%s6788 + $0xe0] sm:$0xff]
    %v6822 = vld [vmem:[%s6788 + $0xe8] sm:$0xff]
    %v6823 = vld [vmem:[%s6788 + $0xf0] sm:$0xff]
    %v6824 = vld [vmem:[%s6788 + $0xf8] sm:$0xf]
    %v6825 = vld [vmem:[%s6788 + $0xfc] sm:$0xff]
    %v6826 = vld [vmem:[%s6788 + $0x104] sm:$0xff]
    %v6827 = vld [vmem:[%s6788 + $0x10c] sm:$0xff]
    %v6828 = vld [vmem:[%s6788 + $0x114] sm:$0xf]
    %v6829 = vld [vmem:[%s6788 + $0x118] sm:$0xff]
    %v6830 = vld [vmem:[%s6788 + $0x120] sm:$0xff]
    %v6831 = vld [vmem:[%s6788 + $0x128] sm:$0xff]
    %v6832 = vld [vmem:[%s6788 + $0x130] sm:$0xf]
    %v6833 = vld [vmem:[%s6788 + $0x134] sm:$0xff]
    %v6834 = vld [vmem:[%s6788 + $0x13c] sm:$0xff]
    %v6835 = vld [vmem:[%s6788 + $0x144] sm:$0xff]
    %v6836 = vld [vmem:[%s6788 + $0x14c] sm:$0xf]
    %v6837 = vld [vmem:[%s6788 + $0x150] sm:$0xff]
    %v6838 = vld [vmem:[%s6788 + $0x158] sm:$0xff]
    %v6839 = vld [vmem:[%s6788 + $0x160] sm:$0xff]
    %v6840 = vld [vmem:[%s6788 + $0x168] sm:$0xf]
    %v6841 = vld [vmem:[%s6788 + $0x16c] sm:$0xff]
    %v6842 = vld [vmem:[%s6788 + $0x174] sm:$0xff]
    %v6843 = vld [vmem:[%s6788 + $0x17c] sm:$0xff]
    %v6844 = vld [vmem:[%s6788 + $0x184] sm:$0xf]
    %v6845 = vld [vmem:[%s6788 + $0x188] sm:$0xff]
    %v6846 = vld [vmem:[%s6788 + $0x190] sm:$0xff]
    %v6847 = vld [vmem:[%s6788 + $0x198] sm:$0xff]
    %v6848 = vld [vmem:[%s6788 + $0x1a0] sm:$0xf]
    %v6849 = vld [vmem:[%s6788 + $0x1a4] sm:$0xff]
    %v6850 = vld [vmem:[%s6788 + $0x1ac] sm:$0xff]
    %v6851 = vld [vmem:[%s6788 + $0x1b4] sm:$0xff]
    %v6852 = vld [vmem:[%s6788 + $0x1bc] sm:$0xf]
    %v6853 = vld [vmem:[%s6788 + $0x1c0] sm:$0xff]
    %v6854 = vld [vmem:[%s6788 + $0x1c8] sm:$0xff]
    %v6855 = vld [vmem:[%s6788 + $0x1d0] sm:$0xff]
    %v6856 = vld [vmem:[%s6788 + $0x1d8] sm:$0xf]
    %v6857 = vld [vmem:[%s6788 + $0x1dc] sm:$0xff]
    %v6858 = vld [vmem:[%s6788 + $0x1e4] sm:$0xff]
    %v6859 = vld [vmem:[%s6788 + $0x1ec] sm:$0xff]
    %v6860 = vld [vmem:[%s6788 + $0x1f4] sm:$0xf]
    %v6861 = vld [vmem:[%s6788 + $0x1f8] sm:$0xff]
    %v6862 = vld [vmem:[%s6788 + $0x200] sm:$0xff]
    %v6863 = vld [vmem:[%s6788 + $0x208] sm:$0xff]
    %v6864 = vld [vmem:[%s6788 + $0x210] sm:$0xf]
    %v6865 = vld [vmem:[%s6788 + $0x214] sm:$0xff]
    %v6866 = vld [vmem:[%s6788 + $0x21c] sm:$0xff]
    %v6867 = vld [vmem:[%s6788 + $0x224] sm:$0xff]
    %v6868 = vld [vmem:[%s6788 + $0x22c] sm:$0xf]
    %v6869 = vld [vmem:[%s6788 + $0x230] sm:$0xff]
    %v6870 = vld [vmem:[%s6788 + $0x238] sm:$0xff]
    %v6871 = vld [vmem:[%s6788 + $0x240] sm:$0xff]
    %v6872 = vld [vmem:[%s6788 + $0x248] sm:$0xf]
    %v6873 = vld [vmem:[%s6788 + $0x24c] sm:$0xff]
    %v6874 = vld [vmem:[%s6788 + $0x254] sm:$0xff]
    %v6875 = vld [vmem:[%s6788 + $0x25c] sm:$0xff]
    %v6876 = vld [vmem:[%s6788 + $0x264] sm:$0xf]
    %v6877 = vld [vmem:[%s6788 + $0x268] sm:$0xff]
    %v6878 = vld [vmem:[%s6788 + $0x270] sm:$0xff]
    %v6879 = vld [vmem:[%s6788 + $0x278] sm:$0xff]
    %v6880 = vld [vmem:[%s6788 + $0x280] sm:$0xf]
    %v6881 = vld [vmem:[%s6788 + $0x284] sm:$0xff]
    %v6882 = vld [vmem:[%s6788 + $0x28c] sm:$0xff]
    %v6883 = vld [vmem:[%s6788 + $0x294] sm:$0xff]
    %v6884 = vld [vmem:[%s6788 + $0x29c] sm:$0xf]
    %v6885 = vld [vmem:[%s6788 + $0x2a0] sm:$0x33]
    %v6886 = vld [vmem:[%s6788 + $0x2a8] sm:$0x33]
    %v6887 = vld [vmem:[%s6788 + $0x2b0] sm:$0x33]
    %v6888 = vld [vmem:[%s6788 + $0x2b8] sm:$0x3]
    %v6989 = vunpack.c.l.b16 %v6789
    %v6990 = vunpack.c.h.b16 %v6789
    %v6991 = vunpack.c.l.b16 %v6790
    %v6992 = vunpack.c.h.b16 %v6790
    %v6993 = vunpack.c.l.b16 %v6791
    %v6994 = vunpack.c.h.b16 %v6791
    %v6995 = vunpack.c.l.b16 %v6792
    %v6996 = vunpack.c.l.b16 %v6793
    %v6997 = vunpack.c.h.b16 %v6793
    %v6998 = vunpack.c.l.b16 %v6794
    %v6999 = vunpack.c.h.b16 %v6794
    %v7000 = vunpack.c.l.b16 %v6795
    %v7001 = vunpack.c.h.b16 %v6795
    %v7002 = vunpack.c.l.b16 %v6796
    %v7003 = vunpack.c.l.b16 %v6797
    %v7004 = vunpack.c.h.b16 %v6797
    %v7005 = vunpack.c.l.b16 %v6798
    %v7006 = vunpack.c.h.b16 %v6798
    %v7007 = vunpack.c.l.b16 %v6799
    %v7008 = vunpack.c.h.b16 %v6799
    %v7009 = vunpack.c.l.b16 %v6800
    %v7010 = vunpack.c.l.b16 %v6801
    %v7011 = vunpack.c.h.b16 %v6801
    %v7012 = vunpack.c.l.b16 %v6802
    %v7013 = vunpack.c.h.b16 %v6802
    %v7014 = vunpack.c.l.b16 %v6803
    %v7015 = vunpack.c.h.b16 %v6803
    %v7016 = vunpack.c.l.b16 %v6804
    %v7017 = vunpack.c.l.b16 %v6805
    %v7018 = vunpack.c.h.b16 %v6805
    %v7019 = vunpack.c.l.b16 %v6806
    %v7020 = vunpack.c.h.b16 %v6806
    %v7021 = vunpack.c.l.b16 %v6807
    %v7022 = vunpack.c.h.b16 %v6807
    %v7023 = vunpack.c.l.b16 %v6808
    %v7024 = vunpack.c.l.b16 %v6809
    %v7025 = vunpack.c.h.b16 %v6809
    %v7026 = vunpack.c.l.b16 %v6810
    %v7027 = vunpack.c.h.b16 %v6810
    %v7028 = vunpack.c.l.b16 %v6811
    %v7029 = vunpack.c.h.b16 %v6811
    %v7030 = vunpack.c.l.b16 %v6812
    %v7031 = vunpack.c.l.b16 %v6813
    %v7032 = vunpack.c.h.b16 %v6813
    %v7033 = vunpack.c.l.b16 %v6814
    %v7034 = vunpack.c.h.b16 %v6814
    %v7035 = vunpack.c.l.b16 %v6815
    %v7036 = vunpack.c.h.b16 %v6815
    %v7037 = vunpack.c.l.b16 %v6816
    %v7038 = vunpack.c.l.b16 %v6817
    %v7039 = vunpack.c.h.b16 %v6817
    %v7040 = vunpack.c.l.b16 %v6818
    %v7041 = vunpack.c.h.b16 %v6818
    %v7042 = vunpack.c.l.b16 %v6819
    %v7043 = vunpack.c.h.b16 %v6819
    %v7044 = vunpack.c.l.b16 %v6820
    %v7045 = vunpack.c.l.b16 %v6821
    %v7046 = vunpack.c.h.b16 %v6821
    %v7047 = vunpack.c.l.b16 %v6822
    %v7048 = vunpack.c.h.b16 %v6822
    %v7049 = vunpack.c.l.b16 %v6823
    %v7050 = vunpack.c.h.b16 %v6823
    %v7051 = vunpack.c.l.b16 %v6824
    %v7052 = vunpack.c.l.b16 %v6825
    %v7053 = vunpack.c.h.b16 %v6825
    %v7054 = vunpack.c.l.b16 %v6826
    %v7055 = vunpack.c.h.b16 %v6826
    %v7056 = vunpack.c.l.b16 %v6827
    %v7057 = vunpack.c.h.b16 %v6827
    %v7058 = vunpack.c.l.b16 %v6828
    %v7059 = vunpack.c.l.b16 %v6829
    %v7060 = vunpack.c.h.b16 %v6829
    %v7061 = vunpack.c.l.b16 %v6830
    %v7062 = vunpack.c.h.b16 %v6830
    %v7063 = vunpack.c.l.b16 %v6831
    %v7064 = vunpack.c.h.b16 %v6831
    %v7065 = vunpack.c.l.b16 %v6832
    %v7066 = vunpack.c.l.b16 %v6833
    %v7067 = vunpack.c.h.b16 %v6833
    %v7068 = vunpack.c.l.b16 %v6834
    %v7069 = vunpack.c.h.b16 %v6834
    %v7070 = vunpack.c.l.b16 %v6835
    %v7071 = vunpack.c.h.b16 %v6835
    %v7072 = vunpack.c.l.b16 %v6836
    %v7073 = vunpack.c.l.b16 %v6837
    %v7074 = vunpack.c.h.b16 %v6837
    %v7075 = vunpack.c.l.b16 %v6838
    %v7076 = vunpack.c.h.b16 %v6838
    %v7077 = vunpack.c.l.b16 %v6839
    %v7078 = vunpack.c.h.b16 %v6839
    %v7079 = vunpack.c.l.b16 %v6840
    %v7080 = vunpack.c.l.b16 %v6841
    %v7081 = vunpack.c.h.b16 %v6841
    %v7082 = vunpack.c.l.b16 %v6842
    %v7083 = vunpack.c.h.b16 %v6842
    %v7084 = vunpack.c.l.b16 %v6843
    %v7085 = vunpack.c.h.b16 %v6843
    %v7086 = vunpack.c.l.b16 %v6844
    %v7087 = vunpack.c.l.b16 %v6845
    %v7088 = vunpack.c.h.b16 %v6845
    %v7089 = vunpack.c.l.b16 %v6846
    %v7090 = vunpack.c.h.b16 %v6846
    %v7091 = vunpack.c.l.b16 %v6847
    %v7092 = vunpack.c.h.b16 %v6847
    %v7093 = vunpack.c.l.b16 %v6848
    %v7094 = vunpack.c.l.b16 %v6849
    %v7095 = vunpack.c.h.b16 %v6849
    %v7096 = vunpack.c.l.b16 %v6850
    %v7097 = vunpack.c.h.b16 %v6850
    %v7098 = vunpack.c.l.b16 %v6851
    %v7099 = vunpack.c.h.b16 %v6851
    %v7100 = vunpack.c.l.b16 %v6852
    %v7101 = vunpack.c.l.b16 %v6853
    %v7102 = vunpack.c.h.b16 %v6853
    %v7103 = vunpack.c.l.b16 %v6854
    %v7104 = vunpack.c.h.b16 %v6854
    %v7105 = vunpack.c.l.b16 %v6855
    %v7106 = vunpack.c.h.b16 %v6855
    %v7107 = vunpack.c.l.b16 %v6856
    %v7108 = vunpack.c.l.b16 %v6857
    %v7109 = vunpack.c.h.b16 %v6857
    %v7110 = vunpack.c.l.b16 %v6858
    %v7111 = vunpack.c.h.b16 %v6858
    %v7112 = vunpack.c.l.b16 %v6859
    %v7113 = vunpack.c.h.b16 %v6859
    %v7114 = vunpack.c.l.b16 %v6860
    %v7115 = vunpack.c.l.b16 %v6861
    %v7116 = vunpack.c.h.b16 %v6861
    %v7117 = vunpack.c.l.b16 %v6862
    %v7118 = vunpack.c.h.b16 %v6862
    %v7119 = vunpack.c.l.b16 %v6863
    %v7120 = vunpack.c.h.b16 %v6863
    %v7121 = vunpack.c.l.b16 %v6864
    %v7122 = vunpack.c.l.b16 %v6865
    %v7123 = vunpack.c.h.b16 %v6865
    %v7124 = vunpack.c.l.b16 %v6866
    %v7125 = vunpack.c.h.b16 %v6866
    %v7126 = vunpack.c.l.b16 %v6867
    %v7127 = vunpack.c.h.b16 %v6867
    %v7128 = vunpack.c.l.b16 %v6868
    %v7129 = vunpack.c.l.b16 %v6869
    %v7130 = vunpack.c.h.b16 %v6869
    %v7131 = vunpack.c.l.b16 %v6870
    %v7132 = vunpack.c.h.b16 %v6870
    %v7133 = vunpack.c.l.b16 %v6871
    %v7134 = vunpack.c.h.b16 %v6871
    %v7135 = vunpack.c.l.b16 %v6872
    %v7136 = vunpack.c.l.b16 %v6873
    %v7137 = vunpack.c.h.b16 %v6873
    %v7138 = vunpack.c.l.b16 %v6874
    %v7139 = vunpack.c.h.b16 %v6874
    %v7140 = vunpack.c.l.b16 %v6875
    %v7141 = vunpack.c.h.b16 %v6875
    %v7142 = vunpack.c.l.b16 %v6876
    %v7143 = vunpack.c.l.b16 %v6877
    %v7144 = vunpack.c.h.b16 %v6877
    %v7145 = vunpack.c.l.b16 %v6878
    %v7146 = vunpack.c.h.b16 %v6878
    %v7147 = vunpack.c.l.b16 %v6879
    %v7148 = vunpack.c.h.b16 %v6879
    %v7149 = vunpack.c.l.b16 %v6880
    %v7150 = vunpack.c.l.b16 %v6881
    %v7151 = vunpack.c.h.b16 %v6881
    %v7152 = vunpack.c.l.b16 %v6882
    %v7153 = vunpack.c.h.b16 %v6882
    %v7154 = vunpack.c.l.b16 %v6883
    %v7155 = vunpack.c.h.b16 %v6883
    %v7156 = vunpack.c.l.b16 %v6884
    %v7157 = vunpack.c.l.b16 %v6885
    %v7158 = vunpack.c.h.b16 %v6885
    %v7159 = vunpack.c.l.b16 %v6886
    %v7160 = vunpack.c.h.b16 %v6886
    %v7161 = vunpack.c.l.b16 %v6887
    %v7162 = vunpack.c.h.b16 %v6887
    %v7163 = vunpack.c.l.b16 %v6888
    %v7164 = vpack.c.b16 %v6996, %v6989
    %v7165 = vpack.c.b16 %v6997, %v6990
    %v7166 = vpack.c.b16 %v6998, %v6991
    %v7167 = vpack.c.b16 %v6999, %v6992
    %v7168 = vpack.c.b16 %v7000, %v6993
    %v7169 = vpack.c.b16 %v7001, %v6994
    %v7170 = vpack.c.b16 %v7002, %v6995
    %v7171 = vpack.c.b16 %v7010, %v7003
    %v7172 = vpack.c.b16 %v7011, %v7004
    %v7173 = vpack.c.b16 %v7012, %v7005
    %v7174 = vpack.c.b16 %v7013, %v7006
    %v7175 = vpack.c.b16 %v7014, %v7007
    %v7176 = vpack.c.b16 %v7015, %v7008
    %v7177 = vpack.c.b16 %v7016, %v7009
    %v7178 = vpack.c.b16 %v7024, %v7017
    %v7179 = vpack.c.b16 %v7025, %v7018
    %v7180 = vpack.c.b16 %v7026, %v7019
    %v7181 = vpack.c.b16 %v7027, %v7020
    %v7182 = vpack.c.b16 %v7028, %v7021
    %v7183 = vpack.c.b16 %v7029, %v7022
    %v7184 = vpack.c.b16 %v7030, %v7023
    %v7185 = vpack.c.b16 %v7038, %v7031
    %v7186 = vpack.c.b16 %v7039, %v7032
    %v7187 = vpack.c.b16 %v7040, %v7033
    %v7188 = vpack.c.b16 %v7041, %v7034
    %v7189 = vpack.c.b16 %v7042, %v7035
    %v7190 = vpack.c.b16 %v7043, %v7036
    %v7191 = vpack.c.b16 %v7044, %v7037
    %v7192 = vpack.c.b16 %v7052, %v7045
    %v7193 = vpack.c.b16 %v7053, %v7046
    %v7194 = vpack.c.b16 %v7054, %v7047
    %v7195 = vpack.c.b16 %v7055, %v7048
    %v7196 = vpack.c.b16 %v7056, %v7049
    %v7197 = vpack.c.b16 %v7057, %v7050
    %v7198 = vpack.c.b16 %v7058, %v7051
    %v7199 = vpack.c.b16 %v7066, %v7059
    %v7200 = vpack.c.b16 %v7067, %v7060
    %v7201 = vpack.c.b16 %v7068, %v7061
    %v7202 = vpack.c.b16 %v7069, %v7062
    %v7203 = vpack.c.b16 %v7070, %v7063
    %v7204 = vpack.c.b16 %v7071, %v7064
    %v7205 = vpack.c.b16 %v7072, %v7065
    %v7206 = vpack.c.b16 %v7080, %v7073
    %v7207 = vpack.c.b16 %v7081, %v7074
    %v7208 = vpack.c.b16 %v7082, %v7075
    %v7209 = vpack.c.b16 %v7083, %v7076
    %v7210 = vpack.c.b16 %v7084, %v7077
    %v7211 = vpack.c.b16 %v7085, %v7078
    %v7212 = vpack.c.b16 %v7086, %v7079
    %v7213 = vpack.c.b16 %v7094, %v7087
    %v7214 = vpack.c.b16 %v7095, %v7088
    %v7215 = vpack.c.b16 %v7096, %v7089
    %v7216 = vpack.c.b16 %v7097, %v7090
    %v7217 = vpack.c.b16 %v7098, %v7091
    %v7218 = vpack.c.b16 %v7099, %v7092
    %v7219 = vpack.c.b16 %v7100, %v7093
    %v7220 = vpack.c.b16 %v7108, %v7101
    %v7221 = vpack.c.b16 %v7109, %v7102
    %v7222 = vpack.c.b16 %v7110, %v7103
    %v7223 = vpack.c.b16 %v7111, %v7104
    %v7224 = vpack.c.b16 %v7112, %v7105
    %v7225 = vpack.c.b16 %v7113, %v7106
    %v7226 = vpack.c.b16 %v7114, %v7107
    %v7227 = vpack.c.b16 %v7122, %v7115
    %v7228 = vpack.c.b16 %v7123, %v7116
    %v7229 = vpack.c.b16 %v7124, %v7117
    %v7230 = vpack.c.b16 %v7125, %v7118
    %v7231 = vpack.c.b16 %v7126, %v7119
    %v7232 = vpack.c.b16 %v7127, %v7120
    %v7233 = vpack.c.b16 %v7128, %v7121
    %v7234 = vpack.c.b16 %v7136, %v7129
    %v7235 = vpack.c.b16 %v7137, %v7130
    %v7236 = vpack.c.b16 %v7138, %v7131
    %v7237 = vpack.c.b16 %v7139, %v7132
    %v7238 = vpack.c.b16 %v7140, %v7133
    %v7239 = vpack.c.b16 %v7141, %v7134
    %v7240 = vpack.c.b16 %v7142, %v7135
    %v7241 = vpack.c.b16 %v7150, %v7143
    %v7242 = vpack.c.b16 %v7151, %v7144
    %v7243 = vpack.c.b16 %v7152, %v7145
    %v7244 = vpack.c.b16 %v7153, %v7146
    %v7245 = vpack.c.b16 %v7154, %v7147
    %v7246 = vpack.c.b16 %v7155, %v7148
    %v7247 = vpack.c.b16 %v7156, %v7149
    %v7248 = vpack.c.b16 %v7157, %v7157
    %v7249 = vpack.c.b16 %v7158, %v7158
    %v7250 = vpack.c.b16 %v7159, %v7159
    %v7251 = vpack.c.b16 %v7160, %v7160
    %v7252 = vpack.c.b16 %v7161, %v7161
    %v7253 = vpack.c.b16 %v7162, %v7162
    %v7254 = vpack.c.b16 %v7163, %v7163
    %v7340 = vsel %vm5067, %v6787, 0
    %v7343 = vsel %vm572, %v7248, 0
    %v7346 = vsel %vm572, %v7249, 0
    %v7349 = vsel %vm572, %v7250, 0
    %v7352 = vsel %vm572, %v7251, 0
    %v7355 = vsel %vm572, %v7252, 0
    %v7358 = vsel %vm572, %v7253, 0
    %v7361 = vsel %vm572, %v7254, 0
    %7363 = vmatpush.bf16.msra.mxu0 %v7213
    %7364 = vmatpush.bf16.msra.mxu0 %v7206
    %7365 = vmatpush.bf16.msra.mxu0 %v7199
    %7366 = vmatpush.bf16.msra.mxu0 %v7192
    %7367 = vmatpush.bf16.msra.mxu0 %v7185
    %7368 = vmatpush.bf16.msra.mxu0 %v7178
    %7369 = vmatpush.bf16.msra.mxu0 %v7171
    %7370 = vmatpush.bf16.msra.mxu0 %v7164
    %7371 = vmatmul.bf16.gmra.mxu0 %v6786
    %v7372 = vpop.f32.mrf.mxu0
    %v7373 = vadd.f32 0.0, %v7372
    %v7374 = vpop.f32.mrf.mxu0
    %v7375 = vadd.f32 0.0, %v7374
    %7376 = vdwg.mxu0
    %7377 = vmatpush.bf16.msra.mxu0 0
    %7378 = vmatpush.bf16.msra.mxu0 0
    %7379 = vmatpush.bf16.msra.mxu0 0
    %7380 = vmatpush.bf16.msra.mxu0 %v7343
    %7381 = vmatpush.bf16.msra.mxu0 %v7241
    %7382 = vmatpush.bf16.msra.mxu0 %v7234
    %7383 = vmatpush.bf16.msra.mxu0 %v7227
    %7384 = vmatpush.bf16.msra.mxu0 %v7220
    %7385 = vmatmul.bf16.gmra.mxu0 %v7340
    %v7386 = vpop.f32.mrf.mxu0
    %v7387 = vadd.f32 %v7373, %v7386
    %v7388 = vpop.f32.mrf.mxu0
    %v7389 = vadd.f32 %v7375, %v7388
    %7390 = vdwg.mxu0
    %7391 = vmatpush.bf16.msra.mxu0 %v7214
    %7392 = vmatpush.bf16.msra.mxu0 %v7207
    %7393 = vmatpush.bf16.msra.mxu0 %v7200
    %7394 = vmatpush.bf16.msra.mxu0 %v7193
    %7395 = vmatpush.bf16.msra.mxu0 %v7186
    %7396 = vmatpush.bf16.msra.mxu0 %v7179
    %7397 = vmatpush.bf16.msra.mxu0 %v7172
    %7398 = vmatpush.bf16.msra.mxu0 %v7165
    %7399 = vmatmul.bf16.gmra.mxu0 %v6786
    %v7400 = vpop.f32.mrf.mxu0
    %v7401 = vadd.f32 0.0, %v7400
    %v7402 = vpop.f32.mrf.mxu0
    %v7403 = vadd.f32 0.0, %v7402
    %7404 = vdwg.mxu0
    %7405 = vmatpush.bf16.msra.mxu0 0
    %7406 = vmatpush.bf16.msra.mxu0 0
    %7407 = vmatpush.bf16.msra.mxu0 0
    %7408 = vmatpush.bf16.msra.mxu0 %v7346
    %7409 = vmatpush.bf16.msra.mxu0 %v7242
    %7410 = vmatpush.bf16.msra.mxu0 %v7235
    %7411 = vmatpush.bf16.msra.mxu0 %v7228
    %7412 = vmatpush.bf16.msra.mxu0 %v7221
    %7413 = vmatmul.bf16.gmra.mxu0 %v7340
    %v7414 = vpop.f32.mrf.mxu0
    %v7415 = vadd.f32 %v7401, %v7414
    %v7416 = vpop.f32.mrf.mxu0
    %v7417 = vadd.f32 %v7403, %v7416
    %7418 = vdwg.mxu0
    %7419 = vmatpush.bf16.msra.mxu0 %v7215
    %7420 = vmatpush.bf16.msra.mxu0 %v7208
    %7421 = vmatpush.bf16.msra.mxu0 %v7201
    %7422 = vmatpush.bf16.msra.mxu0 %v7194
    %7423 = vmatpush.bf16.msra.mxu0 %v7187
    %7424 = vmatpush.bf16.msra.mxu0 %v7180
    %7425 = vmatpush.bf16.msra.mxu0 %v7173
    %7426 = vmatpush.bf16.msra.mxu0 %v7166
    %7427 = vmatmul.bf16.gmra.mxu0 %v6786
    %v7428 = vpop.f32.mrf.mxu0
    %v7429 = vadd.f32 0.0, %v7428
    %v7430 = vpop.f32.mrf.mxu0
    %v7431 = vadd.f32 0.0, %v7430
    %7432 = vdwg.mxu0
    %7433 = vmatpush.bf16.msra.mxu0 0
    %7434 = vmatpush.bf16.msra.mxu0 0
    %7435 = vmatpush.bf16.msra.mxu0 0
    %7436 = vmatpush.bf16.msra.mxu0 %v7349
    %7437 = vmatpush.bf16.msra.mxu0 %v7243
    %7438 = vmatpush.bf16.msra.mxu0 %v7236
    %7439 = vmatpush.bf16.msra.mxu0 %v7229
    %7440 = vmatpush.bf16.msra.mxu0 %v7222
    %7441 = vmatmul.bf16.gmra.mxu0 %v7340
    %v7442 = vpop.f32.mrf.mxu0
    %v7443 = vadd.f32 %v7429, %v7442
    %v7444 = vpop.f32.mrf.mxu0
    %v7445 = vadd.f32 %v7431, %v7444
    %7446 = vdwg.mxu0
    %7447 = vmatpush.bf16.msra.mxu0 %v7216
    %7448 = vmatpush.bf16.msra.mxu0 %v7209
    %7449 = vmatpush.bf16.msra.mxu0 %v7202
    %7450 = vmatpush.bf16.msra.mxu0 %v7195
    %7451 = vmatpush.bf16.msra.mxu0 %v7188
    %7452 = vmatpush.bf16.msra.mxu0 %v7181
    %7453 = vmatpush.bf16.msra.mxu0 %v7174
    %7454 = vmatpush.bf16.msra.mxu0 %v7167
    %7455 = vmatmul.bf16.gmra.mxu0 %v6786
    %v7456 = vpop.f32.mrf.mxu0
    %v7457 = vadd.f32 0.0, %v7456
    %v7458 = vpop.f32.mrf.mxu0
    %v7459 = vadd.f32 0.0, %v7458
    %7460 = vdwg.mxu0
    %7461 = vmatpush.bf16.msra.mxu0 0
    %7462 = vmatpush.bf16.msra.mxu0 0
    %7463 = vmatpush.bf16.msra.mxu0 0
    %7464 = vmatpush.bf16.msra.mxu0 %v7352
    %7465 = vmatpush.bf16.msra.mxu0 %v7244
    %7466 = vmatpush.bf16.msra.mxu0 %v7237
    %7467 = vmatpush.bf16.msra.mxu0 %v7230
    %7468 = vmatpush.bf16.msra.mxu0 %v7223
    %7469 = vmatmul.bf16.gmra.mxu0 %v7340
    %v7470 = vpop.f32.mrf.mxu0
    %v7471 = vadd.f32 %v7457, %v7470
    %v7472 = vpop.f32.mrf.mxu0
    %v7473 = vadd.f32 %v7459, %v7472
    %7474 = vdwg.mxu0
    %7475 = vmatpush.bf16.msra.mxu0 %v7217
    %7476 = vmatpush.bf16.msra.mxu0 %v7210
    %7477 = vmatpush.bf16.msra.mxu0 %v7203
    %7478 = vmatpush.bf16.msra.mxu0 %v7196
    %7479 = vmatpush.bf16.msra.mxu0 %v7189
    %7480 = vmatpush.bf16.msra.mxu0 %v7182
    %7481 = vmatpush.bf16.msra.mxu0 %v7175
    %7482 = vmatpush.bf16.msra.mxu0 %v7168
    %7483 = vmatmul.bf16.gmra.mxu0 %v6786
    %v7484 = vpop.f32.mrf.mxu0
    %v7485 = vadd.f32 0.0, %v7484
    %v7486 = vpop.f32.mrf.mxu0
    %v7487 = vadd.f32 0.0, %v7486
    %7488 = vdwg.mxu0
    %7489 = vmatpush.bf16.msra.mxu0 0
    %7490 = vmatpush.bf16.msra.mxu0 0
    %7491 = vmatpush.bf16.msra.mxu0 0
    %7492 = vmatpush.bf16.msra.mxu0 %v7355
    %7493 = vmatpush.bf16.msra.mxu0 %v7245
    %7494 = vmatpush.bf16.msra.mxu0 %v7238
    %7495 = vmatpush.bf16.msra.mxu0 %v7231
    %7496 = vmatpush.bf16.msra.mxu0 %v7224
    %7497 = vmatmul.bf16.gmra.mxu0 %v7340
    %v7498 = vpop.f32.mrf.mxu0
    %v7499 = vadd.f32 %v7485, %v7498
    %v7500 = vpop.f32.mrf.mxu0
    %v7501 = vadd.f32 %v7487, %v7500
    %7502 = vdwg.mxu0
    %7503 = vmatpush.bf16.msra.mxu0 %v7218
    %7504 = vmatpush.bf16.msra.mxu0 %v7211
    %7505 = vmatpush.bf16.msra.mxu0 %v7204
    %7506 = vmatpush.bf16.msra.mxu0 %v7197
    %7507 = vmatpush.bf16.msra.mxu0 %v7190
    %7508 = vmatpush.bf16.msra.mxu0 %v7183
    %7509 = vmatpush.bf16.msra.mxu0 %v7176
    %7510 = vmatpush.bf16.msra.mxu0 %v7169
    %7511 = vmatmul.bf16.gmra.mxu0 %v6786
    %v7512 = vpop.f32.mrf.mxu0
    %v7513 = vadd.f32 0.0, %v7512
    %v7514 = vpop.f32.mrf.mxu0
    %v7515 = vadd.f32 0.0, %v7514
    %7516 = vdwg.mxu0
    %7517 = vmatpush.bf16.msra.mxu0 0
    %7518 = vmatpush.bf16.msra.mxu0 0
    %7519 = vmatpush.bf16.msra.mxu0 0
    %7520 = vmatpush.bf16.msra.mxu0 %v7358
    %7521 = vmatpush.bf16.msra.mxu0 %v7246
    %7522 = vmatpush.bf16.msra.mxu0 %v7239
    %7523 = vmatpush.bf16.msra.mxu0 %v7232
    %7524 = vmatpush.bf16.msra.mxu0 %v7225
    %7525 = vmatmul.bf16.gmra.mxu0 %v7340
    %v7526 = vpop.f32.mrf.mxu0
    %v7527 = vadd.f32 %v7513, %v7526
    %v7528 = vpop.f32.mrf.mxu0
    %v7529 = vadd.f32 %v7515, %v7528
    %7530 = vdwg.mxu0
    %7531 = vmatpush.bf16.msra.mxu0 %v7219
    %7532 = vmatpush.bf16.msra.mxu0 %v7212
    %7533 = vmatpush.bf16.msra.mxu0 %v7205
    %7534 = vmatpush.bf16.msra.mxu0 %v7198
    %7535 = vmatpush.bf16.msra.mxu0 %v7191
    %7536 = vmatpush.bf16.msra.mxu0 %v7184
    %7537 = vmatpush.bf16.msra.mxu0 %v7177
    %7538 = vmatpush.bf16.msra.mxu0 %v7170
    %7539 = vmatmul.bf16.gmra.mxu0 %v6786
    %v7540 = vpop.f32.mrf.mxu0
    %v7541 = vadd.f32 0.0, %v7540
    %v7542 = vpop.f32.mrf.mxu0
    %v7543 = vadd.f32 0.0, %v7542
    %7544 = vdwg.mxu0
    %7545 = vmatpush.bf16.msra.mxu0 0
    %7546 = vmatpush.bf16.msra.mxu0 0
    %7547 = vmatpush.bf16.msra.mxu0 0
    %7548 = vmatpush.bf16.msra.mxu0 %v7361
    %7549 = vmatpush.bf16.msra.mxu0 %v7247
    %7550 = vmatpush.bf16.msra.mxu0 %v7240
    %7551 = vmatpush.bf16.msra.mxu0 %v7233
    %7552 = vmatpush.bf16.msra.mxu0 %v7226
    %7553 = vmatmul.bf16.gmra.mxu0 %v7340
    %v7554 = vpop.f32.mrf.mxu0
    %v7555 = vadd.f32 %v7541, %v7554
    %v7556 = vpop.f32.mrf.mxu0
    %v7557 = vadd.f32 %v7543, %v7556
    %7558 = vdwg.mxu0
    %v7559 = vadd.f32 %v6610, %v7387
    %v7560 = vadd.f32 %v6638, %v7415
    %v7561 = vadd.f32 %v6666, %v7443
    %v7562 = vadd.f32 %v6694, %v7471
    %v7563 = vadd.f32 %v6722, %v7499
    %v7564 = vadd.f32 %v6750, %v7527
    %v7565 = vadd.f32 %v6778, %v7555
    %v7566 = vadd.f32 %v6612, %v7389
    %v7567 = vadd.f32 %v6640, %v7417
    %v7568 = vadd.f32 %v6668, %v7445
    %v7569 = vadd.f32 %v6696, %v7473
    %v7570 = vadd.f32 %v6724, %v7501
    %v7571 = vadd.f32 %v6752, %v7529
    %v7572 = vadd.f32 %v6780, %v7557
    %v7573 = vld [vmem:[#allocation4 + $0x30] sm:$0xff]
    %v7574 = vld [vmem:[#allocation4 + $0x38] sm:$0xff]
    %v7575 = vld [vmem:[#allocation4 + $0xc0] sm:$0xff]
    %v7576 = vld [vmem:[#allocation4 + $0xc8] sm:$0xff]
    %v7577 = vpack.c.bf16 %v7575, %v7573
    %v7578 = vpack.c.bf16 %v7576, %v7574
    %s7579 = scalar_lea.vmem [#allocation5], 2100
    %v7580 = vld [vmem:[%s7579] sm:$0xff]
    %v7581 = vld [vmem:[%s7579 + $0x8] sm:$0xff]
    %v7582 = vld [vmem:[%s7579 + $0x10] sm:$0xff]
    %v7583 = vld [vmem:[%s7579 + $0x18] sm:$0xf]
    %v7584 = vld [vmem:[%s7579 + $0x1c] sm:$0xff]
    %v7585 = vld [vmem:[%s7579 + $0x24] sm:$0xff]
    %v7586 = vld [vmem:[%s7579 + $0x2c] sm:$0xff]
    %v7587 = vld [vmem:[%s7579 + $0x34] sm:$0xf]
    %v7588 = vld [vmem:[%s7579 + $0x38] sm:$0xff]
    %v7589 = vld [vmem:[%s7579 + $0x40] sm:$0xff]
    %v7590 = vld [vmem:[%s7579 + $0x48] sm:$0xff]
    %v7591 = vld [vmem:[%s7579 + $0x50] sm:$0xf]
    %v7592 = vld [vmem:[%s7579 + $0x54] sm:$0xff]
    %v7593 = vld [vmem:[%s7579 + $0x5c] sm:$0xff]
    %v7594 = vld [vmem:[%s7579 + $0x64] sm:$0xff]
    %v7595 = vld [vmem:[%s7579 + $0x6c] sm:$0xf]
    %v7596 = vld [vmem:[%s7579 + $0x70] sm:$0xff]
    %v7597 = vld [vmem:[%s7579 + $0x78] sm:$0xff]
    %v7598 = vld [vmem:[%s7579 + $0x80] sm:$0xff]
    %v7599 = vld [vmem:[%s7579 + $0x88] sm:$0xf]
    %v7600 = vld [vmem:[%s7579 + $0x8c] sm:$0xff]
    %v7601 = vld [vmem:[%s7579 + $0x94] sm:$0xff]
    %v7602 = vld [vmem:[%s7579 + $0x9c] sm:$0xff]
    %v7603 = vld [vmem:[%s7579 + $0xa4] sm:$0xf]
    %v7604 = vld [vmem:[%s7579 + $0xa8] sm:$0xff]
    %v7605 = vld [vmem:[%s7579 + $0xb0] sm:$0xff]
    %v7606 = vld [vmem:[%s7579 + $0xb8] sm:$0xff]
    %v7607 = vld [vmem:[%s7579 + $0xc0] sm:$0xf]
    %v7608 = vld [vmem:[%s7579 + $0xc4] sm:$0xff]
    %v7609 = vld [vmem:[%s7579 + $0xcc] sm:$0xff]
    %v7610 = vld [vmem:[%s7579 + $0xd4] sm:$0xff]
    %v7611 = vld [vmem:[%s7579 + $0xdc] sm:$0xf]
    %v7612 = vld [vmem:[%s7579 + $0xe0] sm:$0xff]
    %v7613 = vld [vmem:[%s7579 + $0xe8] sm:$0xff]
    %v7614 = vld [vmem:[%s7579 + $0xf0] sm:$0xff]
    %v7615 = vld [vmem:[%s7579 + $0xf8] sm:$0xf]
    %v7616 = vld [vmem:[%s7579 + $0xfc] sm:$0xff]
    %v7617 = vld [vmem:[%s7579 + $0x104] sm:$0xff]
    %v7618 = vld [vmem:[%s7579 + $0x10c] sm:$0xff]
    %v7619 = vld [vmem:[%s7579 + $0x114] sm:$0xf]
    %v7620 = vld [vmem:[%s7579 + $0x118] sm:$0xff]
    %v7621 = vld [vmem:[%s7579 + $0x120] sm:$0xff]
    %v7622 = vld [vmem:[%s7579 + $0x128] sm:$0xff]
    %v7623 = vld [vmem:[%s7579 + $0x130] sm:$0xf]
    %v7624 = vld [vmem:[%s7579 + $0x134] sm:$0xff]
    %v7625 = vld [vmem:[%s7579 + $0x13c] sm:$0xff]
    %v7626 = vld [vmem:[%s7579 + $0x144] sm:$0xff]
    %v7627 = vld [vmem:[%s7579 + $0x14c] sm:$0xf]
    %v7628 = vld [vmem:[%s7579 + $0x150] sm:$0xff]
    %v7629 = vld [vmem:[%s7579 + $0x158] sm:$0xff]
    %v7630 = vld [vmem:[%s7579 + $0x160] sm:$0xff]
    %v7631 = vld [vmem:[%s7579 + $0x168] sm:$0xf]
    %v7632 = vld [vmem:[%s7579 + $0x16c] sm:$0xff]
    %v7633 = vld [vmem:[%s7579 + $0x174] sm:$0xff]
    %v7634 = vld [vmem:[%s7579 + $0x17c] sm:$0xff]
    %v7635 = vld [vmem:[%s7579 + $0x184] sm:$0xf]
    %v7636 = vld [vmem:[%s7579 + $0x188] sm:$0xff]
    %v7637 = vld [vmem:[%s7579 + $0x190] sm:$0xff]
    %v7638 = vld [vmem:[%s7579 + $0x198] sm:$0xff]
    %v7639 = vld [vmem:[%s7579 + $0x1a0] sm:$0xf]
    %v7640 = vld [vmem:[%s7579 + $0x1a4] sm:$0xff]
    %v7641 = vld [vmem:[%s7579 + $0x1ac] sm:$0xff]
    %v7642 = vld [vmem:[%s7579 + $0x1b4] sm:$0xff]
    %v7643 = vld [vmem:[%s7579 + $0x1bc] sm:$0xf]
    %v7644 = vld [vmem:[%s7579 + $0x1c0] sm:$0xff]
    %v7645 = vld [vmem:[%s7579 + $0x1c8] sm:$0xff]
    %v7646 = vld [vmem:[%s7579 + $0x1d0] sm:$0xff]
    %v7647 = vld [vmem:[%s7579 + $0x1d8] sm:$0xf]
    %v7648 = vld [vmem:[%s7579 + $0x1dc] sm:$0xff]
    %v7649 = vld [vmem:[%s7579 + $0x1e4] sm:$0xff]
    %v7650 = vld [vmem:[%s7579 + $0x1ec] sm:$0xff]
    %v7651 = vld [vmem:[%s7579 + $0x1f4] sm:$0xf]
    %v7652 = vld [vmem:[%s7579 + $0x1f8] sm:$0xff]
    %v7653 = vld [vmem:[%s7579 + $0x200] sm:$0xff]
    %v7654 = vld [vmem:[%s7579 + $0x208] sm:$0xff]
    %v7655 = vld [vmem:[%s7579 + $0x210] sm:$0xf]
    %v7656 = vld [vmem:[%s7579 + $0x214] sm:$0xff]
    %v7657 = vld [vmem:[%s7579 + $0x21c] sm:$0xff]
    %v7658 = vld [vmem:[%s7579 + $0x224] sm:$0xff]
    %v7659 = vld [vmem:[%s7579 + $0x22c] sm:$0xf]
    %v7660 = vld [vmem:[%s7579 + $0x230] sm:$0xff]
    %v7661 = vld [vmem:[%s7579 + $0x238] sm:$0xff]
    %v7662 = vld [vmem:[%s7579 + $0x240] sm:$0xff]
    %v7663 = vld [vmem:[%s7579 + $0x248] sm:$0xf]
    %v7664 = vld [vmem:[%s7579 + $0x24c] sm:$0xff]
    %v7665 = vld [vmem:[%s7579 + $0x254] sm:$0xff]
    %v7666 = vld [vmem:[%s7579 + $0x25c] sm:$0xff]
    %v7667 = vld [vmem:[%s7579 + $0x264] sm:$0xf]
    %v7668 = vld [vmem:[%s7579 + $0x268] sm:$0xff]
    %v7669 = vld [vmem:[%s7579 + $0x270] sm:$0xff]
    %v7670 = vld [vmem:[%s7579 + $0x278] sm:$0xff]
    %v7671 = vld [vmem:[%s7579 + $0x280] sm:$0xf]
    %v7672 = vld [vmem:[%s7579 + $0x284] sm:$0xff]
    %v7673 = vld [vmem:[%s7579 + $0x28c] sm:$0xff]
    %v7674 = vld [vmem:[%s7579 + $0x294] sm:$0xff]
    %v7675 = vld [vmem:[%s7579 + $0x29c] sm:$0xf]
    %v7676 = vld [vmem:[%s7579 + $0x2a0] sm:$0x33]
    %v7677 = vld [vmem:[%s7579 + $0x2a8] sm:$0x33]
    %v7678 = vld [vmem:[%s7579 + $0x2b0] sm:$0x33]
    %v7679 = vld [vmem:[%s7579 + $0x2b8] sm:$0x3]
    %v7780 = vunpack.c.l.b16 %v7580
    %v7781 = vunpack.c.h.b16 %v7580
    %v7782 = vunpack.c.l.b16 %v7581
    %v7783 = vunpack.c.h.b16 %v7581
    %v7784 = vunpack.c.l.b16 %v7582
    %v7785 = vunpack.c.h.b16 %v7582
    %v7786 = vunpack.c.l.b16 %v7583
    %v7787 = vunpack.c.l.b16 %v7584
    %v7788 = vunpack.c.h.b16 %v7584
    %v7789 = vunpack.c.l.b16 %v7585
    %v7790 = vunpack.c.h.b16 %v7585
    %v7791 = vunpack.c.l.b16 %v7586
    %v7792 = vunpack.c.h.b16 %v7586
    %v7793 = vunpack.c.l.b16 %v7587
    %v7794 = vunpack.c.l.b16 %v7588
    %v7795 = vunpack.c.h.b16 %v7588
    %v7796 = vunpack.c.l.b16 %v7589
    %v7797 = vunpack.c.h.b16 %v7589
    %v7798 = vunpack.c.l.b16 %v7590
    %v7799 = vunpack.c.h.b16 %v7590
    %v7800 = vunpack.c.l.b16 %v7591
    %v7801 = vunpack.c.l.b16 %v7592
    %v7802 = vunpack.c.h.b16 %v7592
    %v7803 = vunpack.c.l.b16 %v7593
    %v7804 = vunpack.c.h.b16 %v7593
    %v7805 = vunpack.c.l.b16 %v7594
    %v7806 = vunpack.c.h.b16 %v7594
    %v7807 = vunpack.c.l.b16 %v7595
    %v7808 = vunpack.c.l.b16 %v7596
    %v7809 = vunpack.c.h.b16 %v7596
    %v7810 = vunpack.c.l.b16 %v7597
    %v7811 = vunpack.c.h.b16 %v7597
    %v7812 = vunpack.c.l.b16 %v7598
    %v7813 = vunpack.c.h.b16 %v7598
    %v7814 = vunpack.c.l.b16 %v7599
    %v7815 = vunpack.c.l.b16 %v7600
    %v7816 = vunpack.c.h.b16 %v7600
    %v7817 = vunpack.c.l.b16 %v7601
    %v7818 = vunpack.c.h.b16 %v7601
    %v7819 = vunpack.c.l.b16 %v7602
    %v7820 = vunpack.c.h.b16 %v7602
    %v7821 = vunpack.c.l.b16 %v7603
    %v7822 = vunpack.c.l.b16 %v7604
    %v7823 = vunpack.c.h.b16 %v7604
    %v7824 = vunpack.c.l.b16 %v7605
    %v7825 = vunpack.c.h.b16 %v7605
    %v7826 = vunpack.c.l.b16 %v7606
    %v7827 = vunpack.c.h.b16 %v7606
    %v7828 = vunpack.c.l.b16 %v7607
    %v7829 = vunpack.c.l.b16 %v7608
    %v7830 = vunpack.c.h.b16 %v7608
    %v7831 = vunpack.c.l.b16 %v7609
    %v7832 = vunpack.c.h.b16 %v7609
    %v7833 = vunpack.c.l.b16 %v7610
    %v7834 = vunpack.c.h.b16 %v7610
    %v7835 = vunpack.c.l.b16 %v7611
    %v7836 = vunpack.c.l.b16 %v7612
    %v7837 = vunpack.c.h.b16 %v7612
    %v7838 = vunpack.c.l.b16 %v7613
    %v7839 = vunpack.c.h.b16 %v7613
    %v7840 = vunpack.c.l.b16 %v7614
    %v7841 = vunpack.c.h.b16 %v7614
    %v7842 = vunpack.c.l.b16 %v7615
    %v7843 = vunpack.c.l.b16 %v7616
    %v7844 = vunpack.c.h.b16 %v7616
    %v7845 = vunpack.c.l.b16 %v7617
    %v7846 = vunpack.c.h.b16 %v7617
    %v7847 = vunpack.c.l.b16 %v7618
    %v7848 = vunpack.c.h.b16 %v7618
    %v7849 = vunpack.c.l.b16 %v7619
    %v7850 = vunpack.c.l.b16 %v7620
    %v7851 = vunpack.c.h.b16 %v7620
    %v7852 = vunpack.c.l.b16 %v7621
    %v7853 = vunpack.c.h.b16 %v7621
    %v7854 = vunpack.c.l.b16 %v7622
    %v7855 = vunpack.c.h.b16 %v7622
    %v7856 = vunpack.c.l.b16 %v7623
    %v7857 = vunpack.c.l.b16 %v7624
    %v7858 = vunpack.c.h.b16 %v7624
    %v7859 = vunpack.c.l.b16 %v7625
    %v7860 = vunpack.c.h.b16 %v7625
    %v7861 = vunpack.c.l.b16 %v7626
    %v7862 = vunpack.c.h.b16 %v7626
    %v7863 = vunpack.c.l.b16 %v7627
    %v7864 = vunpack.c.l.b16 %v7628
    %v7865 = vunpack.c.h.b16 %v7628
    %v7866 = vunpack.c.l.b16 %v7629
    %v7867 = vunpack.c.h.b16 %v7629
    %v7868 = vunpack.c.l.b16 %v7630
    %v7869 = vunpack.c.h.b16 %v7630
    %v7870 = vunpack.c.l.b16 %v7631
    %v7871 = vunpack.c.l.b16 %v7632
    %v7872 = vunpack.c.h.b16 %v7632
    %v7873 = vunpack.c.l.b16 %v7633
    %v7874 = vunpack.c.h.b16 %v7633
    %v7875 = vunpack.c.l.b16 %v7634
    %v7876 = vunpack.c.h.b16 %v7634
    %v7877 = vunpack.c.l.b16 %v7635
    %v7878 = vunpack.c.l.b16 %v7636
    %v7879 = vunpack.c.h.b16 %v7636
    %v7880 = vunpack.c.l.b16 %v7637
    %v7881 = vunpack.c.h.b16 %v7637
    %v7882 = vunpack.c.l.b16 %v7638
    %v7883 = vunpack.c.h.b16 %v7638
    %v7884 = vunpack.c.l.b16 %v7639
    %v7885 = vunpack.c.l.b16 %v7640
    %v7886 = vunpack.c.h.b16 %v7640
    %v7887 = vunpack.c.l.b16 %v7641
    %v7888 = vunpack.c.h.b16 %v7641
    %v7889 = vunpack.c.l.b16 %v7642
    %v7890 = vunpack.c.h.b16 %v7642
    %v7891 = vunpack.c.l.b16 %v7643
    %v7892 = vunpack.c.l.b16 %v7644
    %v7893 = vunpack.c.h.b16 %v7644
    %v7894 = vunpack.c.l.b16 %v7645
    %v7895 = vunpack.c.h.b16 %v7645
    %v7896 = vunpack.c.l.b16 %v7646
    %v7897 = vunpack.c.h.b16 %v7646
    %v7898 = vunpack.c.l.b16 %v7647
    %v7899 = vunpack.c.l.b16 %v7648
    %v7900 = vunpack.c.h.b16 %v7648
    %v7901 = vunpack.c.l.b16 %v7649
    %v7902 = vunpack.c.h.b16 %v7649
    %v7903 = vunpack.c.l.b16 %v7650
    %v7904 = vunpack.c.h.b16 %v7650
    %v7905 = vunpack.c.l.b16 %v7651
    %v7906 = vunpack.c.l.b16 %v7652
    %v7907 = vunpack.c.h.b16 %v7652
    %v7908 = vunpack.c.l.b16 %v7653
    %v7909 = vunpack.c.h.b16 %v7653
    %v7910 = vunpack.c.l.b16 %v7654
    %v7911 = vunpack.c.h.b16 %v7654
    %v7912 = vunpack.c.l.b16 %v7655
    %v7913 = vunpack.c.l.b16 %v7656
    %v7914 = vunpack.c.h.b16 %v7656
    %v7915 = vunpack.c.l.b16 %v7657
    %v7916 = vunpack.c.h.b16 %v7657
    %v7917 = vunpack.c.l.b16 %v7658
    %v7918 = vunpack.c.h.b16 %v7658
    %v7919 = vunpack.c.l.b16 %v7659
    %v7920 = vunpack.c.l.b16 %v7660
    %v7921 = vunpack.c.h.b16 %v7660
    %v7922 = vunpack.c.l.b16 %v7661
    %v7923 = vunpack.c.h.b16 %v7661
    %v7924 = vunpack.c.l.b16 %v7662
    %v7925 = vunpack.c.h.b16 %v7662
    %v7926 = vunpack.c.l.b16 %v7663
    %v7927 = vunpack.c.l.b16 %v7664
    %v7928 = vunpack.c.h.b16 %v7664
    %v7929 = vunpack.c.l.b16 %v7665
    %v7930 = vunpack.c.h.b16 %v7665
    %v7931 = vunpack.c.l.b16 %v7666
    %v7932 = vunpack.c.h.b16 %v7666
    %v7933 = vunpack.c.l.b16 %v7667
    %v7934 = vunpack.c.l.b16 %v7668
    %v7935 = vunpack.c.h.b16 %v7668
    %v7936 = vunpack.c.l.b16 %v7669
    %v7937 = vunpack.c.h.b16 %v7669
    %v7938 = vunpack.c.l.b16 %v7670
    %v7939 = vunpack.c.h.b16 %v7670
    %v7940 = vunpack.c.l.b16 %v7671
    %v7941 = vunpack.c.l.b16 %v7672
    %v7942 = vunpack.c.h.b16 %v7672
    %v7943 = vunpack.c.l.b16 %v7673
    %v7944 = vunpack.c.h.b16 %v7673
    %v7945 = vunpack.c.l.b16 %v7674
    %v7946 = vunpack.c.h.b16 %v7674
    %v7947 = vunpack.c.l.b16 %v7675
    %v7948 = vunpack.c.l.b16 %v7676
    %v7949 = vunpack.c.h.b16 %v7676
    %v7950 = vunpack.c.l.b16 %v7677
    %v7951 = vunpack.c.h.b16 %v7677
    %v7952 = vunpack.c.l.b16 %v7678
    %v7953 = vunpack.c.h.b16 %v7678
    %v7954 = vunpack.c.l.b16 %v7679
    %v7955 = vpack.c.b16 %v7787, %v7780
    %v7956 = vpack.c.b16 %v7788, %v7781
    %v7957 = vpack.c.b16 %v7789, %v7782
    %v7958 = vpack.c.b16 %v7790, %v7783
    %v7959 = vpack.c.b16 %v7791, %v7784
    %v7960 = vpack.c.b16 %v7792, %v7785
    %v7961 = vpack.c.b16 %v7793, %v7786
    %v7962 = vpack.c.b16 %v7801, %v7794
    %v7963 = vpack.c.b16 %v7802, %v7795
    %v7964 = vpack.c.b16 %v7803, %v7796
    %v7965 = vpack.c.b16 %v7804, %v7797
    %v7966 = vpack.c.b16 %v7805, %v7798
    %v7967 = vpack.c.b16 %v7806, %v7799
    %v7968 = vpack.c.b16 %v7807, %v7800
    %v7969 = vpack.c.b16 %v7815, %v7808
    %v7970 = vpack.c.b16 %v7816, %v7809
    %v7971 = vpack.c.b16 %v7817, %v7810
    %v7972 = vpack.c.b16 %v7818, %v7811
    %v7973 = vpack.c.b16 %v7819, %v7812
    %v7974 = vpack.c.b16 %v7820, %v7813
    %v7975 = vpack.c.b16 %v7821, %v7814
    %v7976 = vpack.c.b16 %v7829, %v7822
    %v7977 = vpack.c.b16 %v7830, %v7823
    %v7978 = vpack.c.b16 %v7831, %v7824
    %v7979 = vpack.c.b16 %v7832, %v7825
    %v7980 = vpack.c.b16 %v7833, %v7826
    %v7981 = vpack.c.b16 %v7834, %v7827
    %v7982 = vpack.c.b16 %v7835, %v7828
    %v7983 = vpack.c.b16 %v7843, %v7836
    %v7984 = vpack.c.b16 %v7844, %v7837
    %v7985 = vpack.c.b16 %v7845, %v7838
    %v7986 = vpack.c.b16 %v7846, %v7839
    %v7987 = vpack.c.b16 %v7847, %v7840
    %v7988 = vpack.c.b16 %v7848, %v7841
    %v7989 = vpack.c.b16 %v7849, %v7842
    %v7990 = vpack.c.b16 %v7857, %v7850
    %v7991 = vpack.c.b16 %v7858, %v7851
    %v7992 = vpack.c.b16 %v7859, %v7852
    %v7993 = vpack.c.b16 %v7860, %v7853
    %v7994 = vpack.c.b16 %v7861, %v7854
    %v7995 = vpack.c.b16 %v7862, %v7855
    %v7996 = vpack.c.b16 %v7863, %v7856
    %v7997 = vpack.c.b16 %v7871, %v7864
    %v7998 = vpack.c.b16 %v7872, %v7865
    %v7999 = vpack.c.b16 %v7873, %v7866
    %v8000 = vpack.c.b16 %v7874, %v7867
    %v8001 = vpack.c.b16 %v7875, %v7868
    %v8002 = vpack.c.b16 %v7876, %v7869
    %v8003 = vpack.c.b16 %v7877, %v7870
    %v8004 = vpack.c.b16 %v7885, %v7878
    %v8005 = vpack.c.b16 %v7886, %v7879
    %v8006 = vpack.c.b16 %v7887, %v7880
    %v8007 = vpack.c.b16 %v7888, %v7881
    %v8008 = vpack.c.b16 %v7889, %v7882
    %v8009 = vpack.c.b16 %v7890, %v7883
    %v8010 = vpack.c.b16 %v7891, %v7884
    %v8011 = vpack.c.b16 %v7899, %v7892
    %v8012 = vpack.c.b16 %v7900, %v7893
    %v8013 = vpack.c.b16 %v7901, %v7894
    %v8014 = vpack.c.b16 %v7902, %v7895
    %v8015 = vpack.c.b16 %v7903, %v7896
    %v8016 = vpack.c.b16 %v7904, %v7897
    %v8017 = vpack.c.b16 %v7905, %v7898
    %v8018 = vpack.c.b16 %v7913, %v7906
    %v8019 = vpack.c.b16 %v7914, %v7907
    %v8020 = vpack.c.b16 %v7915, %v7908
    %v8021 = vpack.c.b16 %v7916, %v7909
    %v8022 = vpack.c.b16 %v7917, %v7910
    %v8023 = vpack.c.b16 %v7918, %v7911
    %v8024 = vpack.c.b16 %v7919, %v7912
    %v8025 = vpack.c.b16 %v7927, %v7920
    %v8026 = vpack.c.b16 %v7928, %v7921
    %v8027 = vpack.c.b16 %v7929, %v7922
    %v8028 = vpack.c.b16 %v7930, %v7923
    %v8029 = vpack.c.b16 %v7931, %v7924
    %v8030 = vpack.c.b16 %v7932, %v7925
    %v8031 = vpack.c.b16 %v7933, %v7926
    %v8032 = vpack.c.b16 %v7941, %v7934
    %v8033 = vpack.c.b16 %v7942, %v7935
    %v8034 = vpack.c.b16 %v7943, %v7936
    %v8035 = vpack.c.b16 %v7944, %v7937
    %v8036 = vpack.c.b16 %v7945, %v7938
    %v8037 = vpack.c.b16 %v7946, %v7939
    %v8038 = vpack.c.b16 %v7947, %v7940
    %v8039 = vpack.c.b16 %v7948, %v7948
    %v8040 = vpack.c.b16 %v7949, %v7949
    %v8041 = vpack.c.b16 %v7950, %v7950
    %v8042 = vpack.c.b16 %v7951, %v7951
    %v8043 = vpack.c.b16 %v7952, %v7952
    %v8044 = vpack.c.b16 %v7953, %v7953
    %v8045 = vpack.c.b16 %v7954, %v7954
    %v8131 = vsel %vm5067, %v7578, 0
    %v8134 = vsel %vm572, %v8039, 0
    %v8137 = vsel %vm572, %v8040, 0
    %v8140 = vsel %vm572, %v8041, 0
    %v8143 = vsel %vm572, %v8042, 0
    %v8146 = vsel %vm572, %v8043, 0
    %v8149 = vsel %vm572, %v8044, 0
    %v8152 = vsel %vm572, %v8045, 0
    %8154 = vmatpush.bf16.msra.mxu0 %v8004
    %8155 = vmatpush.bf16.msra.mxu0 %v7997
    %8156 = vmatpush.bf16.msra.mxu0 %v7990
    %8157 = vmatpush.bf16.msra.mxu0 %v7983
    %8158 = vmatpush.bf16.msra.mxu0 %v7976
    %8159 = vmatpush.bf16.msra.mxu0 %v7969
    %8160 = vmatpush.bf16.msra.mxu0 %v7962
    %8161 = vmatpush.bf16.msra.mxu0 %v7955
    %8162 = vmatmul.bf16.gmra.mxu0 %v7577
    %v8163 = vpop.f32.mrf.mxu0
    %v8164 = vadd.f32 0.0, %v8163
    %v8165 = vpop.f32.mrf.mxu0
    %v8166 = vadd.f32 0.0, %v8165
    %8167 = vdwg.mxu0
    %8168 = vmatpush.bf16.msra.mxu0 0
    %8169 = vmatpush.bf16.msra.mxu0 0
    %8170 = vmatpush.bf16.msra.mxu0 0
    %8171 = vmatpush.bf16.msra.mxu0 %v8134
    %8172 = vmatpush.bf16.msra.mxu0 %v8032
    %8173 = vmatpush.bf16.msra.mxu0 %v8025
    %8174 = vmatpush.bf16.msra.mxu0 %v8018
    %8175 = vmatpush.bf16.msra.mxu0 %v8011
    %8176 = vmatmul.bf16.gmra.mxu0 %v8131
    %v8177 = vpop.f32.mrf.mxu0
    %v8178 = vadd.f32 %v8164, %v8177
    %v8179 = vpop.f32.mrf.mxu0
    %v8180 = vadd.f32 %v8166, %v8179
    %8181 = vdwg.mxu0
    %8182 = vmatpush.bf16.msra.mxu0 %v8005
    %8183 = vmatpush.bf16.msra.mxu0 %v7998
    %8184 = vmatpush.bf16.msra.mxu0 %v7991
    %8185 = vmatpush.bf16.msra.mxu0 %v7984
    %8186 = vmatpush.bf16.msra.mxu0 %v7977
    %8187 = vmatpush.bf16.msra.mxu0 %v7970
    %8188 = vmatpush.bf16.msra.mxu0 %v7963
    %8189 = vmatpush.bf16.msra.mxu0 %v7956
    %8190 = vmatmul.bf16.gmra.mxu0 %v7577
    %v8191 = vpop.f32.mrf.mxu0
    %v8192 = vadd.f32 0.0, %v8191
    %v8193 = vpop.f32.mrf.mxu0
    %v8194 = vadd.f32 0.0, %v8193
    %8195 = vdwg.mxu0
    %8196 = vmatpush.bf16.msra.mxu0 0
    %8197 = vmatpush.bf16.msra.mxu0 0
    %8198 = vmatpush.bf16.msra.mxu0 0
    %8199 = vmatpush.bf16.msra.mxu0 %v8137
    %8200 = vmatpush.bf16.msra.mxu0 %v8033
    %8201 = vmatpush.bf16.msra.mxu0 %v8026
    %8202 = vmatpush.bf16.msra.mxu0 %v8019
    %8203 = vmatpush.bf16.msra.mxu0 %v8012
    %8204 = vmatmul.bf16.gmra.mxu0 %v8131
    %v8205 = vpop.f32.mrf.mxu0
    %v8206 = vadd.f32 %v8192, %v8205
    %v8207 = vpop.f32.mrf.mxu0
    %v8208 = vadd.f32 %v8194, %v8207
    %8209 = vdwg.mxu0
    %8210 = vmatpush.bf16.msra.mxu0 %v8006
    %8211 = vmatpush.bf16.msra.mxu0 %v7999
    %8212 = vmatpush.bf16.msra.mxu0 %v7992
    %8213 = vmatpush.bf16.msra.mxu0 %v7985
    %8214 = vmatpush.bf16.msra.mxu0 %v7978
    %8215 = vmatpush.bf16.msra.mxu0 %v7971
    %8216 = vmatpush.bf16.msra.mxu0 %v7964
    %8217 = vmatpush.bf16.msra.mxu0 %v7957
    %8218 = vmatmul.bf16.gmra.mxu0 %v7577
    %v8219 = vpop.f32.mrf.mxu0
    %v8220 = vadd.f32 0.0, %v8219
    %v8221 = vpop.f32.mrf.mxu0
    %v8222 = vadd.f32 0.0, %v8221
    %8223 = vdwg.mxu0
    %8224 = vmatpush.bf16.msra.mxu0 0
    %8225 = vmatpush.bf16.msra.mxu0 0
    %8226 = vmatpush.bf16.msra.mxu0 0
    %8227 = vmatpush.bf16.msra.mxu0 %v8140
    %8228 = vmatpush.bf16.msra.mxu0 %v8034
    %8229 = vmatpush.bf16.msra.mxu0 %v8027
    %8230 = vmatpush.bf16.msra.mxu0 %v8020
    %8231 = vmatpush.bf16.msra.mxu0 %v8013
    %8232 = vmatmul.bf16.gmra.mxu0 %v8131
    %v8233 = vpop.f32.mrf.mxu0
    %v8234 = vadd.f32 %v8220, %v8233
    %v8235 = vpop.f32.mrf.mxu0
    %v8236 = vadd.f32 %v8222, %v8235
    %8237 = vdwg.mxu0
    %8238 = vmatpush.bf16.msra.mxu0 %v8007
    %8239 = vmatpush.bf16.msra.mxu0 %v8000
    %8240 = vmatpush.bf16.msra.mxu0 %v7993
    %8241 = vmatpush.bf16.msra.mxu0 %v7986
    %8242 = vmatpush.bf16.msra.mxu0 %v7979
    %8243 = vmatpush.bf16.msra.mxu0 %v7972
    %8244 = vmatpush.bf16.msra.mxu0 %v7965
    %8245 = vmatpush.bf16.msra.mxu0 %v7958
    %8246 = vmatmul.bf16.gmra.mxu0 %v7577
    %v8247 = vpop.f32.mrf.mxu0
    %v8248 = vadd.f32 0.0, %v8247
    %v8249 = vpop.f32.mrf.mxu0
    %v8250 = vadd.f32 0.0, %v8249
    %8251 = vdwg.mxu0
    %8252 = vmatpush.bf16.msra.mxu0 0
    %8253 = vmatpush.bf16.msra.mxu0 0
    %8254 = vmatpush.bf16.msra.mxu0 0
    %8255 = vmatpush.bf16.msra.mxu0 %v8143
    %8256 = vmatpush.bf16.msra.mxu0 %v8035
    %8257 = vmatpush.bf16.msra.mxu0 %v8028
    %8258 = vmatpush.bf16.msra.mxu0 %v8021
    %8259 = vmatpush.bf16.msra.mxu0 %v8014
    %8260 = vmatmul.bf16.gmra.mxu0 %v8131
    %v8261 = vpop.f32.mrf.mxu0
    %v8262 = vadd.f32 %v8248, %v8261
    %v8263 = vpop.f32.mrf.mxu0
    %v8264 = vadd.f32 %v8250, %v8263
    %8265 = vdwg.mxu0
    %8266 = vmatpush.bf16.msra.mxu0 %v8008
    %8267 = vmatpush.bf16.msra.mxu0 %v8001
    %8268 = vmatpush.bf16.msra.mxu0 %v7994
    %8269 = vmatpush.bf16.msra.mxu0 %v7987
    %8270 = vmatpush.bf16.msra.mxu0 %v7980
    %8271 = vmatpush.bf16.msra.mxu0 %v7973
    %8272 = vmatpush.bf16.msra.mxu0 %v7966
    %8273 = vmatpush.bf16.msra.mxu0 %v7959
    %8274 = vmatmul.bf16.gmra.mxu0 %v7577
    %v8275 = vpop.f32.mrf.mxu0
    %v8276 = vadd.f32 0.0, %v8275
    %v8277 = vpop.f32.mrf.mxu0
    %v8278 = vadd.f32 0.0, %v8277
    %8279 = vdwg.mxu0
    %8280 = vmatpush.bf16.msra.mxu0 0
    %8281 = vmatpush.bf16.msra.mxu0 0
    %8282 = vmatpush.bf16.msra.mxu0 0
    %8283 = vmatpush.bf16.msra.mxu0 %v8146
    %8284 = vmatpush.bf16.msra.mxu0 %v8036
    %8285 = vmatpush.bf16.msra.mxu0 %v8029
    %8286 = vmatpush.bf16.msra.mxu0 %v8022
    %8287 = vmatpush.bf16.msra.mxu0 %v8015
    %8288 = vmatmul.bf16.gmra.mxu0 %v8131
    %v8289 = vpop.f32.mrf.mxu0
    %v8290 = vadd.f32 %v8276, %v8289
    %v8291 = vpop.f32.mrf.mxu0
    %v8292 = vadd.f32 %v8278, %v8291
    %8293 = vdwg.mxu0
    %8294 = vmatpush.bf16.msra.mxu0 %v8009
    %8295 = vmatpush.bf16.msra.mxu0 %v8002
    %8296 = vmatpush.bf16.msra.mxu0 %v7995
    %8297 = vmatpush.bf16.msra.mxu0 %v7988
    %8298 = vmatpush.bf16.msra.mxu0 %v7981
    %8299 = vmatpush.bf16.msra.mxu0 %v7974
    %8300 = vmatpush.bf16.msra.mxu0 %v7967
    %8301 = vmatpush.bf16.msra.mxu0 %v7960
    %8302 = vmatmul.bf16.gmra.mxu0 %v7577
    %v8303 = vpop.f32.mrf.mxu0
    %v8304 = vadd.f32 0.0, %v8303
    %v8305 = vpop.f32.mrf.mxu0
    %v8306 = vadd.f32 0.0, %v8305
    %8307 = vdwg.mxu0
    %8308 = vmatpush.bf16.msra.mxu0 0
    %8309 = vmatpush.bf16.msra.mxu0 0
    %8310 = vmatpush.bf16.msra.mxu0 0
    %8311 = vmatpush.bf16.msra.mxu0 %v8149
    %8312 = vmatpush.bf16.msra.mxu0 %v8037
    %8313 = vmatpush.bf16.msra.mxu0 %v8030
    %8314 = vmatpush.bf16.msra.mxu0 %v8023
    %8315 = vmatpush.bf16.msra.mxu0 %v8016
    %8316 = vmatmul.bf16.gmra.mxu0 %v8131
    %v8317 = vpop.f32.mrf.mxu0
    %v8318 = vadd.f32 %v8304, %v8317
    %v8319 = vpop.f32.mrf.mxu0
    %v8320 = vadd.f32 %v8306, %v8319
    %8321 = vdwg.mxu0
    %8322 = vmatpush.bf16.msra.mxu0 %v8010
    %8323 = vmatpush.bf16.msra.mxu0 %v8003
    %8324 = vmatpush.bf16.msra.mxu0 %v7996
    %8325 = vmatpush.bf16.msra.mxu0 %v7989
    %8326 = vmatpush.bf16.msra.mxu0 %v7982
    %8327 = vmatpush.bf16.msra.mxu0 %v7975
    %8328 = vmatpush.bf16.msra.mxu0 %v7968
    %8329 = vmatpush.bf16.msra.mxu0 %v7961
    %8330 = vmatmul.bf16.gmra.mxu0 %v7577
    %v8331 = vpop.f32.mrf.mxu0
    %v8332 = vadd.f32 0.0, %v8331
    %v8333 = vpop.f32.mrf.mxu0
    %v8334 = vadd.f32 0.0, %v8333
    %8335 = vdwg.mxu0
    %8336 = vmatpush.bf16.msra.mxu0 0
    %8337 = vmatpush.bf16.msra.mxu0 0
    %8338 = vmatpush.bf16.msra.mxu0 0
    %8339 = vmatpush.bf16.msra.mxu0 %v8152
    %8340 = vmatpush.bf16.msra.mxu0 %v8038
    %8341 = vmatpush.bf16.msra.mxu0 %v8031
    %8342 = vmatpush.bf16.msra.mxu0 %v8024
    %8343 = vmatpush.bf16.msra.mxu0 %v8017
    %8344 = vmatmul.bf16.gmra.mxu0 %v8131
    %v8345 = vpop.f32.mrf.mxu0
    %v8346 = vadd.f32 %v8332, %v8345
    %v8347 = vpop.f32.mrf.mxu0
    %v8348 = vadd.f32 %v8334, %v8347
    %8349 = vdwg.mxu0
    %v8350 = vadd.f32 %v7559, %v8178
    %v8351 = vadd.f32 %v7560, %v8206
    %v8352 = vadd.f32 %v7561, %v8234
    %v8353 = vadd.f32 %v7562, %v8262
    %v8354 = vadd.f32 %v7563, %v8290
    %v8355 = vadd.f32 %v7564, %v8318
    %v8356 = vadd.f32 %v7565, %v8346
    %v8357 = vadd.f32 %v7566, %v8180
    %v8358 = vadd.f32 %v7567, %v8208
    %v8359 = vadd.f32 %v7568, %v8236
    %v8360 = vadd.f32 %v7569, %v8264
    %v8361 = vadd.f32 %v7570, %v8292
    %v8362 = vadd.f32 %v7571, %v8320
    %v8363 = vadd.f32 %v7572, %v8348
    %v8364 = vld [vmem:[#allocation4 + $0x40] sm:$0xff]
    %v8365 = vld [vmem:[#allocation4 + $0x48] sm:$0xff]
    %v8366 = vld [vmem:[#allocation4 + $0xd0] sm:$0xff]
    %v8367 = vld [vmem:[#allocation4 + $0xd8] sm:$0xff]
    %v8368 = vpack.c.bf16 %v8366, %v8364
    %v8369 = vpack.c.bf16 %v8367, %v8365
    %s8370 = scalar_lea.vmem [#allocation5], 2800
    %v8371 = vld [vmem:[%s8370] sm:$0xff]
    %v8372 = vld [vmem:[%s8370 + $0x8] sm:$0xff]
    %v8373 = vld [vmem:[%s8370 + $0x10] sm:$0xff]
    %v8374 = vld [vmem:[%s8370 + $0x18] sm:$0xf]
    %v8375 = vld [vmem:[%s8370 + $0x1c] sm:$0xff]
    %v8376 = vld [vmem:[%s8370 + $0x24] sm:$0xff]
    %v8377 = vld [vmem:[%s8370 + $0x2c] sm:$0xff]
    %v8378 = vld [vmem:[%s8370 + $0x34] sm:$0xf]
    %v8379 = vld [vmem:[%s8370 + $0x38] sm:$0xff]
    %v8380 = vld [vmem:[%s8370 + $0x40] sm:$0xff]
    %v8381 = vld [vmem:[%s8370 + $0x48] sm:$0xff]
    %v8382 = vld [vmem:[%s8370 + $0x50] sm:$0xf]
    %v8383 = vld [vmem:[%s8370 + $0x54] sm:$0xff]
    %v8384 = vld [vmem:[%s8370 + $0x5c] sm:$0xff]
    %v8385 = vld [vmem:[%s8370 + $0x64] sm:$0xff]
    %v8386 = vld [vmem:[%s8370 + $0x6c] sm:$0xf]
    %v8387 = vld [vmem:[%s8370 + $0x70] sm:$0xff]
    %v8388 = vld [vmem:[%s8370 + $0x78] sm:$0xff]
    %v8389 = vld [vmem:[%s8370 + $0x80] sm:$0xff]
    %v8390 = vld [vmem:[%s8370 + $0x88] sm:$0xf]
    %v8391 = vld [vmem:[%s8370 + $0x8c] sm:$0xff]
    %v8392 = vld [vmem:[%s8370 + $0x94] sm:$0xff]
    %v8393 = vld [vmem:[%s8370 + $0x9c] sm:$0xff]
    %v8394 = vld [vmem:[%s8370 + $0xa4] sm:$0xf]
    %v8395 = vld [vmem:[%s8370 + $0xa8] sm:$0xff]
    %v8396 = vld [vmem:[%s8370 + $0xb0] sm:$0xff]
    %v8397 = vld [vmem:[%s8370 + $0xb8] sm:$0xff]
    %v8398 = vld [vmem:[%s8370 + $0xc0] sm:$0xf]
    %v8399 = vld [vmem:[%s8370 + $0xc4] sm:$0xff]
    %v8400 = vld [vmem:[%s8370 + $0xcc] sm:$0xff]
    %v8401 = vld [vmem:[%s8370 + $0xd4] sm:$0xff]
    %v8402 = vld [vmem:[%s8370 + $0xdc] sm:$0xf]
    %v8403 = vld [vmem:[%s8370 + $0xe0] sm:$0xff]
    %v8404 = vld [vmem:[%s8370 + $0xe8] sm:$0xff]
    %v8405 = vld [vmem:[%s8370 + $0xf0] sm:$0xff]
    %v8406 = vld [vmem:[%s8370 + $0xf8] sm:$0xf]
    %v8407 = vld [vmem:[%s8370 + $0xfc] sm:$0xff]
    %v8408 = vld [vmem:[%s8370 + $0x104] sm:$0xff]
    %v8409 = vld [vmem:[%s8370 + $0x10c] sm:$0xff]
    %v8410 = vld [vmem:[%s8370 + $0x114] sm:$0xf]
    %v8411 = vld [vmem:[%s8370 + $0x118] sm:$0xff]
    %v8412 = vld [vmem:[%s8370 + $0x120] sm:$0xff]
    %v8413 = vld [vmem:[%s8370 + $0x128] sm:$0xff]
    %v8414 = vld [vmem:[%s8370 + $0x130] sm:$0xf]
    %v8415 = vld [vmem:[%s8370 + $0x134] sm:$0xff]
    %v8416 = vld [vmem:[%s8370 + $0x13c] sm:$0xff]
    %v8417 = vld [vmem:[%s8370 + $0x144] sm:$0xff]
    %v8418 = vld [vmem:[%s8370 + $0x14c] sm:$0xf]
    %v8419 = vld [vmem:[%s8370 + $0x150] sm:$0xff]
    %v8420 = vld [vmem:[%s8370 + $0x158] sm:$0xff]
    %v8421 = vld [vmem:[%s8370 + $0x160] sm:$0xff]
    %v8422 = vld [vmem:[%s8370 + $0x168] sm:$0xf]
    %v8423 = vld [vmem:[%s8370 + $0x16c] sm:$0xff]
    %v8424 = vld [vmem:[%s8370 + $0x174] sm:$0xff]
    %v8425 = vld [vmem:[%s8370 + $0x17c] sm:$0xff]
    %v8426 = vld [vmem:[%s8370 + $0x184] sm:$0xf]
    %v8427 = vld [vmem:[%s8370 + $0x188] sm:$0xff]
    %v8428 = vld [vmem:[%s8370 + $0x190] sm:$0xff]
    %v8429 = vld [vmem:[%s8370 + $0x198] sm:$0xff]
    %v8430 = vld [vmem:[%s8370 + $0x1a0] sm:$0xf]
    %v8431 = vld [vmem:[%s8370 + $0x1a4] sm:$0xff]
    %v8432 = vld [vmem:[%s8370 + $0x1ac] sm:$0xff]
    %v8433 = vld [vmem:[%s8370 + $0x1b4] sm:$0xff]
    %v8434 = vld [vmem:[%s8370 + $0x1bc] sm:$0xf]
    %v8435 = vld [vmem:[%s8370 + $0x1c0] sm:$0xff]
    %v8436 = vld [vmem:[%s8370 + $0x1c8] sm:$0xff]
    %v8437 = vld [vmem:[%s8370 + $0x1d0] sm:$0xff]
    %v8438 = vld [vmem:[%s8370 + $0x1d8] sm:$0xf]
    %v8439 = vld [vmem:[%s8370 + $0x1dc] sm:$0xff]
    %v8440 = vld [vmem:[%s8370 + $0x1e4] sm:$0xff]
    %v8441 = vld [vmem:[%s8370 + $0x1ec] sm:$0xff]
    %v8442 = vld [vmem:[%s8370 + $0x1f4] sm:$0xf]
    %v8443 = vld [vmem:[%s8370 + $0x1f8] sm:$0xff]
    %v8444 = vld [vmem:[%s8370 + $0x200] sm:$0xff]
    %v8445 = vld [vmem:[%s8370 + $0x208] sm:$0xff]
    %v8446 = vld [vmem:[%s8370 + $0x210] sm:$0xf]
    %v8447 = vld [vmem:[%s8370 + $0x214] sm:$0xff]
    %v8448 = vld [vmem:[%s8370 + $0x21c] sm:$0xff]
    %v8449 = vld [vmem:[%s8370 + $0x224] sm:$0xff]
    %v8450 = vld [vmem:[%s8370 + $0x22c] sm:$0xf]
    %v8451 = vld [vmem:[%s8370 + $0x230] sm:$0xff]
    %v8452 = vld [vmem:[%s8370 + $0x238] sm:$0xff]
    %v8453 = vld [vmem:[%s8370 + $0x240] sm:$0xff]
    %v8454 = vld [vmem:[%s8370 + $0x248] sm:$0xf]
    %v8455 = vld [vmem:[%s8370 + $0x24c] sm:$0xff]
    %v8456 = vld [vmem:[%s8370 + $0x254] sm:$0xff]
    %v8457 = vld [vmem:[%s8370 + $0x25c] sm:$0xff]
    %v8458 = vld [vmem:[%s8370 + $0x264] sm:$0xf]
    %v8459 = vld [vmem:[%s8370 + $0x268] sm:$0xff]
    %v8460 = vld [vmem:[%s8370 + $0x270] sm:$0xff]
    %v8461 = vld [vmem:[%s8370 + $0x278] sm:$0xff]
    %v8462 = vld [vmem:[%s8370 + $0x280] sm:$0xf]
    %v8463 = vld [vmem:[%s8370 + $0x284] sm:$0xff]
    %v8464 = vld [vmem:[%s8370 + $0x28c] sm:$0xff]
    %v8465 = vld [vmem:[%s8370 + $0x294] sm:$0xff]
    %v8466 = vld [vmem:[%s8370 + $0x29c] sm:$0xf]
    %v8467 = vld [vmem:[%s8370 + $0x2a0] sm:$0x33]
    %v8468 = vld [vmem:[%s8370 + $0x2a8] sm:$0x33]
    %v8469 = vld [vmem:[%s8370 + $0x2b0] sm:$0x33]
    %v8470 = vld [vmem:[%s8370 + $0x2b8] sm:$0x3]
    %v8571 = vunpack.c.l.b16 %v8371
    %v8572 = vunpack.c.h.b16 %v8371
    %v8573 = vunpack.c.l.b16 %v8372
    %v8574 = vunpack.c.h.b16 %v8372
    %v8575 = vunpack.c.l.b16 %v8373
    %v8576 = vunpack.c.h.b16 %v8373
    %v8577 = vunpack.c.l.b16 %v8374
    %v8578 = vunpack.c.l.b16 %v8375
    %v8579 = vunpack.c.h.b16 %v8375
    %v8580 = vunpack.c.l.b16 %v8376
    %v8581 = vunpack.c.h.b16 %v8376
    %v8582 = vunpack.c.l.b16 %v8377
    %v8583 = vunpack.c.h.b16 %v8377
    %v8584 = vunpack.c.l.b16 %v8378
    %v8585 = vunpack.c.l.b16 %v8379
    %v8586 = vunpack.c.h.b16 %v8379
    %v8587 = vunpack.c.l.b16 %v8380
    %v8588 = vunpack.c.h.b16 %v8380
    %v8589 = vunpack.c.l.b16 %v8381
    %v8590 = vunpack.c.h.b16 %v8381
    %v8591 = vunpack.c.l.b16 %v8382
    %v8592 = vunpack.c.l.b16 %v8383
    %v8593 = vunpack.c.h.b16 %v8383
    %v8594 = vunpack.c.l.b16 %v8384
    %v8595 = vunpack.c.h.b16 %v8384
    %v8596 = vunpack.c.l.b16 %v8385
    %v8597 = vunpack.c.h.b16 %v8385
    %v8598 = vunpack.c.l.b16 %v8386
    %v8599 = vunpack.c.l.b16 %v8387
    %v8600 = vunpack.c.h.b16 %v8387
    %v8601 = vunpack.c.l.b16 %v8388
    %v8602 = vunpack.c.h.b16 %v8388
    %v8603 = vunpack.c.l.b16 %v8389
    %v8604 = vunpack.c.h.b16 %v8389
    %v8605 = vunpack.c.l.b16 %v8390
    %v8606 = vunpack.c.l.b16 %v8391
    %v8607 = vunpack.c.h.b16 %v8391
    %v8608 = vunpack.c.l.b16 %v8392
    %v8609 = vunpack.c.h.b16 %v8392
    %v8610 = vunpack.c.l.b16 %v8393
    %v8611 = vunpack.c.h.b16 %v8393
    %v8612 = vunpack.c.l.b16 %v8394
    %v8613 = vunpack.c.l.b16 %v8395
    %v8614 = vunpack.c.h.b16 %v8395
    %v8615 = vunpack.c.l.b16 %v8396
    %v8616 = vunpack.c.h.b16 %v8396
    %v8617 = vunpack.c.l.b16 %v8397
    %v8618 = vunpack.c.h.b16 %v8397
    %v8619 = vunpack.c.l.b16 %v8398
    %v8620 = vunpack.c.l.b16 %v8399
    %v8621 = vunpack.c.h.b16 %v8399
    %v8622 = vunpack.c.l.b16 %v8400
    %v8623 = vunpack.c.h.b16 %v8400
    %v8624 = vunpack.c.l.b16 %v8401
    %v8625 = vunpack.c.h.b16 %v8401
    %v8626 = vunpack.c.l.b16 %v8402
    %v8627 = vunpack.c.l.b16 %v8403
    %v8628 = vunpack.c.h.b16 %v8403
    %v8629 = vunpack.c.l.b16 %v8404
    %v8630 = vunpack.c.h.b16 %v8404
    %v8631 = vunpack.c.l.b16 %v8405
    %v8632 = vunpack.c.h.b16 %v8405
    %v8633 = vunpack.c.l.b16 %v8406
    %v8634 = vunpack.c.l.b16 %v8407
    %v8635 = vunpack.c.h.b16 %v8407
    %v8636 = vunpack.c.l.b16 %v8408
    %v8637 = vunpack.c.h.b16 %v8408
    %v8638 = vunpack.c.l.b16 %v8409
    %v8639 = vunpack.c.h.b16 %v8409
    %v8640 = vunpack.c.l.b16 %v8410
    %v8641 = vunpack.c.l.b16 %v8411
    %v8642 = vunpack.c.h.b16 %v8411
    %v8643 = vunpack.c.l.b16 %v8412
    %v8644 = vunpack.c.h.b16 %v8412
    %v8645 = vunpack.c.l.b16 %v8413
    %v8646 = vunpack.c.h.b16 %v8413
    %v8647 = vunpack.c.l.b16 %v8414
    %v8648 = vunpack.c.l.b16 %v8415
    %v8649 = vunpack.c.h.b16 %v8415
    %v8650 = vunpack.c.l.b16 %v8416
    %v8651 = vunpack.c.h.b16 %v8416
    %v8652 = vunpack.c.l.b16 %v8417
    %v8653 = vunpack.c.h.b16 %v8417
    %v8654 = vunpack.c.l.b16 %v8418
    %v8655 = vunpack.c.l.b16 %v8419
    %v8656 = vunpack.c.h.b16 %v8419
    %v8657 = vunpack.c.l.b16 %v8420
    %v8658 = vunpack.c.h.b16 %v8420
    %v8659 = vunpack.c.l.b16 %v8421
    %v8660 = vunpack.c.h.b16 %v8421
    %v8661 = vunpack.c.l.b16 %v8422
    %v8662 = vunpack.c.l.b16 %v8423
    %v8663 = vunpack.c.h.b16 %v8423
    %v8664 = vunpack.c.l.b16 %v8424
    %v8665 = vunpack.c.h.b16 %v8424
    %v8666 = vunpack.c.l.b16 %v8425
    %v8667 = vunpack.c.h.b16 %v8425
    %v8668 = vunpack.c.l.b16 %v8426
    %v8669 = vunpack.c.l.b16 %v8427
    %v8670 = vunpack.c.h.b16 %v8427
    %v8671 = vunpack.c.l.b16 %v8428
    %v8672 = vunpack.c.h.b16 %v8428
    %v8673 = vunpack.c.l.b16 %v8429
    %v8674 = vunpack.c.h.b16 %v8429
    %v8675 = vunpack.c.l.b16 %v8430
    %v8676 = vunpack.c.l.b16 %v8431
    %v8677 = vunpack.c.h.b16 %v8431
    %v8678 = vunpack.c.l.b16 %v8432
    %v8679 = vunpack.c.h.b16 %v8432
    %v8680 = vunpack.c.l.b16 %v8433
    %v8681 = vunpack.c.h.b16 %v8433
    %v8682 = vunpack.c.l.b16 %v8434
    %v8683 = vunpack.c.l.b16 %v8435
    %v8684 = vunpack.c.h.b16 %v8435
    %v8685 = vunpack.c.l.b16 %v8436
    %v8686 = vunpack.c.h.b16 %v8436
    %v8687 = vunpack.c.l.b16 %v8437
    %v8688 = vunpack.c.h.b16 %v8437
    %v8689 = vunpack.c.l.b16 %v8438
    %v8690 = vunpack.c.l.b16 %v8439
    %v8691 = vunpack.c.h.b16 %v8439
    %v8692 = vunpack.c.l.b16 %v8440
    %v8693 = vunpack.c.h.b16 %v8440
    %v8694 = vunpack.c.l.b16 %v8441
    %v8695 = vunpack.c.h.b16 %v8441
    %v8696 = vunpack.c.l.b16 %v8442
    %v8697 = vunpack.c.l.b16 %v8443
    %v8698 = vunpack.c.h.b16 %v8443
    %v8699 = vunpack.c.l.b16 %v8444
    %v8700 = vunpack.c.h.b16 %v8444
    %v8701 = vunpack.c.l.b16 %v8445
    %v8702 = vunpack.c.h.b16 %v8445
    %v8703 = vunpack.c.l.b16 %v8446
    %v8704 = vunpack.c.l.b16 %v8447
    %v8705 = vunpack.c.h.b16 %v8447
    %v8706 = vunpack.c.l.b16 %v8448
    %v8707 = vunpack.c.h.b16 %v8448
    %v8708 = vunpack.c.l.b16 %v8449
    %v8709 = vunpack.c.h.b16 %v8449
    %v8710 = vunpack.c.l.b16 %v8450
    %v8711 = vunpack.c.l.b16 %v8451
    %v8712 = vunpack.c.h.b16 %v8451
    %v8713 = vunpack.c.l.b16 %v8452
    %v8714 = vunpack.c.h.b16 %v8452
    %v8715 = vunpack.c.l.b16 %v8453
    %v8716 = vunpack.c.h.b16 %v8453
    %v8717 = vunpack.c.l.b16 %v8454
    %v8718 = vunpack.c.l.b16 %v8455
    %v8719 = vunpack.c.h.b16 %v8455
    %v8720 = vunpack.c.l.b16 %v8456
    %v8721 = vunpack.c.h.b16 %v8456
    %v8722 = vunpack.c.l.b16 %v8457
    %v8723 = vunpack.c.h.b16 %v8457
    %v8724 = vunpack.c.l.b16 %v8458
    %v8725 = vunpack.c.l.b16 %v8459
    %v8726 = vunpack.c.h.b16 %v8459
    %v8727 = vunpack.c.l.b16 %v8460
    %v8728 = vunpack.c.h.b16 %v8460
    %v8729 = vunpack.c.l.b16 %v8461
    %v8730 = vunpack.c.h.b16 %v8461
    %v8731 = vunpack.c.l.b16 %v8462
    %v8732 = vunpack.c.l.b16 %v8463
    %v8733 = vunpack.c.h.b16 %v8463
    %v8734 = vunpack.c.l.b16 %v8464
    %v8735 = vunpack.c.h.b16 %v8464
    %v8736 = vunpack.c.l.b16 %v8465
    %v8737 = vunpack.c.h.b16 %v8465
    %v8738 = vunpack.c.l.b16 %v8466
    %v8739 = vunpack.c.l.b16 %v8467
    %v8740 = vunpack.c.h.b16 %v8467
    %v8741 = vunpack.c.l.b16 %v8468
    %v8742 = vunpack.c.h.b16 %v8468
    %v8743 = vunpack.c.l.b16 %v8469
    %v8744 = vunpack.c.h.b16 %v8469
    %v8745 = vunpack.c.l.b16 %v8470
    %v8746 = vpack.c.b16 %v8578, %v8571
    %v8747 = vpack.c.b16 %v8579, %v8572
    %v8748 = vpack.c.b16 %v8580, %v8573
    %v8749 = vpack.c.b16 %v8581, %v8574
    %v8750 = vpack.c.b16 %v8582, %v8575
    %v8751 = vpack.c.b16 %v8583, %v8576
    %v8752 = vpack.c.b16 %v8584, %v8577
    %v8753 = vpack.c.b16 %v8592, %v8585
    %v8754 = vpack.c.b16 %v8593, %v8586
    %v8755 = vpack.c.b16 %v8594, %v8587
    %v8756 = vpack.c.b16 %v8595, %v8588
    %v8757 = vpack.c.b16 %v8596, %v8589
    %v8758 = vpack.c.b16 %v8597, %v8590
    %v8759 = vpack.c.b16 %v8598, %v8591
    %v8760 = vpack.c.b16 %v8606, %v8599
    %v8761 = vpack.c.b16 %v8607, %v8600
    %v8762 = vpack.c.b16 %v8608, %v8601
    %v8763 = vpack.c.b16 %v8609, %v8602
    %v8764 = vpack.c.b16 %v8610, %v8603
    %v8765 = vpack.c.b16 %v8611, %v8604
    %v8766 = vpack.c.b16 %v8612, %v8605
    %v8767 = vpack.c.b16 %v8620, %v8613
    %v8768 = vpack.c.b16 %v8621, %v8614
    %v8769 = vpack.c.b16 %v8622, %v8615
    %v8770 = vpack.c.b16 %v8623, %v8616
    %v8771 = vpack.c.b16 %v8624, %v8617
    %v8772 = vpack.c.b16 %v8625, %v8618
    %v8773 = vpack.c.b16 %v8626, %v8619
    %v8774 = vpack.c.b16 %v8634, %v8627
    %v8775 = vpack.c.b16 %v8635, %v8628
    %v8776 = vpack.c.b16 %v8636, %v8629
    %v8777 = vpack.c.b16 %v8637, %v8630
    %v8778 = vpack.c.b16 %v8638, %v8631
    %v8779 = vpack.c.b16 %v8639, %v8632
    %v8780 = vpack.c.b16 %v8640, %v8633
    %v8781 = vpack.c.b16 %v8648, %v8641
    %v8782 = vpack.c.b16 %v8649, %v8642
    %v8783 = vpack.c.b16 %v8650, %v8643
    %v8784 = vpack.c.b16 %v8651, %v8644
    %v8785 = vpack.c.b16 %v8652, %v8645
    %v8786 = vpack.c.b16 %v8653, %v8646
    %v8787 = vpack.c.b16 %v8654, %v8647
    %v8788 = vpack.c.b16 %v8662, %v8655
    %v8789 = vpack.c.b16 %v8663, %v8656
    %v8790 = vpack.c.b16 %v8664, %v8657
    %v8791 = vpack.c.b16 %v8665, %v8658
    %v8792 = vpack.c.b16 %v8666, %v8659
    %v8793 = vpack.c.b16 %v8667, %v8660
    %v8794 = vpack.c.b16 %v8668, %v8661
    %v8795 = vpack.c.b16 %v8676, %v8669
    %v8796 = vpack.c.b16 %v8677, %v8670
    %v8797 = vpack.c.b16 %v8678, %v8671
    %v8798 = vpack.c.b16 %v8679, %v8672
    %v8799 = vpack.c.b16 %v8680, %v8673
    %v8800 = vpack.c.b16 %v8681, %v8674
    %v8801 = vpack.c.b16 %v8682, %v8675
    %v8802 = vpack.c.b16 %v8690, %v8683
    %v8803 = vpack.c.b16 %v8691, %v8684
    %v8804 = vpack.c.b16 %v8692, %v8685
    %v8805 = vpack.c.b16 %v8693, %v8686
    %v8806 = vpack.c.b16 %v8694, %v8687
    %v8807 = vpack.c.b16 %v8695, %v8688
    %v8808 = vpack.c.b16 %v8696, %v8689
    %v8809 = vpack.c.b16 %v8704, %v8697
    %v8810 = vpack.c.b16 %v8705, %v8698
    %v8811 = vpack.c.b16 %v8706, %v8699
    %v8812 = vpack.c.b16 %v8707, %v8700
    %v8813 = vpack.c.b16 %v8708, %v8701
    %v8814 = vpack.c.b16 %v8709, %v8702
    %v8815 = vpack.c.b16 %v8710, %v8703
    %v8816 = vpack.c.b16 %v8718, %v8711
    %v8817 = vpack.c.b16 %v8719, %v8712
    %v8818 = vpack.c.b16 %v8720, %v8713
    %v8819 = vpack.c.b16 %v8721, %v8714
    %v8820 = vpack.c.b16 %v8722, %v8715
    %v8821 = vpack.c.b16 %v8723, %v8716
    %v8822 = vpack.c.b16 %v8724, %v8717
    %v8823 = vpack.c.b16 %v8732, %v8725
    %v8824 = vpack.c.b16 %v8733, %v8726
    %v8825 = vpack.c.b16 %v8734, %v8727
    %v8826 = vpack.c.b16 %v8735, %v8728
    %v8827 = vpack.c.b16 %v8736, %v8729
    %v8828 = vpack.c.b16 %v8737, %v8730
    %v8829 = vpack.c.b16 %v8738, %v8731
    %v8830 = vpack.c.b16 %v8739, %v8739
    %v8831 = vpack.c.b16 %v8740, %v8740
    %v8832 = vpack.c.b16 %v8741, %v8741
    %v8833 = vpack.c.b16 %v8742, %v8742
    %v8834 = vpack.c.b16 %v8743, %v8743
    %v8835 = vpack.c.b16 %v8744, %v8744
    %v8836 = vpack.c.b16 %v8745, %v8745
    %v8922 = vsel %vm5067, %v8369, 0
    %v8925 = vsel %vm572, %v8830, 0
    %v8928 = vsel %vm572, %v8831, 0
    %v8931 = vsel %vm572, %v8832, 0
    %v8934 = vsel %vm572, %v8833, 0
    %v8937 = vsel %vm572, %v8834, 0
    %v8940 = vsel %vm572, %v8835, 0
    %v8943 = vsel %vm572, %v8836, 0
    %8945 = vmatpush.bf16.msra.mxu0 %v8795
    %8946 = vmatpush.bf16.msra.mxu0 %v8788
    %8947 = vmatpush.bf16.msra.mxu0 %v8781
    %8948 = vmatpush.bf16.msra.mxu0 %v8774
    %8949 = vmatpush.bf16.msra.mxu0 %v8767
    %8950 = vmatpush.bf16.msra.mxu0 %v8760
    %8951 = vmatpush.bf16.msra.mxu0 %v8753
    %8952 = vmatpush.bf16.msra.mxu0 %v8746
    %8953 = vmatmul.bf16.gmra.mxu0 %v8368
    %v8954 = vpop.f32.mrf.mxu0
    %v8955 = vadd.f32 0.0, %v8954
    %v8956 = vpop.f32.mrf.mxu0
    %v8957 = vadd.f32 0.0, %v8956
    %8958 = vdwg.mxu0
    %8959 = vmatpush.bf16.msra.mxu0 0
    %8960 = vmatpush.bf16.msra.mxu0 0
    %8961 = vmatpush.bf16.msra.mxu0 0
    %8962 = vmatpush.bf16.msra.mxu0 %v8925
    %8963 = vmatpush.bf16.msra.mxu0 %v8823
    %8964 = vmatpush.bf16.msra.mxu0 %v8816
    %8965 = vmatpush.bf16.msra.mxu0 %v8809
    %8966 = vmatpush.bf16.msra.mxu0 %v8802
    %8967 = vmatmul.bf16.gmra.mxu0 %v8922
    %v8968 = vpop.f32.mrf.mxu0
    %v8969 = vadd.f32 %v8955, %v8968
    %v8970 = vpop.f32.mrf.mxu0
    %v8971 = vadd.f32 %v8957, %v8970
    %8972 = vdwg.mxu0
    %8973 = vmatpush.bf16.msra.mxu0 %v8796
    %8974 = vmatpush.bf16.msra.mxu0 %v8789
    %8975 = vmatpush.bf16.msra.mxu0 %v8782
    %8976 = vmatpush.bf16.msra.mxu0 %v8775
    %8977 = vmatpush.bf16.msra.mxu0 %v8768
    %8978 = vmatpush.bf16.msra.mxu0 %v8761
    %8979 = vmatpush.bf16.msra.mxu0 %v8754
    %8980 = vmatpush.bf16.msra.mxu0 %v8747
    %8981 = vmatmul.bf16.gmra.mxu0 %v8368
    %v8982 = vpop.f32.mrf.mxu0
    %v8983 = vadd.f32 0.0, %v8982
    %v8984 = vpop.f32.mrf.mxu0
    %v8985 = vadd.f32 0.0, %v8984
    %8986 = vdwg.mxu0
    %8987 = vmatpush.bf16.msra.mxu0 0
    %8988 = vmatpush.bf16.msra.mxu0 0
    %8989 = vmatpush.bf16.msra.mxu0 0
    %8990 = vmatpush.bf16.msra.mxu0 %v8928
    %8991 = vmatpush.bf16.msra.mxu0 %v8824
    %8992 = vmatpush.bf16.msra.mxu0 %v8817
    %8993 = vmatpush.bf16.msra.mxu0 %v8810
    %8994 = vmatpush.bf16.msra.mxu0 %v8803
    %8995 = vmatmul.bf16.gmra.mxu0 %v8922
    %v8996 = vpop.f32.mrf.mxu0
    %v8997 = vadd.f32 %v8983, %v8996
    %v8998 = vpop.f32.mrf.mxu0
    %v8999 = vadd.f32 %v8985, %v8998
    %9000 = vdwg.mxu0
    %9001 = vmatpush.bf16.msra.mxu0 %v8797
    %9002 = vmatpush.bf16.msra.mxu0 %v8790
    %9003 = vmatpush.bf16.msra.mxu0 %v8783
    %9004 = vmatpush.bf16.msra.mxu0 %v8776
    %9005 = vmatpush.bf16.msra.mxu0 %v8769
    %9006 = vmatpush.bf16.msra.mxu0 %v8762
    %9007 = vmatpush.bf16.msra.mxu0 %v8755
    %9008 = vmatpush.bf16.msra.mxu0 %v8748
    %9009 = vmatmul.bf16.gmra.mxu0 %v8368
    %v9010 = vpop.f32.mrf.mxu0
    %v9011 = vadd.f32 0.0, %v9010
    %v9012 = vpop.f32.mrf.mxu0
    %v9013 = vadd.f32 0.0, %v9012
    %9014 = vdwg.mxu0
    %9015 = vmatpush.bf16.msra.mxu0 0
    %9016 = vmatpush.bf16.msra.mxu0 0
    %9017 = vmatpush.bf16.msra.mxu0 0
    %9018 = vmatpush.bf16.msra.mxu0 %v8931
    %9019 = vmatpush.bf16.msra.mxu0 %v8825
    %9020 = vmatpush.bf16.msra.mxu0 %v8818
    %9021 = vmatpush.bf16.msra.mxu0 %v8811
    %9022 = vmatpush.bf16.msra.mxu0 %v8804
    %9023 = vmatmul.bf16.gmra.mxu0 %v8922
    %v9024 = vpop.f32.mrf.mxu0
    %v9025 = vadd.f32 %v9011, %v9024
    %v9026 = vpop.f32.mrf.mxu0
    %v9027 = vadd.f32 %v9013, %v9026
    %9028 = vdwg.mxu0
    %9029 = vmatpush.bf16.msra.mxu0 %v8798
    %9030 = vmatpush.bf16.msra.mxu0 %v8791
    %9031 = vmatpush.bf16.msra.mxu0 %v8784
    %9032 = vmatpush.bf16.msra.mxu0 %v8777
    %9033 = vmatpush.bf16.msra.mxu0 %v8770
    %9034 = vmatpush.bf16.msra.mxu0 %v8763
    %9035 = vmatpush.bf16.msra.mxu0 %v8756
    %9036 = vmatpush.bf16.msra.mxu0 %v8749
    %9037 = vmatmul.bf16.gmra.mxu0 %v8368
    %v9038 = vpop.f32.mrf.mxu0
    %v9039 = vadd.f32 0.0, %v9038
    %v9040 = vpop.f32.mrf.mxu0
    %v9041 = vadd.f32 0.0, %v9040
    %9042 = vdwg.mxu0
    %9043 = vmatpush.bf16.msra.mxu0 0
    %9044 = vmatpush.bf16.msra.mxu0 0
    %9045 = vmatpush.bf16.msra.mxu0 0
    %9046 = vmatpush.bf16.msra.mxu0 %v8934
    %9047 = vmatpush.bf16.msra.mxu0 %v8826
    %9048 = vmatpush.bf16.msra.mxu0 %v8819
    %9049 = vmatpush.bf16.msra.mxu0 %v8812
    %9050 = vmatpush.bf16.msra.mxu0 %v8805
    %9051 = vmatmul.bf16.gmra.mxu0 %v8922
    %v9052 = vpop.f32.mrf.mxu0
    %v9053 = vadd.f32 %v9039, %v9052
    %v9054 = vpop.f32.mrf.mxu0
    %v9055 = vadd.f32 %v9041, %v9054
    %9056 = vdwg.mxu0
    %9057 = vmatpush.bf16.msra.mxu0 %v8799
    %9058 = vmatpush.bf16.msra.mxu0 %v8792
    %9059 = vmatpush.bf16.msra.mxu0 %v8785
    %9060 = vmatpush.bf16.msra.mxu0 %v8778
    %9061 = vmatpush.bf16.msra.mxu0 %v8771
    %9062 = vmatpush.bf16.msra.mxu0 %v8764
    %9063 = vmatpush.bf16.msra.mxu0 %v8757
    %9064 = vmatpush.bf16.msra.mxu0 %v8750
    %9065 = vmatmul.bf16.gmra.mxu0 %v8368
    %v9066 = vpop.f32.mrf.mxu0
    %v9067 = vadd.f32 0.0, %v9066
    %v9068 = vpop.f32.mrf.mxu0
    %v9069 = vadd.f32 0.0, %v9068
    %9070 = vdwg.mxu0
    %9071 = vmatpush.bf16.msra.mxu0 0
    %9072 = vmatpush.bf16.msra.mxu0 0
    %9073 = vmatpush.bf16.msra.mxu0 0
    %9074 = vmatpush.bf16.msra.mxu0 %v8937
    %9075 = vmatpush.bf16.msra.mxu0 %v8827
    %9076 = vmatpush.bf16.msra.mxu0 %v8820
    %9077 = vmatpush.bf16.msra.mxu0 %v8813
    %9078 = vmatpush.bf16.msra.mxu0 %v8806
    %9079 = vmatmul.bf16.gmra.mxu0 %v8922
    %v9080 = vpop.f32.mrf.mxu0
    %v9081 = vadd.f32 %v9067, %v9080
    %v9082 = vpop.f32.mrf.mxu0
    %v9083 = vadd.f32 %v9069, %v9082
    %9084 = vdwg.mxu0
    %9085 = vmatpush.bf16.msra.mxu0 %v8800
    %9086 = vmatpush.bf16.msra.mxu0 %v8793
    %9087 = vmatpush.bf16.msra.mxu0 %v8786
    %9088 = vmatpush.bf16.msra.mxu0 %v8779
    %9089 = vmatpush.bf16.msra.mxu0 %v8772
    %9090 = vmatpush.bf16.msra.mxu0 %v8765
    %9091 = vmatpush.bf16.msra.mxu0 %v8758
    %9092 = vmatpush.bf16.msra.mxu0 %v8751
    %9093 = vmatmul.bf16.gmra.mxu0 %v8368
    %v9094 = vpop.f32.mrf.mxu0
    %v9095 = vadd.f32 0.0, %v9094
    %v9096 = vpop.f32.mrf.mxu0
    %v9097 = vadd.f32 0.0, %v9096
    %9098 = vdwg.mxu0
    %9099 = vmatpush.bf16.msra.mxu0 0
    %9100 = vmatpush.bf16.msra.mxu0 0
    %9101 = vmatpush.bf16.msra.mxu0 0
    %9102 = vmatpush.bf16.msra.mxu0 %v8940
    %9103 = vmatpush.bf16.msra.mxu0 %v8828
    %9104 = vmatpush.bf16.msra.mxu0 %v8821
    %9105 = vmatpush.bf16.msra.mxu0 %v8814
    %9106 = vmatpush.bf16.msra.mxu0 %v8807
    %9107 = vmatmul.bf16.gmra.mxu0 %v8922
    %v9108 = vpop.f32.mrf.mxu0
    %v9109 = vadd.f32 %v9095, %v9108
    %v9110 = vpop.f32.mrf.mxu0
    %v9111 = vadd.f32 %v9097, %v9110
    %9112 = vdwg.mxu0
    %9113 = vmatpush.bf16.msra.mxu0 %v8801
    %9114 = vmatpush.bf16.msra.mxu0 %v8794
    %9115 = vmatpush.bf16.msra.mxu0 %v8787
    %9116 = vmatpush.bf16.msra.mxu0 %v8780
    %9117 = vmatpush.bf16.msra.mxu0 %v8773
    %9118 = vmatpush.bf16.msra.mxu0 %v8766
    %9119 = vmatpush.bf16.msra.mxu0 %v8759
    %9120 = vmatpush.bf16.msra.mxu0 %v8752
    %9121 = vmatmul.bf16.gmra.mxu0 %v8368
    %v9122 = vpop.f32.mrf.mxu0
    %v9123 = vadd.f32 0.0, %v9122
    %v9124 = vpop.f32.mrf.mxu0
    %v9125 = vadd.f32 0.0, %v9124
    %9126 = vdwg.mxu0
    %9127 = vmatpush.bf16.msra.mxu0 0
    %9128 = vmatpush.bf16.msra.mxu0 0
    %9129 = vmatpush.bf16.msra.mxu0 0
    %9130 = vmatpush.bf16.msra.mxu0 %v8943
    %9131 = vmatpush.bf16.msra.mxu0 %v8829
    %9132 = vmatpush.bf16.msra.mxu0 %v8822
    %9133 = vmatpush.bf16.msra.mxu0 %v8815
    %9134 = vmatpush.bf16.msra.mxu0 %v8808
    %9135 = vmatmul.bf16.gmra.mxu0 %v8922
    %v9136 = vpop.f32.mrf.mxu0
    %v9137 = vadd.f32 %v9123, %v9136
    %v9138 = vpop.f32.mrf.mxu0
    %v9139 = vadd.f32 %v9125, %v9138
    %9140 = vdwg.mxu0
    %v9141 = vadd.f32 %v8350, %v8969
    %v9142 = vadd.f32 %v8351, %v8997
    %v9143 = vadd.f32 %v8352, %v9025
    %v9144 = vadd.f32 %v8353, %v9053
    %v9145 = vadd.f32 %v8354, %v9081
    %v9146 = vadd.f32 %v8355, %v9109
    %v9147 = vadd.f32 %v8356, %v9137
    %v9148 = vadd.f32 %v8357, %v8971
    %v9149 = vadd.f32 %v8358, %v8999
    %v9150 = vadd.f32 %v8359, %v9027
    %v9151 = vadd.f32 %v8360, %v9055
    %v9152 = vadd.f32 %v8361, %v9083
    %v9153 = vadd.f32 %v8362, %v9111
    %v9154 = vadd.f32 %v8363, %v9139
    %v9155 = vld [vmem:[#allocation4 + $0x50] sm:$0xff]
    %v9156 = vld [vmem:[#allocation4 + $0x58] sm:$0xff]
    %v9157 = vld [vmem:[#allocation4 + $0xe0] sm:$0xff]
    %v9158 = vld [vmem:[#allocation4 + $0xe8] sm:$0xff]
    %v9159 = vpack.c.bf16 %v9157, %v9155
    %v9160 = vpack.c.bf16 %v9158, %v9156
    %s9161 = scalar_lea.vmem [#allocation5], 3500
    %v9162 = vld [vmem:[%s9161] sm:$0xff]
    %v9163 = vld [vmem:[%s9161 + $0x8] sm:$0xff]
    %v9164 = vld [vmem:[%s9161 + $0x10] sm:$0xff]
    %v9165 = vld [vmem:[%s9161 + $0x18] sm:$0xf]
    %v9166 = vld [vmem:[%s9161 + $0x1c] sm:$0xff]
    %v9167 = vld [vmem:[%s9161 + $0x24] sm:$0xff]
    %v9168 = vld [vmem:[%s9161 + $0x2c] sm:$0xff]
    %v9169 = vld [vmem:[%s9161 + $0x34] sm:$0xf]
    %v9170 = vld [vmem:[%s9161 + $0x38] sm:$0xff]
    %v9171 = vld [vmem:[%s9161 + $0x40] sm:$0xff]
    %v9172 = vld [vmem:[%s9161 + $0x48] sm:$0xff]
    %v9173 = vld [vmem:[%s9161 + $0x50] sm:$0xf]
    %v9174 = vld [vmem:[%s9161 + $0x54] sm:$0xff]
    %v9175 = vld [vmem:[%s9161 + $0x5c] sm:$0xff]
    %v9176 = vld [vmem:[%s9161 + $0x64] sm:$0xff]
    %v9177 = vld [vmem:[%s9161 + $0x6c] sm:$0xf]
    %v9178 = vld [vmem:[%s9161 + $0x70] sm:$0xff]
    %v9179 = vld [vmem:[%s9161 + $0x78] sm:$0xff]
    %v9180 = vld [vmem:[%s9161 + $0x80] sm:$0xff]
    %v9181 = vld [vmem:[%s9161 + $0x88] sm:$0xf]
    %v9182 = vld [vmem:[%s9161 + $0x8c] sm:$0xff]
    %v9183 = vld [vmem:[%s9161 + $0x94] sm:$0xff]
    %v9184 = vld [vmem:[%s9161 + $0x9c] sm:$0xff]
    %v9185 = vld [vmem:[%s9161 + $0xa4] sm:$0xf]
    %v9186 = vld [vmem:[%s9161 + $0xa8] sm:$0xff]
    %v9187 = vld [vmem:[%s9161 + $0xb0] sm:$0xff]
    %v9188 = vld [vmem:[%s9161 + $0xb8] sm:$0xff]
    %v9189 = vld [vmem:[%s9161 + $0xc0] sm:$0xf]
    %v9190 = vld [vmem:[%s9161 + $0xc4] sm:$0xff]
    %v9191 = vld [vmem:[%s9161 + $0xcc] sm:$0xff]
    %v9192 = vld [vmem:[%s9161 + $0xd4] sm:$0xff]
    %v9193 = vld [vmem:[%s9161 + $0xdc] sm:$0xf]
    %v9194 = vld [vmem:[%s9161 + $0xe0] sm:$0xff]
    %v9195 = vld [vmem:[%s9161 + $0xe8] sm:$0xff]
    %v9196 = vld [vmem:[%s9161 + $0xf0] sm:$0xff]
    %v9197 = vld [vmem:[%s9161 + $0xf8] sm:$0xf]
    %v9198 = vld [vmem:[%s9161 + $0xfc] sm:$0xff]
    %v9199 = vld [vmem:[%s9161 + $0x104] sm:$0xff]
    %v9200 = vld [vmem:[%s9161 + $0x10c] sm:$0xff]
    %v9201 = vld [vmem:[%s9161 + $0x114] sm:$0xf]
    %v9202 = vld [vmem:[%s9161 + $0x118] sm:$0xff]
    %v9203 = vld [vmem:[%s9161 + $0x120] sm:$0xff]
    %v9204 = vld [vmem:[%s9161 + $0x128] sm:$0xff]
    %v9205 = vld [vmem:[%s9161 + $0x130] sm:$0xf]
    %v9206 = vld [vmem:[%s9161 + $0x134] sm:$0xff]
    %v9207 = vld [vmem:[%s9161 + $0x13c] sm:$0xff]
    %v9208 = vld [vmem:[%s9161 + $0x144] sm:$0xff]
    %v9209 = vld [vmem:[%s9161 + $0x14c] sm:$0xf]
    %v9210 = vld [vmem:[%s9161 + $0x150] sm:$0xff]
    %v9211 = vld [vmem:[%s9161 + $0x158] sm:$0xff]
    %v9212 = vld [vmem:[%s9161 + $0x160] sm:$0xff]
    %v9213 = vld [vmem:[%s9161 + $0x168] sm:$0xf]
    %v9214 = vld [vmem:[%s9161 + $0x16c] sm:$0xff]
    %v9215 = vld [vmem:[%s9161 + $0x174] sm:$0xff]
    %v9216 = vld [vmem:[%s9161 + $0x17c] sm:$0xff]
    %v9217 = vld [vmem:[%s9161 + $0x184] sm:$0xf]
    %v9218 = vld [vmem:[%s9161 + $0x188] sm:$0xff]
    %v9219 = vld [vmem:[%s9161 + $0x190] sm:$0xff]
    %v9220 = vld [vmem:[%s9161 + $0x198] sm:$0xff]
    %v9221 = vld [vmem:[%s9161 + $0x1a0] sm:$0xf]
    %v9222 = vld [vmem:[%s9161 + $0x1a4] sm:$0xff]
    %v9223 = vld [vmem:[%s9161 + $0x1ac] sm:$0xff]
    %v9224 = vld [vmem:[%s9161 + $0x1b4] sm:$0xff]
    %v9225 = vld [vmem:[%s9161 + $0x1bc] sm:$0xf]
    %v9226 = vld [vmem:[%s9161 + $0x1c0] sm:$0xff]
    %v9227 = vld [vmem:[%s9161 + $0x1c8] sm:$0xff]
    %v9228 = vld [vmem:[%s9161 + $0x1d0] sm:$0xff]
    %v9229 = vld [vmem:[%s9161 + $0x1d8] sm:$0xf]
    %v9230 = vld [vmem:[%s9161 + $0x1dc] sm:$0xff]
    %v9231 = vld [vmem:[%s9161 + $0x1e4] sm:$0xff]
    %v9232 = vld [vmem:[%s9161 + $0x1ec] sm:$0xff]
    %v9233 = vld [vmem:[%s9161 + $0x1f4] sm:$0xf]
    %v9234 = vld [vmem:[%s9161 + $0x1f8] sm:$0xff]
    %v9235 = vld [vmem:[%s9161 + $0x200] sm:$0xff]
    %v9236 = vld [vmem:[%s9161 + $0x208] sm:$0xff]
    %v9237 = vld [vmem:[%s9161 + $0x210] sm:$0xf]
    %v9238 = vld [vmem:[%s9161 + $0x214] sm:$0xff]
    %v9239 = vld [vmem:[%s9161 + $0x21c] sm:$0xff]
    %v9240 = vld [vmem:[%s9161 + $0x224] sm:$0xff]
    %v9241 = vld [vmem:[%s9161 + $0x22c] sm:$0xf]
    %v9242 = vld [vmem:[%s9161 + $0x230] sm:$0xff]
    %v9243 = vld [vmem:[%s9161 + $0x238] sm:$0xff]
    %v9244 = vld [vmem:[%s9161 + $0x240] sm:$0xff]
    %v9245 = vld [vmem:[%s9161 + $0x248] sm:$0xf]
    %v9246 = vld [vmem:[%s9161 + $0x24c] sm:$0xff]
    %v9247 = vld [vmem:[%s9161 + $0x254] sm:$0xff]
    %v9248 = vld [vmem:[%s9161 + $0x25c] sm:$0xff]
    %v9249 = vld [vmem:[%s9161 + $0x264] sm:$0xf]
    %v9250 = vld [vmem:[%s9161 + $0x268] sm:$0xff]
    %v9251 = vld [vmem:[%s9161 + $0x270] sm:$0xff]
    %v9252 = vld [vmem:[%s9161 + $0x278] sm:$0xff]
    %v9253 = vld [vmem:[%s9161 + $0x280] sm:$0xf]
    %v9254 = vld [vmem:[%s9161 + $0x284] sm:$0xff]
    %v9255 = vld [vmem:[%s9161 + $0x28c] sm:$0xff]
    %v9256 = vld [vmem:[%s9161 + $0x294] sm:$0xff]
    %v9257 = vld [vmem:[%s9161 + $0x29c] sm:$0xf]
    %v9258 = vld [vmem:[%s9161 + $0x2a0] sm:$0x33]
    %v9259 = vld [vmem:[%s9161 + $0x2a8] sm:$0x33]
    %v9260 = vld [vmem:[%s9161 + $0x2b0] sm:$0x33]
    %v9261 = vld [vmem:[%s9161 + $0x2b8] sm:$0x3]
    %v9362 = vunpack.c.l.b16 %v9162
    %v9363 = vunpack.c.h.b16 %v9162
    %v9364 = vunpack.c.l.b16 %v9163
    %v9365 = vunpack.c.h.b16 %v9163
    %v9366 = vunpack.c.l.b16 %v9164
    %v9367 = vunpack.c.h.b16 %v9164
    %v9368 = vunpack.c.l.b16 %v9165
    %v9369 = vunpack.c.l.b16 %v9166
    %v9370 = vunpack.c.h.b16 %v9166
    %v9371 = vunpack.c.l.b16 %v9167
    %v9372 = vunpack.c.h.b16 %v9167
    %v9373 = vunpack.c.l.b16 %v9168
    %v9374 = vunpack.c.h.b16 %v9168
    %v9375 = vunpack.c.l.b16 %v9169
    %v9376 = vunpack.c.l.b16 %v9170
    %v9377 = vunpack.c.h.b16 %v9170
    %v9378 = vunpack.c.l.b16 %v9171
    %v9379 = vunpack.c.h.b16 %v9171
    %v9380 = vunpack.c.l.b16 %v9172
    %v9381 = vunpack.c.h.b16 %v9172
    %v9382 = vunpack.c.l.b16 %v9173
    %v9383 = vunpack.c.l.b16 %v9174
    %v9384 = vunpack.c.h.b16 %v9174
    %v9385 = vunpack.c.l.b16 %v9175
    %v9386 = vunpack.c.h.b16 %v9175
    %v9387 = vunpack.c.l.b16 %v9176
    %v9388 = vunpack.c.h.b16 %v9176
    %v9389 = vunpack.c.l.b16 %v9177
    %v9390 = vunpack.c.l.b16 %v9178
    %v9391 = vunpack.c.h.b16 %v9178
    %v9392 = vunpack.c.l.b16 %v9179
    %v9393 = vunpack.c.h.b16 %v9179
    %v9394 = vunpack.c.l.b16 %v9180
    %v9395 = vunpack.c.h.b16 %v9180
    %v9396 = vunpack.c.l.b16 %v9181
    %v9397 = vunpack.c.l.b16 %v9182
    %v9398 = vunpack.c.h.b16 %v9182
    %v9399 = vunpack.c.l.b16 %v9183
    %v9400 = vunpack.c.h.b16 %v9183
    %v9401 = vunpack.c.l.b16 %v9184
    %v9402 = vunpack.c.h.b16 %v9184
    %v9403 = vunpack.c.l.b16 %v9185
    %v9404 = vunpack.c.l.b16 %v9186
    %v9405 = vunpack.c.h.b16 %v9186
    %v9406 = vunpack.c.l.b16 %v9187
    %v9407 = vunpack.c.h.b16 %v9187
    %v9408 = vunpack.c.l.b16 %v9188
    %v9409 = vunpack.c.h.b16 %v9188
    %v9410 = vunpack.c.l.b16 %v9189
    %v9411 = vunpack.c.l.b16 %v9190
    %v9412 = vunpack.c.h.b16 %v9190
    %v9413 = vunpack.c.l.b16 %v9191
    %v9414 = vunpack.c.h.b16 %v9191
    %v9415 = vunpack.c.l.b16 %v9192
    %v9416 = vunpack.c.h.b16 %v9192
    %v9417 = vunpack.c.l.b16 %v9193
    %v9418 = vunpack.c.l.b16 %v9194
    %v9419 = vunpack.c.h.b16 %v9194
    %v9420 = vunpack.c.l.b16 %v9195
    %v9421 = vunpack.c.h.b16 %v9195
    %v9422 = vunpack.c.l.b16 %v9196
    %v9423 = vunpack.c.h.b16 %v9196
    %v9424 = vunpack.c.l.b16 %v9197
    %v9425 = vunpack.c.l.b16 %v9198
    %v9426 = vunpack.c.h.b16 %v9198
    %v9427 = vunpack.c.l.b16 %v9199
    %v9428 = vunpack.c.h.b16 %v9199
    %v9429 = vunpack.c.l.b16 %v9200
    %v9430 = vunpack.c.h.b16 %v9200
    %v9431 = vunpack.c.l.b16 %v9201
    %v9432 = vunpack.c.l.b16 %v9202
    %v9433 = vunpack.c.h.b16 %v9202
    %v9434 = vunpack.c.l.b16 %v9203
    %v9435 = vunpack.c.h.b16 %v9203
    %v9436 = vunpack.c.l.b16 %v9204
    %v9437 = vunpack.c.h.b16 %v9204
    %v9438 = vunpack.c.l.b16 %v9205
    %v9439 = vunpack.c.l.b16 %v9206
    %v9440 = vunpack.c.h.b16 %v9206
    %v9441 = vunpack.c.l.b16 %v9207
    %v9442 = vunpack.c.h.b16 %v9207
    %v9443 = vunpack.c.l.b16 %v9208
    %v9444 = vunpack.c.h.b16 %v9208
    %v9445 = vunpack.c.l.b16 %v9209
    %v9446 = vunpack.c.l.b16 %v9210
    %v9447 = vunpack.c.h.b16 %v9210
    %v9448 = vunpack.c.l.b16 %v9211
    %v9449 = vunpack.c.h.b16 %v9211
    %v9450 = vunpack.c.l.b16 %v9212
    %v9451 = vunpack.c.h.b16 %v9212
    %v9452 = vunpack.c.l.b16 %v9213
    %v9453 = vunpack.c.l.b16 %v9214
    %v9454 = vunpack.c.h.b16 %v9214
    %v9455 = vunpack.c.l.b16 %v9215
    %v9456 = vunpack.c.h.b16 %v9215
    %v9457 = vunpack.c.l.b16 %v9216
    %v9458 = vunpack.c.h.b16 %v9216
    %v9459 = vunpack.c.l.b16 %v9217
    %v9460 = vunpack.c.l.b16 %v9218
    %v9461 = vunpack.c.h.b16 %v9218
    %v9462 = vunpack.c.l.b16 %v9219
    %v9463 = vunpack.c.h.b16 %v9219
    %v9464 = vunpack.c.l.b16 %v9220
    %v9465 = vunpack.c.h.b16 %v9220
    %v9466 = vunpack.c.l.b16 %v9221
    %v9467 = vunpack.c.l.b16 %v9222
    %v9468 = vunpack.c.h.b16 %v9222
    %v9469 = vunpack.c.l.b16 %v9223
    %v9470 = vunpack.c.h.b16 %v9223
    %v9471 = vunpack.c.l.b16 %v9224
    %v9472 = vunpack.c.h.b16 %v9224
    %v9473 = vunpack.c.l.b16 %v9225
    %v9474 = vunpack.c.l.b16 %v9226
    %v9475 = vunpack.c.h.b16 %v9226
    %v9476 = vunpack.c.l.b16 %v9227
    %v9477 = vunpack.c.h.b16 %v9227
    %v9478 = vunpack.c.l.b16 %v9228
    %v9479 = vunpack.c.h.b16 %v9228
    %v9480 = vunpack.c.l.b16 %v9229
    %v9481 = vunpack.c.l.b16 %v9230
    %v9482 = vunpack.c.h.b16 %v9230
    %v9483 = vunpack.c.l.b16 %v9231
    %v9484 = vunpack.c.h.b16 %v9231
    %v9485 = vunpack.c.l.b16 %v9232
    %v9486 = vunpack.c.h.b16 %v9232
    %v9487 = vunpack.c.l.b16 %v9233
    %v9488 = vunpack.c.l.b16 %v9234
    %v9489 = vunpack.c.h.b16 %v9234
    %v9490 = vunpack.c.l.b16 %v9235
    %v9491 = vunpack.c.h.b16 %v9235
    %v9492 = vunpack.c.l.b16 %v9236
    %v9493 = vunpack.c.h.b16 %v9236
    %v9494 = vunpack.c.l.b16 %v9237
    %v9495 = vunpack.c.l.b16 %v9238
    %v9496 = vunpack.c.h.b16 %v9238
    %v9497 = vunpack.c.l.b16 %v9239
    %v9498 = vunpack.c.h.b16 %v9239
    %v9499 = vunpack.c.l.b16 %v9240
    %v9500 = vunpack.c.h.b16 %v9240
    %v9501 = vunpack.c.l.b16 %v9241
    %v9502 = vunpack.c.l.b16 %v9242
    %v9503 = vunpack.c.h.b16 %v9242
    %v9504 = vunpack.c.l.b16 %v9243
    %v9505 = vunpack.c.h.b16 %v9243
    %v9506 = vunpack.c.l.b16 %v9244
    %v9507 = vunpack.c.h.b16 %v9244
    %v9508 = vunpack.c.l.b16 %v9245
    %v9509 = vunpack.c.l.b16 %v9246
    %v9510 = vunpack.c.h.b16 %v9246
    %v9511 = vunpack.c.l.b16 %v9247
    %v9512 = vunpack.c.h.b16 %v9247
    %v9513 = vunpack.c.l.b16 %v9248
    %v9514 = vunpack.c.h.b16 %v9248
    %v9515 = vunpack.c.l.b16 %v9249
    %v9516 = vunpack.c.l.b16 %v9250
    %v9517 = vunpack.c.h.b16 %v9250
    %v9518 = vunpack.c.l.b16 %v9251
    %v9519 = vunpack.c.h.b16 %v9251
    %v9520 = vunpack.c.l.b16 %v9252
    %v9521 = vunpack.c.h.b16 %v9252
    %v9522 = vunpack.c.l.b16 %v9253
    %v9523 = vunpack.c.l.b16 %v9254
    %v9524 = vunpack.c.h.b16 %v9254
    %v9525 = vunpack.c.l.b16 %v9255
    %v9526 = vunpack.c.h.b16 %v9255
    %v9527 = vunpack.c.l.b16 %v9256
    %v9528 = vunpack.c.h.b16 %v9256
    %v9529 = vunpack.c.l.b16 %v9257
    %v9530 = vunpack.c.l.b16 %v9258
    %v9531 = vunpack.c.h.b16 %v9258
    %v9532 = vunpack.c.l.b16 %v9259
    %v9533 = vunpack.c.h.b16 %v9259
    %v9534 = vunpack.c.l.b16 %v9260
    %v9535 = vunpack.c.h.b16 %v9260
    %v9536 = vunpack.c.l.b16 %v9261
    %v9537 = vpack.c.b16 %v9369, %v9362
    %v9538 = vpack.c.b16 %v9370, %v9363
    %v9539 = vpack.c.b16 %v9371, %v9364
    %v9540 = vpack.c.b16 %v9372, %v9365
    %v9541 = vpack.c.b16 %v9373, %v9366
    %v9542 = vpack.c.b16 %v9374, %v9367
    %v9543 = vpack.c.b16 %v9375, %v9368
    %v9544 = vpack.c.b16 %v9383, %v9376
    %v9545 = vpack.c.b16 %v9384, %v9377
    %v9546 = vpack.c.b16 %v9385, %v9378
    %v9547 = vpack.c.b16 %v9386, %v9379
    %v9548 = vpack.c.b16 %v9387, %v9380
    %v9549 = vpack.c.b16 %v9388, %v9381
    %v9550 = vpack.c.b16 %v9389, %v9382
    %v9551 = vpack.c.b16 %v9397, %v9390
    %v9552 = vpack.c.b16 %v9398, %v9391
    %v9553 = vpack.c.b16 %v9399, %v9392
    %v9554 = vpack.c.b16 %v9400, %v9393
    %v9555 = vpack.c.b16 %v9401, %v9394
    %v9556 = vpack.c.b16 %v9402, %v9395
    %v9557 = vpack.c.b16 %v9403, %v9396
    %v9558 = vpack.c.b16 %v9411, %v9404
    %v9559 = vpack.c.b16 %v9412, %v9405
    %v9560 = vpack.c.b16 %v9413, %v9406
    %v9561 = vpack.c.b16 %v9414, %v9407
    %v9562 = vpack.c.b16 %v9415, %v9408
    %v9563 = vpack.c.b16 %v9416, %v9409
    %v9564 = vpack.c.b16 %v9417, %v9410
    %v9565 = vpack.c.b16 %v9425, %v9418
    %v9566 = vpack.c.b16 %v9426, %v9419
    %v9567 = vpack.c.b16 %v9427, %v9420
    %v9568 = vpack.c.b16 %v9428, %v9421
    %v9569 = vpack.c.b16 %v9429, %v9422
    %v9570 = vpack.c.b16 %v9430, %v9423
    %v9571 = vpack.c.b16 %v9431, %v9424
    %v9572 = vpack.c.b16 %v9439, %v9432
    %v9573 = vpack.c.b16 %v9440, %v9433
    %v9574 = vpack.c.b16 %v9441, %v9434
    %v9575 = vpack.c.b16 %v9442, %v9435
    %v9576 = vpack.c.b16 %v9443, %v9436
    %v9577 = vpack.c.b16 %v9444, %v9437
    %v9578 = vpack.c.b16 %v9445, %v9438
    %v9579 = vpack.c.b16 %v9453, %v9446
    %v9580 = vpack.c.b16 %v9454, %v9447
    %v9581 = vpack.c.b16 %v9455, %v9448
    %v9582 = vpack.c.b16 %v9456, %v9449
    %v9583 = vpack.c.b16 %v9457, %v9450
    %v9584 = vpack.c.b16 %v9458, %v9451
    %v9585 = vpack.c.b16 %v9459, %v9452
    %v9586 = vpack.c.b16 %v9467, %v9460
    %v9587 = vpack.c.b16 %v9468, %v9461
    %v9588 = vpack.c.b16 %v9469, %v9462
    %v9589 = vpack.c.b16 %v9470, %v9463
    %v9590 = vpack.c.b16 %v9471, %v9464
    %v9591 = vpack.c.b16 %v9472, %v9465
    %v9592 = vpack.c.b16 %v9473, %v9466
    %v9593 = vpack.c.b16 %v9481, %v9474
    %v9594 = vpack.c.b16 %v9482, %v9475
    %v9595 = vpack.c.b16 %v9483, %v9476
    %v9596 = vpack.c.b16 %v9484, %v9477
    %v9597 = vpack.c.b16 %v9485, %v9478
    %v9598 = vpack.c.b16 %v9486, %v9479
    %v9599 = vpack.c.b16 %v9487, %v9480
    %v9600 = vpack.c.b16 %v9495, %v9488
    %v9601 = vpack.c.b16 %v9496, %v9489
    %v9602 = vpack.c.b16 %v9497, %v9490
    %v9603 = vpack.c.b16 %v9498, %v9491
    %v9604 = vpack.c.b16 %v9499, %v9492
    %v9605 = vpack.c.b16 %v9500, %v9493
    %v9606 = vpack.c.b16 %v9501, %v9494
    %v9607 = vpack.c.b16 %v9509, %v9502
    %v9608 = vpack.c.b16 %v9510, %v9503
    %v9609 = vpack.c.b16 %v9511, %v9504
    %v9610 = vpack.c.b16 %v9512, %v9505
    %v9611 = vpack.c.b16 %v9513, %v9506
    %v9612 = vpack.c.b16 %v9514, %v9507
    %v9613 = vpack.c.b16 %v9515, %v9508
    %v9614 = vpack.c.b16 %v9523, %v9516
    %v9615 = vpack.c.b16 %v9524, %v9517
    %v9616 = vpack.c.b16 %v9525, %v9518
    %v9617 = vpack.c.b16 %v9526, %v9519
    %v9618 = vpack.c.b16 %v9527, %v9520
    %v9619 = vpack.c.b16 %v9528, %v9521
    %v9620 = vpack.c.b16 %v9529, %v9522
    %v9621 = vpack.c.b16 %v9530, %v9530
    %v9622 = vpack.c.b16 %v9531, %v9531
    %v9623 = vpack.c.b16 %v9532, %v9532
    %v9624 = vpack.c.b16 %v9533, %v9533
    %v9625 = vpack.c.b16 %v9534, %v9534
    %v9626 = vpack.c.b16 %v9535, %v9535
    %v9627 = vpack.c.b16 %v9536, %v9536
    %v9713 = vsel %vm5067, %v9160, 0
    %v9716 = vsel %vm572, %v9621, 0
    %v9719 = vsel %vm572, %v9622, 0
    %v9722 = vsel %vm572, %v9623, 0
    %v9725 = vsel %vm572, %v9624, 0
    %v9728 = vsel %vm572, %v9625, 0
    %v9731 = vsel %vm572, %v9626, 0
    %v9734 = vsel %vm572, %v9627, 0
    %9736 = vmatpush.bf16.msra.mxu0 %v9586
    %9737 = vmatpush.bf16.msra.mxu0 %v9579
    %9738 = vmatpush.bf16.msra.mxu0 %v9572
    %9739 = vmatpush.bf16.msra.mxu0 %v9565
    %9740 = vmatpush.bf16.msra.mxu0 %v9558
    %9741 = vmatpush.bf16.msra.mxu0 %v9551
    %9742 = vmatpush.bf16.msra.mxu0 %v9544
    %9743 = vmatpush.bf16.msra.mxu0 %v9537
    %9744 = vmatmul.bf16.gmra.mxu0 %v9159
    %v9745 = vpop.f32.mrf.mxu0
    %v9746 = vadd.f32 0.0, %v9745
    %v9747 = vpop.f32.mrf.mxu0
    %v9748 = vadd.f32 0.0, %v9747
    %9749 = vdwg.mxu0
    %9750 = vmatpush.bf16.msra.mxu0 0
    %9751 = vmatpush.bf16.msra.mxu0 0
    %9752 = vmatpush.bf16.msra.mxu0 0
    %9753 = vmatpush.bf16.msra.mxu0 %v9716
    %9754 = vmatpush.bf16.msra.mxu0 %v9614
    %9755 = vmatpush.bf16.msra.mxu0 %v9607
    %9756 = vmatpush.bf16.msra.mxu0 %v9600
    %9757 = vmatpush.bf16.msra.mxu0 %v9593
    %9758 = vmatmul.bf16.gmra.mxu0 %v9713
    %v9759 = vpop.f32.mrf.mxu0
    %v9760 = vadd.f32 %v9746, %v9759
    %v9761 = vpop.f32.mrf.mxu0
    %v9762 = vadd.f32 %v9748, %v9761
    %9763 = vdwg.mxu0
    %9764 = vmatpush.bf16.msra.mxu0 %v9587
    %9765 = vmatpush.bf16.msra.mxu0 %v9580
    %9766 = vmatpush.bf16.msra.mxu0 %v9573
    %9767 = vmatpush.bf16.msra.mxu0 %v9566
    %9768 = vmatpush.bf16.msra.mxu0 %v9559
    %9769 = vmatpush.bf16.msra.mxu0 %v9552
    %9770 = vmatpush.bf16.msra.mxu0 %v9545
    %9771 = vmatpush.bf16.msra.mxu0 %v9538
    %9772 = vmatmul.bf16.gmra.mxu0 %v9159
    %v9773 = vpop.f32.mrf.mxu0
    %v9774 = vadd.f32 0.0, %v9773
    %v9775 = vpop.f32.mrf.mxu0
    %v9776 = vadd.f32 0.0, %v9775
    %9777 = vdwg.mxu0
    %9778 = vmatpush.bf16.msra.mxu0 0
    %9779 = vmatpush.bf16.msra.mxu0 0
    %9780 = vmatpush.bf16.msra.mxu0 0
    %9781 = vmatpush.bf16.msra.mxu0 %v9719
    %9782 = vmatpush.bf16.msra.mxu0 %v9615
    %9783 = vmatpush.bf16.msra.mxu0 %v9608
    %9784 = vmatpush.bf16.msra.mxu0 %v9601
    %9785 = vmatpush.bf16.msra.mxu0 %v9594
    %9786 = vmatmul.bf16.gmra.mxu0 %v9713
    %v9787 = vpop.f32.mrf.mxu0
    %v9788 = vadd.f32 %v9774, %v9787
    %v9789 = vpop.f32.mrf.mxu0
    %v9790 = vadd.f32 %v9776, %v9789
    %9791 = vdwg.mxu0
    %9792 = vmatpush.bf16.msra.mxu0 %v9588
    %9793 = vmatpush.bf16.msra.mxu0 %v9581
    %9794 = vmatpush.bf16.msra.mxu0 %v9574
    %9795 = vmatpush.bf16.msra.mxu0 %v9567
    %9796 = vmatpush.bf16.msra.mxu0 %v9560
    %9797 = vmatpush.bf16.msra.mxu0 %v9553
    %9798 = vmatpush.bf16.msra.mxu0 %v9546
    %9799 = vmatpush.bf16.msra.mxu0 %v9539
    %9800 = vmatmul.bf16.gmra.mxu0 %v9159
    %v9801 = vpop.f32.mrf.mxu0
    %v9802 = vadd.f32 0.0, %v9801
    %v9803 = vpop.f32.mrf.mxu0
    %v9804 = vadd.f32 0.0, %v9803
    %9805 = vdwg.mxu0
    %9806 = vmatpush.bf16.msra.mxu0 0
    %9807 = vmatpush.bf16.msra.mxu0 0
    %9808 = vmatpush.bf16.msra.mxu0 0
    %9809 = vmatpush.bf16.msra.mxu0 %v9722
    %9810 = vmatpush.bf16.msra.mxu0 %v9616
    %9811 = vmatpush.bf16.msra.mxu0 %v9609
    %9812 = vmatpush.bf16.msra.mxu0 %v9602
    %9813 = vmatpush.bf16.msra.mxu0 %v9595
    %9814 = vmatmul.bf16.gmra.mxu0 %v9713
    %v9815 = vpop.f32.mrf.mxu0
    %v9816 = vadd.f32 %v9802, %v9815
    %v9817 = vpop.f32.mrf.mxu0
    %v9818 = vadd.f32 %v9804, %v9817
    %9819 = vdwg.mxu0
    %9820 = vmatpush.bf16.msra.mxu0 %v9589
    %9821 = vmatpush.bf16.msra.mxu0 %v9582
    %9822 = vmatpush.bf16.msra.mxu0 %v9575
    %9823 = vmatpush.bf16.msra.mxu0 %v9568
    %9824 = vmatpush.bf16.msra.mxu0 %v9561
    %9825 = vmatpush.bf16.msra.mxu0 %v9554
    %9826 = vmatpush.bf16.msra.mxu0 %v9547
    %9827 = vmatpush.bf16.msra.mxu0 %v9540
    %9828 = vmatmul.bf16.gmra.mxu0 %v9159
    %v9829 = vpop.f32.mrf.mxu0
    %v9830 = vadd.f32 0.0, %v9829
    %v9831 = vpop.f32.mrf.mxu0
    %v9832 = vadd.f32 0.0, %v9831
    %9833 = vdwg.mxu0
    %9834 = vmatpush.bf16.msra.mxu0 0
    %9835 = vmatpush.bf16.msra.mxu0 0
    %9836 = vmatpush.bf16.msra.mxu0 0
    %9837 = vmatpush.bf16.msra.mxu0 %v9725
    %9838 = vmatpush.bf16.msra.mxu0 %v9617
    %9839 = vmatpush.bf16.msra.mxu0 %v9610
    %9840 = vmatpush.bf16.msra.mxu0 %v9603
    %9841 = vmatpush.bf16.msra.mxu0 %v9596
    %9842 = vmatmul.bf16.gmra.mxu0 %v9713
    %v9843 = vpop.f32.mrf.mxu0
    %v9844 = vadd.f32 %v9830, %v9843
    %v9845 = vpop.f32.mrf.mxu0
    %v9846 = vadd.f32 %v9832, %v9845
    %9847 = vdwg.mxu0
    %9848 = vmatpush.bf16.msra.mxu0 %v9590
    %9849 = vmatpush.bf16.msra.mxu0 %v9583
    %9850 = vmatpush.bf16.msra.mxu0 %v9576
    %9851 = vmatpush.bf16.msra.mxu0 %v9569
    %9852 = vmatpush.bf16.msra.mxu0 %v9562
    %9853 = vmatpush.bf16.msra.mxu0 %v9555
    %9854 = vmatpush.bf16.msra.mxu0 %v9548
    %9855 = vmatpush.bf16.msra.mxu0 %v9541
    %9856 = vmatmul.bf16.gmra.mxu0 %v9159
    %v9857 = vpop.f32.mrf.mxu0
    %v9858 = vadd.f32 0.0, %v9857
    %v9859 = vpop.f32.mrf.mxu0
    %v9860 = vadd.f32 0.0, %v9859
    %9861 = vdwg.mxu0
    %9862 = vmatpush.bf16.msra.mxu0 0
    %9863 = vmatpush.bf16.msra.mxu0 0
    %9864 = vmatpush.bf16.msra.mxu0 0
    %9865 = vmatpush.bf16.msra.mxu0 %v9728
    %9866 = vmatpush.bf16.msra.mxu0 %v9618
    %9867 = vmatpush.bf16.msra.mxu0 %v9611
    %9868 = vmatpush.bf16.msra.mxu0 %v9604
    %9869 = vmatpush.bf16.msra.mxu0 %v9597
    %9870 = vmatmul.bf16.gmra.mxu0 %v9713
    %v9871 = vpop.f32.mrf.mxu0
    %v9872 = vadd.f32 %v9858, %v9871
    %v9873 = vpop.f32.mrf.mxu0
    %v9874 = vadd.f32 %v9860, %v9873
    %9875 = vdwg.mxu0
    %9876 = vmatpush.bf16.msra.mxu0 %v9591
    %9877 = vmatpush.bf16.msra.mxu0 %v9584
    %9878 = vmatpush.bf16.msra.mxu0 %v9577
    %9879 = vmatpush.bf16.msra.mxu0 %v9570
    %9880 = vmatpush.bf16.msra.mxu0 %v9563
    %9881 = vmatpush.bf16.msra.mxu0 %v9556
    %9882 = vmatpush.bf16.msra.mxu0 %v9549
    %9883 = vmatpush.bf16.msra.mxu0 %v9542
    %9884 = vmatmul.bf16.gmra.mxu0 %v9159
    %v9885 = vpop.f32.mrf.mxu0
    %v9886 = vadd.f32 0.0, %v9885
    %v9887 = vpop.f32.mrf.mxu0
    %v9888 = vadd.f32 0.0, %v9887
    %9889 = vdwg.mxu0
    %9890 = vmatpush.bf16.msra.mxu0 0
    %9891 = vmatpush.bf16.msra.mxu0 0
    %9892 = vmatpush.bf16.msra.mxu0 0
    %9893 = vmatpush.bf16.msra.mxu0 %v9731
    %9894 = vmatpush.bf16.msra.mxu0 %v9619
    %9895 = vmatpush.bf16.msra.mxu0 %v9612
    %9896 = vmatpush.bf16.msra.mxu0 %v9605
    %9897 = vmatpush.bf16.msra.mxu0 %v9598
    %9898 = vmatmul.bf16.gmra.mxu0 %v9713
    %v9899 = vpop.f32.mrf.mxu0
    %v9900 = vadd.f32 %v9886, %v9899
    %v9901 = vpop.f32.mrf.mxu0
    %v9902 = vadd.f32 %v9888, %v9901
    %9903 = vdwg.mxu0
    %9904 = vmatpush.bf16.msra.mxu0 %v9592
    %9905 = vmatpush.bf16.msra.mxu0 %v9585
    %9906 = vmatpush.bf16.msra.mxu0 %v9578
    %9907 = vmatpush.bf16.msra.mxu0 %v9571
    %9908 = vmatpush.bf16.msra.mxu0 %v9564
    %9909 = vmatpush.bf16.msra.mxu0 %v9557
    %9910 = vmatpush.bf16.msra.mxu0 %v9550
    %9911 = vmatpush.bf16.msra.mxu0 %v9543
    %9912 = vmatmul.bf16.gmra.mxu0 %v9159
    %v9913 = vpop.f32.mrf.mxu0
    %v9914 = vadd.f32 0.0, %v9913
    %v9915 = vpop.f32.mrf.mxu0
    %v9916 = vadd.f32 0.0, %v9915
    %9917 = vdwg.mxu0
    %9918 = vmatpush.bf16.msra.mxu0 0
    %9919 = vmatpush.bf16.msra.mxu0 0
    %9920 = vmatpush.bf16.msra.mxu0 0
    %9921 = vmatpush.bf16.msra.mxu0 %v9734
    %9922 = vmatpush.bf16.msra.mxu0 %v9620
    %9923 = vmatpush.bf16.msra.mxu0 %v9613
    %9924 = vmatpush.bf16.msra.mxu0 %v9606
    %9925 = vmatpush.bf16.msra.mxu0 %v9599
    %9926 = vmatmul.bf16.gmra.mxu0 %v9713
    %v9927 = vpop.f32.mrf.mxu0
    %v9928 = vadd.f32 %v9914, %v9927
    %v9929 = vpop.f32.mrf.mxu0
    %v9930 = vadd.f32 %v9916, %v9929
    %9931 = vdwg.mxu0
    %v9932 = vadd.f32 %v9141, %v9760
    %v9933 = vadd.f32 %v9142, %v9788
    %v9934 = vadd.f32 %v9143, %v9816
    %v9935 = vadd.f32 %v9144, %v9844
    %v9936 = vadd.f32 %v9145, %v9872
    %v9937 = vadd.f32 %v9146, %v9900
    %v9938 = vadd.f32 %v9147, %v9928
    %v9939 = vadd.f32 %v9148, %v9762
    %v9940 = vadd.f32 %v9149, %v9790
    %v9941 = vadd.f32 %v9150, %v9818
    %v9942 = vadd.f32 %v9151, %v9846
    %v9943 = vadd.f32 %v9152, %v9874
    %v9944 = vadd.f32 %v9153, %v9902
    %v9945 = vadd.f32 %v9154, %v9930
    %v9946 = vld [vmem:[#allocation4 + $0x60] sm:$0xff]
    %v9947 = vld [vmem:[#allocation4 + $0x68] sm:$0xff]
    %v9948 = vld [vmem:[#allocation4 + $0xf0] sm:$0xff]
    %v9949 = vld [vmem:[#allocation4 + $0xf8] sm:$0xff]
    %v9950 = vpack.c.bf16 %v9948, %v9946
    %v9951 = vpack.c.bf16 %v9949, %v9947
    %s9952 = scalar_lea.vmem [#allocation5], 4200
    %v9953 = vld [vmem:[%s9952] sm:$0xff]
    %v9954 = vld [vmem:[%s9952 + $0x8] sm:$0xff]
    %v9955 = vld [vmem:[%s9952 + $0x10] sm:$0xff]
    %v9956 = vld [vmem:[%s9952 + $0x18] sm:$0xf]
    %v9957 = vld [vmem:[%s9952 + $0x1c] sm:$0xff]
    %v9958 = vld [vmem:[%s9952 + $0x24] sm:$0xff]
    %v9959 = vld [vmem:[%s9952 + $0x2c] sm:$0xff]
    %v9960 = vld [vmem:[%s9952 + $0x34] sm:$0xf]
    %v9961 = vld [vmem:[%s9952 + $0x38] sm:$0xff]
    %v9962 = vld [vmem:[%s9952 + $0x40] sm:$0xff]
    %v9963 = vld [vmem:[%s9952 + $0x48] sm:$0xff]
    %v9964 = vld [vmem:[%s9952 + $0x50] sm:$0xf]
    %v9965 = vld [vmem:[%s9952 + $0x54] sm:$0xff]
    %v9966 = vld [vmem:[%s9952 + $0x5c] sm:$0xff]
    %v9967 = vld [vmem:[%s9952 + $0x64] sm:$0xff]
    %v9968 = vld [vmem:[%s9952 + $0x6c] sm:$0xf]
    %v9969 = vld [vmem:[%s9952 + $0x70] sm:$0xff]
    %v9970 = vld [vmem:[%s9952 + $0x78] sm:$0xff]
    %v9971 = vld [vmem:[%s9952 + $0x80] sm:$0xff]
    %v9972 = vld [vmem:[%s9952 + $0x88] sm:$0xf]
    %v9973 = vld [vmem:[%s9952 + $0x8c] sm:$0xff]
    %v9974 = vld [vmem:[%s9952 + $0x94] sm:$0xff]
    %v9975 = vld [vmem:[%s9952 + $0x9c] sm:$0xff]
    %v9976 = vld [vmem:[%s9952 + $0xa4] sm:$0xf]
    %v9977 = vld [vmem:[%s9952 + $0xa8] sm:$0xff]
    %v9978 = vld [vmem:[%s9952 + $0xb0] sm:$0xff]
    %v9979 = vld [vmem:[%s9952 + $0xb8] sm:$0xff]
    %v9980 = vld [vmem:[%s9952 + $0xc0] sm:$0xf]
    %v9981 = vld [vmem:[%s9952 + $0xc4] sm:$0xff]
    %v9982 = vld [vmem:[%s9952 + $0xcc] sm:$0xff]
    %v9983 = vld [vmem:[%s9952 + $0xd4] sm:$0xff]
    %v9984 = vld [vmem:[%s9952 + $0xdc] sm:$0xf]
    %v9985 = vld [vmem:[%s9952 + $0xe0] sm:$0xff]
    %v9986 = vld [vmem:[%s9952 + $0xe8] sm:$0xff]
    %v9987 = vld [vmem:[%s9952 + $0xf0] sm:$0xff]
    %v9988 = vld [vmem:[%s9952 + $0xf8] sm:$0xf]
    %v9989 = vld [vmem:[%s9952 + $0xfc] sm:$0xff]
    %v9990 = vld [vmem:[%s9952 + $0x104] sm:$0xff]
    %v9991 = vld [vmem:[%s9952 + $0x10c] sm:$0xff]
    %v9992 = vld [vmem:[%s9952 + $0x114] sm:$0xf]
    %v9993 = vld [vmem:[%s9952 + $0x118] sm:$0xff]
    %v9994 = vld [vmem:[%s9952 + $0x120] sm:$0xff]
    %v9995 = vld [vmem:[%s9952 + $0x128] sm:$0xff]
    %v9996 = vld [vmem:[%s9952 + $0x130] sm:$0xf]
    %v9997 = vld [vmem:[%s9952 + $0x134] sm:$0xff]
    %v9998 = vld [vmem:[%s9952 + $0x13c] sm:$0xff]
    %v9999 = vld [vmem:[%s9952 + $0x144] sm:$0xff]
    %v10000 = vld [vmem:[%s9952 + $0x14c] sm:$0xf]
    %v10001 = vld [vmem:[%s9952 + $0x150] sm:$0xff]
    %v10002 = vld [vmem:[%s9952 + $0x158] sm:$0xff]
    %v10003 = vld [vmem:[%s9952 + $0x160] sm:$0xff]
    %v10004 = vld [vmem:[%s9952 + $0x168] sm:$0xf]
    %v10005 = vld [vmem:[%s9952 + $0x16c] sm:$0xff]
    %v10006 = vld [vmem:[%s9952 + $0x174] sm:$0xff]
    %v10007 = vld [vmem:[%s9952 + $0x17c] sm:$0xff]
    %v10008 = vld [vmem:[%s9952 + $0x184] sm:$0xf]
    %v10009 = vld [vmem:[%s9952 + $0x188] sm:$0xff]
    %v10010 = vld [vmem:[%s9952 + $0x190] sm:$0xff]
    %v10011 = vld [vmem:[%s9952 + $0x198] sm:$0xff]
    %v10012 = vld [vmem:[%s9952 + $0x1a0] sm:$0xf]
    %v10013 = vld [vmem:[%s9952 + $0x1a4] sm:$0xff]
    %v10014 = vld [vmem:[%s9952 + $0x1ac] sm:$0xff]
    %v10015 = vld [vmem:[%s9952 + $0x1b4] sm:$0xff]
    %v10016 = vld [vmem:[%s9952 + $0x1bc] sm:$0xf]
    %v10017 = vld [vmem:[%s9952 + $0x1c0] sm:$0xff]
    %v10018 = vld [vmem:[%s9952 + $0x1c8] sm:$0xff]
    %v10019 = vld [vmem:[%s9952 + $0x1d0] sm:$0xff]
    %v10020 = vld [vmem:[%s9952 + $0x1d8] sm:$0xf]
    %v10021 = vld [vmem:[%s9952 + $0x1dc] sm:$0xff]
    %v10022 = vld [vmem:[%s9952 + $0x1e4] sm:$0xff]
    %v10023 = vld [vmem:[%s9952 + $0x1ec] sm:$0xff]
    %v10024 = vld [vmem:[%s9952 + $0x1f4] sm:$0xf]
    %v10025 = vld [vmem:[%s9952 + $0x1f8] sm:$0xff]
    %v10026 = vld [vmem:[%s9952 + $0x200] sm:$0xff]
    %v10027 = vld [vmem:[%s9952 + $0x208] sm:$0xff]
    %v10028 = vld [vmem:[%s9952 + $0x210] sm:$0xf]
    %v10029 = vld [vmem:[%s9952 + $0x214] sm:$0xff]
    %v10030 = vld [vmem:[%s9952 + $0x21c] sm:$0xff]
    %v10031 = vld [vmem:[%s9952 + $0x224] sm:$0xff]
    %v10032 = vld [vmem:[%s9952 + $0x22c] sm:$0xf]
    %v10033 = vld [vmem:[%s9952 + $0x230] sm:$0xff]
    %v10034 = vld [vmem:[%s9952 + $0x238] sm:$0xff]
    %v10035 = vld [vmem:[%s9952 + $0x240] sm:$0xff]
    %v10036 = vld [vmem:[%s9952 + $0x248] sm:$0xf]
    %v10037 = vld [vmem:[%s9952 + $0x24c] sm:$0xff]
    %v10038 = vld [vmem:[%s9952 + $0x254] sm:$0xff]
    %v10039 = vld [vmem:[%s9952 + $0x25c] sm:$0xff]
    %v10040 = vld [vmem:[%s9952 + $0x264] sm:$0xf]
    %v10041 = vld [vmem:[%s9952 + $0x268] sm:$0xff]
    %v10042 = vld [vmem:[%s9952 + $0x270] sm:$0xff]
    %v10043 = vld [vmem:[%s9952 + $0x278] sm:$0xff]
    %v10044 = vld [vmem:[%s9952 + $0x280] sm:$0xf]
    %v10045 = vld [vmem:[%s9952 + $0x284] sm:$0xff]
    %v10046 = vld [vmem:[%s9952 + $0x28c] sm:$0xff]
    %v10047 = vld [vmem:[%s9952 + $0x294] sm:$0xff]
    %v10048 = vld [vmem:[%s9952 + $0x29c] sm:$0xf]
    %v10049 = vld [vmem:[%s9952 + $0x2a0] sm:$0x33]
    %v10050 = vld [vmem:[%s9952 + $0x2a8] sm:$0x33]
    %v10051 = vld [vmem:[%s9952 + $0x2b0] sm:$0x33]
    %v10052 = vld [vmem:[%s9952 + $0x2b8] sm:$0x3]
    %v10153 = vunpack.c.l.b16 %v9953
    %v10154 = vunpack.c.h.b16 %v9953
    %v10155 = vunpack.c.l.b16 %v9954
    %v10156 = vunpack.c.h.b16 %v9954
    %v10157 = vunpack.c.l.b16 %v9955
    %v10158 = vunpack.c.h.b16 %v9955
    %v10159 = vunpack.c.l.b16 %v9956
    %v10160 = vunpack.c.l.b16 %v9957
    %v10161 = vunpack.c.h.b16 %v9957
    %v10162 = vunpack.c.l.b16 %v9958
    %v10163 = vunpack.c.h.b16 %v9958
    %v10164 = vunpack.c.l.b16 %v9959
    %v10165 = vunpack.c.h.b16 %v9959
    %v10166 = vunpack.c.l.b16 %v9960
    %v10167 = vunpack.c.l.b16 %v9961
    %v10168 = vunpack.c.h.b16 %v9961
    %v10169 = vunpack.c.l.b16 %v9962
    %v10170 = vunpack.c.h.b16 %v9962
    %v10171 = vunpack.c.l.b16 %v9963
    %v10172 = vunpack.c.h.b16 %v9963
    %v10173 = vunpack.c.l.b16 %v9964
    %v10174 = vunpack.c.l.b16 %v9965
    %v10175 = vunpack.c.h.b16 %v9965
    %v10176 = vunpack.c.l.b16 %v9966
    %v10177 = vunpack.c.h.b16 %v9966
    %v10178 = vunpack.c.l.b16 %v9967
    %v10179 = vunpack.c.h.b16 %v9967
    %v10180 = vunpack.c.l.b16 %v9968
    %v10181 = vunpack.c.l.b16 %v9969
    %v10182 = vunpack.c.h.b16 %v9969
    %v10183 = vunpack.c.l.b16 %v9970
    %v10184 = vunpack.c.h.b16 %v9970
    %v10185 = vunpack.c.l.b16 %v9971
    %v10186 = vunpack.c.h.b16 %v9971
    %v10187 = vunpack.c.l.b16 %v9972
    %v10188 = vunpack.c.l.b16 %v9973
    %v10189 = vunpack.c.h.b16 %v9973
    %v10190 = vunpack.c.l.b16 %v9974
    %v10191 = vunpack.c.h.b16 %v9974
    %v10192 = vunpack.c.l.b16 %v9975
    %v10193 = vunpack.c.h.b16 %v9975
    %v10194 = vunpack.c.l.b16 %v9976
    %v10195 = vunpack.c.l.b16 %v9977
    %v10196 = vunpack.c.h.b16 %v9977
    %v10197 = vunpack.c.l.b16 %v9978
    %v10198 = vunpack.c.h.b16 %v9978
    %v10199 = vunpack.c.l.b16 %v9979
    %v10200 = vunpack.c.h.b16 %v9979
    %v10201 = vunpack.c.l.b16 %v9980
    %v10202 = vunpack.c.l.b16 %v9981
    %v10203 = vunpack.c.h.b16 %v9981
    %v10204 = vunpack.c.l.b16 %v9982
    %v10205 = vunpack.c.h.b16 %v9982
    %v10206 = vunpack.c.l.b16 %v9983
    %v10207 = vunpack.c.h.b16 %v9983
    %v10208 = vunpack.c.l.b16 %v9984
    %v10209 = vunpack.c.l.b16 %v9985
    %v10210 = vunpack.c.h.b16 %v9985
    %v10211 = vunpack.c.l.b16 %v9986
    %v10212 = vunpack.c.h.b16 %v9986
    %v10213 = vunpack.c.l.b16 %v9987
    %v10214 = vunpack.c.h.b16 %v9987
    %v10215 = vunpack.c.l.b16 %v9988
    %v10216 = vunpack.c.l.b16 %v9989
    %v10217 = vunpack.c.h.b16 %v9989
    %v10218 = vunpack.c.l.b16 %v9990
    %v10219 = vunpack.c.h.b16 %v9990
    %v10220 = vunpack.c.l.b16 %v9991
    %v10221 = vunpack.c.h.b16 %v9991
    %v10222 = vunpack.c.l.b16 %v9992
    %v10223 = vunpack.c.l.b16 %v9993
    %v10224 = vunpack.c.h.b16 %v9993
    %v10225 = vunpack.c.l.b16 %v9994
    %v10226 = vunpack.c.h.b16 %v9994
    %v10227 = vunpack.c.l.b16 %v9995
    %v10228 = vunpack.c.h.b16 %v9995
    %v10229 = vunpack.c.l.b16 %v9996
    %v10230 = vunpack.c.l.b16 %v9997
    %v10231 = vunpack.c.h.b16 %v9997
    %v10232 = vunpack.c.l.b16 %v9998
    %v10233 = vunpack.c.h.b16 %v9998
    %v10234 = vunpack.c.l.b16 %v9999
    %v10235 = vunpack.c.h.b16 %v9999
    %v10236 = vunpack.c.l.b16 %v10000
    %v10237 = vunpack.c.l.b16 %v10001
    %v10238 = vunpack.c.h.b16 %v10001
    %v10239 = vunpack.c.l.b16 %v10002
    %v10240 = vunpack.c.h.b16 %v10002
    %v10241 = vunpack.c.l.b16 %v10003
    %v10242 = vunpack.c.h.b16 %v10003
    %v10243 = vunpack.c.l.b16 %v10004
    %v10244 = vunpack.c.l.b16 %v10005
    %v10245 = vunpack.c.h.b16 %v10005
    %v10246 = vunpack.c.l.b16 %v10006
    %v10247 = vunpack.c.h.b16 %v10006
    %v10248 = vunpack.c.l.b16 %v10007
    %v10249 = vunpack.c.h.b16 %v10007
    %v10250 = vunpack.c.l.b16 %v10008
    %v10251 = vunpack.c.l.b16 %v10009
    %v10252 = vunpack.c.h.b16 %v10009
    %v10253 = vunpack.c.l.b16 %v10010
    %v10254 = vunpack.c.h.b16 %v10010
    %v10255 = vunpack.c.l.b16 %v10011
    %v10256 = vunpack.c.h.b16 %v10011
    %v10257 = vunpack.c.l.b16 %v10012
    %v10258 = vunpack.c.l.b16 %v10013
    %v10259 = vunpack.c.h.b16 %v10013
    %v10260 = vunpack.c.l.b16 %v10014
    %v10261 = vunpack.c.h.b16 %v10014
    %v10262 = vunpack.c.l.b16 %v10015
    %v10263 = vunpack.c.h.b16 %v10015
    %v10264 = vunpack.c.l.b16 %v10016
    %v10265 = vunpack.c.l.b16 %v10017
    %v10266 = vunpack.c.h.b16 %v10017
    %v10267 = vunpack.c.l.b16 %v10018
    %v10268 = vunpack.c.h.b16 %v10018
    %v10269 = vunpack.c.l.b16 %v10019
    %v10270 = vunpack.c.h.b16 %v10019
    %v10271 = vunpack.c.l.b16 %v10020
    %v10272 = vunpack.c.l.b16 %v10021
    %v10273 = vunpack.c.h.b16 %v10021
    %v10274 = vunpack.c.l.b16 %v10022
    %v10275 = vunpack.c.h.b16 %v10022
    %v10276 = vunpack.c.l.b16 %v10023
    %v10277 = vunpack.c.h.b16 %v10023
    %v10278 = vunpack.c.l.b16 %v10024
    %v10279 = vunpack.c.l.b16 %v10025
    %v10280 = vunpack.c.h.b16 %v10025
    %v10281 = vunpack.c.l.b16 %v10026
    %v10282 = vunpack.c.h.b16 %v10026
    %v10283 = vunpack.c.l.b16 %v10027
    %v10284 = vunpack.c.h.b16 %v10027
    %v10285 = vunpack.c.l.b16 %v10028
    %v10286 = vunpack.c.l.b16 %v10029
    %v10287 = vunpack.c.h.b16 %v10029
    %v10288 = vunpack.c.l.b16 %v10030
    %v10289 = vunpack.c.h.b16 %v10030
    %v10290 = vunpack.c.l.b16 %v10031
    %v10291 = vunpack.c.h.b16 %v10031
    %v10292 = vunpack.c.l.b16 %v10032
    %v10293 = vunpack.c.l.b16 %v10033
    %v10294 = vunpack.c.h.b16 %v10033
    %v10295 = vunpack.c.l.b16 %v10034
    %v10296 = vunpack.c.h.b16 %v10034
    %v10297 = vunpack.c.l.b16 %v10035
    %v10298 = vunpack.c.h.b16 %v10035
    %v10299 = vunpack.c.l.b16 %v10036
    %v10300 = vunpack.c.l.b16 %v10037
    %v10301 = vunpack.c.h.b16 %v10037
    %v10302 = vunpack.c.l.b16 %v10038
    %v10303 = vunpack.c.h.b16 %v10038
    %v10304 = vunpack.c.l.b16 %v10039
    %v10305 = vunpack.c.h.b16 %v10039
    %v10306 = vunpack.c.l.b16 %v10040
    %v10307 = vunpack.c.l.b16 %v10041
    %v10308 = vunpack.c.h.b16 %v10041
    %v10309 = vunpack.c.l.b16 %v10042
    %v10310 = vunpack.c.h.b16 %v10042
    %v10311 = vunpack.c.l.b16 %v10043
    %v10312 = vunpack.c.h.b16 %v10043
    %v10313 = vunpack.c.l.b16 %v10044
    %v10314 = vunpack.c.l.b16 %v10045
    %v10315 = vunpack.c.h.b16 %v10045
    %v10316 = vunpack.c.l.b16 %v10046
    %v10317 = vunpack.c.h.b16 %v10046
    %v10318 = vunpack.c.l.b16 %v10047
    %v10319 = vunpack.c.h.b16 %v10047
    %v10320 = vunpack.c.l.b16 %v10048
    %v10321 = vunpack.c.l.b16 %v10049
    %v10322 = vunpack.c.h.b16 %v10049
    %v10323 = vunpack.c.l.b16 %v10050
    %v10324 = vunpack.c.h.b16 %v10050
    %v10325 = vunpack.c.l.b16 %v10051
    %v10326 = vunpack.c.h.b16 %v10051
    %v10327 = vunpack.c.l.b16 %v10052
    %v10328 = vpack.c.b16 %v10160, %v10153
    %v10329 = vpack.c.b16 %v10161, %v10154
    %v10330 = vpack.c.b16 %v10162, %v10155
    %v10331 = vpack.c.b16 %v10163, %v10156
    %v10332 = vpack.c.b16 %v10164, %v10157
    %v10333 = vpack.c.b16 %v10165, %v10158
    %v10334 = vpack.c.b16 %v10166, %v10159
    %v10335 = vpack.c.b16 %v10174, %v10167
    %v10336 = vpack.c.b16 %v10175, %v10168
    %v10337 = vpack.c.b16 %v10176, %v10169
    %v10338 = vpack.c.b16 %v10177, %v10170
    %v10339 = vpack.c.b16 %v10178, %v10171
    %v10340 = vpack.c.b16 %v10179, %v10172
    %v10341 = vpack.c.b16 %v10180, %v10173
    %v10342 = vpack.c.b16 %v10188, %v10181
    %v10343 = vpack.c.b16 %v10189, %v10182
    %v10344 = vpack.c.b16 %v10190, %v10183
    %v10345 = vpack.c.b16 %v10191, %v10184
    %v10346 = vpack.c.b16 %v10192, %v10185
    %v10347 = vpack.c.b16 %v10193, %v10186
    %v10348 = vpack.c.b16 %v10194, %v10187
    %v10349 = vpack.c.b16 %v10202, %v10195
    %v10350 = vpack.c.b16 %v10203, %v10196
    %v10351 = vpack.c.b16 %v10204, %v10197
    %v10352 = vpack.c.b16 %v10205, %v10198
    %v10353 = vpack.c.b16 %v10206, %v10199
    %v10354 = vpack.c.b16 %v10207, %v10200
    %v10355 = vpack.c.b16 %v10208, %v10201
    %v10356 = vpack.c.b16 %v10216, %v10209
    %v10357 = vpack.c.b16 %v10217, %v10210
    %v10358 = vpack.c.b16 %v10218, %v10211
    %v10359 = vpack.c.b16 %v10219, %v10212
    %v10360 = vpack.c.b16 %v10220, %v10213
    %v10361 = vpack.c.b16 %v10221, %v10214
    %v10362 = vpack.c.b16 %v10222, %v10215
    %v10363 = vpack.c.b16 %v10230, %v10223
    %v10364 = vpack.c.b16 %v10231, %v10224
    %v10365 = vpack.c.b16 %v10232, %v10225
    %v10366 = vpack.c.b16 %v10233, %v10226
    %v10367 = vpack.c.b16 %v10234, %v10227
    %v10368 = vpack.c.b16 %v10235, %v10228
    %v10369 = vpack.c.b16 %v10236, %v10229
    %v10370 = vpack.c.b16 %v10244, %v10237
    %v10371 = vpack.c.b16 %v10245, %v10238
    %v10372 = vpack.c.b16 %v10246, %v10239
    %v10373 = vpack.c.b16 %v10247, %v10240
    %v10374 = vpack.c.b16 %v10248, %v10241
    %v10375 = vpack.c.b16 %v10249, %v10242
    %v10376 = vpack.c.b16 %v10250, %v10243
    %v10377 = vpack.c.b16 %v10258, %v10251
    %v10378 = vpack.c.b16 %v10259, %v10252
    %v10379 = vpack.c.b16 %v10260, %v10253
    %v10380 = vpack.c.b16 %v10261, %v10254
    %v10381 = vpack.c.b16 %v10262, %v10255
    %v10382 = vpack.c.b16 %v10263, %v10256
    %v10383 = vpack.c.b16 %v10264, %v10257
    %v10384 = vpack.c.b16 %v10272, %v10265
    %v10385 = vpack.c.b16 %v10273, %v10266
    %v10386 = vpack.c.b16 %v10274, %v10267
    %v10387 = vpack.c.b16 %v10275, %v10268
    %v10388 = vpack.c.b16 %v10276, %v10269
    %v10389 = vpack.c.b16 %v10277, %v10270
    %v10390 = vpack.c.b16 %v10278, %v10271
    %v10391 = vpack.c.b16 %v10286, %v10279
    %v10392 = vpack.c.b16 %v10287, %v10280
    %v10393 = vpack.c.b16 %v10288, %v10281
    %v10394 = vpack.c.b16 %v10289, %v10282
    %v10395 = vpack.c.b16 %v10290, %v10283
    %v10396 = vpack.c.b16 %v10291, %v10284
    %v10397 = vpack.c.b16 %v10292, %v10285
    %v10398 = vpack.c.b16 %v10300, %v10293
    %v10399 = vpack.c.b16 %v10301, %v10294
    %v10400 = vpack.c.b16 %v10302, %v10295
    %v10401 = vpack.c.b16 %v10303, %v10296
    %v10402 = vpack.c.b16 %v10304, %v10297
    %v10403 = vpack.c.b16 %v10305, %v10298
    %v10404 = vpack.c.b16 %v10306, %v10299
    %v10405 = vpack.c.b16 %v10314, %v10307
    %v10406 = vpack.c.b16 %v10315, %v10308
    %v10407 = vpack.c.b16 %v10316, %v10309
    %v10408 = vpack.c.b16 %v10317, %v10310
    %v10409 = vpack.c.b16 %v10318, %v10311
    %v10410 = vpack.c.b16 %v10319, %v10312
    %v10411 = vpack.c.b16 %v10320, %v10313
    %v10412 = vpack.c.b16 %v10321, %v10321
    %v10413 = vpack.c.b16 %v10322, %v10322
    %v10414 = vpack.c.b16 %v10323, %v10323
    %v10415 = vpack.c.b16 %v10324, %v10324
    %v10416 = vpack.c.b16 %v10325, %v10325
    %v10417 = vpack.c.b16 %v10326, %v10326
    %v10418 = vpack.c.b16 %v10327, %v10327
    %v10504 = vsel %vm5067, %v9951, 0
    %v10507 = vsel %vm572, %v10412, 0
    %v10510 = vsel %vm572, %v10413, 0
    %v10513 = vsel %vm572, %v10414, 0
    %v10516 = vsel %vm572, %v10415, 0
    %v10519 = vsel %vm572, %v10416, 0
    %v10522 = vsel %vm572, %v10417, 0
    %v10525 = vsel %vm572, %v10418, 0
    %10527 = vmatpush.bf16.msra.mxu0 %v10377
    %10528 = vmatpush.bf16.msra.mxu0 %v10370
    %10529 = vmatpush.bf16.msra.mxu0 %v10363
    %10530 = vmatpush.bf16.msra.mxu0 %v10356
    %10531 = vmatpush.bf16.msra.mxu0 %v10349
    %10532 = vmatpush.bf16.msra.mxu0 %v10342
    %10533 = vmatpush.bf16.msra.mxu0 %v10335
    %10534 = vmatpush.bf16.msra.mxu0 %v10328
    %10535 = vmatmul.bf16.gmra.mxu0 %v9950
    %v10536 = vpop.f32.mrf.mxu0
    %v10537 = vadd.f32 0.0, %v10536
    %v10538 = vpop.f32.mrf.mxu0
    %v10539 = vadd.f32 0.0, %v10538
    %10540 = vdwg.mxu0
    %10541 = vmatpush.bf16.msra.mxu0 0
    %10542 = vmatpush.bf16.msra.mxu0 0
    %10543 = vmatpush.bf16.msra.mxu0 0
    %10544 = vmatpush.bf16.msra.mxu0 %v10507
    %10545 = vmatpush.bf16.msra.mxu0 %v10405
    %10546 = vmatpush.bf16.msra.mxu0 %v10398
    %10547 = vmatpush.bf16.msra.mxu0 %v10391
    %10548 = vmatpush.bf16.msra.mxu0 %v10384
    %10549 = vmatmul.bf16.gmra.mxu0 %v10504
    %v10550 = vpop.f32.mrf.mxu0
    %v10551 = vadd.f32 %v10537, %v10550
    %v10552 = vpop.f32.mrf.mxu0
    %v10553 = vadd.f32 %v10539, %v10552
    %10554 = vdwg.mxu0
    %10555 = vmatpush.bf16.msra.mxu0 %v10378
    %10556 = vmatpush.bf16.msra.mxu0 %v10371
    %10557 = vmatpush.bf16.msra.mxu0 %v10364
    %10558 = vmatpush.bf16.msra.mxu0 %v10357
    %10559 = vmatpush.bf16.msra.mxu0 %v10350
    %10560 = vmatpush.bf16.msra.mxu0 %v10343
    %10561 = vmatpush.bf16.msra.mxu0 %v10336
    %10562 = vmatpush.bf16.msra.mxu0 %v10329
    %10563 = vmatmul.bf16.gmra.mxu0 %v9950
    %v10564 = vpop.f32.mrf.mxu0
    %v10565 = vadd.f32 0.0, %v10564
    %v10566 = vpop.f32.mrf.mxu0
    %v10567 = vadd.f32 0.0, %v10566
    %10568 = vdwg.mxu0
    %10569 = vmatpush.bf16.msra.mxu0 0
    %10570 = vmatpush.bf16.msra.mxu0 0
    %10571 = vmatpush.bf16.msra.mxu0 0
    %10572 = vmatpush.bf16.msra.mxu0 %v10510
    %10573 = vmatpush.bf16.msra.mxu0 %v10406
    %10574 = vmatpush.bf16.msra.mxu0 %v10399
    %10575 = vmatpush.bf16.msra.mxu0 %v10392
    %10576 = vmatpush.bf16.msra.mxu0 %v10385
    %10577 = vmatmul.bf16.gmra.mxu0 %v10504
    %v10578 = vpop.f32.mrf.mxu0
    %v10579 = vadd.f32 %v10565, %v10578
    %v10580 = vpop.f32.mrf.mxu0
    %v10581 = vadd.f32 %v10567, %v10580
    %10582 = vdwg.mxu0
    %10583 = vmatpush.bf16.msra.mxu0 %v10379
    %10584 = vmatpush.bf16.msra.mxu0 %v10372
    %10585 = vmatpush.bf16.msra.mxu0 %v10365
    %10586 = vmatpush.bf16.msra.mxu0 %v10358
    %10587 = vmatpush.bf16.msra.mxu0 %v10351
    %10588 = vmatpush.bf16.msra.mxu0 %v10344
    %10589 = vmatpush.bf16.msra.mxu0 %v10337
    %10590 = vmatpush.bf16.msra.mxu0 %v10330
    %10591 = vmatmul.bf16.gmra.mxu0 %v9950
    %v10592 = vpop.f32.mrf.mxu0
    %v10593 = vadd.f32 0.0, %v10592
    %v10594 = vpop.f32.mrf.mxu0
    %v10595 = vadd.f32 0.0, %v10594
    %10596 = vdwg.mxu0
    %10597 = vmatpush.bf16.msra.mxu0 0
    %10598 = vmatpush.bf16.msra.mxu0 0
    %10599 = vmatpush.bf16.msra.mxu0 0
    %10600 = vmatpush.bf16.msra.mxu0 %v10513
    %10601 = vmatpush.bf16.msra.mxu0 %v10407
    %10602 = vmatpush.bf16.msra.mxu0 %v10400
    %10603 = vmatpush.bf16.msra.mxu0 %v10393
    %10604 = vmatpush.bf16.msra.mxu0 %v10386
    %10605 = vmatmul.bf16.gmra.mxu0 %v10504
    %v10606 = vpop.f32.mrf.mxu0
    %v10607 = vadd.f32 %v10593, %v10606
    %v10608 = vpop.f32.mrf.mxu0
    %v10609 = vadd.f32 %v10595, %v10608
    %10610 = vdwg.mxu0
    %10611 = vmatpush.bf16.msra.mxu0 %v10380
    %10612 = vmatpush.bf16.msra.mxu0 %v10373
    %10613 = vmatpush.bf16.msra.mxu0 %v10366
    %10614 = vmatpush.bf16.msra.mxu0 %v10359
    %10615 = vmatpush.bf16.msra.mxu0 %v10352
    %10616 = vmatpush.bf16.msra.mxu0 %v10345
    %10617 = vmatpush.bf16.msra.mxu0 %v10338
    %10618 = vmatpush.bf16.msra.mxu0 %v10331
    %10619 = vmatmul.bf16.gmra.mxu0 %v9950
    %v10620 = vpop.f32.mrf.mxu0
    %v10621 = vadd.f32 0.0, %v10620
    %v10622 = vpop.f32.mrf.mxu0
    %v10623 = vadd.f32 0.0, %v10622
    %10624 = vdwg.mxu0
    %10625 = vmatpush.bf16.msra.mxu0 0
    %10626 = vmatpush.bf16.msra.mxu0 0
    %10627 = vmatpush.bf16.msra.mxu0 0
    %10628 = vmatpush.bf16.msra.mxu0 %v10516
    %10629 = vmatpush.bf16.msra.mxu0 %v10408
    %10630 = vmatpush.bf16.msra.mxu0 %v10401
    %10631 = vmatpush.bf16.msra.mxu0 %v10394
    %10632 = vmatpush.bf16.msra.mxu0 %v10387
    %10633 = vmatmul.bf16.gmra.mxu0 %v10504
    %v10634 = vpop.f32.mrf.mxu0
    %v10635 = vadd.f32 %v10621, %v10634
    %v10636 = vpop.f32.mrf.mxu0
    %v10637 = vadd.f32 %v10623, %v10636
    %10638 = vdwg.mxu0
    %10639 = vmatpush.bf16.msra.mxu0 %v10381
    %10640 = vmatpush.bf16.msra.mxu0 %v10374
    %10641 = vmatpush.bf16.msra.mxu0 %v10367
    %10642 = vmatpush.bf16.msra.mxu0 %v10360
    %10643 = vmatpush.bf16.msra.mxu0 %v10353
    %10644 = vmatpush.bf16.msra.mxu0 %v10346
    %10645 = vmatpush.bf16.msra.mxu0 %v10339
    %10646 = vmatpush.bf16.msra.mxu0 %v10332
    %10647 = vmatmul.bf16.gmra.mxu0 %v9950
    %v10648 = vpop.f32.mrf.mxu0
    %v10649 = vadd.f32 0.0, %v10648
    %v10650 = vpop.f32.mrf.mxu0
    %v10651 = vadd.f32 0.0, %v10650
    %10652 = vdwg.mxu0
    %10653 = vmatpush.bf16.msra.mxu0 0
    %10654 = vmatpush.bf16.msra.mxu0 0
    %10655 = vmatpush.bf16.msra.mxu0 0
    %10656 = vmatpush.bf16.msra.mxu0 %v10519
    %10657 = vmatpush.bf16.msra.mxu0 %v10409
    %10658 = vmatpush.bf16.msra.mxu0 %v10402
    %10659 = vmatpush.bf16.msra.mxu0 %v10395
    %10660 = vmatpush.bf16.msra.mxu0 %v10388
    %10661 = vmatmul.bf16.gmra.mxu0 %v10504
    %v10662 = vpop.f32.mrf.mxu0
    %v10663 = vadd.f32 %v10649, %v10662
    %v10664 = vpop.f32.mrf.mxu0
    %v10665 = vadd.f32 %v10651, %v10664
    %10666 = vdwg.mxu0
    %10667 = vmatpush.bf16.msra.mxu0 %v10382
    %10668 = vmatpush.bf16.msra.mxu0 %v10375
    %10669 = vmatpush.bf16.msra.mxu0 %v10368
    %10670 = vmatpush.bf16.msra.mxu0 %v10361
    %10671 = vmatpush.bf16.msra.mxu0 %v10354
    %10672 = vmatpush.bf16.msra.mxu0 %v10347
    %10673 = vmatpush.bf16.msra.mxu0 %v10340
    %10674 = vmatpush.bf16.msra.mxu0 %v10333
    %10675 = vmatmul.bf16.gmra.mxu0 %v9950
    %v10676 = vpop.f32.mrf.mxu0
    %v10677 = vadd.f32 0.0, %v10676
    %v10678 = vpop.f32.mrf.mxu0
    %v10679 = vadd.f32 0.0, %v10678
    %10680 = vdwg.mxu0
    %10681 = vmatpush.bf16.msra.mxu0 0
    %10682 = vmatpush.bf16.msra.mxu0 0
    %10683 = vmatpush.bf16.msra.mxu0 0
    %10684 = vmatpush.bf16.msra.mxu0 %v10522
    %10685 = vmatpush.bf16.msra.mxu0 %v10410
    %10686 = vmatpush.bf16.msra.mxu0 %v10403
    %10687 = vmatpush.bf16.msra.mxu0 %v10396
    %10688 = vmatpush.bf16.msra.mxu0 %v10389
    %10689 = vmatmul.bf16.gmra.mxu0 %v10504
    %v10690 = vpop.f32.mrf.mxu0
    %v10691 = vadd.f32 %v10677, %v10690
    %v10692 = vpop.f32.mrf.mxu0
    %v10693 = vadd.f32 %v10679, %v10692
    %10694 = vdwg.mxu0
    %10695 = vmatpush.bf16.msra.mxu0 %v10383
    %10696 = vmatpush.bf16.msra.mxu0 %v10376
    %10697 = vmatpush.bf16.msra.mxu0 %v10369
    %10698 = vmatpush.bf16.msra.mxu0 %v10362
    %10699 = vmatpush.bf16.msra.mxu0 %v10355
    %10700 = vmatpush.bf16.msra.mxu0 %v10348
    %10701 = vmatpush.bf16.msra.mxu0 %v10341
    %10702 = vmatpush.bf16.msra.mxu0 %v10334
    %10703 = vmatmul.bf16.gmra.mxu0 %v9950
    %v10704 = vpop.f32.mrf.mxu0
    %v10705 = vadd.f32 0.0, %v10704
    %v10706 = vpop.f32.mrf.mxu0
    %v10707 = vadd.f32 0.0, %v10706
    %10708 = vdwg.mxu0
    %10709 = vmatpush.bf16.msra.mxu0 0
    %10710 = vmatpush.bf16.msra.mxu0 0
    %10711 = vmatpush.bf16.msra.mxu0 0
    %10712 = vmatpush.bf16.msra.mxu0 %v10525
    %10713 = vmatpush.bf16.msra.mxu0 %v10411
    %10714 = vmatpush.bf16.msra.mxu0 %v10404
    %10715 = vmatpush.bf16.msra.mxu0 %v10397
    %10716 = vmatpush.bf16.msra.mxu0 %v10390
    %10717 = vmatmul.bf16.gmra.mxu0 %v10504
    %v10718 = vpop.f32.mrf.mxu0
    %v10719 = vadd.f32 %v10705, %v10718
    %v10720 = vpop.f32.mrf.mxu0
    %v10721 = vadd.f32 %v10707, %v10720
    %10722 = vdwg.mxu0
    %v10723 = vadd.f32 %v9932, %v10551
    %v10724 = vadd.f32 %v9933, %v10579
    %v10725 = vadd.f32 %v9934, %v10607
    %v10726 = vadd.f32 %v9935, %v10635
    %v10727 = vadd.f32 %v9936, %v10663
    %v10728 = vadd.f32 %v9937, %v10691
    %v10729 = vadd.f32 %v9938, %v10719
    %v10730 = vadd.f32 %v9939, %v10553
    %v10731 = vadd.f32 %v9940, %v10581
    %v10732 = vadd.f32 %v9941, %v10609
    %v10733 = vadd.f32 %v9942, %v10637
    %v10734 = vadd.f32 %v9943, %v10665
    %v10735 = vadd.f32 %v9944, %v10693
    %v10736 = vadd.f32 %v9945, %v10721
    %v10737 = vld [vmem:[#allocation4 + $0x70] sm:$0xff]
    %v10738 = vld [vmem:[#allocation4 + $0x78] sm:$0xff]
    %v10739 = vld [vmem:[#allocation4 + $0x100] sm:$0xff]
    %v10740 = vld [vmem:[#allocation4 + $0x108] sm:$0xff]
    %v10741 = vpack.c.bf16 %v10739, %v10737
    %v10742 = vpack.c.bf16 %v10740, %v10738
    %s10743 = scalar_lea.vmem [#allocation5], 4900
    %v10744 = vld [vmem:[%s10743] sm:$0xff]
    %v10745 = vld [vmem:[%s10743 + $0x8] sm:$0xff]
    %v10746 = vld [vmem:[%s10743 + $0x10] sm:$0xff]
    %v10747 = vld [vmem:[%s10743 + $0x18] sm:$0xf]
    %v10748 = vld [vmem:[%s10743 + $0x1c] sm:$0xff]
    %v10749 = vld [vmem:[%s10743 + $0x24] sm:$0xff]
    %v10750 = vld [vmem:[%s10743 + $0x2c] sm:$0xff]
    %v10751 = vld [vmem:[%s10743 + $0x34] sm:$0xf]
    %v10752 = vld [vmem:[%s10743 + $0x38] sm:$0xff]
    %v10753 = vld [vmem:[%s10743 + $0x40] sm:$0xff]
    %v10754 = vld [vmem:[%s10743 + $0x48] sm:$0xff]
    %v10755 = vld [vmem:[%s10743 + $0x50] sm:$0xf]
    %v10756 = vld [vmem:[%s10743 + $0x54] sm:$0xff]
    %v10757 = vld [vmem:[%s10743 + $0x5c] sm:$0xff]
    %v10758 = vld [vmem:[%s10743 + $0x64] sm:$0xff]
    %v10759 = vld [vmem:[%s10743 + $0x6c] sm:$0xf]
    %v10760 = vld [vmem:[%s10743 + $0x70] sm:$0xff]
    %v10761 = vld [vmem:[%s10743 + $0x78] sm:$0xff]
    %v10762 = vld [vmem:[%s10743 + $0x80] sm:$0xff]
    %v10763 = vld [vmem:[%s10743 + $0x88] sm:$0xf]
    %v10764 = vld [vmem:[%s10743 + $0x8c] sm:$0xff]
    %v10765 = vld [vmem:[%s10743 + $0x94] sm:$0xff]
    %v10766 = vld [vmem:[%s10743 + $0x9c] sm:$0xff]
    %v10767 = vld [vmem:[%s10743 + $0xa4] sm:$0xf]
    %v10768 = vld [vmem:[%s10743 + $0xa8] sm:$0xff]
    %v10769 = vld [vmem:[%s10743 + $0xb0] sm:$0xff]
    %v10770 = vld [vmem:[%s10743 + $0xb8] sm:$0xff]
    %v10771 = vld [vmem:[%s10743 + $0xc0] sm:$0xf]
    %v10772 = vld [vmem:[%s10743 + $0xc4] sm:$0xff]
    %v10773 = vld [vmem:[%s10743 + $0xcc] sm:$0xff]
    %v10774 = vld [vmem:[%s10743 + $0xd4] sm:$0xff]
    %v10775 = vld [vmem:[%s10743 + $0xdc] sm:$0xf]
    %v10776 = vld [vmem:[%s10743 + $0xe0] sm:$0xff]
    %v10777 = vld [vmem:[%s10743 + $0xe8] sm:$0xff]
    %v10778 = vld [vmem:[%s10743 + $0xf0] sm:$0xff]
    %v10779 = vld [vmem:[%s10743 + $0xf8] sm:$0xf]
    %v10780 = vld [vmem:[%s10743 + $0xfc] sm:$0xff]
    %v10781 = vld [vmem:[%s10743 + $0x104] sm:$0xff]
    %v10782 = vld [vmem:[%s10743 + $0x10c] sm:$0xff]
    %v10783 = vld [vmem:[%s10743 + $0x114] sm:$0xf]
    %v10784 = vld [vmem:[%s10743 + $0x118] sm:$0xff]
    %v10785 = vld [vmem:[%s10743 + $0x120] sm:$0xff]
    %v10786 = vld [vmem:[%s10743 + $0x128] sm:$0xff]
    %v10787 = vld [vmem:[%s10743 + $0x130] sm:$0xf]
    %v10788 = vld [vmem:[%s10743 + $0x134] sm:$0xff]
    %v10789 = vld [vmem:[%s10743 + $0x13c] sm:$0xff]
    %v10790 = vld [vmem:[%s10743 + $0x144] sm:$0xff]
    %v10791 = vld [vmem:[%s10743 + $0x14c] sm:$0xf]
    %v10792 = vld [vmem:[%s10743 + $0x150] sm:$0xff]
    %v10793 = vld [vmem:[%s10743 + $0x158] sm:$0xff]
    %v10794 = vld [vmem:[%s10743 + $0x160] sm:$0xff]
    %v10795 = vld [vmem:[%s10743 + $0x168] sm:$0xf]
    %v10796 = vld [vmem:[%s10743 + $0x16c] sm:$0xff]
    %v10797 = vld [vmem:[%s10743 + $0x174] sm:$0xff]
    %v10798 = vld [vmem:[%s10743 + $0x17c] sm:$0xff]
    %v10799 = vld [vmem:[%s10743 + $0x184] sm:$0xf]
    %v10800 = vld [vmem:[%s10743 + $0x188] sm:$0xff]
    %v10801 = vld [vmem:[%s10743 + $0x190] sm:$0xff]
    %v10802 = vld [vmem:[%s10743 + $0x198] sm:$0xff]
    %v10803 = vld [vmem:[%s10743 + $0x1a0] sm:$0xf]
    %v10804 = vld [vmem:[%s10743 + $0x1a4] sm:$0xff]
    %v10805 = vld [vmem:[%s10743 + $0x1ac] sm:$0xff]
    %v10806 = vld [vmem:[%s10743 + $0x1b4] sm:$0xff]
    %v10807 = vld [vmem:[%s10743 + $0x1bc] sm:$0xf]
    %v10808 = vld [vmem:[%s10743 + $0x1c0] sm:$0xff]
    %v10809 = vld [vmem:[%s10743 + $0x1c8] sm:$0xff]
    %v10810 = vld [vmem:[%s10743 + $0x1d0] sm:$0xff]
    %v10811 = vld [vmem:[%s10743 + $0x1d8] sm:$0xf]
    %v10812 = vld [vmem:[%s10743 + $0x1dc] sm:$0xff]
    %v10813 = vld [vmem:[%s10743 + $0x1e4] sm:$0xff]
    %v10814 = vld [vmem:[%s10743 + $0x1ec] sm:$0xff]
    %v10815 = vld [vmem:[%s10743 + $0x1f4] sm:$0xf]
    %v10816 = vld [vmem:[%s10743 + $0x1f8] sm:$0xff]
    %v10817 = vld [vmem:[%s10743 + $0x200] sm:$0xff]
    %v10818 = vld [vmem:[%s10743 + $0x208] sm:$0xff]
    %v10819 = vld [vmem:[%s10743 + $0x210] sm:$0xf]
    %v10820 = vld [vmem:[%s10743 + $0x214] sm:$0xff]
    %v10821 = vld [vmem:[%s10743 + $0x21c] sm:$0xff]
    %v10822 = vld [vmem:[%s10743 + $0x224] sm:$0xff]
    %v10823 = vld [vmem:[%s10743 + $0x22c] sm:$0xf]
    %v10824 = vld [vmem:[%s10743 + $0x230] sm:$0xff]
    %v10825 = vld [vmem:[%s10743 + $0x238] sm:$0xff]
    %v10826 = vld [vmem:[%s10743 + $0x240] sm:$0xff]
    %v10827 = vld [vmem:[%s10743 + $0x248] sm:$0xf]
    %v10828 = vld [vmem:[%s10743 + $0x24c] sm:$0xff]
    %v10829 = vld [vmem:[%s10743 + $0x254] sm:$0xff]
    %v10830 = vld [vmem:[%s10743 + $0x25c] sm:$0xff]
    %v10831 = vld [vmem:[%s10743 + $0x264] sm:$0xf]
    %v10832 = vld [vmem:[%s10743 + $0x268] sm:$0xff]
    %v10833 = vld [vmem:[%s10743 + $0x270] sm:$0xff]
    %v10834 = vld [vmem:[%s10743 + $0x278] sm:$0xff]
    %v10835 = vld [vmem:[%s10743 + $0x280] sm:$0xf]
    %v10836 = vld [vmem:[%s10743 + $0x284] sm:$0xff]
    %v10837 = vld [vmem:[%s10743 + $0x28c] sm:$0xff]
    %v10838 = vld [vmem:[%s10743 + $0x294] sm:$0xff]
    %v10839 = vld [vmem:[%s10743 + $0x29c] sm:$0xf]
    %v10840 = vld [vmem:[%s10743 + $0x2a0] sm:$0x33]
    %v10841 = vld [vmem:[%s10743 + $0x2a8] sm:$0x33]
    %v10842 = vld [vmem:[%s10743 + $0x2b0] sm:$0x33]
    %v10843 = vld [vmem:[%s10743 + $0x2b8] sm:$0x3]
    %v10944 = vunpack.c.l.b16 %v10744
    %v10945 = vunpack.c.h.b16 %v10744
    %v10946 = vunpack.c.l.b16 %v10745
    %v10947 = vunpack.c.h.b16 %v10745
    %v10948 = vunpack.c.l.b16 %v10746
    %v10949 = vunpack.c.h.b16 %v10746
    %v10950 = vunpack.c.l.b16 %v10747
    %v10951 = vunpack.c.l.b16 %v10748
    %v10952 = vunpack.c.h.b16 %v10748
    %v10953 = vunpack.c.l.b16 %v10749
    %v10954 = vunpack.c.h.b16 %v10749
    %v10955 = vunpack.c.l.b16 %v10750
    %v10956 = vunpack.c.h.b16 %v10750
    %v10957 = vunpack.c.l.b16 %v10751
    %v10958 = vunpack.c.l.b16 %v10752
    %v10959 = vunpack.c.h.b16 %v10752
    %v10960 = vunpack.c.l.b16 %v10753
    %v10961 = vunpack.c.h.b16 %v10753
    %v10962 = vunpack.c.l.b16 %v10754
    %v10963 = vunpack.c.h.b16 %v10754
    %v10964 = vunpack.c.l.b16 %v10755
    %v10965 = vunpack.c.l.b16 %v10756
    %v10966 = vunpack.c.h.b16 %v10756
    %v10967 = vunpack.c.l.b16 %v10757
    %v10968 = vunpack.c.h.b16 %v10757
    %v10969 = vunpack.c.l.b16 %v10758
    %v10970 = vunpack.c.h.b16 %v10758
    %v10971 = vunpack.c.l.b16 %v10759
    %v10972 = vunpack.c.l.b16 %v10760
    %v10973 = vunpack.c.h.b16 %v10760
    %v10974 = vunpack.c.l.b16 %v10761
    %v10975 = vunpack.c.h.b16 %v10761
    %v10976 = vunpack.c.l.b16 %v10762
    %v10977 = vunpack.c.h.b16 %v10762
    %v10978 = vunpack.c.l.b16 %v10763
    %v10979 = vunpack.c.l.b16 %v10764
    %v10980 = vunpack.c.h.b16 %v10764
    %v10981 = vunpack.c.l.b16 %v10765
    %v10982 = vunpack.c.h.b16 %v10765
    %v10983 = vunpack.c.l.b16 %v10766
    %v10984 = vunpack.c.h.b16 %v10766
    %v10985 = vunpack.c.l.b16 %v10767
    %v10986 = vunpack.c.l.b16 %v10768
    %v10987 = vunpack.c.h.b16 %v10768
    %v10988 = vunpack.c.l.b16 %v10769
    %v10989 = vunpack.c.h.b16 %v10769
    %v10990 = vunpack.c.l.b16 %v10770
    %v10991 = vunpack.c.h.b16 %v10770
    %v10992 = vunpack.c.l.b16 %v10771
    %v10993 = vunpack.c.l.b16 %v10772
    %v10994 = vunpack.c.h.b16 %v10772
    %v10995 = vunpack.c.l.b16 %v10773
    %v10996 = vunpack.c.h.b16 %v10773
    %v10997 = vunpack.c.l.b16 %v10774
    %v10998 = vunpack.c.h.b16 %v10774
    %v10999 = vunpack.c.l.b16 %v10775
    %v11000 = vunpack.c.l.b16 %v10776
    %v11001 = vunpack.c.h.b16 %v10776
    %v11002 = vunpack.c.l.b16 %v10777
    %v11003 = vunpack.c.h.b16 %v10777
    %v11004 = vunpack.c.l.b16 %v10778
    %v11005 = vunpack.c.h.b16 %v10778
    %v11006 = vunpack.c.l.b16 %v10779
    %v11007 = vunpack.c.l.b16 %v10780
    %v11008 = vunpack.c.h.b16 %v10780
    %v11009 = vunpack.c.l.b16 %v10781
    %v11010 = vunpack.c.h.b16 %v10781
    %v11011 = vunpack.c.l.b16 %v10782
    %v11012 = vunpack.c.h.b16 %v10782
    %v11013 = vunpack.c.l.b16 %v10783
    %v11014 = vunpack.c.l.b16 %v10784
    %v11015 = vunpack.c.h.b16 %v10784
    %v11016 = vunpack.c.l.b16 %v10785
    %v11017 = vunpack.c.h.b16 %v10785
    %v11018 = vunpack.c.l.b16 %v10786
    %v11019 = vunpack.c.h.b16 %v10786
    %v11020 = vunpack.c.l.b16 %v10787
    %v11021 = vunpack.c.l.b16 %v10788
    %v11022 = vunpack.c.h.b16 %v10788
    %v11023 = vunpack.c.l.b16 %v10789
    %v11024 = vunpack.c.h.b16 %v10789
    %v11025 = vunpack.c.l.b16 %v10790
    %v11026 = vunpack.c.h.b16 %v10790
    %v11027 = vunpack.c.l.b16 %v10791
    %v11028 = vunpack.c.l.b16 %v10792
    %v11029 = vunpack.c.h.b16 %v10792
    %v11030 = vunpack.c.l.b16 %v10793
    %v11031 = vunpack.c.h.b16 %v10793
    %v11032 = vunpack.c.l.b16 %v10794
    %v11033 = vunpack.c.h.b16 %v10794
    %v11034 = vunpack.c.l.b16 %v10795
    %v11035 = vunpack.c.l.b16 %v10796
    %v11036 = vunpack.c.h.b16 %v10796
    %v11037 = vunpack.c.l.b16 %v10797
    %v11038 = vunpack.c.h.b16 %v10797
    %v11039 = vunpack.c.l.b16 %v10798
    %v11040 = vunpack.c.h.b16 %v10798
    %v11041 = vunpack.c.l.b16 %v10799
    %v11042 = vunpack.c.l.b16 %v10800
    %v11043 = vunpack.c.h.b16 %v10800
    %v11044 = vunpack.c.l.b16 %v10801
    %v11045 = vunpack.c.h.b16 %v10801
    %v11046 = vunpack.c.l.b16 %v10802
    %v11047 = vunpack.c.h.b16 %v10802
    %v11048 = vunpack.c.l.b16 %v10803
    %v11049 = vunpack.c.l.b16 %v10804
    %v11050 = vunpack.c.h.b16 %v10804
    %v11051 = vunpack.c.l.b16 %v10805
    %v11052 = vunpack.c.h.b16 %v10805
    %v11053 = vunpack.c.l.b16 %v10806
    %v11054 = vunpack.c.h.b16 %v10806
    %v11055 = vunpack.c.l.b16 %v10807
    %v11056 = vunpack.c.l.b16 %v10808
    %v11057 = vunpack.c.h.b16 %v10808
    %v11058 = vunpack.c.l.b16 %v10809
    %v11059 = vunpack.c.h.b16 %v10809
    %v11060 = vunpack.c.l.b16 %v10810
    %v11061 = vunpack.c.h.b16 %v10810
    %v11062 = vunpack.c.l.b16 %v10811
    %v11063 = vunpack.c.l.b16 %v10812
    %v11064 = vunpack.c.h.b16 %v10812
    %v11065 = vunpack.c.l.b16 %v10813
    %v11066 = vunpack.c.h.b16 %v10813
    %v11067 = vunpack.c.l.b16 %v10814
    %v11068 = vunpack.c.h.b16 %v10814
    %v11069 = vunpack.c.l.b16 %v10815
    %v11070 = vunpack.c.l.b16 %v10816
    %v11071 = vunpack.c.h.b16 %v10816
    %v11072 = vunpack.c.l.b16 %v10817
    %v11073 = vunpack.c.h.b16 %v10817
    %v11074 = vunpack.c.l.b16 %v10818
    %v11075 = vunpack.c.h.b16 %v10818
    %v11076 = vunpack.c.l.b16 %v10819
    %v11077 = vunpack.c.l.b16 %v10820
    %v11078 = vunpack.c.h.b16 %v10820
    %v11079 = vunpack.c.l.b16 %v10821
    %v11080 = vunpack.c.h.b16 %v10821
    %v11081 = vunpack.c.l.b16 %v10822
    %v11082 = vunpack.c.h.b16 %v10822
    %v11083 = vunpack.c.l.b16 %v10823
    %v11084 = vunpack.c.l.b16 %v10824
    %v11085 = vunpack.c.h.b16 %v10824
    %v11086 = vunpack.c.l.b16 %v10825
    %v11087 = vunpack.c.h.b16 %v10825
    %v11088 = vunpack.c.l.b16 %v10826
    %v11089 = vunpack.c.h.b16 %v10826
    %v11090 = vunpack.c.l.b16 %v10827
    %v11091 = vunpack.c.l.b16 %v10828
    %v11092 = vunpack.c.h.b16 %v10828
    %v11093 = vunpack.c.l.b16 %v10829
    %v11094 = vunpack.c.h.b16 %v10829
    %v11095 = vunpack.c.l.b16 %v10830
    %v11096 = vunpack.c.h.b16 %v10830
    %v11097 = vunpack.c.l.b16 %v10831
    %v11098 = vunpack.c.l.b16 %v10832
    %v11099 = vunpack.c.h.b16 %v10832
    %v11100 = vunpack.c.l.b16 %v10833
    %v11101 = vunpack.c.h.b16 %v10833
    %v11102 = vunpack.c.l.b16 %v10834
    %v11103 = vunpack.c.h.b16 %v10834
    %v11104 = vunpack.c.l.b16 %v10835
    %v11105 = vunpack.c.l.b16 %v10836
    %v11106 = vunpack.c.h.b16 %v10836
    %v11107 = vunpack.c.l.b16 %v10837
    %v11108 = vunpack.c.h.b16 %v10837
    %v11109 = vunpack.c.l.b16 %v10838
    %v11110 = vunpack.c.h.b16 %v10838
    %v11111 = vunpack.c.l.b16 %v10839
    %v11112 = vunpack.c.l.b16 %v10840
    %v11113 = vunpack.c.h.b16 %v10840
    %v11114 = vunpack.c.l.b16 %v10841
    %v11115 = vunpack.c.h.b16 %v10841
    %v11116 = vunpack.c.l.b16 %v10842
    %v11117 = vunpack.c.h.b16 %v10842
    %v11118 = vunpack.c.l.b16 %v10843
    %v11119 = vpack.c.b16 %v10951, %v10944
    %v11120 = vpack.c.b16 %v10952, %v10945
    %v11121 = vpack.c.b16 %v10953, %v10946
    %v11122 = vpack.c.b16 %v10954, %v10947
    %v11123 = vpack.c.b16 %v10955, %v10948
    %v11124 = vpack.c.b16 %v10956, %v10949
    %v11125 = vpack.c.b16 %v10957, %v10950
    %v11126 = vpack.c.b16 %v10965, %v10958
    %v11127 = vpack.c.b16 %v10966, %v10959
    %v11128 = vpack.c.b16 %v10967, %v10960
    %v11129 = vpack.c.b16 %v10968, %v10961
    %v11130 = vpack.c.b16 %v10969, %v10962
    %v11131 = vpack.c.b16 %v10970, %v10963
    %v11132 = vpack.c.b16 %v10971, %v10964
    %v11133 = vpack.c.b16 %v10979, %v10972
    %v11134 = vpack.c.b16 %v10980, %v10973
    %v11135 = vpack.c.b16 %v10981, %v10974
    %v11136 = vpack.c.b16 %v10982, %v10975
    %v11137 = vpack.c.b16 %v10983, %v10976
    %v11138 = vpack.c.b16 %v10984, %v10977
    %v11139 = vpack.c.b16 %v10985, %v10978
    %v11140 = vpack.c.b16 %v10993, %v10986
    %v11141 = vpack.c.b16 %v10994, %v10987
    %v11142 = vpack.c.b16 %v10995, %v10988
    %v11143 = vpack.c.b16 %v10996, %v10989
    %v11144 = vpack.c.b16 %v10997, %v10990
    %v11145 = vpack.c.b16 %v10998, %v10991
    %v11146 = vpack.c.b16 %v10999, %v10992
    %v11147 = vpack.c.b16 %v11007, %v11000
    %v11148 = vpack.c.b16 %v11008, %v11001
    %v11149 = vpack.c.b16 %v11009, %v11002
    %v11150 = vpack.c.b16 %v11010, %v11003
    %v11151 = vpack.c.b16 %v11011, %v11004
    %v11152 = vpack.c.b16 %v11012, %v11005
    %v11153 = vpack.c.b16 %v11013, %v11006
    %v11154 = vpack.c.b16 %v11021, %v11014
    %v11155 = vpack.c.b16 %v11022, %v11015
    %v11156 = vpack.c.b16 %v11023, %v11016
    %v11157 = vpack.c.b16 %v11024, %v11017
    %v11158 = vpack.c.b16 %v11025, %v11018
    %v11159 = vpack.c.b16 %v11026, %v11019
    %v11160 = vpack.c.b16 %v11027, %v11020
    %v11161 = vpack.c.b16 %v11035, %v11028
    %v11162 = vpack.c.b16 %v11036, %v11029
    %v11163 = vpack.c.b16 %v11037, %v11030
    %v11164 = vpack.c.b16 %v11038, %v11031
    %v11165 = vpack.c.b16 %v11039, %v11032
    %v11166 = vpack.c.b16 %v11040, %v11033
    %v11167 = vpack.c.b16 %v11041, %v11034
    %v11168 = vpack.c.b16 %v11049, %v11042
    %v11169 = vpack.c.b16 %v11050, %v11043
    %v11170 = vpack.c.b16 %v11051, %v11044
    %v11171 = vpack.c.b16 %v11052, %v11045
    %v11172 = vpack.c.b16 %v11053, %v11046
    %v11173 = vpack.c.b16 %v11054, %v11047
    %v11174 = vpack.c.b16 %v11055, %v11048
    %v11175 = vpack.c.b16 %v11063, %v11056
    %v11176 = vpack.c.b16 %v11064, %v11057
    %v11177 = vpack.c.b16 %v11065, %v11058
    %v11178 = vpack.c.b16 %v11066, %v11059
    %v11179 = vpack.c.b16 %v11067, %v11060
    %v11180 = vpack.c.b16 %v11068, %v11061
    %v11181 = vpack.c.b16 %v11069, %v11062
    %v11182 = vpack.c.b16 %v11077, %v11070
    %v11183 = vpack.c.b16 %v11078, %v11071
    %v11184 = vpack.c.b16 %v11079, %v11072
    %v11185 = vpack.c.b16 %v11080, %v11073
    %v11186 = vpack.c.b16 %v11081, %v11074
    %v11187 = vpack.c.b16 %v11082, %v11075
    %v11188 = vpack.c.b16 %v11083, %v11076
    %v11189 = vpack.c.b16 %v11091, %v11084
    %v11190 = vpack.c.b16 %v11092, %v11085
    %v11191 = vpack.c.b16 %v11093, %v11086
    %v11192 = vpack.c.b16 %v11094, %v11087
    %v11193 = vpack.c.b16 %v11095, %v11088
    %v11194 = vpack.c.b16 %v11096, %v11089
    %v11195 = vpack.c.b16 %v11097, %v11090
    %v11196 = vpack.c.b16 %v11105, %v11098
    %v11197 = vpack.c.b16 %v11106, %v11099
    %v11198 = vpack.c.b16 %v11107, %v11100
    %v11199 = vpack.c.b16 %v11108, %v11101
    %v11200 = vpack.c.b16 %v11109, %v11102
    %v11201 = vpack.c.b16 %v11110, %v11103
    %v11202 = vpack.c.b16 %v11111, %v11104
    %v11203 = vpack.c.b16 %v11112, %v11112
    %v11204 = vpack.c.b16 %v11113, %v11113
    %v11205 = vpack.c.b16 %v11114, %v11114
    %v11206 = vpack.c.b16 %v11115, %v11115
    %v11207 = vpack.c.b16 %v11116, %v11116
    %v11208 = vpack.c.b16 %v11117, %v11117
    %v11209 = vpack.c.b16 %v11118, %v11118
    %v11295 = vsel %vm5067, %v10742, 0
    %v11298 = vsel %vm572, %v11203, 0
    %v11301 = vsel %vm572, %v11204, 0
    %v11304 = vsel %vm572, %v11205, 0
    %v11307 = vsel %vm572, %v11206, 0
    %v11310 = vsel %vm572, %v11207, 0
    %v11313 = vsel %vm572, %v11208, 0
    %v11316 = vsel %vm572, %v11209, 0
    %11318 = vmatpush.bf16.msra.mxu0 %v11168
    %11319 = vmatpush.bf16.msra.mxu0 %v11161
    %11320 = vmatpush.bf16.msra.mxu0 %v11154
    %11321 = vmatpush.bf16.msra.mxu0 %v11147
    %11322 = vmatpush.bf16.msra.mxu0 %v11140
    %11323 = vmatpush.bf16.msra.mxu0 %v11133
    %11324 = vmatpush.bf16.msra.mxu0 %v11126
    %11325 = vmatpush.bf16.msra.mxu0 %v11119
    %11326 = vmatmul.bf16.gmra.mxu0 %v10741
    %v11327 = vpop.f32.mrf.mxu0
    %v11328 = vadd.f32 0.0, %v11327
    %v11329 = vpop.f32.mrf.mxu0
    %v11330 = vadd.f32 0.0, %v11329
    %11331 = vdwg.mxu0
    %11332 = vmatpush.bf16.msra.mxu0 0
    %11333 = vmatpush.bf16.msra.mxu0 0
    %11334 = vmatpush.bf16.msra.mxu0 0
    %11335 = vmatpush.bf16.msra.mxu0 %v11298
    %11336 = vmatpush.bf16.msra.mxu0 %v11196
    %11337 = vmatpush.bf16.msra.mxu0 %v11189
    %11338 = vmatpush.bf16.msra.mxu0 %v11182
    %11339 = vmatpush.bf16.msra.mxu0 %v11175
    %11340 = vmatmul.bf16.gmra.mxu0 %v11295
    %v11341 = vpop.f32.mrf.mxu0
    %v11342 = vadd.f32 %v11328, %v11341
    %v11343 = vpop.f32.mrf.mxu0
    %v11344 = vadd.f32 %v11330, %v11343
    %11345 = vdwg.mxu0
    %11346 = vmatpush.bf16.msra.mxu0 %v11169
    %11347 = vmatpush.bf16.msra.mxu0 %v11162
    %11348 = vmatpush.bf16.msra.mxu0 %v11155
    %11349 = vmatpush.bf16.msra.mxu0 %v11148
    %11350 = vmatpush.bf16.msra.mxu0 %v11141
    %11351 = vmatpush.bf16.msra.mxu0 %v11134
    %11352 = vmatpush.bf16.msra.mxu0 %v11127
    %11353 = vmatpush.bf16.msra.mxu0 %v11120
    %11354 = vmatmul.bf16.gmra.mxu0 %v10741
    %v11355 = vpop.f32.mrf.mxu0
    %v11356 = vadd.f32 0.0, %v11355
    %v11357 = vpop.f32.mrf.mxu0
    %v11358 = vadd.f32 0.0, %v11357
    %11359 = vdwg.mxu0
    %11360 = vmatpush.bf16.msra.mxu0 0
    %11361 = vmatpush.bf16.msra.mxu0 0
    %11362 = vmatpush.bf16.msra.mxu0 0
    %11363 = vmatpush.bf16.msra.mxu0 %v11301
    %11364 = vmatpush.bf16.msra.mxu0 %v11197
    %11365 = vmatpush.bf16.msra.mxu0 %v11190
    %11366 = vmatpush.bf16.msra.mxu0 %v11183
    %11367 = vmatpush.bf16.msra.mxu0 %v11176
    %11368 = vmatmul.bf16.gmra.mxu0 %v11295
    %v11369 = vpop.f32.mrf.mxu0
    %v11370 = vadd.f32 %v11356, %v11369
    %v11371 = vpop.f32.mrf.mxu0
    %v11372 = vadd.f32 %v11358, %v11371
    %11373 = vdwg.mxu0
    %11374 = vmatpush.bf16.msra.mxu0 %v11170
    %11375 = vmatpush.bf16.msra.mxu0 %v11163
    %11376 = vmatpush.bf16.msra.mxu0 %v11156
    %11377 = vmatpush.bf16.msra.mxu0 %v11149
    %11378 = vmatpush.bf16.msra.mxu0 %v11142
    %11379 = vmatpush.bf16.msra.mxu0 %v11135
    %11380 = vmatpush.bf16.msra.mxu0 %v11128
    %11381 = vmatpush.bf16.msra.mxu0 %v11121
    %11382 = vmatmul.bf16.gmra.mxu0 %v10741
    %v11383 = vpop.f32.mrf.mxu0
    %v11384 = vadd.f32 0.0, %v11383
    %v11385 = vpop.f32.mrf.mxu0
    %v11386 = vadd.f32 0.0, %v11385
    %11387 = vdwg.mxu0
    %11388 = vmatpush.bf16.msra.mxu0 0
    %11389 = vmatpush.bf16.msra.mxu0 0
    %11390 = vmatpush.bf16.msra.mxu0 0
    %11391 = vmatpush.bf16.msra.mxu0 %v11304
    %11392 = vmatpush.bf16.msra.mxu0 %v11198
    %11393 = vmatpush.bf16.msra.mxu0 %v11191
    %11394 = vmatpush.bf16.msra.mxu0 %v11184
    %11395 = vmatpush.bf16.msra.mxu0 %v11177
    %11396 = vmatmul.bf16.gmra.mxu0 %v11295
    %v11397 = vpop.f32.mrf.mxu0
    %v11398 = vadd.f32 %v11384, %v11397
    %v11399 = vpop.f32.mrf.mxu0
    %v11400 = vadd.f32 %v11386, %v11399
    %11401 = vdwg.mxu0
    %11402 = vmatpush.bf16.msra.mxu0 %v11171
    %11403 = vmatpush.bf16.msra.mxu0 %v11164
    %11404 = vmatpush.bf16.msra.mxu0 %v11157
    %11405 = vmatpush.bf16.msra.mxu0 %v11150
    %11406 = vmatpush.bf16.msra.mxu0 %v11143
    %11407 = vmatpush.bf16.msra.mxu0 %v11136
    %11408 = vmatpush.bf16.msra.mxu0 %v11129
    %11409 = vmatpush.bf16.msra.mxu0 %v11122
    %11410 = vmatmul.bf16.gmra.mxu0 %v10741
    %v11411 = vpop.f32.mrf.mxu0
    %v11412 = vadd.f32 0.0, %v11411
    %v11413 = vpop.f32.mrf.mxu0
    %v11414 = vadd.f32 0.0, %v11413
    %11415 = vdwg.mxu0
    %11416 = vmatpush.bf16.msra.mxu0 0
    %11417 = vmatpush.bf16.msra.mxu0 0
    %11418 = vmatpush.bf16.msra.mxu0 0
    %11419 = vmatpush.bf16.msra.mxu0 %v11307
    %11420 = vmatpush.bf16.msra.mxu0 %v11199
    %11421 = vmatpush.bf16.msra.mxu0 %v11192
    %11422 = vmatpush.bf16.msra.mxu0 %v11185
    %11423 = vmatpush.bf16.msra.mxu0 %v11178
    %11424 = vmatmul.bf16.gmra.mxu0 %v11295
    %v11425 = vpop.f32.mrf.mxu0
    %v11426 = vadd.f32 %v11412, %v11425
    %v11427 = vpop.f32.mrf.mxu0
    %v11428 = vadd.f32 %v11414, %v11427
    %11429 = vdwg.mxu0
    %11430 = vmatpush.bf16.msra.mxu0 %v11172
    %11431 = vmatpush.bf16.msra.mxu0 %v11165
    %11432 = vmatpush.bf16.msra.mxu0 %v11158
    %11433 = vmatpush.bf16.msra.mxu0 %v11151
    %11434 = vmatpush.bf16.msra.mxu0 %v11144
    %11435 = vmatpush.bf16.msra.mxu0 %v11137
    %11436 = vmatpush.bf16.msra.mxu0 %v11130
    %11437 = vmatpush.bf16.msra.mxu0 %v11123
    %11438 = vmatmul.bf16.gmra.mxu0 %v10741
    %v11439 = vpop.f32.mrf.mxu0
    %v11440 = vadd.f32 0.0, %v11439
    %v11441 = vpop.f32.mrf.mxu0
    %v11442 = vadd.f32 0.0, %v11441
    %11443 = vdwg.mxu0
    %11444 = vmatpush.bf16.msra.mxu0 0
    %11445 = vmatpush.bf16.msra.mxu0 0
    %11446 = vmatpush.bf16.msra.mxu0 0
    %11447 = vmatpush.bf16.msra.mxu0 %v11310
    %11448 = vmatpush.bf16.msra.mxu0 %v11200
    %11449 = vmatpush.bf16.msra.mxu0 %v11193
    %11450 = vmatpush.bf16.msra.mxu0 %v11186
    %11451 = vmatpush.bf16.msra.mxu0 %v11179
    %11452 = vmatmul.bf16.gmra.mxu0 %v11295
    %v11453 = vpop.f32.mrf.mxu0
    %v11454 = vadd.f32 %v11440, %v11453
    %v11455 = vpop.f32.mrf.mxu0
    %v11456 = vadd.f32 %v11442, %v11455
    %11457 = vdwg.mxu0
    %11458 = vmatpush.bf16.msra.mxu0 %v11173
    %11459 = vmatpush.bf16.msra.mxu0 %v11166
    %11460 = vmatpush.bf16.msra.mxu0 %v11159
    %11461 = vmatpush.bf16.msra.mxu0 %v11152
    %11462 = vmatpush.bf16.msra.mxu0 %v11145
    %11463 = vmatpush.bf16.msra.mxu0 %v11138
    %11464 = vmatpush.bf16.msra.mxu0 %v11131
    %11465 = vmatpush.bf16.msra.mxu0 %v11124
    %11466 = vmatmul.bf16.gmra.mxu0 %v10741
    %v11467 = vpop.f32.mrf.mxu0
    %v11468 = vadd.f32 0.0, %v11467
    %v11469 = vpop.f32.mrf.mxu0
    %v11470 = vadd.f32 0.0, %v11469
    %11471 = vdwg.mxu0
    %11472 = vmatpush.bf16.msra.mxu0 0
    %11473 = vmatpush.bf16.msra.mxu0 0
    %11474 = vmatpush.bf16.msra.mxu0 0
    %11475 = vmatpush.bf16.msra.mxu0 %v11313
    %11476 = vmatpush.bf16.msra.mxu0 %v11201
    %11477 = vmatpush.bf16.msra.mxu0 %v11194
    %11478 = vmatpush.bf16.msra.mxu0 %v11187
    %11479 = vmatpush.bf16.msra.mxu0 %v11180
    %11480 = vmatmul.bf16.gmra.mxu0 %v11295
    %v11481 = vpop.f32.mrf.mxu0
    %v11482 = vadd.f32 %v11468, %v11481
    %v11483 = vpop.f32.mrf.mxu0
    %v11484 = vadd.f32 %v11470, %v11483
    %11485 = vdwg.mxu0
    %11486 = vmatpush.bf16.msra.mxu0 %v11174
    %11487 = vmatpush.bf16.msra.mxu0 %v11167
    %11488 = vmatpush.bf16.msra.mxu0 %v11160
    %11489 = vmatpush.bf16.msra.mxu0 %v11153
    %11490 = vmatpush.bf16.msra.mxu0 %v11146
    %11491 = vmatpush.bf16.msra.mxu0 %v11139
    %11492 = vmatpush.bf16.msra.mxu0 %v11132
    %11493 = vmatpush.bf16.msra.mxu0 %v11125
    %11494 = vmatmul.bf16.gmra.mxu0 %v10741
    %v11495 = vpop.f32.mrf.mxu0
    %v11496 = vadd.f32 0.0, %v11495
    %v11497 = vpop.f32.mrf.mxu0
    %v11498 = vadd.f32 0.0, %v11497
    %11499 = vdwg.mxu0
    %11500 = vmatpush.bf16.msra.mxu0 0
    %11501 = vmatpush.bf16.msra.mxu0 0
    %11502 = vmatpush.bf16.msra.mxu0 0
    %11503 = vmatpush.bf16.msra.mxu0 %v11316
    %11504 = vmatpush.bf16.msra.mxu0 %v11202
    %11505 = vmatpush.bf16.msra.mxu0 %v11195
    %11506 = vmatpush.bf16.msra.mxu0 %v11188
    %11507 = vmatpush.bf16.msra.mxu0 %v11181
    %11508 = vmatmul.bf16.gmra.mxu0 %v11295
    %v11509 = vpop.f32.mrf.mxu0
    %v11510 = vadd.f32 %v11496, %v11509
    %v11511 = vpop.f32.mrf.mxu0
    %v11512 = vadd.f32 %v11498, %v11511
    %11513 = vdwg.mxu0
    %v11514 = vadd.f32 %v10723, %v11342
    %v11515 = vadd.f32 %v10724, %v11370
    %v11516 = vadd.f32 %v10725, %v11398
    %v11517 = vadd.f32 %v10726, %v11426
    %v11518 = vadd.f32 %v10727, %v11454
    %v11519 = vadd.f32 %v10728, %v11482
    %v11520 = vadd.f32 %v10729, %v11510
    %v11521 = vadd.f32 %v10730, %v11344
    %v11522 = vadd.f32 %v10731, %v11372
    %v11523 = vadd.f32 %v10732, %v11400
    %v11524 = vadd.f32 %v10733, %v11428
    %v11525 = vadd.f32 %v10734, %v11456
    %v11526 = vadd.f32 %v10735, %v11484
    %v11527 = vadd.f32 %v10736, %v11512
    %v11528 = vld [vmem:[#allocation4 + $0x80] sm:$0xff]
    %v11529 = vld [vmem:[#allocation4 + $0x88] sm:$0xff]
    %v11530 = vld [vmem:[#allocation4 + $0x110] sm:$0xff]
    %v11531 = vld [vmem:[#allocation4 + $0x118] sm:$0xff]
    %v11532 = vpack.c.bf16 %v11530, %v11528
    %v11533 = vpack.c.bf16 %v11531, %v11529
    %s11534 = scalar_lea.vmem [#allocation5], 5600
    %v11535 = vld [vmem:[%s11534] sm:$0xff]
    %v11536 = vld [vmem:[%s11534 + $0x8] sm:$0xff]
    %v11537 = vld [vmem:[%s11534 + $0x10] sm:$0xff]
    %v11538 = vld [vmem:[%s11534 + $0x18] sm:$0xf]
    %v11539 = vld [vmem:[%s11534 + $0x1c] sm:$0xff]
    %v11540 = vld [vmem:[%s11534 + $0x24] sm:$0xff]
    %v11541 = vld [vmem:[%s11534 + $0x2c] sm:$0xff]
    %v11542 = vld [vmem:[%s11534 + $0x34] sm:$0xf]
    %v11543 = vld [vmem:[%s11534 + $0x38] sm:$0xff]
    %v11544 = vld [vmem:[%s11534 + $0x40] sm:$0xff]
    %v11545 = vld [vmem:[%s11534 + $0x48] sm:$0xff]
    %v11546 = vld [vmem:[%s11534 + $0x50] sm:$0xf]
    %v11547 = vld [vmem:[%s11534 + $0x54] sm:$0xff]
    %v11548 = vld [vmem:[%s11534 + $0x5c] sm:$0xff]
    %v11549 = vld [vmem:[%s11534 + $0x64] sm:$0xff]
    %v11550 = vld [vmem:[%s11534 + $0x6c] sm:$0xf]
    %v11551 = vld [vmem:[%s11534 + $0x70] sm:$0xff]
    %v11552 = vld [vmem:[%s11534 + $0x78] sm:$0xff]
    %v11553 = vld [vmem:[%s11534 + $0x80] sm:$0xff]
    %v11554 = vld [vmem:[%s11534 + $0x88] sm:$0xf]
    %v11555 = vld [vmem:[%s11534 + $0x8c] sm:$0xff]
    %v11556 = vld [vmem:[%s11534 + $0x94] sm:$0xff]
    %v11557 = vld [vmem:[%s11534 + $0x9c] sm:$0xff]
    %v11558 = vld [vmem:[%s11534 + $0xa4] sm:$0xf]
    %v11559 = vld [vmem:[%s11534 + $0xa8] sm:$0xff]
    %v11560 = vld [vmem:[%s11534 + $0xb0] sm:$0xff]
    %v11561 = vld [vmem:[%s11534 + $0xb8] sm:$0xff]
    %v11562 = vld [vmem:[%s11534 + $0xc0] sm:$0xf]
    %v11563 = vld [vmem:[%s11534 + $0xc4] sm:$0xff]
    %v11564 = vld [vmem:[%s11534 + $0xcc] sm:$0xff]
    %v11565 = vld [vmem:[%s11534 + $0xd4] sm:$0xff]
    %v11566 = vld [vmem:[%s11534 + $0xdc] sm:$0xf]
    %v11567 = vld [vmem:[%s11534 + $0xe0] sm:$0xff]
    %v11568 = vld [vmem:[%s11534 + $0xe8] sm:$0xff]
    %v11569 = vld [vmem:[%s11534 + $0xf0] sm:$0xff]
    %v11570 = vld [vmem:[%s11534 + $0xf8] sm:$0xf]
    %v11571 = vld [vmem:[%s11534 + $0xfc] sm:$0xff]
    %v11572 = vld [vmem:[%s11534 + $0x104] sm:$0xff]
    %v11573 = vld [vmem:[%s11534 + $0x10c] sm:$0xff]
    %v11574 = vld [vmem:[%s11534 + $0x114] sm:$0xf]
    %v11575 = vld [vmem:[%s11534 + $0x118] sm:$0xff]
    %v11576 = vld [vmem:[%s11534 + $0x120] sm:$0xff]
    %v11577 = vld [vmem:[%s11534 + $0x128] sm:$0xff]
    %v11578 = vld [vmem:[%s11534 + $0x130] sm:$0xf]
    %v11579 = vld [vmem:[%s11534 + $0x134] sm:$0xff]
    %v11580 = vld [vmem:[%s11534 + $0x13c] sm:$0xff]
    %v11581 = vld [vmem:[%s11534 + $0x144] sm:$0xff]
    %v11582 = vld [vmem:[%s11534 + $0x14c] sm:$0xf]
    %v11583 = vld [vmem:[%s11534 + $0x150] sm:$0xff]
    %v11584 = vld [vmem:[%s11534 + $0x158] sm:$0xff]
    %v11585 = vld [vmem:[%s11534 + $0x160] sm:$0xff]
    %v11586 = vld [vmem:[%s11534 + $0x168] sm:$0xf]
    %v11587 = vld [vmem:[%s11534 + $0x16c] sm:$0xff]
    %v11588 = vld [vmem:[%s11534 + $0x174] sm:$0xff]
    %v11589 = vld [vmem:[%s11534 + $0x17c] sm:$0xff]
    %v11590 = vld [vmem:[%s11534 + $0x184] sm:$0xf]
    %v11591 = vld [vmem:[%s11534 + $0x188] sm:$0xff]
    %v11592 = vld [vmem:[%s11534 + $0x190] sm:$0xff]
    %v11593 = vld [vmem:[%s11534 + $0x198] sm:$0xff]
    %v11594 = vld [vmem:[%s11534 + $0x1a0] sm:$0xf]
    %v11595 = vld [vmem:[%s11534 + $0x1a4] sm:$0xff]
    %v11596 = vld [vmem:[%s11534 + $0x1ac] sm:$0xff]
    %v11597 = vld [vmem:[%s11534 + $0x1b4] sm:$0xff]
    %v11598 = vld [vmem:[%s11534 + $0x1bc] sm:$0xf]
    %v11599 = vld [vmem:[%s11534 + $0x1c0] sm:$0xff]
    %v11600 = vld [vmem:[%s11534 + $0x1c8] sm:$0xff]
    %v11601 = vld [vmem:[%s11534 + $0x1d0] sm:$0xff]
    %v11602 = vld [vmem:[%s11534 + $0x1d8] sm:$0xf]
    %v11603 = vld [vmem:[%s11534 + $0x1dc] sm:$0xff]
    %v11604 = vld [vmem:[%s11534 + $0x1e4] sm:$0xff]
    %v11605 = vld [vmem:[%s11534 + $0x1ec] sm:$0xff]
    %v11606 = vld [vmem:[%s11534 + $0x1f4] sm:$0xf]
    %v11607 = vld [vmem:[%s11534 + $0x1f8] sm:$0xff]
    %v11608 = vld [vmem:[%s11534 + $0x200] sm:$0xff]
    %v11609 = vld [vmem:[%s11534 + $0x208] sm:$0xff]
    %v11610 = vld [vmem:[%s11534 + $0x210] sm:$0xf]
    %v11611 = vld [vmem:[%s11534 + $0x214] sm:$0xff]
    %v11612 = vld [vmem:[%s11534 + $0x21c] sm:$0xff]
    %v11613 = vld [vmem:[%s11534 + $0x224] sm:$0xff]
    %v11614 = vld [vmem:[%s11534 + $0x22c] sm:$0xf]
    %v11615 = vld [vmem:[%s11534 + $0x230] sm:$0xff]
    %v11616 = vld [vmem:[%s11534 + $0x238] sm:$0xff]
    %v11617 = vld [vmem:[%s11534 + $0x240] sm:$0xff]
    %v11618 = vld [vmem:[%s11534 + $0x248] sm:$0xf]
    %v11619 = vld [vmem:[%s11534 + $0x24c] sm:$0xff]
    %v11620 = vld [vmem:[%s11534 + $0x254] sm:$0xff]
    %v11621 = vld [vmem:[%s11534 + $0x25c] sm:$0xff]
    %v11622 = vld [vmem:[%s11534 + $0x264] sm:$0xf]
    %v11623 = vld [vmem:[%s11534 + $0x268] sm:$0xff]
    %v11624 = vld [vmem:[%s11534 + $0x270] sm:$0xff]
    %v11625 = vld [vmem:[%s11534 + $0x278] sm:$0xff]
    %v11626 = vld [vmem:[%s11534 + $0x280] sm:$0xf]
    %v11627 = vld [vmem:[%s11534 + $0x284] sm:$0xff]
    %v11628 = vld [vmem:[%s11534 + $0x28c] sm:$0xff]
    %v11629 = vld [vmem:[%s11534 + $0x294] sm:$0xff]
    %v11630 = vld [vmem:[%s11534 + $0x29c] sm:$0xf]
    %v11631 = vld [vmem:[%s11534 + $0x2a0] sm:$0x33]
    %v11632 = vld [vmem:[%s11534 + $0x2a8] sm:$0x33]
    %v11633 = vld [vmem:[%s11534 + $0x2b0] sm:$0x33]
    %v11634 = vld [vmem:[%s11534 + $0x2b8] sm:$0x3]
    %v11735 = vunpack.c.l.b16 %v11535
    %v11736 = vunpack.c.h.b16 %v11535
    %v11737 = vunpack.c.l.b16 %v11536
    %v11738 = vunpack.c.h.b16 %v11536
    %v11739 = vunpack.c.l.b16 %v11537
    %v11740 = vunpack.c.h.b16 %v11537
    %v11741 = vunpack.c.l.b16 %v11538
    %v11742 = vunpack.c.l.b16 %v11539
    %v11743 = vunpack.c.h.b16 %v11539
    %v11744 = vunpack.c.l.b16 %v11540
    %v11745 = vunpack.c.h.b16 %v11540
    %v11746 = vunpack.c.l.b16 %v11541
    %v11747 = vunpack.c.h.b16 %v11541
    %v11748 = vunpack.c.l.b16 %v11542
    %v11749 = vunpack.c.l.b16 %v11543
    %v11750 = vunpack.c.h.b16 %v11543
    %v11751 = vunpack.c.l.b16 %v11544
    %v11752 = vunpack.c.h.b16 %v11544
    %v11753 = vunpack.c.l.b16 %v11545
    %v11754 = vunpack.c.h.b16 %v11545
    %v11755 = vunpack.c.l.b16 %v11546
    %v11756 = vunpack.c.l.b16 %v11547
    %v11757 = vunpack.c.h.b16 %v11547
    %v11758 = vunpack.c.l.b16 %v11548
    %v11759 = vunpack.c.h.b16 %v11548
    %v11760 = vunpack.c.l.b16 %v11549
    %v11761 = vunpack.c.h.b16 %v11549
    %v11762 = vunpack.c.l.b16 %v11550
    %v11763 = vunpack.c.l.b16 %v11551
    %v11764 = vunpack.c.h.b16 %v11551
    %v11765 = vunpack.c.l.b16 %v11552
    %v11766 = vunpack.c.h.b16 %v11552
    %v11767 = vunpack.c.l.b16 %v11553
    %v11768 = vunpack.c.h.b16 %v11553
    %v11769 = vunpack.c.l.b16 %v11554
    %v11770 = vunpack.c.l.b16 %v11555
    %v11771 = vunpack.c.h.b16 %v11555
    %v11772 = vunpack.c.l.b16 %v11556
    %v11773 = vunpack.c.h.b16 %v11556
    %v11774 = vunpack.c.l.b16 %v11557
    %v11775 = vunpack.c.h.b16 %v11557
    %v11776 = vunpack.c.l.b16 %v11558
    %v11777 = vunpack.c.l.b16 %v11559
    %v11778 = vunpack.c.h.b16 %v11559
    %v11779 = vunpack.c.l.b16 %v11560
    %v11780 = vunpack.c.h.b16 %v11560
    %v11781 = vunpack.c.l.b16 %v11561
    %v11782 = vunpack.c.h.b16 %v11561
    %v11783 = vunpack.c.l.b16 %v11562
    %v11784 = vunpack.c.l.b16 %v11563
    %v11785 = vunpack.c.h.b16 %v11563
    %v11786 = vunpack.c.l.b16 %v11564
    %v11787 = vunpack.c.h.b16 %v11564
    %v11788 = vunpack.c.l.b16 %v11565
    %v11789 = vunpack.c.h.b16 %v11565
    %v11790 = vunpack.c.l.b16 %v11566
    %v11791 = vunpack.c.l.b16 %v11567
    %v11792 = vunpack.c.h.b16 %v11567
    %v11793 = vunpack.c.l.b16 %v11568
    %v11794 = vunpack.c.h.b16 %v11568
    %v11795 = vunpack.c.l.b16 %v11569
    %v11796 = vunpack.c.h.b16 %v11569
    %v11797 = vunpack.c.l.b16 %v11570
    %v11798 = vunpack.c.l.b16 %v11571
    %v11799 = vunpack.c.h.b16 %v11571
    %v11800 = vunpack.c.l.b16 %v11572
    %v11801 = vunpack.c.h.b16 %v11572
    %v11802 = vunpack.c.l.b16 %v11573
    %v11803 = vunpack.c.h.b16 %v11573
    %v11804 = vunpack.c.l.b16 %v11574
    %v11805 = vunpack.c.l.b16 %v11575
    %v11806 = vunpack.c.h.b16 %v11575
    %v11807 = vunpack.c.l.b16 %v11576
    %v11808 = vunpack.c.h.b16 %v11576
    %v11809 = vunpack.c.l.b16 %v11577
    %v11810 = vunpack.c.h.b16 %v11577
    %v11811 = vunpack.c.l.b16 %v11578
    %v11812 = vunpack.c.l.b16 %v11579
    %v11813 = vunpack.c.h.b16 %v11579
    %v11814 = vunpack.c.l.b16 %v11580
    %v11815 = vunpack.c.h.b16 %v11580
    %v11816 = vunpack.c.l.b16 %v11581
    %v11817 = vunpack.c.h.b16 %v11581
    %v11818 = vunpack.c.l.b16 %v11582
    %v11819 = vunpack.c.l.b16 %v11583
    %v11820 = vunpack.c.h.b16 %v11583
    %v11821 = vunpack.c.l.b16 %v11584
    %v11822 = vunpack.c.h.b16 %v11584
    %v11823 = vunpack.c.l.b16 %v11585
    %v11824 = vunpack.c.h.b16 %v11585
    %v11825 = vunpack.c.l.b16 %v11586
    %v11826 = vunpack.c.l.b16 %v11587
    %v11827 = vunpack.c.h.b16 %v11587
    %v11828 = vunpack.c.l.b16 %v11588
    %v11829 = vunpack.c.h.b16 %v11588
    %v11830 = vunpack.c.l.b16 %v11589
    %v11831 = vunpack.c.h.b16 %v11589
    %v11832 = vunpack.c.l.b16 %v11590
    %v11833 = vunpack.c.l.b16 %v11591
    %v11834 = vunpack.c.h.b16 %v11591
    %v11835 = vunpack.c.l.b16 %v11592
    %v11836 = vunpack.c.h.b16 %v11592
    %v11837 = vunpack.c.l.b16 %v11593
    %v11838 = vunpack.c.h.b16 %v11593
    %v11839 = vunpack.c.l.b16 %v11594
    %v11840 = vunpack.c.l.b16 %v11595
    %v11841 = vunpack.c.h.b16 %v11595
    %v11842 = vunpack.c.l.b16 %v11596
    %v11843 = vunpack.c.h.b16 %v11596
    %v11844 = vunpack.c.l.b16 %v11597
    %v11845 = vunpack.c.h.b16 %v11597
    %v11846 = vunpack.c.l.b16 %v11598
    %v11847 = vunpack.c.l.b16 %v11599
    %v11848 = vunpack.c.h.b16 %v11599
    %v11849 = vunpack.c.l.b16 %v11600
    %v11850 = vunpack.c.h.b16 %v11600
    %v11851 = vunpack.c.l.b16 %v11601
    %v11852 = vunpack.c.h.b16 %v11601
    %v11853 = vunpack.c.l.b16 %v11602
    %v11854 = vunpack.c.l.b16 %v11603
    %v11855 = vunpack.c.h.b16 %v11603
    %v11856 = vunpack.c.l.b16 %v11604
    %v11857 = vunpack.c.h.b16 %v11604
    %v11858 = vunpack.c.l.b16 %v11605
    %v11859 = vunpack.c.h.b16 %v11605
    %v11860 = vunpack.c.l.b16 %v11606
    %v11861 = vunpack.c.l.b16 %v11607
    %v11862 = vunpack.c.h.b16 %v11607
    %v11863 = vunpack.c.l.b16 %v11608
    %v11864 = vunpack.c.h.b16 %v11608
    %v11865 = vunpack.c.l.b16 %v11609
    %v11866 = vunpack.c.h.b16 %v11609
    %v11867 = vunpack.c.l.b16 %v11610
    %v11868 = vunpack.c.l.b16 %v11611
    %v11869 = vunpack.c.h.b16 %v11611
    %v11870 = vunpack.c.l.b16 %v11612
    %v11871 = vunpack.c.h.b16 %v11612
    %v11872 = vunpack.c.l.b16 %v11613
    %v11873 = vunpack.c.h.b16 %v11613
    %v11874 = vunpack.c.l.b16 %v11614
    %v11875 = vunpack.c.l.b16 %v11615
    %v11876 = vunpack.c.h.b16 %v11615
    %v11877 = vunpack.c.l.b16 %v11616
    %v11878 = vunpack.c.h.b16 %v11616
    %v11879 = vunpack.c.l.b16 %v11617
    %v11880 = vunpack.c.h.b16 %v11617
    %v11881 = vunpack.c.l.b16 %v11618
    %v11882 = vunpack.c.l.b16 %v11619
    %v11883 = vunpack.c.h.b16 %v11619
    %v11884 = vunpack.c.l.b16 %v11620
    %v11885 = vunpack.c.h.b16 %v11620
    %v11886 = vunpack.c.l.b16 %v11621
    %v11887 = vunpack.c.h.b16 %v11621
    %v11888 = vunpack.c.l.b16 %v11622
    %v11889 = vunpack.c.l.b16 %v11623
    %v11890 = vunpack.c.h.b16 %v11623
    %v11891 = vunpack.c.l.b16 %v11624
    %v11892 = vunpack.c.h.b16 %v11624
    %v11893 = vunpack.c.l.b16 %v11625
    %v11894 = vunpack.c.h.b16 %v11625
    %v11895 = vunpack.c.l.b16 %v11626
    %v11896 = vunpack.c.l.b16 %v11627
    %v11897 = vunpack.c.h.b16 %v11627
    %v11898 = vunpack.c.l.b16 %v11628
    %v11899 = vunpack.c.h.b16 %v11628
    %v11900 = vunpack.c.l.b16 %v11629
    %v11901 = vunpack.c.h.b16 %v11629
    %v11902 = vunpack.c.l.b16 %v11630
    %v11903 = vunpack.c.l.b16 %v11631
    %v11904 = vunpack.c.h.b16 %v11631
    %v11905 = vunpack.c.l.b16 %v11632
    %v11906 = vunpack.c.h.b16 %v11632
    %v11907 = vunpack.c.l.b16 %v11633
    %v11908 = vunpack.c.h.b16 %v11633
    %v11909 = vunpack.c.l.b16 %v11634
    %v11910 = vpack.c.b16 %v11742, %v11735
    %v11911 = vpack.c.b16 %v11743, %v11736
    %v11912 = vpack.c.b16 %v11744, %v11737
    %v11913 = vpack.c.b16 %v11745, %v11738
    %v11914 = vpack.c.b16 %v11746, %v11739
    %v11915 = vpack.c.b16 %v11747, %v11740
    %v11916 = vpack.c.b16 %v11748, %v11741
    %v11917 = vpack.c.b16 %v11756, %v11749
    %v11918 = vpack.c.b16 %v11757, %v11750
    %v11919 = vpack.c.b16 %v11758, %v11751
    %v11920 = vpack.c.b16 %v11759, %v11752
    %v11921 = vpack.c.b16 %v11760, %v11753
    %v11922 = vpack.c.b16 %v11761, %v11754
    %v11923 = vpack.c.b16 %v11762, %v11755
    %v11924 = vpack.c.b16 %v11770, %v11763
    %v11925 = vpack.c.b16 %v11771, %v11764
    %v11926 = vpack.c.b16 %v11772, %v11765
    %v11927 = vpack.c.b16 %v11773, %v11766
    %v11928 = vpack.c.b16 %v11774, %v11767
    %v11929 = vpack.c.b16 %v11775, %v11768
    %v11930 = vpack.c.b16 %v11776, %v11769
    %v11931 = vpack.c.b16 %v11784, %v11777
    %v11932 = vpack.c.b16 %v11785, %v11778
    %v11933 = vpack.c.b16 %v11786, %v11779
    %v11934 = vpack.c.b16 %v11787, %v11780
    %v11935 = vpack.c.b16 %v11788, %v11781
    %v11936 = vpack.c.b16 %v11789, %v11782
    %v11937 = vpack.c.b16 %v11790, %v11783
    %v11938 = vpack.c.b16 %v11798, %v11791
    %v11939 = vpack.c.b16 %v11799, %v11792
    %v11940 = vpack.c.b16 %v11800, %v11793
    %v11941 = vpack.c.b16 %v11801, %v11794
    %v11942 = vpack.c.b16 %v11802, %v11795
    %v11943 = vpack.c.b16 %v11803, %v11796
    %v11944 = vpack.c.b16 %v11804, %v11797
    %v11945 = vpack.c.b16 %v11812, %v11805
    %v11946 = vpack.c.b16 %v11813, %v11806
    %v11947 = vpack.c.b16 %v11814, %v11807
    %v11948 = vpack.c.b16 %v11815, %v11808
    %v11949 = vpack.c.b16 %v11816, %v11809
    %v11950 = vpack.c.b16 %v11817, %v11810
    %v11951 = vpack.c.b16 %v11818, %v11811
    %v11952 = vpack.c.b16 %v11826, %v11819
    %v11953 = vpack.c.b16 %v11827, %v11820
    %v11954 = vpack.c.b16 %v11828, %v11821
    %v11955 = vpack.c.b16 %v11829, %v11822
    %v11956 = vpack.c.b16 %v11830, %v11823
    %v11957 = vpack.c.b16 %v11831, %v11824
    %v11958 = vpack.c.b16 %v11832, %v11825
    %v11959 = vpack.c.b16 %v11840, %v11833
    %v11960 = vpack.c.b16 %v11841, %v11834
    %v11961 = vpack.c.b16 %v11842, %v11835
    %v11962 = vpack.c.b16 %v11843, %v11836
    %v11963 = vpack.c.b16 %v11844, %v11837
    %v11964 = vpack.c.b16 %v11845, %v11838
    %v11965 = vpack.c.b16 %v11846, %v11839
    %v11966 = vpack.c.b16 %v11854, %v11847
    %v11967 = vpack.c.b16 %v11855, %v11848
    %v11968 = vpack.c.b16 %v11856, %v11849
    %v11969 = vpack.c.b16 %v11857, %v11850
    %v11970 = vpack.c.b16 %v11858, %v11851
    %v11971 = vpack.c.b16 %v11859, %v11852
    %v11972 = vpack.c.b16 %v11860, %v11853
    %v11973 = vpack.c.b16 %v11868, %v11861
    %v11974 = vpack.c.b16 %v11869, %v11862
    %v11975 = vpack.c.b16 %v11870, %v11863
    %v11976 = vpack.c.b16 %v11871, %v11864
    %v11977 = vpack.c.b16 %v11872, %v11865
    %v11978 = vpack.c.b16 %v11873, %v11866
    %v11979 = vpack.c.b16 %v11874, %v11867
    %v11980 = vpack.c.b16 %v11882, %v11875
    %v11981 = vpack.c.b16 %v11883, %v11876
    %v11982 = vpack.c.b16 %v11884, %v11877
    %v11983 = vpack.c.b16 %v11885, %v11878
    %v11984 = vpack.c.b16 %v11886, %v11879
    %v11985 = vpack.c.b16 %v11887, %v11880
    %v11986 = vpack.c.b16 %v11888, %v11881
    %v11987 = vpack.c.b16 %v11896, %v11889
    %v11988 = vpack.c.b16 %v11897, %v11890
    %v11989 = vpack.c.b16 %v11898, %v11891
    %v11990 = vpack.c.b16 %v11899, %v11892
    %v11991 = vpack.c.b16 %v11900, %v11893
    %v11992 = vpack.c.b16 %v11901, %v11894
    %v11993 = vpack.c.b16 %v11902, %v11895
    %v11994 = vpack.c.b16 %v11903, %v11903
    %v11995 = vpack.c.b16 %v11904, %v11904
    %v11996 = vpack.c.b16 %v11905, %v11905
    %v11997 = vpack.c.b16 %v11906, %v11906
    %v11998 = vpack.c.b16 %v11907, %v11907
    %v11999 = vpack.c.b16 %v11908, %v11908
    %v12000 = vpack.c.b16 %v11909, %v11909
    %v12086 = vsel %vm5067, %v11533, 0
    %v12089 = vsel %vm572, %v11994, 0
    %v12092 = vsel %vm572, %v11995, 0
    %v12095 = vsel %vm572, %v11996, 0
    %v12098 = vsel %vm572, %v11997, 0
    %v12101 = vsel %vm572, %v11998, 0
    %v12104 = vsel %vm572, %v11999, 0
    %v12107 = vsel %vm572, %v12000, 0
    %12109 = vmatpush.bf16.msra.mxu0 %v11959
    %12110 = vmatpush.bf16.msra.mxu0 %v11952
    %12111 = vmatpush.bf16.msra.mxu0 %v11945
    %12112 = vmatpush.bf16.msra.mxu0 %v11938
    %12113 = vmatpush.bf16.msra.mxu0 %v11931
    %12114 = vmatpush.bf16.msra.mxu0 %v11924
    %12115 = vmatpush.bf16.msra.mxu0 %v11917
    %12116 = vmatpush.bf16.msra.mxu0 %v11910
    %12117 = vmatmul.bf16.gmra.mxu0 %v11532
    %v12118 = vpop.f32.mrf.mxu0
    %v12119 = vadd.f32 0.0, %v12118
    %v12120 = vpop.f32.mrf.mxu0
    %v12121 = vadd.f32 0.0, %v12120
    %12122 = vdwg.mxu0
    %12123 = vmatpush.bf16.msra.mxu0 0
    %12124 = vmatpush.bf16.msra.mxu0 0
    %12125 = vmatpush.bf16.msra.mxu0 0
    %12126 = vmatpush.bf16.msra.mxu0 %v12089
    %12127 = vmatpush.bf16.msra.mxu0 %v11987
    %12128 = vmatpush.bf16.msra.mxu0 %v11980
    %12129 = vmatpush.bf16.msra.mxu0 %v11973
    %12130 = vmatpush.bf16.msra.mxu0 %v11966
    %12131 = vmatmul.bf16.gmra.mxu0 %v12086
    %v12132 = vpop.f32.mrf.mxu0
    %v12133 = vadd.f32 %v12119, %v12132
    %v12134 = vpop.f32.mrf.mxu0
    %v12135 = vadd.f32 %v12121, %v12134
    %12136 = vdwg.mxu0
    %12137 = vmatpush.bf16.msra.mxu0 %v11960
    %12138 = vmatpush.bf16.msra.mxu0 %v11953
    %12139 = vmatpush.bf16.msra.mxu0 %v11946
    %12140 = vmatpush.bf16.msra.mxu0 %v11939
    %12141 = vmatpush.bf16.msra.mxu0 %v11932
    %12142 = vmatpush.bf16.msra.mxu0 %v11925
    %12143 = vmatpush.bf16.msra.mxu0 %v11918
    %12144 = vmatpush.bf16.msra.mxu0 %v11911
    %12145 = vmatmul.bf16.gmra.mxu0 %v11532
    %v12146 = vpop.f32.mrf.mxu0
    %v12147 = vadd.f32 0.0, %v12146
    %v12148 = vpop.f32.mrf.mxu0
    %v12149 = vadd.f32 0.0, %v12148
    %12150 = vdwg.mxu0
    %12151 = vmatpush.bf16.msra.mxu0 0
    %12152 = vmatpush.bf16.msra.mxu0 0
    %12153 = vmatpush.bf16.msra.mxu0 0
    %12154 = vmatpush.bf16.msra.mxu0 %v12092
    %12155 = vmatpush.bf16.msra.mxu0 %v11988
    %12156 = vmatpush.bf16.msra.mxu0 %v11981
    %12157 = vmatpush.bf16.msra.mxu0 %v11974
    %12158 = vmatpush.bf16.msra.mxu0 %v11967
    %12159 = vmatmul.bf16.gmra.mxu0 %v12086
    %v12160 = vpop.f32.mrf.mxu0
    %v12161 = vadd.f32 %v12147, %v12160
    %v12162 = vpop.f32.mrf.mxu0
    %v12163 = vadd.f32 %v12149, %v12162
    %12164 = vdwg.mxu0
    %12165 = vmatpush.bf16.msra.mxu0 %v11961
    %12166 = vmatpush.bf16.msra.mxu0 %v11954
    %12167 = vmatpush.bf16.msra.mxu0 %v11947
    %12168 = vmatpush.bf16.msra.mxu0 %v11940
    %12169 = vmatpush.bf16.msra.mxu0 %v11933
    %12170 = vmatpush.bf16.msra.mxu0 %v11926
    %12171 = vmatpush.bf16.msra.mxu0 %v11919
    %12172 = vmatpush.bf16.msra.mxu0 %v11912
    %12173 = vmatmul.bf16.gmra.mxu0 %v11532
    %v12174 = vpop.f32.mrf.mxu0
    %v12175 = vadd.f32 0.0, %v12174
    %v12176 = vpop.f32.mrf.mxu0
    %v12177 = vadd.f32 0.0, %v12176
    %12178 = vdwg.mxu0
    %12179 = vmatpush.bf16.msra.mxu0 0
    %12180 = vmatpush.bf16.msra.mxu0 0
    %12181 = vmatpush.bf16.msra.mxu0 0
    %12182 = vmatpush.bf16.msra.mxu0 %v12095
    %12183 = vmatpush.bf16.msra.mxu0 %v11989
    %12184 = vmatpush.bf16.msra.mxu0 %v11982
    %12185 = vmatpush.bf16.msra.mxu0 %v11975
    %12186 = vmatpush.bf16.msra.mxu0 %v11968
    %12187 = vmatmul.bf16.gmra.mxu0 %v12086
    %v12188 = vpop.f32.mrf.mxu0
    %v12189 = vadd.f32 %v12175, %v12188
    %v12190 = vpop.f32.mrf.mxu0
    %v12191 = vadd.f32 %v12177, %v12190
    %12192 = vdwg.mxu0
    %12193 = vmatpush.bf16.msra.mxu0 %v11962
    %12194 = vmatpush.bf16.msra.mxu0 %v11955
    %12195 = vmatpush.bf16.msra.mxu0 %v11948
    %12196 = vmatpush.bf16.msra.mxu0 %v11941
    %12197 = vmatpush.bf16.msra.mxu0 %v11934
    %12198 = vmatpush.bf16.msra.mxu0 %v11927
    %12199 = vmatpush.bf16.msra.mxu0 %v11920
    %12200 = vmatpush.bf16.msra.mxu0 %v11913
    %12201 = vmatmul.bf16.gmra.mxu0 %v11532
    %v12202 = vpop.f32.mrf.mxu0
    %v12203 = vadd.f32 0.0, %v12202
    %v12204 = vpop.f32.mrf.mxu0
    %v12205 = vadd.f32 0.0, %v12204
    %12206 = vdwg.mxu0
    %12207 = vmatpush.bf16.msra.mxu0 0
    %12208 = vmatpush.bf16.msra.mxu0 0
    %12209 = vmatpush.bf16.msra.mxu0 0
    %12210 = vmatpush.bf16.msra.mxu0 %v12098
    %12211 = vmatpush.bf16.msra.mxu0 %v11990
    %12212 = vmatpush.bf16.msra.mxu0 %v11983
    %12213 = vmatpush.bf16.msra.mxu0 %v11976
    %12214 = vmatpush.bf16.msra.mxu0 %v11969
    %12215 = vmatmul.bf16.gmra.mxu0 %v12086
    %v12216 = vpop.f32.mrf.mxu0
    %v12217 = vadd.f32 %v12203, %v12216
    %v12218 = vpop.f32.mrf.mxu0
    %v12219 = vadd.f32 %v12205, %v12218
    %12220 = vdwg.mxu0
    %12221 = vmatpush.bf16.msra.mxu0 %v11963
    %12222 = vmatpush.bf16.msra.mxu0 %v11956
    %12223 = vmatpush.bf16.msra.mxu0 %v11949
    %12224 = vmatpush.bf16.msra.mxu0 %v11942
    %12225 = vmatpush.bf16.msra.mxu0 %v11935
    %12226 = vmatpush.bf16.msra.mxu0 %v11928
    %12227 = vmatpush.bf16.msra.mxu0 %v11921
    %12228 = vmatpush.bf16.msra.mxu0 %v11914
    %12229 = vmatmul.bf16.gmra.mxu0 %v11532
    %v12230 = vpop.f32.mrf.mxu0
    %v12231 = vadd.f32 0.0, %v12230
    %v12232 = vpop.f32.mrf.mxu0
    %v12233 = vadd.f32 0.0, %v12232
    %12234 = vdwg.mxu0
    %12235 = vmatpush.bf16.msra.mxu0 0
    %12236 = vmatpush.bf16.msra.mxu0 0
    %12237 = vmatpush.bf16.msra.mxu0 0
    %12238 = vmatpush.bf16.msra.mxu0 %v12101
    %12239 = vmatpush.bf16.msra.mxu0 %v11991
    %12240 = vmatpush.bf16.msra.mxu0 %v11984
    %12241 = vmatpush.bf16.msra.mxu0 %v11977
    %12242 = vmatpush.bf16.msra.mxu0 %v11970
    %12243 = vmatmul.bf16.gmra.mxu0 %v12086
    %v12244 = vpop.f32.mrf.mxu0
    %v12245 = vadd.f32 %v12231, %v12244
    %v12246 = vpop.f32.mrf.mxu0
    %v12247 = vadd.f32 %v12233, %v12246
    %12248 = vdwg.mxu0
    %12249 = vmatpush.bf16.msra.mxu0 %v11964
    %12250 = vmatpush.bf16.msra.mxu0 %v11957
    %12251 = vmatpush.bf16.msra.mxu0 %v11950
    %12252 = vmatpush.bf16.msra.mxu0 %v11943
    %12253 = vmatpush.bf16.msra.mxu0 %v11936
    %12254 = vmatpush.bf16.msra.mxu0 %v11929
    %12255 = vmatpush.bf16.msra.mxu0 %v11922
    %12256 = vmatpush.bf16.msra.mxu0 %v11915
    %12257 = vmatmul.bf16.gmra.mxu0 %v11532
    %v12258 = vpop.f32.mrf.mxu0
    %v12259 = vadd.f32 0.0, %v12258
    %v12260 = vpop.f32.mrf.mxu0
    %v12261 = vadd.f32 0.0, %v12260
    %12262 = vdwg.mxu0
    %12263 = vmatpush.bf16.msra.mxu0 0
    %12264 = vmatpush.bf16.msra.mxu0 0
    %12265 = vmatpush.bf16.msra.mxu0 0
    %12266 = vmatpush.bf16.msra.mxu0 %v12104
    %12267 = vmatpush.bf16.msra.mxu0 %v11992
    %12268 = vmatpush.bf16.msra.mxu0 %v11985
    %12269 = vmatpush.bf16.msra.mxu0 %v11978
    %12270 = vmatpush.bf16.msra.mxu0 %v11971
    %12271 = vmatmul.bf16.gmra.mxu0 %v12086
    %v12272 = vpop.f32.mrf.mxu0
    %v12273 = vadd.f32 %v12259, %v12272
    %v12274 = vpop.f32.mrf.mxu0
    %v12275 = vadd.f32 %v12261, %v12274
    %12276 = vdwg.mxu0
    %12277 = vmatpush.bf16.msra.mxu0 %v11965
    %12278 = vmatpush.bf16.msra.mxu0 %v11958
    %12279 = vmatpush.bf16.msra.mxu0 %v11951
    %12280 = vmatpush.bf16.msra.mxu0 %v11944
    %12281 = vmatpush.bf16.msra.mxu0 %v11937
    %12282 = vmatpush.bf16.msra.mxu0 %v11930
    %12283 = vmatpush.bf16.msra.mxu0 %v11923
    %12284 = vmatpush.bf16.msra.mxu0 %v11916
    %12285 = vmatmul.bf16.gmra.mxu0 %v11532
    %v12286 = vpop.f32.mrf.mxu0
    %v12287 = vadd.f32 0.0, %v12286
    %v12288 = vpop.f32.mrf.mxu0
    %v12289 = vadd.f32 0.0, %v12288
    %12290 = vdwg.mxu0
    %12291 = vmatpush.bf16.msra.mxu0 0
    %12292 = vmatpush.bf16.msra.mxu0 0
    %12293 = vmatpush.bf16.msra.mxu0 0
    %12294 = vmatpush.bf16.msra.mxu0 %v12107
    %12295 = vmatpush.bf16.msra.mxu0 %v11993
    %12296 = vmatpush.bf16.msra.mxu0 %v11986
    %12297 = vmatpush.bf16.msra.mxu0 %v11979
    %12298 = vmatpush.bf16.msra.mxu0 %v11972
    %12299 = vmatmul.bf16.gmra.mxu0 %v12086
    %v12300 = vpop.f32.mrf.mxu0
    %v12301 = vadd.f32 %v12287, %v12300
    %v12302 = vpop.f32.mrf.mxu0
    %v12303 = vadd.f32 %v12289, %v12302
    %12304 = vdwg.mxu0
    %v12305 = vadd.f32 %v11514, %v12133
    %v12306 = vadd.f32 %v11515, %v12161
    %v12307 = vadd.f32 %v11516, %v12189
    %v12308 = vadd.f32 %v11517, %v12217
    %v12309 = vadd.f32 %v11518, %v12245
    %v12310 = vadd.f32 %v11519, %v12273
    %v12311 = vadd.f32 %v11520, %v12301
    %v12312 = vadd.f32 %v11521, %v12135
    %v12313 = vadd.f32 %v11522, %v12163
    %v12314 = vadd.f32 %v11523, %v12191
    %v12315 = vadd.f32 %v11524, %v12219
    %v12316 = vadd.f32 %v11525, %v12247
    %v12317 = vadd.f32 %v11526, %v12275
    %v12318 = vadd.f32 %v11527, %v12303
    %v12319 = vld [vmem:[%s10] sm:$0xff]
    %12321 = vset.pattern.permute.xlu0 0
    %12322 = vperm.xlu0 %12321, %v12319
    %v12323 = vpop.permute.xlu0 %12322
    %v12325 = vadd.f32 %v12305, %v12323
    %v12326 = vadd.f32 %v12306, %v12323
    %v12327 = vadd.f32 %v12307, %v12323
    %v12328 = vadd.f32 %v12308, %v12323
    %v12329 = vadd.f32 %v12309, %v12323
    %v12330 = vadd.f32 %v12310, %v12323
    %v12331 = vadd.f32 %v12311, %v12323
    %v12332 = vadd.f32 %v12312, %v12323
    %v12333 = vadd.f32 %v12313, %v12323
    %v12334 = vadd.f32 %v12314, %v12323
    %v12335 = vadd.f32 %v12315, %v12323
    %v12336 = vadd.f32 %v12316, %v12323
    %v12337 = vadd.f32 %v12317, %v12323
    %v12338 = vadd.f32 %v12318, %v12323
    %v12346 = vrot.slane %v12332, 5
    %v12347 = vrot.slane %v12333, 5
    %v12348 = vrot.slane %v12334, 5
    %v12349 = vrot.slane %v12335, 5
    %v12350 = vrot.slane %v12336, 5
    %v12351 = vrot.slane %v12337, 5
    %v12352 = vrot.slane %v12338, 5
    %v12360 = vsel %vm574, %v12325, %v12346
    %v12361 = vsel %vm574, %v12326, %v12347
    %v12362 = vsel %vm574, %v12327, %v12348
    %v12363 = vsel %vm574, %v12328, %v12349
    %v12364 = vsel %vm574, %v12329, %v12350
    %v12365 = vsel %vm574, %v12330, %v12351
    %v12366 = vsel %vm574, %v12331, %v12352
    %12367 = vst [vmem:[%s12] sm:$0x3f] %v12360
    %12368 = vst [vmem:[%s12 + $0x8] sm:$0x3f] %v12361
    %12369 = vst [vmem:[%s12 + $0x10] sm:$0x3f] %v12362
    %12370 = vst [vmem:[%s12 + $0x18] sm:$0x3f] %v12363
    %12371 = vst [vmem:[%s12 + $0x20] sm:$0x3f] %v12364
    %12372 = vst [vmem:[%s12 + $0x28] sm:$0x3f] %v12365
    %vm12373 = vcmask 128000
    %12374 = vst.msk [vmem:[%s12 + $0x30] sm:$0x3f] %vm12373, %v12366
    // Predicated region
    $region78: #{decoder_img_forward.1} parent=1 // pred_check
      _
    $region79: #{decoder_img_forward.1} parent=1 // pred_check_branch
      %12376 = sbr.rel (0) target = $region81
    $region80: #{decoder_img_forward.1} parent=1 // pred_region
      _
    $region81: #{decoder_img_forward.1} parent=1 // pred_fallthru
      _
    // Predicated region
    $region82: #{decoder_img_forward.1} parent=1 // pred_check
      _
    $region83: #{decoder_img_forward.1} parent=1 // pred_check_branch
      %12378 = sbr.rel (0) target = $region85
    $region84: #{decoder_img_forward.1} parent=1 // pred_region
      _
    $region85: #{decoder_img_forward.1} parent=1 // pred_fallthru
      _
    %12379 = vsyncpa [#allocation8], 1
    %12380 = vsyncpa [#allocation10], 1
    %12381 = vsyncpa [#allocation13], 1
  %12382 = vsyncmov [#allocation6]
  %s12383 = vpop.sfrf %12382
  %p12384 = scmp.eq.s32.totalorder %s12383, 0
  %p12385 = pneg %p12384
  %12387 = shalt.err (%p12385)

</llo_original>
